<compile_context>
chip_gen: v7x
topology: tpu7x:2x2x1
jax: 0.10.0
libtpu: 0.0.40
codegen_flags: <defaults>
</compile_context>

<pallas_src>
import functools

import jax
import jax.numpy as jnp
from jax.experimental import pallas as pl
from jax.experimental.pallas import tpu as pltpu

LRELU_SLOPE = 0.2
BN_EPS = 1e-5
MXU_DTYPE = jnp.bfloat16     # MXU operand dtype (accumulation stays f32)
ACT_DTYPE = jnp.bfloat16     # activation dtype on HBM layer boundaries
VMEM_LIMIT = 32 * 1024 * 1024


def _round_up(x, m):
    return (x + m - 1) // m * m


def _cparams():
    return pltpu.CompilerParams(vmem_limit_bytes=VMEM_LIMIT)


def _lrelu(x):
    return jnp.where(x >= 0, x, LRELU_SLOPE * x)


# ---------------------------------------------------------------------------
# Pallas kernels (gridless: whole layer resident in VMEM)
# ---------------------------------------------------------------------------
def _conv_bias_lrelu_kernel(p_ref, w_ref, b_ref, o_ref):
    # patches [M,Kp] bf16 @ weight [Kp,C] bf16 -> f32, + bias, LeakyReLU, bf16 store.
    acc = jnp.dot(p_ref[...], w_ref[...], preferred_element_type=jnp.float32)
    acc = acc + b_ref[...]
    o_ref[...] = _lrelu(acc).astype(o_ref.dtype)


def _conv_bn_lrelu_kernel(p_ref, w_ref, g_ref, beta_ref, o_ref, *, inv_m):
    # Fused conv (as matmul) + training-mode BatchNorm + LeakyReLU.
    # Stats are computed in-register over the full batch*spatial extent
    # (padded rows, if any, are exact zeros and divided out by the true 1/m).
    acc = jnp.dot(p_ref[...], w_ref[...], preferred_element_type=jnp.float32)
    mean = jnp.sum(acc, axis=0, keepdims=True) * inv_m
    ex2 = jnp.sum(acc * acc, axis=0, keepdims=True) * inv_m
    var = jnp.maximum(ex2 - mean * mean, 0.0)      # single-pass var, clamped >= 0
    inv = jax.lax.rsqrt(var + BN_EPS)              # EUP slot (free under DMA bound)
    scale = g_ref[...] * inv
    shift = beta_ref[...] - mean * scale
    y = acc * scale + shift
    o_ref[...] = _lrelu(y).astype(o_ref.dtype)


def _linear_head_kernel(x_ref, w1_ref, b1_ref, w2_ref, b2_ref, o_ref):
    # linear1 + LeakyReLU + linear2, all in one call; lane dims padded to 128.
    h = jnp.dot(x_ref[...], w1_ref[...], preferred_element_type=jnp.float32)
    h = _lrelu(h + b1_ref[...])
    out = jnp.dot(h.astype(MXU_DTYPE), w2_ref[...],
                  preferred_element_type=jnp.float32)
    o_ref[...] = out + b2_ref[...]


# ---------------------------------------------------------------------------
# Pallas wrappers
# ---------------------------------------------------------------------------
def conv_bias_lrelu(patches, w, b):
    M, K = patches.shape
    C = w.shape[1]
    return pl.pallas_call(
        _conv_bias_lrelu_kernel,
        out_shape=jax.ShapeDtypeStruct((M, C), ACT_DTYPE),
        compiler_params=_cparams(),
        cost_estimate=pl.CostEstimate(
            flops=2 * M * K * C, transcendentals=0,
            bytes_accessed=(M * K + K * C + M * C) * 2),
    )(patches, w, b)


def conv_bn_lrelu(patches, w, gamma, beta):
    M, K = patches.shape
    C = w.shape[1]
    Mp = _round_up(M, 8)
    if Mp != M:                       # keep the in-kernel row reduction exact
        patches = jnp.pad(patches, ((0, Mp - M), (0, 0)))
    kernel = functools.partial(_conv_bn_lrelu_kernel, inv_m=1.0 / M)
    out = pl.pallas_call(
        kernel,
        out_shape=jax.ShapeDtypeStruct((Mp, C), ACT_DTYPE),
        compiler_params=_cparams(),
        cost_estimate=pl.CostEstimate(
            flops=2 * Mp * K * C + 8 * Mp * C, transcendentals=C,
            bytes_accessed=(Mp * K + K * C + Mp * C) * 2),
    )(patches, w, gamma, beta)
    return out[:M] if Mp != M else out


def linear_head(x, w1, b1, w2, b2):
    N, K = x.shape
    H1 = w1.shape[1]
    H2 = w2.shape[1]
    return pl.pallas_call(
        _linear_head_kernel,
        out_shape=jax.ShapeDtypeStruct((N, H2), jnp.float32),
        compiler_params=_cparams(),
        cost_estimate=pl.CostEstimate(
            flops=2 * N * (K * H1 + H1 * H2), transcendentals=0,
            bytes_accessed=(N * K + K * H1 + H1 * H2) * 2 + N * H2 * 4),
    )(x, w1, b1, w2, b2)


# ---------------------------------------------------------------------------
# Glue (plain JAX): im2col on bf16 activations, K zero-padded to 128 multiples
# ---------------------------------------------------------------------------
def im2col(x, k, stride, pad):
    """NHWC -> [N*Ho*Wo, round_up(k*k*C,128)] bf16 patches, K index (i*k+j)*C+c."""
    N, H, W, C = x.shape
    xp = jnp.pad(x, ((0, 0), (pad, pad), (pad, pad), (0, 0)))
    Ho = (H + 2 * pad - k) // stride + 1
    Wo = (W + 2 * pad - k) // stride + 1
    cols = []
    for i in range(k):
        for j in range(k):
            cols.append(xp[:, i:i + stride * Ho:stride, j:j + stride * Wo:stride, :])
    patches = jnp.concatenate(cols, axis=-1).reshape(N * Ho * Wo, k * k * C)
    Kp = _round_up(k * k * C, 128)
    if Kp != k * k * C:
        patches = jnp.pad(patches, ((0, 0), (0, Kp - k * k * C)))
    return patches, N, Ho, Wo


# ---------------------------------------------------------------------------
# Model: parameters + forward
# ---------------------------------------------------------------------------
def make_layer_defs(nf):
    # (name, cin, cout, k, stride, pad) for the BN-followed conv blocks
    return [
        ("conv0_1", nf,     nf,     4, 2, 1),
        ("conv1_0", nf,     nf * 2, 3, 1, 1),
        ("conv1_1", nf * 2, nf * 2, 4, 2, 1),
        ("conv2_0", nf * 2, nf * 4, 3, 1, 1),
        ("conv2_1", nf * 4, nf * 4, 4, 2, 1),
        ("conv3_0", nf * 4, nf * 8, 3, 1, 1),
        ("conv3_1", nf * 8, nf * 8, 4, 2, 1),
        ("conv4_0", nf * 8, nf * 8, 3, 1, 1),
        ("conv4_1", nf * 8, nf * 8, 4, 2, 1),
    ]


def init_params(key, in_channels, nf, image_size):
    """Weights stored once in kernel layout (pre-transposed, K/lane padded)."""
    assert image_size % 32 == 0
    params = {}
    keys = jax.random.split(key, 64)
    ki = iter(range(64))

    def nrm(shape, scale=0.05):
        return scale * jax.random.normal(keys[next(ki)], shape, jnp.float32)

    def conv_wmat(cout, cin, k):
        w = nrm((cout, cin, k, k))                              # torch layout
        wm = jnp.transpose(w, (2, 3, 1, 0)).reshape(k * k * cin, cout)
        Kp = _round_up(k * k * cin, 128)
        if Kp != k * k * cin:
            wm = jnp.pad(wm, ((0, Kp - k * k * cin), (0, 0)))   # zero rows
        return wm.astype(MXU_DTYPE)

    # conv0_0 (with bias, no BN)
    params["conv0_0_w"] = conv_wmat(nf, in_channels, 3)
    params["conv0_0_b"] = nrm((1, nf))

    for name, cin, cout, k, _, _ in make_layer_defs(nf):
        params[f"{name}_w"] = conv_wmat(cout, cin, k)
        params[f"{name}_g"] = 1.0 + 0.1 * jax.random.normal(
            keys[next(ki)], (1, cout), jnp.float32)
        params[f"{name}_beta"] = nrm((1, cout), 0.1)

    hw = image_size // 32
    c_last = nf * 8
    feat = c_last * hw * hw
    feat_p = _round_up(feat, 128)
    h1, h1_p = 100, 128

    # torch linear1.weight [100, feat] with feat in (C,H,W) order; permute the
    # columns once to (H,W,C) so the runtime flatten is a plain NHWC reshape.
    w1 = nrm((h1, feat))
    w1 = w1.reshape(h1, c_last, hw, hw).transpose(0, 2, 3, 1).reshape(h1, feat)
    params["linear1_w"] = jnp.pad(
        w1.T, ((0, feat_p - feat), (0, h1_p - h1))).astype(MXU_DTYPE)  # [feat_p,128]
    params["linear1_b"] = jnp.pad(nrm((1, h1)), ((0, 0), (0, h1_p - h1)))

    w2 = nrm((1, h1))                                            # torch [1, 100]
    params["linear2_w"] = jnp.pad(
        w2.T, ((0, h1_p - h1), (0, 127))).astype(MXU_DTYPE)      # [128, 128]
    params["linear2_b"] = jnp.pad(nrm((1, 1)), ((0, 0), (0, 127)))
    return params


def vgg_discriminator(params, x_nchw, nf):
    x = jnp.transpose(x_nchw, (0, 2, 3, 1)).astype(ACT_DTYPE)   # NCHW -> NHWC bf16

    # conv0_0 + bias + LeakyReLU (no BN)
    patches, n, h, w = im2col(x, 3, 1, 1)
    x = conv_bias_lrelu(patches, params["conv0_0_w"],
                        params["conv0_0_b"]).reshape(n, h, w, -1)

    # conv -> BN -> LeakyReLU blocks, each fully fused in one pallas_call
    for name, _, _, k, stride, pad in make_layer_defs(nf):
        patches, n, h, w = im2col(x, k, stride, pad)
        x = conv_bn_lrelu(patches, params[f"{name}_w"],
                          params[f"{name}_g"],
                          params[f"{name}_beta"]).reshape(n, h, w, -1)

    # flatten (NHWC order; linear1 rows were permuted at init to match torch)
    nb, hh, ww, cc = x.shape
    feat = hh * ww * cc
    xf = x.reshape(nb, feat)
    feat_p = params["linear1_w"].shape[0]
    if feat_p != feat:
        xf = jnp.pad(xf, ((0, 0), (0, feat_p - feat)))

    out = linear_head(xf, params["linear1_w"], params["linear1_b"],
                      params["linear2_w"], params["linear2_b"])
    return out[:, :1]                                            # [N, 1] f32


# ---------------------------------------------------------------------------
# Driver
# ---------------------------------------------------------------------------
if __name__ == "__main__":
    in_channels = 4
    num_features = 8
    image_size = 32            # module requires image_size % 32 == 0
    batch = 2

    key = jax.random.PRNGKey(0)
    pkey, xkey = jax.random.split(key)
    params = init_params(pkey, in_channels, num_features, image_size)
    x = jax.random.normal(xkey, (batch, in_channels, image_size, image_size),
                          jnp.float32)

    fwd = jax.jit(functools.partial(vgg_discriminator, nf=num_features))
    out = jax.block_until_ready(fwd(params, x))
    assert out.shape == (batch, 1), out.shape
    assert bool(jnp.all(jnp.isfinite(out)))
    print("KERNEL_OK")
</pallas_src>

<mosaic_0001>
module attributes {stable_mosaic.version = 11 : i64} {
  func.func @_conv_bias_lrelu_kernel(%arg0: memref<2048x128xbf16, #tpu.memory_space<vmem>>, %arg1: memref<128x8xbf16, #tpu.memory_space<vmem>>, %arg2: memref<1x8xf32, #tpu.memory_space<vmem>>, %arg3: memref<2048x8xbf16, #tpu.memory_space<vmem>>) attributes {dimension_semantics = [], scalar_prefetch = 0 : i64, scratch_operands = 0 : i64, tpu.core_type = #tpu.core_type<tc>} {
    %c0 = arith.constant 0 : index
    %c0_0 = arith.constant 0 : index
    %0 = vector.load %arg0[%c0, %c0_0] : memref<2048x128xbf16, #tpu.memory_space<vmem>>, vector<2048x128xbf16>
    %c0_1 = arith.constant 0 : index
    %c0_2 = arith.constant 0 : index
    %1 = vector.load %arg1[%c0_1, %c0_2] : memref<128x8xbf16, #tpu.memory_space<vmem>>, vector<128x8xbf16>
    %cst = arith.constant dense<0.000000e+00> : vector<2048x8xf32>
    %2 = tpu.matmul %0, %1, %cst {dimension_numbers = #tpu.dot_dimension_numbers<[1], [0], [0], [1], [0, 0, 1, 1], [], []>} : vector<2048x128xbf16>, vector<128x8xbf16>, vector<2048x8xf32> -> vector<2048x8xf32>
    %c0_3 = arith.constant 0 : index
    %c0_4 = arith.constant 0 : index
    %3 = vector.load %arg2[%c0_3, %c0_4] : memref<1x8xf32, #tpu.memory_space<vmem>>, vector<1x8xf32>
    %4 = vector.broadcast %3 : vector<1x8xf32> to vector<2048x8xf32>
    %5 = arith.addf %2, %4 : vector<2048x8xf32>
    %cst_5 = arith.constant 0.000000e+00 : f32
    %6 = vector.broadcast %cst_5 : f32 to vector<2048x8xf32>
    %7 = arith.cmpf oge, %5, %6 : vector<2048x8xf32>
    %cst_6 = arith.constant 2.000000e-01 : f32
    %8 = vector.broadcast %cst_6 : f32 to vector<2048x8xf32>
    %9 = arith.mulf %8, %5 : vector<2048x8xf32>
    %10 = arith.select %7, %5, %9 : vector<2048x8xi1>, vector<2048x8xf32>
    %11 = arith.truncf %10 : vector<2048x8xf32> to vector<2048x8xbf16>
    %c0_7 = arith.constant 0 : index
    %c0_8 = arith.constant 0 : index
    %12 = vector.load %arg3[%c0_7, %c0_8] : memref<2048x8xbf16, #tpu.memory_space<vmem>>, vector<2048x8xbf16>
    tpu.vector_store %arg3[%c0_7, %c0_8], %11 {strides = array<i32>} : memref<2048x8xbf16, #tpu.memory_space<vmem>>, vector<2048x8xbf16>,
    return
  }
}

module attributes {stable_mosaic.version = 11 : i64} {
  func.func @_conv_bn_lrelu_kernel(%arg0: memref<512x128xbf16, #tpu.memory_space<vmem>>, %arg1: memref<128x8xbf16, #tpu.memory_space<vmem>>, %arg2: memref<1x8xf32, #tpu.memory_space<vmem>>, %arg3: memref<1x8xf32, #tpu.memory_space<vmem>>, %arg4: memref<512x8xbf16, #tpu.memory_space<vmem>>) attributes {dimension_semantics = [], scalar_prefetch = 0 : i64, scratch_operands = 0 : i64, tpu.core_type = #tpu.core_type<tc>} {
    %c0 = arith.constant 0 : index
    %c0_0 = arith.constant 0 : index
    %0 = vector.load %arg0[%c0, %c0_0] : memref<512x128xbf16, #tpu.memory_space<vmem>>, vector<512x128xbf16>
    %c0_1 = arith.constant 0 : index
    %c0_2 = arith.constant 0 : index
    %1 = vector.load %arg1[%c0_1, %c0_2] : memref<128x8xbf16, #tpu.memory_space<vmem>>, vector<128x8xbf16>
    %cst = arith.constant dense<0.000000e+00> : vector<512x8xf32>
    %2 = tpu.matmul %0, %1, %cst {dimension_numbers = #tpu.dot_dimension_numbers<[1], [0], [0], [1], [0, 0, 1, 1], [], []>} : vector<512x128xbf16>, vector<128x8xbf16>, vector<512x8xf32> -> vector<512x8xf32>
    %cst_3 = arith.constant dense<0.000000e+00> : vector<8xf32>
    %3 = vector.multi_reduction <add>, %2, %cst_3 [0] : vector<512x8xf32> to vector<8xf32>
    %4 = vector.shape_cast %3 : vector<8xf32> to vector<1x8xf32>
    %cst_4 = arith.constant 0.001953125 : f32
    %5 = vector.broadcast %cst_4 : f32 to vector<1x8xf32>
    %6 = arith.mulf %4, %5 : vector<1x8xf32>
    %7 = arith.mulf %2, %2 : vector<512x8xf32>
    %cst_5 = arith.constant dense<0.000000e+00> : vector<8xf32>
    %8 = vector.multi_reduction <add>, %7, %cst_5 [0] : vector<512x8xf32> to vector<8xf32>
    %9 = vector.shape_cast %8 : vector<8xf32> to vector<1x8xf32>
    %cst_6 = arith.constant 0.001953125 : f32
    %10 = vector.broadcast %cst_6 : f32 to vector<1x8xf32>
    %11 = arith.mulf %9, %10 : vector<1x8xf32>
    %12 = arith.mulf %6, %6 : vector<1x8xf32>
    %13 = arith.subf %11, %12 : vector<1x8xf32>
    %cst_7 = arith.constant 0.000000e+00 : f32
    %14 = vector.broadcast %cst_7 : f32 to vector<1x8xf32>
    %15 = arith.maximumf %13, %14 : vector<1x8xf32>
    %cst_8 = arith.constant 9.99999974E-6 : f32
    %16 = vector.broadcast %cst_8 : f32 to vector<1x8xf32>
    %17 = arith.addf %15, %16 : vector<1x8xf32>
    %18 = math.rsqrt %17 : vector<1x8xf32>
    %c0_9 = arith.constant 0 : index
    %c0_10 = arith.constant 0 : index
    %19 = vector.load %arg2[%c0_9, %c0_10] : memref<1x8xf32, #tpu.memory_space<vmem>>, vector<1x8xf32>
    %20 = arith.mulf %19, %18 : vector<1x8xf32>
    %c0_11 = arith.constant 0 : index
    %c0_12 = arith.constant 0 : index
    %21 = vector.load %arg3[%c0_11, %c0_12] : memref<1x8xf32, #tpu.memory_space<vmem>>, vector<1x8xf32>
    %22 = arith.mulf %6, %20 : vector<1x8xf32>
    %23 = arith.subf %21, %22 : vector<1x8xf32>
    %24 = vector.broadcast %20 : vector<1x8xf32> to vector<512x8xf32>
    %25 = arith.mulf %2, %24 : vector<512x8xf32>
    %26 = vector.broadcast %23 : vector<1x8xf32> to vector<512x8xf32>
    %27 = arith.addf %25, %26 : vector<512x8xf32>
    %cst_13 = arith.constant 0.000000e+00 : f32
    %28 = vector.broadcast %cst_13 : f32 to vector<512x8xf32>
    %29 = arith.cmpf oge, %27, %28 : vector<512x8xf32>
    %cst_14 = arith.constant 2.000000e-01 : f32
    %30 = vector.broadcast %cst_14 : f32 to vector<512x8xf32>
    %31 = arith.mulf %30, %27 : vector<512x8xf32>
    %32 = arith.select %29, %27, %31 : vector<512x8xi1>, vector<512x8xf32>
    %33 = arith.truncf %32 : vector<512x8xf32> to vector<512x8xbf16>
    %c0_15 = arith.constant 0 : index
    %c0_16 = arith.constant 0 : index
    %34 = vector.load %arg4[%c0_15, %c0_16] : memref<512x8xbf16, #tpu.memory_space<vmem>>, vector<512x8xbf16>
    tpu.vector_store %arg4[%c0_15, %c0_16], %33 {strides = array<i32>} : memref<512x8xbf16, #tpu.memory_space<vmem>>, vector<512x8xbf16>,
    return
  }
}

module attributes {stable_mosaic.version = 11 : i64} {
  func.func @_conv_bn_lrelu_kernel(%arg0: memref<512x128xbf16, #tpu.memory_space<vmem>>, %arg1: memref<128x16xbf16, #tpu.memory_space<vmem>>, %arg2: memref<1x16xf32, #tpu.memory_space<vmem>>, %arg3: memref<1x16xf32, #tpu.memory_space<vmem>>, %arg4: memref<512x16xbf16, #tpu.memory_space<vmem>>) attributes {dimension_semantics = [], scalar_prefetch = 0 : i64, scratch_operands = 0 : i64, tpu.core_type = #tpu.core_type<tc>} {
    %c0 = arith.constant 0 : index
    %c0_0 = arith.constant 0 : index
    %0 = vector.load %arg0[%c0, %c0_0] : memref<512x128xbf16, #tpu.memory_space<vmem>>, vector<512x128xbf16>
    %c0_1 = arith.constant 0 : index
    %c0_2 = arith.constant 0 : index
    %1 = vector.load %arg1[%c0_1, %c0_2] : memref<128x16xbf16, #tpu.memory_space<vmem>>, vector<128x16xbf16>
    %cst = arith.constant dense<0.000000e+00> : vector<512x16xf32>
    %2 = tpu.matmul %0, %1, %cst {dimension_numbers = #tpu.dot_dimension_numbers<[1], [0], [0], [1], [0, 0, 1, 1], [], []>} : vector<512x128xbf16>, vector<128x16xbf16>, vector<512x16xf32> -> vector<512x16xf32>
    %cst_3 = arith.constant dense<0.000000e+00> : vector<16xf32>
    %3 = vector.multi_reduction <add>, %2, %cst_3 [0] : vector<512x16xf32> to vector<16xf32>
    %4 = vector.shape_cast %3 : vector<16xf32> to vector<1x16xf32>
    %cst_4 = arith.constant 0.001953125 : f32
    %5 = vector.broadcast %cst_4 : f32 to vector<1x16xf32>
    %6 = arith.mulf %4, %5 : vector<1x16xf32>
    %7 = arith.mulf %2, %2 : vector<512x16xf32>
    %cst_5 = arith.constant dense<0.000000e+00> : vector<16xf32>
    %8 = vector.multi_reduction <add>, %7, %cst_5 [0] : vector<512x16xf32> to vector<16xf32>
    %9 = vector.shape_cast %8 : vector<16xf32> to vector<1x16xf32>
    %cst_6 = arith.constant 0.001953125 : f32
    %10 = vector.broadcast %cst_6 : f32 to vector<1x16xf32>
    %11 = arith.mulf %9, %10 : vector<1x16xf32>
    %12 = arith.mulf %6, %6 : vector<1x16xf32>
    %13 = arith.subf %11, %12 : vector<1x16xf32>
    %cst_7 = arith.constant 0.000000e+00 : f32
    %14 = vector.broadcast %cst_7 : f32 to vector<1x16xf32>
    %15 = arith.maximumf %13, %14 : vector<1x16xf32>
    %cst_8 = arith.constant 9.99999974E-6 : f32
    %16 = vector.broadcast %cst_8 : f32 to vector<1x16xf32>
    %17 = arith.addf %15, %16 : vector<1x16xf32>
    %18 = math.rsqrt %17 : vector<1x16xf32>
    %c0_9 = arith.constant 0 : index
    %c0_10 = arith.constant 0 : index
    %19 = vector.load %arg2[%c0_9, %c0_10] : memref<1x16xf32, #tpu.memory_space<vmem>>, vector<1x16xf32>
    %20 = arith.mulf %19, %18 : vector<1x16xf32>
    %c0_11 = arith.constant 0 : index
    %c0_12 = arith.constant 0 : index
    %21 = vector.load %arg3[%c0_11, %c0_12] : memref<1x16xf32, #tpu.memory_space<vmem>>, vector<1x16xf32>
    %22 = arith.mulf %6, %20 : vector<1x16xf32>
    %23 = arith.subf %21, %22 : vector<1x16xf32>
    %24 = vector.broadcast %20 : vector<1x16xf32> to vector<512x16xf32>
    %25 = arith.mulf %2, %24 : vector<512x16xf32>
    %26 = vector.broadcast %23 : vector<1x16xf32> to vector<512x16xf32>
    %27 = arith.addf %25, %26 : vector<512x16xf32>
    %cst_13 = arith.constant 0.000000e+00 : f32
    %28 = vector.broadcast %cst_13 : f32 to vector<512x16xf32>
    %29 = arith.cmpf oge, %27, %28 : vector<512x16xf32>
    %cst_14 = arith.constant 2.000000e-01 : f32
    %30 = vector.broadcast %cst_14 : f32 to vector<512x16xf32>
    %31 = arith.mulf %30, %27 : vector<512x16xf32>
    %32 = arith.select %29, %27, %31 : vector<512x16xi1>, vector<512x16xf32>
    %33 = arith.truncf %32 : vector<512x16xf32> to vector<512x16xbf16>
    %c0_15 = arith.constant 0 : index
    %c0_16 = arith.constant 0 : index
    %34 = vector.load %arg4[%c0_15, %c0_16] : memref<512x16xbf16, #tpu.memory_space<vmem>>, vector<512x16xbf16>
    tpu.vector_store %arg4[%c0_15, %c0_16], %33 {strides = array<i32>} : memref<512x16xbf16, #tpu.memory_space<vmem>>, vector<512x16xbf16>,
    return
  }
}

module attributes {stable_mosaic.version = 11 : i64} {
  func.func @_conv_bn_lrelu_kernel(%arg0: memref<128x256xbf16, #tpu.memory_space<vmem>>, %arg1: memref<256x16xbf16, #tpu.memory_space<vmem>>, %arg2: memref<1x16xf32, #tpu.memory_space<vmem>>, %arg3: memref<1x16xf32, #tpu.memory_space<vmem>>, %arg4: memref<128x16xbf16, #tpu.memory_space<vmem>>) attributes {dimension_semantics = [], scalar_prefetch = 0 : i64, scratch_operands = 0 : i64, tpu.core_type = #tpu.core_type<tc>} {
    %c0 = arith.constant 0 : index
    %c0_0 = arith.constant 0 : index
    %0 = vector.load %arg0[%c0, %c0_0] : memref<128x256xbf16, #tpu.memory_space<vmem>>, vector<128x256xbf16>
    %c0_1 = arith.constant 0 : index
    %c0_2 = arith.constant 0 : index
    %1 = vector.load %arg1[%c0_1, %c0_2] : memref<256x16xbf16, #tpu.memory_space<vmem>>, vector<256x16xbf16>
    %cst = arith.constant dense<0.000000e+00> : vector<128x16xf32>
    %2 = tpu.matmul %0, %1, %cst {dimension_numbers = #tpu.dot_dimension_numbers<[1], [0], [0], [1], [0, 0, 1, 1], [], []>} : vector<128x256xbf16>, vector<256x16xbf16>, vector<128x16xf32> -> vector<128x16xf32>
    %cst_3 = arith.constant dense<0.000000e+00> : vector<16xf32>
    %3 = vector.multi_reduction <add>, %2, %cst_3 [0] : vector<128x16xf32> to vector<16xf32>
    %4 = vector.shape_cast %3 : vector<16xf32> to vector<1x16xf32>
    %cst_4 = arith.constant 7.812500e-03 : f32
    %5 = vector.broadcast %cst_4 : f32 to vector<1x16xf32>
    %6 = arith.mulf %4, %5 : vector<1x16xf32>
    %7 = arith.mulf %2, %2 : vector<128x16xf32>
    %cst_5 = arith.constant dense<0.000000e+00> : vector<16xf32>
    %8 = vector.multi_reduction <add>, %7, %cst_5 [0] : vector<128x16xf32> to vector<16xf32>
    %9 = vector.shape_cast %8 : vector<16xf32> to vector<1x16xf32>
    %cst_6 = arith.constant 7.812500e-03 : f32
    %10 = vector.broadcast %cst_6 : f32 to vector<1x16xf32>
    %11 = arith.mulf %9, %10 : vector<1x16xf32>
    %12 = arith.mulf %6, %6 : vector<1x16xf32>
    %13 = arith.subf %11, %12 : vector<1x16xf32>
    %cst_7 = arith.constant 0.000000e+00 : f32
    %14 = vector.broadcast %cst_7 : f32 to vector<1x16xf32>
    %15 = arith.maximumf %13, %14 : vector<1x16xf32>
    %cst_8 = arith.constant 9.99999974E-6 : f32
    %16 = vector.broadcast %cst_8 : f32 to vector<1x16xf32>
    %17 = arith.addf %15, %16 : vector<1x16xf32>
    %18 = math.rsqrt %17 : vector<1x16xf32>
    %c0_9 = arith.constant 0 : index
    %c0_10 = arith.constant 0 : index
    %19 = vector.load %arg2[%c0_9, %c0_10] : memref<1x16xf32, #tpu.memory_space<vmem>>, vector<1x16xf32>
    %20 = arith.mulf %19, %18 : vector<1x16xf32>
    %c0_11 = arith.constant 0 : index
    %c0_12 = arith.constant 0 : index
    %21 = vector.load %arg3[%c0_11, %c0_12] : memref<1x16xf32, #tpu.memory_space<vmem>>, vector<1x16xf32>
    %22 = arith.mulf %6, %20 : vector<1x16xf32>
    %23 = arith.subf %21, %22 : vector<1x16xf32>
    %24 = vector.broadcast %20 : vector<1x16xf32> to vector<128x16xf32>
    %25 = arith.mulf %2, %24 : vector<128x16xf32>
    %26 = vector.broadcast %23 : vector<1x16xf32> to vector<128x16xf32>
    %27 = arith.addf %25, %26 : vector<128x16xf32>
    %cst_13 = arith.constant 0.000000e+00 : f32
    %28 = vector.broadcast %cst_13 : f32 to vector<128x16xf32>
    %29 = arith.cmpf oge, %27, %28 : vector<128x16xf32>
    %cst_14 = arith.constant 2.000000e-01 : f32
    %30 = vector.broadcast %cst_14 : f32 to vector<128x16xf32>
    %31 = arith.mulf %30, %27 : vector<128x16xf32>
    %32 = arith.select %29, %27, %31 : vector<128x16xi1>, vector<128x16xf32>
    %33 = arith.truncf %32 : vector<128x16xf32> to vector<128x16xbf16>
    %c0_15 = arith.constant 0 : index
    %c0_16 = arith.constant 0 : index
    %34 = vector.load %arg4[%c0_15, %c0_16] : memref<128x16xbf16, #tpu.memory_space<vmem>>, vector<128x16xbf16>
    tpu.vector_store %arg4[%c0_15, %c0_16], %33 {strides = array<i32>} : memref<128x16xbf16, #tpu.memory_space<vmem>>, vector<128x16xbf16>,
    return
  }
}

module attributes {stable_mosaic.version = 11 : i64} {
  func.func @_conv_bn_lrelu_kernel(%arg0: memref<128x256xbf16, #tpu.memory_space<vmem>>, %arg1: memref<256x32xbf16, #tpu.memory_space<vmem>>, %arg2: memref<1x32xf32, #tpu.memory_space<vmem>>, %arg3: memref<1x32xf32, #tpu.memory_space<vmem>>, %arg4: memref<128x32xbf16, #tpu.memory_space<vmem>>) attributes {dimension_semantics = [], scalar_prefetch = 0 : i64, scratch_operands = 0 : i64, tpu.core_type = #tpu.core_type<tc>} {
    %c0 = arith.constant 0 : index
    %c0_0 = arith.constant 0 : index
    %0 = vector.load %arg0[%c0, %c0_0] : memref<128x256xbf16, #tpu.memory_space<vmem>>, vector<128x256xbf16>
    %c0_1 = arith.constant 0 : index
    %c0_2 = arith.constant 0 : index
    %1 = vector.load %arg1[%c0_1, %c0_2] : memref<256x32xbf16, #tpu.memory_space<vmem>>, vector<256x32xbf16>
    %cst = arith.constant dense<0.000000e+00> : vector<128x32xf32>
    %2 = tpu.matmul %0, %1, %cst {dimension_numbers = #tpu.dot_dimension_numbers<[1], [0], [0], [1], [0, 0, 1, 1], [], []>} : vector<128x256xbf16>, vector<256x32xbf16>, vector<128x32xf32> -> vector<128x32xf32>
    %cst_3 = arith.constant dense<0.000000e+00> : vector<32xf32>
    %3 = vector.multi_reduction <add>, %2, %cst_3 [0] : vector<128x32xf32> to vector<32xf32>
    %4 = vector.shape_cast %3 : vector<32xf32> to vector<1x32xf32>
    %cst_4 = arith.constant 7.812500e-03 : f32
    %5 = vector.broadcast %cst_4 : f32 to vector<1x32xf32>
    %6 = arith.mulf %4, %5 : vector<1x32xf32>
    %7 = arith.mulf %2, %2 : vector<128x32xf32>
    %cst_5 = arith.constant dense<0.000000e+00> : vector<32xf32>
    %8 = vector.multi_reduction <add>, %7, %cst_5 [0] : vector<128x32xf32> to vector<32xf32>
    %9 = vector.shape_cast %8 : vector<32xf32> to vector<1x32xf32>
    %cst_6 = arith.constant 7.812500e-03 : f32
    %10 = vector.broadcast %cst_6 : f32 to vector<1x32xf32>
    %11 = arith.mulf %9, %10 : vector<1x32xf32>
    %12 = arith.mulf %6, %6 : vector<1x32xf32>
    %13 = arith.subf %11, %12 : vector<1x32xf32>
    %cst_7 = arith.constant 0.000000e+00 : f32
    %14 = vector.broadcast %cst_7 : f32 to vector<1x32xf32>
    %15 = arith.maximumf %13, %14 : vector<1x32xf32>
    %cst_8 = arith.constant 9.99999974E-6 : f32
    %16 = vector.broadcast %cst_8 : f32 to vector<1x32xf32>
    %17 = arith.addf %15, %16 : vector<1x32xf32>
    %18 = math.rsqrt %17 : vector<1x32xf32>
    %c0_9 = arith.constant 0 : index
    %c0_10 = arith.constant 0 : index
    %19 = vector.load %arg2[%c0_9, %c0_10] : memref<1x32xf32, #tpu.memory_space<vmem>>, vector<1x32xf32>
    %20 = arith.mulf %19, %18 : vector<1x32xf32>
    %c0_11 = arith.constant 0 : index
    %c0_12 = arith.constant 0 : index
    %21 = vector.load %arg3[%c0_11, %c0_12] : memref<1x32xf32, #tpu.memory_space<vmem>>, vector<1x32xf32>
    %22 = arith.mulf %6, %20 : vector<1x32xf32>
    %23 = arith.subf %21, %22 : vector<1x32xf32>
    %24 = vector.broadcast %20 : vector<1x32xf32> to vector<128x32xf32>
    %25 = arith.mulf %2, %24 : vector<128x32xf32>
    %26 = vector.broadcast %23 : vector<1x32xf32> to vector<128x32xf32>
    %27 = arith.addf %25, %26 : vector<128x32xf32>
    %cst_13 = arith.constant 0.000000e+00 : f32
    %28 = vector.broadcast %cst_13 : f32 to vector<128x32xf32>
    %29 = arith.cmpf oge, %27, %28 : vector<128x32xf32>
    %cst_14 = arith.constant 2.000000e-01 : f32
    %30 = vector.broadcast %cst_14 : f32 to vector<128x32xf32>
    %31 = arith.mulf %30, %27 : vector<128x32xf32>
    %32 = arith.select %29, %27, %31 : vector<128x32xi1>, vector<128x32xf32>
    %33 = arith.truncf %32 : vector<128x32xf32> to vector<128x32xbf16>
    %c0_15 = arith.constant 0 : index
    %c0_16 = arith.constant 0 : index
    %34 = vector.load %arg4[%c0_15, %c0_16] : memref<128x32xbf16, #tpu.memory_space<vmem>>, vector<128x32xbf16>
    tpu.vector_store %arg4[%c0_15, %c0_16], %33 {strides = array<i32>} : memref<128x32xbf16, #tpu.memory_space<vmem>>, vector<128x32xbf16>,
    return
  }
}

module attributes {stable_mosaic.version = 11 : i64} {
  func.func @_conv_bn_lrelu_kernel(%arg0: memref<32x512xbf16, #tpu.memory_space<vmem>>, %arg1: memref<512x32xbf16, #tpu.memory_space<vmem>>, %arg2: memref<1x32xf32, #tpu.memory_space<vmem>>, %arg3: memref<1x32xf32, #tpu.memory_space<vmem>>, %arg4: memref<32x32xbf16, #tpu.memory_space<vmem>>) attributes {dimension_semantics = [], scalar_prefetch = 0 : i64, scratch_operands = 0 : i64, tpu.core_type = #tpu.core_type<tc>} {
    %c0 = arith.constant 0 : index
    %c0_0 = arith.constant 0 : index
    %0 = vector.load %arg0[%c0, %c0_0] : memref<32x512xbf16, #tpu.memory_space<vmem>>, vector<32x512xbf16>
    %c0_1 = arith.constant 0 : index
    %c0_2 = arith.constant 0 : index
    %1 = vector.load %arg1[%c0_1, %c0_2] : memref<512x32xbf16, #tpu.memory_space<vmem>>, vector<512x32xbf16>
    %cst = arith.constant dense<0.000000e+00> : vector<32x32xf32>
    %2 = tpu.matmul %0, %1, %cst {dimension_numbers = #tpu.dot_dimension_numbers<[1], [0], [0], [1], [0, 0, 1, 1], [], []>} : vector<32x512xbf16>, vector<512x32xbf16>, vector<32x32xf32> -> vector<32x32xf32>
    %cst_3 = arith.constant dense<0.000000e+00> : vector<32xf32>
    %3 = vector.multi_reduction <add>, %2, %cst_3 [0] : vector<32x32xf32> to vector<32xf32>
    %4 = vector.shape_cast %3 : vector<32xf32> to vector<1x32xf32>
    %cst_4 = arith.constant 3.125000e-02 : f32
    %5 = vector.broadcast %cst_4 : f32 to vector<1x32xf32>
    %6 = arith.mulf %4, %5 : vector<1x32xf32>
    %7 = arith.mulf %2, %2 : vector<32x32xf32>
    %cst_5 = arith.constant dense<0.000000e+00> : vector<32xf32>
    %8 = vector.multi_reduction <add>, %7, %cst_5 [0] : vector<32x32xf32> to vector<32xf32>
    %9 = vector.shape_cast %8 : vector<32xf32> to vector<1x32xf32>
    %cst_6 = arith.constant 3.125000e-02 : f32
    %10 = vector.broadcast %cst_6 : f32 to vector<1x32xf32>
    %11 = arith.mulf %9, %10 : vector<1x32xf32>
    %12 = arith.mulf %6, %6 : vector<1x32xf32>
    %13 = arith.subf %11, %12 : vector<1x32xf32>
    %cst_7 = arith.constant 0.000000e+00 : f32
    %14 = vector.broadcast %cst_7 : f32 to vector<1x32xf32>
    %15 = arith.maximumf %13, %14 : vector<1x32xf32>
    %cst_8 = arith.constant 9.99999974E-6 : f32
    %16 = vector.broadcast %cst_8 : f32 to vector<1x32xf32>
    %17 = arith.addf %15, %16 : vector<1x32xf32>
    %18 = math.rsqrt %17 : vector<1x32xf32>
    %c0_9 = arith.constant 0 : index
    %c0_10 = arith.constant 0 : index
    %19 = vector.load %arg2[%c0_9, %c0_10] : memref<1x32xf32, #tpu.memory_space<vmem>>, vector<1x32xf32>
    %20 = arith.mulf %19, %18 : vector<1x32xf32>
    %c0_11 = arith.constant 0 : index
    %c0_12 = arith.constant 0 : index
    %21 = vector.load %arg3[%c0_11, %c0_12] : memref<1x32xf32, #tpu.memory_space<vmem>>, vector<1x32xf32>
    %22 = arith.mulf %6, %20 : vector<1x32xf32>
    %23 = arith.subf %21, %22 : vector<1x32xf32>
    %24 = vector.broadcast %20 : vector<1x32xf32> to vector<32x32xf32>
    %25 = arith.mulf %2, %24 : vector<32x32xf32>
    %26 = vector.broadcast %23 : vector<1x32xf32> to vector<32x32xf32>
    %27 = arith.addf %25, %26 : vector<32x32xf32>
    %cst_13 = arith.constant 0.000000e+00 : f32
    %28 = vector.broadcast %cst_13 : f32 to vector<32x32xf32>
    %29 = arith.cmpf oge, %27, %28 : vector<32x32xf32>
    %cst_14 = arith.constant 2.000000e-01 : f32
    %30 = vector.broadcast %cst_14 : f32 to vector<32x32xf32>
    %31 = arith.mulf %30, %27 : vector<32x32xf32>
    %32 = arith.select %29, %27, %31 : vector<32x32xi1>, vector<32x32xf32>
    %33 = arith.truncf %32 : vector<32x32xf32> to vector<32x32xbf16>
    %c0_15 = arith.constant 0 : index
    %c0_16 = arith.constant 0 : index
    %34 = vector.load %arg4[%c0_15, %c0_16] : memref<32x32xbf16, #tpu.memory_space<vmem>>, vector<32x32xbf16>
    tpu.vector_store %arg4[%c0_15, %c0_16], %33 {strides = array<i32>} : memref<32x32xbf16, #tpu.memory_space<vmem>>, vector<32x32xbf16>,
    return
  }
}

module attributes {stable_mosaic.version = 11 : i64} {
  func.func @_conv_bn_lrelu_kernel(%arg0: memref<32x384xbf16, #tpu.memory_space<vmem>>, %arg1: memref<384x64xbf16, #tpu.memory_space<vmem>>, %arg2: memref<1x64xf32, #tpu.memory_space<vmem>>, %arg3: memref<1x64xf32, #tpu.memory_space<vmem>>, %arg4: memref<32x64xbf16, #tpu.memory_space<vmem>>) attributes {dimension_semantics = [], scalar_prefetch = 0 : i64, scratch_operands = 0 : i64, tpu.core_type = #tpu.core_type<tc>} {
    %c0 = arith.constant 0 : index
    %c0_0 = arith.constant 0 : index
    %0 = vector.load %arg0[%c0, %c0_0] : memref<32x384xbf16, #tpu.memory_space<vmem>>, vector<32x384xbf16>
    %c0_1 = arith.constant 0 : index
    %c0_2 = arith.constant 0 : index
    %1 = vector.load %arg1[%c0_1, %c0_2] : memref<384x64xbf16, #tpu.memory_space<vmem>>, vector<384x64xbf16>
    %cst = arith.constant dense<0.000000e+00> : vector<32x64xf32>
    %2 = tpu.matmul %0, %1, %cst {dimension_numbers = #tpu.dot_dimension_numbers<[1], [0], [0], [1], [0, 0, 1, 1], [], []>} : vector<32x384xbf16>, vector<384x64xbf16>, vector<32x64xf32> -> vector<32x64xf32>
    %cst_3 = arith.constant dense<0.000000e+00> : vector<64xf32>
    %3 = vector.multi_reduction <add>, %2, %cst_3 [0] : vector<32x64xf32> to vector<64xf32>
    %4 = vector.shape_cast %3 : vector<64xf32> to vector<1x64xf32>
    %cst_4 = arith.constant 3.125000e-02 : f32
    %5 = vector.broadcast %cst_4 : f32 to vector<1x64xf32>
    %6 = arith.mulf %4, %5 : vector<1x64xf32>
    %7 = arith.mulf %2, %2 : vector<32x64xf32>
    %cst_5 = arith.constant dense<0.000000e+00> : vector<64xf32>
    %8 = vector.multi_reduction <add>, %7, %cst_5 [0] : vector<32x64xf32> to vector<64xf32>
    %9 = vector.shape_cast %8 : vector<64xf32> to vector<1x64xf32>
    %cst_6 = arith.constant 3.125000e-02 : f32
    %10 = vector.broadcast %cst_6 : f32 to vector<1x64xf32>
    %11 = arith.mulf %9, %10 : vector<1x64xf32>
    %12 = arith.mulf %6, %6 : vector<1x64xf32>
    %13 = arith.subf %11, %12 : vector<1x64xf32>
    %cst_7 = arith.constant 0.000000e+00 : f32
    %14 = vector.broadcast %cst_7 : f32 to vector<1x64xf32>
    %15 = arith.maximumf %13, %14 : vector<1x64xf32>
    %cst_8 = arith.constant 9.99999974E-6 : f32
    %16 = vector.broadcast %cst_8 : f32 to vector<1x64xf32>
    %17 = arith.addf %15, %16 : vector<1x64xf32>
    %18 = math.rsqrt %17 : vector<1x64xf32>
    %c0_9 = arith.constant 0 : index
    %c0_10 = arith.constant 0 : index
    %19 = vector.load %arg2[%c0_9, %c0_10] : memref<1x64xf32, #tpu.memory_space<vmem>>, vector<1x64xf32>
    %20 = arith.mulf %19, %18 : vector<1x64xf32>
    %c0_11 = arith.constant 0 : index
    %c0_12 = arith.constant 0 : index
    %21 = vector.load %arg3[%c0_11, %c0_12] : memref<1x64xf32, #tpu.memory_space<vmem>>, vector<1x64xf32>
    %22 = arith.mulf %6, %20 : vector<1x64xf32>
    %23 = arith.subf %21, %22 : vector<1x64xf32>
    %24 = vector.broadcast %20 : vector<1x64xf32> to vector<32x64xf32>
    %25 = arith.mulf %2, %24 : vector<32x64xf32>
    %26 = vector.broadcast %23 : vector<1x64xf32> to vector<32x64xf32>
    %27 = arith.addf %25, %26 : vector<32x64xf32>
    %cst_13 = arith.constant 0.000000e+00 : f32
    %28 = vector.broadcast %cst_13 : f32 to vector<32x64xf32>
    %29 = arith.cmpf oge, %27, %28 : vector<32x64xf32>
    %cst_14 = arith.constant 2.000000e-01 : f32
    %30 = vector.broadcast %cst_14 : f32 to vector<32x64xf32>
    %31 = arith.mulf %30, %27 : vector<32x64xf32>
    %32 = arith.select %29, %27, %31 : vector<32x64xi1>, vector<32x64xf32>
    %33 = arith.truncf %32 : vector<32x64xf32> to vector<32x64xbf16>
    %c0_15 = arith.constant 0 : index
    %c0_16 = arith.constant 0 : index
    %34 = vector.load %arg4[%c0_15, %c0_16] : memref<32x64xbf16, #tpu.memory_space<vmem>>, vector<32x64xbf16>
    tpu.vector_store %arg4[%c0_15, %c0_16], %33 {strides = array<i32>} : memref<32x64xbf16, #tpu.memory_space<vmem>>, vector<32x64xbf16>,
    return
  }
}

module attributes {stable_mosaic.version = 11 : i64} {
  func.func @_conv_bn_lrelu_kernel(%arg0: memref<8x1024xbf16, #tpu.memory_space<vmem>>, %arg1: memref<1024x64xbf16, #tpu.memory_space<vmem>>, %arg2: memref<1x64xf32, #tpu.memory_space<vmem>>, %arg3: memref<1x64xf32, #tpu.memory_space<vmem>>, %arg4: memref<8x64xbf16, #tpu.memory_space<vmem>>) attributes {dimension_semantics = [], scalar_prefetch = 0 : i64, scratch_operands = 0 : i64, tpu.core_type = #tpu.core_type<tc>} {
    %c0 = arith.constant 0 : index
    %c0_0 = arith.constant 0 : index
    %0 = vector.load %arg0[%c0, %c0_0] : memref<8x1024xbf16, #tpu.memory_space<vmem>>, vector<8x1024xbf16>
    %c0_1 = arith.constant 0 : index
    %c0_2 = arith.constant 0 : index
    %1 = vector.load %arg1[%c0_1, %c0_2] : memref<1024x64xbf16, #tpu.memory_space<vmem>>, vector<1024x64xbf16>
    %cst = arith.constant dense<0.000000e+00> : vector<8x64xf32>
    %2 = tpu.matmul %0, %1, %cst {dimension_numbers = #tpu.dot_dimension_numbers<[1], [0], [0], [1], [0, 0, 1, 1], [], []>} : vector<8x1024xbf16>, vector<1024x64xbf16>, vector<8x64xf32> -> vector<8x64xf32>
    %cst_3 = arith.constant dense<0.000000e+00> : vector<64xf32>
    %3 = vector.multi_reduction <add>, %2, %cst_3 [0] : vector<8x64xf32> to vector<64xf32>
    %4 = vector.shape_cast %3 : vector<64xf32> to vector<1x64xf32>
    %cst_4 = arith.constant 1.250000e-01 : f32
    %5 = vector.broadcast %cst_4 : f32 to vector<1x64xf32>
    %6 = arith.mulf %4, %5 : vector<1x64xf32>
    %7 = arith.mulf %2, %2 : vector<8x64xf32>
    %cst_5 = arith.constant dense<0.000000e+00> : vector<64xf32>
    %8 = vector.multi_reduction <add>, %7, %cst_5 [0] : vector<8x64xf32> to vector<64xf32>
    %9 = vector.shape_cast %8 : vector<64xf32> to vector<1x64xf32>
    %cst_6 = arith.constant 1.250000e-01 : f32
    %10 = vector.broadcast %cst_6 : f32 to vector<1x64xf32>
    %11 = arith.mulf %9, %10 : vector<1x64xf32>
    %12 = arith.mulf %6, %6 : vector<1x64xf32>
    %13 = arith.subf %11, %12 : vector<1x64xf32>
    %cst_7 = arith.constant 0.000000e+00 : f32
    %14 = vector.broadcast %cst_7 : f32 to vector<1x64xf32>
    %15 = arith.maximumf %13, %14 : vector<1x64xf32>
    %cst_8 = arith.constant 9.99999974E-6 : f32
    %16 = vector.broadcast %cst_8 : f32 to vector<1x64xf32>
    %17 = arith.addf %15, %16 : vector<1x64xf32>
    %18 = math.rsqrt %17 : vector<1x64xf32>
    %c0_9 = arith.constant 0 : index
    %c0_10 = arith.constant 0 : index
    %19 = vector.load %arg2[%c0_9, %c0_10] : memref<1x64xf32, #tpu.memory_space<vmem>>, vector<1x64xf32>
    %20 = arith.mulf %19, %18 : vector<1x64xf32>
    %c0_11 = arith.constant 0 : index
    %c0_12 = arith.constant 0 : index
    %21 = vector.load %arg3[%c0_11, %c0_12] : memref<1x64xf32, #tpu.memory_space<vmem>>, vector<1x64xf32>
    %22 = arith.mulf %6, %20 : vector<1x64xf32>
    %23 = arith.subf %21, %22 : vector<1x64xf32>
    %24 = vector.broadcast %20 : vector<1x64xf32> to vector<8x64xf32>
    %25 = arith.mulf %2, %24 : vector<8x64xf32>
    %26 = vector.broadcast %23 : vector<1x64xf32> to vector<8x64xf32>
    %27 = arith.addf %25, %26 : vector<8x64xf32>
    %cst_13 = arith.constant 0.000000e+00 : f32
    %28 = vector.broadcast %cst_13 : f32 to vector<8x64xf32>
    %29 = arith.cmpf oge, %27, %28 : vector<8x64xf32>
    %cst_14 = arith.constant 2.000000e-01 : f32
    %30 = vector.broadcast %cst_14 : f32 to vector<8x64xf32>
    %31 = arith.mulf %30, %27 : vector<8x64xf32>
    %32 = arith.select %29, %27, %31 : vector<8x64xi1>, vector<8x64xf32>
    %33 = arith.truncf %32 : vector<8x64xf32> to vector<8x64xbf16>
    %c0_15 = arith.constant 0 : index
    %c0_16 = arith.constant 0 : index
    %34 = vector.load %arg4[%c0_15, %c0_16] : memref<8x64xbf16, #tpu.memory_space<vmem>>, vector<8x64xbf16>
    tpu.vector_store %arg4[%c0_15, %c0_16], %33 {strides = array<i32>} : memref<8x64xbf16, #tpu.memory_space<vmem>>, vector<8x64xbf16>,
    return
  }
}

module attributes {stable_mosaic.version = 11 : i64} {
  func.func @_conv_bn_lrelu_kernel(%arg0: memref<8x640xbf16, #tpu.memory_space<vmem>>, %arg1: memref<640x64xbf16, #tpu.memory_space<vmem>>, %arg2: memref<1x64xf32, #tpu.memory_space<vmem>>, %arg3: memref<1x64xf32, #tpu.memory_space<vmem>>, %arg4: memref<8x64xbf16, #tpu.memory_space<vmem>>) attributes {dimension_semantics = [], scalar_prefetch = 0 : i64, scratch_operands = 0 : i64, tpu.core_type = #tpu.core_type<tc>} {
    %c0 = arith.constant 0 : index
    %c0_0 = arith.constant 0 : index
    %0 = vector.load %arg0[%c0, %c0_0] : memref<8x640xbf16, #tpu.memory_space<vmem>>, vector<8x640xbf16>
    %c0_1 = arith.constant 0 : index
    %c0_2 = arith.constant 0 : index
    %1 = vector.load %arg1[%c0_1, %c0_2] : memref<640x64xbf16, #tpu.memory_space<vmem>>, vector<640x64xbf16>
    %cst = arith.constant dense<0.000000e+00> : vector<8x64xf32>
    %2 = tpu.matmul %0, %1, %cst {dimension_numbers = #tpu.dot_dimension_numbers<[1], [0], [0], [1], [0, 0, 1, 1], [], []>} : vector<8x640xbf16>, vector<640x64xbf16>, vector<8x64xf32> -> vector<8x64xf32>
    %cst_3 = arith.constant dense<0.000000e+00> : vector<64xf32>
    %3 = vector.multi_reduction <add>, %2, %cst_3 [0] : vector<8x64xf32> to vector<64xf32>
    %4 = vector.shape_cast %3 : vector<64xf32> to vector<1x64xf32>
    %cst_4 = arith.constant 1.250000e-01 : f32
    %5 = vector.broadcast %cst_4 : f32 to vector<1x64xf32>
    %6 = arith.mulf %4, %5 : vector<1x64xf32>
    %7 = arith.mulf %2, %2 : vector<8x64xf32>
    %cst_5 = arith.constant dense<0.000000e+00> : vector<64xf32>
    %8 = vector.multi_reduction <add>, %7, %cst_5 [0] : vector<8x64xf32> to vector<64xf32>
    %9 = vector.shape_cast %8 : vector<64xf32> to vector<1x64xf32>
    %cst_6 = arith.constant 1.250000e-01 : f32
    %10 = vector.broadcast %cst_6 : f32 to vector<1x64xf32>
    %11 = arith.mulf %9, %10 : vector<1x64xf32>
    %12 = arith.mulf %6, %6 : vector<1x64xf32>
    %13 = arith.subf %11, %12 : vector<1x64xf32>
    %cst_7 = arith.constant 0.000000e+00 : f32
    %14 = vector.broadcast %cst_7 : f32 to vector<1x64xf32>
    %15 = arith.maximumf %13, %14 : vector<1x64xf32>
    %cst_8 = arith.constant 9.99999974E-6 : f32
    %16 = vector.broadcast %cst_8 : f32 to vector<1x64xf32>
    %17 = arith.addf %15, %16 : vector<1x64xf32>
    %18 = math.rsqrt %17 : vector<1x64xf32>
    %c0_9 = arith.constant 0 : index
    %c0_10 = arith.constant 0 : index
    %19 = vector.load %arg2[%c0_9, %c0_10] : memref<1x64xf32, #tpu.memory_space<vmem>>, vector<1x64xf32>
    %20 = arith.mulf %19, %18 : vector<1x64xf32>
    %c0_11 = arith.constant 0 : index
    %c0_12 = arith.constant 0 : index
    %21 = vector.load %arg3[%c0_11, %c0_12] : memref<1x64xf32, #tpu.memory_space<vmem>>, vector<1x64xf32>
    %22 = arith.mulf %6, %20 : vector<1x64xf32>
    %23 = arith.subf %21, %22 : vector<1x64xf32>
    %24 = vector.broadcast %20 : vector<1x64xf32> to vector<8x64xf32>
    %25 = arith.mulf %2, %24 : vector<8x64xf32>
    %26 = vector.broadcast %23 : vector<1x64xf32> to vector<8x64xf32>
    %27 = arith.addf %25, %26 : vector<8x64xf32>
    %cst_13 = arith.constant 0.000000e+00 : f32
    %28 = vector.broadcast %cst_13 : f32 to vector<8x64xf32>
    %29 = arith.cmpf oge, %27, %28 : vector<8x64xf32>
    %cst_14 = arith.constant 2.000000e-01 : f32
    %30 = vector.broadcast %cst_14 : f32 to vector<8x64xf32>
    %31 = arith.mulf %30, %27 : vector<8x64xf32>
    %32 = arith.select %29, %27, %31 : vector<8x64xi1>, vector<8x64xf32>
    %33 = arith.truncf %32 : vector<8x64xf32> to vector<8x64xbf16>
    %c0_15 = arith.constant 0 : index
    %c0_16 = arith.constant 0 : index
    %34 = vector.load %arg4[%c0_15, %c0_16] : memref<8x64xbf16, #tpu.memory_space<vmem>>, vector<8x64xbf16>
    tpu.vector_store %arg4[%c0_15, %c0_16], %33 {strides = array<i32>} : memref<8x64xbf16, #tpu.memory_space<vmem>>, vector<8x64xbf16>,
    return
  }
}

module attributes {stable_mosaic.version = 11 : i64} {
  func.func @_linear_head_kernel(%arg0: memref<2x128xbf16, #tpu.memory_space<vmem>>, %arg1: memref<128x128xbf16, #tpu.memory_space<vmem>>, %arg2: memref<1x128xf32, #tpu.memory_space<vmem>>, %arg3: memref<128x128xbf16, #tpu.memory_space<vmem>>, %arg4: memref<1x128xf32, #tpu.memory_space<vmem>>, %arg5: memref<2x128xf32, #tpu.memory_space<vmem>>) attributes {dimension_semantics = [], scalar_prefetch = 0 : i64, scratch_operands = 0 : i64, tpu.core_type = #tpu.core_type<tc>} {
    %c0 = arith.constant 0 : index
    %c0_0 = arith.constant 0 : index
    %0 = vector.load %arg0[%c0, %c0_0] : memref<2x128xbf16, #tpu.memory_space<vmem>>, vector<2x128xbf16>
    %c0_1 = arith.constant 0 : index
    %c0_2 = arith.constant 0 : index
    %1 = vector.load %arg1[%c0_1, %c0_2] : memref<128x128xbf16, #tpu.memory_space<vmem>>, vector<128x128xbf16>
    %cst = arith.constant dense<0.000000e+00> : vector<2x128xf32>
    %2 = tpu.matmul %0, %1, %cst {dimension_numbers = #tpu.dot_dimension_numbers<[1], [0], [0], [1], [0, 0, 1, 1], [], []>} : vector<2x128xbf16>, vector<128x128xbf16>, vector<2x128xf32> -> vector<2x128xf32>
    %c0_3 = arith.constant 0 : index
    %c0_4 = arith.constant 0 : index
    %3 = vector.load %arg2[%c0_3, %c0_4] : memref<1x128xf32, #tpu.memory_space<vmem>>, vector<1x128xf32>
    %4 = vector.broadcast %3 : vector<1x128xf32> to vector<2x128xf32>
    %5 = arith.addf %2, %4 : vector<2x128xf32>
    %cst_5 = arith.constant 0.000000e+00 : f32
    %6 = vector.broadcast %cst_5 : f32 to vector<2x128xf32>
    %7 = arith.cmpf oge, %5, %6 : vector<2x128xf32>
    %cst_6 = arith.constant 2.000000e-01 : f32
    %8 = vector.broadcast %cst_6 : f32 to vector<2x128xf32>
    %9 = arith.mulf %8, %5 : vector<2x128xf32>
    %10 = arith.select %7, %5, %9 : vector<2x128xi1>, vector<2x128xf32>
    %11 = arith.truncf %10 : vector<2x128xf32> to vector<2x128xbf16>
    %c0_7 = arith.constant 0 : index
    %c0_8 = arith.constant 0 : index
    %12 = vector.load %arg3[%c0_7, %c0_8] : memref<128x128xbf16, #tpu.memory_space<vmem>>, vector<128x128xbf16>
    %cst_9 = arith.constant dense<0.000000e+00> : vector<2x128xf32>
    %13 = tpu.matmul %11, %12, %cst_9 {dimension_numbers = #tpu.dot_dimension_numbers<[1], [0], [0], [1], [0, 0, 1, 1], [], []>} : vector<2x128xbf16>, vector<128x128xbf16>, vector<2x128xf32> -> vector<2x128xf32>
    %c0_10 = arith.constant 0 : index
    %c0_11 = arith.constant 0 : index
    %14 = vector.load %arg4[%c0_10, %c0_11] : memref<1x128xf32, #tpu.memory_space<vmem>>, vector<1x128xf32>
    %15 = vector.broadcast %14 : vector<1x128xf32> to vector<2x128xf32>
    %16 = arith.addf %13, %15 : vector<2x128xf32>
    %c0_12 = arith.constant 0 : index
    %c0_13 = arith.constant 0 : index
    %17 = vector.load %arg5[%c0_12, %c0_13] : memref<2x128xf32, #tpu.memory_space<vmem>>, vector<2x128xf32>
    tpu.vector_store %arg5[%c0_12, %c0_13], %16 {strides = array<i32>} : memref<2x128xf32, #tpu.memory_space<vmem>>, vector<2x128xf32>,
    return
  }
}

module attributes {stable_mosaic.version = 11 : i64} {
  func.func @_conv_bn_lrelu_kernel(%arg0: memref<8x1024xbf16, #tpu.memory_space<vmem>>, %arg1: memref<1024x64xbf16, #tpu.memory_space<vmem>>, %arg2: memref<1x64xf32, #tpu.memory_space<vmem>>, %arg3: memref<1x64xf32, #tpu.memory_space<vmem>>, %arg4: memref<8x64xbf16, #tpu.memory_space<vmem>>) attributes {dimension_semantics = [], scalar_prefetch = 0 : i64, scratch_operands = 0 : i64, tpu.core_type = #tpu.core_type<tc>} {
    %c0 = arith.constant 0 : index
    %c0_0 = arith.constant 0 : index
    %0 = vector.load %arg0[%c0, %c0_0] : memref<8x1024xbf16, #tpu.memory_space<vmem>>, vector<8x1024xbf16>
    %c0_1 = arith.constant 0 : index
    %c0_2 = arith.constant 0 : index
    %1 = vector.load %arg1[%c0_1, %c0_2] : memref<1024x64xbf16, #tpu.memory_space<vmem>>, vector<1024x64xbf16>
    %cst = arith.constant dense<0.000000e+00> : vector<8x64xf32>
    %2 = tpu.matmul %0, %1, %cst {dimension_numbers = #tpu.dot_dimension_numbers<[1], [0], [0], [1], [0, 0, 1, 1], [], []>} : vector<8x1024xbf16>, vector<1024x64xbf16>, vector<8x64xf32> -> vector<8x64xf32>
    %cst_3 = arith.constant dense<0.000000e+00> : vector<64xf32>
    %3 = vector.multi_reduction <add>, %2, %cst_3 [0] : vector<8x64xf32> to vector<64xf32>
    %4 = vector.shape_cast %3 : vector<64xf32> to vector<1x64xf32>
    %cst_4 = arith.constant 5.000000e-01 : f32
    %5 = vector.broadcast %cst_4 : f32 to vector<1x64xf32>
    %6 = arith.mulf %4, %5 : vector<1x64xf32>
    %7 = arith.mulf %2, %2 : vector<8x64xf32>
    %cst_5 = arith.constant dense<0.000000e+00> : vector<64xf32>
    %8 = vector.multi_reduction <add>, %7, %cst_5 [0] : vector<8x64xf32> to vector<64xf32>
    %9 = vector.shape_cast %8 : vector<64xf32> to vector<1x64xf32>
    %cst_6 = arith.constant 5.000000e-01 : f32
    %10 = vector.broadcast %cst_6 : f32 to vector<1x64xf32>
    %11 = arith.mulf %9, %10 : vector<1x64xf32>
    %12 = arith.mulf %6, %6 : vector<1x64xf32>
    %13 = arith.subf %11, %12 : vector<1x64xf32>
    %cst_7 = arith.constant 0.000000e+00 : f32
    %14 = vector.broadcast %cst_7 : f32 to vector<1x64xf32>
    %15 = arith.maximumf %13, %14 : vector<1x64xf32>
    %cst_8 = arith.constant 9.99999974E-6 : f32
    %16 = vector.broadcast %cst_8 : f32 to vector<1x64xf32>
    %17 = arith.addf %15, %16 : vector<1x64xf32>
    %18 = math.rsqrt %17 : vector<1x64xf32>
    %c0_9 = arith.constant 0 : index
    %c0_10 = arith.constant 0 : index
    %19 = vector.load %arg2[%c0_9, %c0_10] : memref<1x64xf32, #tpu.memory_space<vmem>>, vector<1x64xf32>
    %20 = arith.mulf %19, %18 : vector<1x64xf32>
    %c0_11 = arith.constant 0 : index
    %c0_12 = arith.constant 0 : index
    %21 = vector.load %arg3[%c0_11, %c0_12] : memref<1x64xf32, #tpu.memory_space<vmem>>, vector<1x64xf32>
    %22 = arith.mulf %6, %20 : vector<1x64xf32>
    %23 = arith.subf %21, %22 : vector<1x64xf32>
    %24 = vector.broadcast %20 : vector<1x64xf32> to vector<8x64xf32>
    %25 = arith.mulf %2, %24 : vector<8x64xf32>
    %26 = vector.broadcast %23 : vector<1x64xf32> to vector<8x64xf32>
    %27 = arith.addf %25, %26 : vector<8x64xf32>
    %cst_13 = arith.constant 0.000000e+00 : f32
    %28 = vector.broadcast %cst_13 : f32 to vector<8x64xf32>
    %29 = arith.cmpf oge, %27, %28 : vector<8x64xf32>
    %cst_14 = arith.constant 2.000000e-01 : f32
    %30 = vector.broadcast %cst_14 : f32 to vector<8x64xf32>
    %31 = arith.mulf %30, %27 : vector<8x64xf32>
    %32 = arith.select %29, %27, %31 : vector<8x64xi1>, vector<8x64xf32>
    %33 = arith.truncf %32 : vector<8x64xf32> to vector<8x64xbf16>
    %c0_15 = arith.constant 0 : index
    %c0_16 = arith.constant 0 : index
    %34 = vector.load %arg4[%c0_15, %c0_16] : memref<8x64xbf16, #tpu.memory_space<vmem>>, vector<8x64xbf16>
    tpu.vector_store %arg4[%c0_15, %c0_16], %33 {strides = array<i32>} : memref<8x64xbf16, #tpu.memory_space<vmem>>, vector<8x64xbf16>,
    return
  }
}

</mosaic_0001>

<llo_original>
// kernel: vgg_discriminator.11
$region0: #{vgg_discriminator.11}
  #allocation0 [shape = 'u32[]', space=smem, size = 0x4, offset = 0x4, fixed_abs, tag = 'smem constant byte address 0x4 - core index']
  #allocation1 [shape = 'u32[144,128]{1,0:T(1,128)}', space=vmem, size = 0x12000, scoped, tag = 'internal scratch']
  %s0 = inlined_call_operand.vmem [shape: bf16[2048,128], index: 0, kind: input, shape index: {}]
  %s1 = inlined_call_operand.vmem [shape: bf16[128,8], index: 1, kind: input, shape index: {}]
  %s2 = inlined_call_operand.vmem [shape: f32[1,8], index: 2, kind: input, shape index: {}]
  %s3 = inlined_call_operand.vmem [shape: bf16[2048,8], index: 3, kind: output, shape index: {}]
  %s4 = sld [smem:[#allocation0]]
  $region22: #{vgg_discriminator.11} parent=0
    _
  %s6 = ssub.s32 1, %s4
  %s7 = scalar_select 0, %s6, %s4
  // Predicated region
  $region2: #{vgg_discriminator.11} parent=0 // pred_check
    _
  $region3: #{vgg_discriminator.11} parent=0 // pred_check_branch
    %9 = sbr.rel (0) target = $region5
  $region4: #{vgg_discriminator.11} parent=0 // pred_region
    _
  $region5: #{vgg_discriminator.11} parent=0 // pred_fallthru
    _
  // Predicated region
  $region6: #{vgg_discriminator.11} parent=0 // pred_check
    _
  $region7: #{vgg_discriminator.11} parent=0 // pred_check_branch
    %11 = sbr.rel (0) target = $region9
  $region8: #{vgg_discriminator.11} parent=0 // pred_region
    _
  $region9: #{vgg_discriminator.11} parent=0 // pred_fallthru
    _
  // Predicated region
  $region10: #{vgg_discriminator.11} parent=0 // pred_check
    _
  $region11: #{vgg_discriminator.11} parent=0 // pred_check_branch
    %13 = sbr.rel (0) target = $region13
  $region12: #{vgg_discriminator.11} parent=0 // pred_region
    _
  $region13: #{vgg_discriminator.11} parent=0 // pred_fallthru
    _
  %v15 = vld [vmem:[%s0] sm:$0xf]
  %v16 = vld [vmem:[%s0 + $0x4] sm:$0xf]
  %v17 = vld [vmem:[%s0 + $0x8] sm:$0xf]
  %v18 = vld [vmem:[%s0 + $0xc] sm:$0xf]
  %v19 = vld [vmem:[%s0 + $0x10] sm:$0xf]
  %v20 = vld [vmem:[%s0 + $0x14] sm:$0xf]
  %v21 = vld [vmem:[%s0 + $0x18] sm:$0xf]
  %v22 = vld [vmem:[%s0 + $0x1c] sm:$0xf]
  %v23 = vld [vmem:[%s0 + $0x20] sm:$0xf]
  %v24 = vld [vmem:[%s0 + $0x24] sm:$0xf]
  %v25 = vld [vmem:[%s0 + $0x28] sm:$0xf]
  %v26 = vld [vmem:[%s0 + $0x2c] sm:$0xf]
  %v27 = vld [vmem:[%s0 + $0x30] sm:$0xf]
  %v28 = vld [vmem:[%s0 + $0x34] sm:$0xf]
  %v29 = vld [vmem:[%s0 + $0x38] sm:$0xf]
  %v30 = vld [vmem:[%s0 + $0x3c] sm:$0xf]
  %v31 = vld [vmem:[%s0 + $0x40] sm:$0xf]
  %v32 = vld [vmem:[%s0 + $0x44] sm:$0xf]
  %v33 = vld [vmem:[%s0 + $0x48] sm:$0xf]
  %v34 = vld [vmem:[%s0 + $0x4c] sm:$0xf]
  %v35 = vld [vmem:[%s0 + $0x50] sm:$0xf]
  %v36 = vld [vmem:[%s0 + $0x54] sm:$0xf]
  %v37 = vld [vmem:[%s0 + $0x58] sm:$0xf]
  %v38 = vld [vmem:[%s0 + $0x5c] sm:$0xf]
  %v39 = vld [vmem:[%s0 + $0x60] sm:$0xf]
  %v40 = vld [vmem:[%s0 + $0x64] sm:$0xf]
  %v41 = vld [vmem:[%s0 + $0x68] sm:$0xf]
  %v42 = vld [vmem:[%s0 + $0x6c] sm:$0xf]
  %v43 = vld [vmem:[%s0 + $0x70] sm:$0xf]
  %v44 = vld [vmem:[%s0 + $0x74] sm:$0xf]
  %v45 = vld [vmem:[%s0 + $0x78] sm:$0xf]
  %v46 = vld [vmem:[%s0 + $0x7c] sm:$0xf]
  %v47 = vld [vmem:[%s0 + $0x80] sm:$0xf]
  %v48 = vld [vmem:[%s0 + $0x84] sm:$0xf]
  %v49 = vld [vmem:[%s0 + $0x88] sm:$0xf]
  %v50 = vld [vmem:[%s0 + $0x8c] sm:$0xf]
  %v51 = vld [vmem:[%s0 + $0x90] sm:$0xf]
  %v52 = vld [vmem:[%s0 + $0x94] sm:$0xf]
  %v53 = vld [vmem:[%s0 + $0x98] sm:$0xf]
  %v54 = vld [vmem:[%s0 + $0x9c] sm:$0xf]
  %v55 = vld [vmem:[%s0 + $0xa0] sm:$0xf]
  %v56 = vld [vmem:[%s0 + $0xa4] sm:$0xf]
  %v57 = vld [vmem:[%s0 + $0xa8] sm:$0xf]
  %v58 = vld [vmem:[%s0 + $0xac] sm:$0xf]
  %v59 = vld [vmem:[%s0 + $0xb0] sm:$0xf]
  %v60 = vld [vmem:[%s0 + $0xb4] sm:$0xf]
  %v61 = vld [vmem:[%s0 + $0xb8] sm:$0xf]
  %v62 = vld [vmem:[%s0 + $0xbc] sm:$0xf]
  %v63 = vld [vmem:[%s0 + $0xc0] sm:$0xf]
  %v64 = vld [vmem:[%s0 + $0xc4] sm:$0xf]
  %v65 = vld [vmem:[%s0 + $0xc8] sm:$0xf]
  %v66 = vld [vmem:[%s0 + $0xcc] sm:$0xf]
  %v67 = vld [vmem:[%s0 + $0xd0] sm:$0xf]
  %v68 = vld [vmem:[%s0 + $0xd4] sm:$0xf]
  %v69 = vld [vmem:[%s0 + $0xd8] sm:$0xf]
  %v70 = vld [vmem:[%s0 + $0xdc] sm:$0xf]
  %v71 = vld [vmem:[%s0 + $0xe0] sm:$0xf]
  %v72 = vld [vmem:[%s0 + $0xe4] sm:$0xf]
  %v73 = vld [vmem:[%s0 + $0xe8] sm:$0xf]
  %v74 = vld [vmem:[%s0 + $0xec] sm:$0xf]
  %v75 = vld [vmem:[%s0 + $0xf0] sm:$0xf]
  %v76 = vld [vmem:[%s0 + $0xf4] sm:$0xf]
  %v77 = vld [vmem:[%s0 + $0xf8] sm:$0xf]
  %v78 = vld [vmem:[%s0 + $0xfc] sm:$0xf]
  %v79 = vld [vmem:[%s0 + $0x100] sm:$0xf]
  %v80 = vld [vmem:[%s0 + $0x104] sm:$0xf]
  %v81 = vld [vmem:[%s0 + $0x108] sm:$0xf]
  %v82 = vld [vmem:[%s0 + $0x10c] sm:$0xf]
  %v83 = vld [vmem:[%s0 + $0x110] sm:$0xf]
  %v84 = vld [vmem:[%s0 + $0x114] sm:$0xf]
  %v85 = vld [vmem:[%s0 + $0x118] sm:$0xf]
  %v86 = vld [vmem:[%s0 + $0x11c] sm:$0xf]
  %v87 = vld [vmem:[%s0 + $0x120] sm:$0xf]
  %v88 = vld [vmem:[%s0 + $0x124] sm:$0xf]
  %v89 = vld [vmem:[%s0 + $0x128] sm:$0xf]
  %v90 = vld [vmem:[%s0 + $0x12c] sm:$0xf]
  %v91 = vld [vmem:[%s0 + $0x130] sm:$0xf]
  %v92 = vld [vmem:[%s0 + $0x134] sm:$0xf]
  %v93 = vld [vmem:[%s0 + $0x138] sm:$0xf]
  %v94 = vld [vmem:[%s0 + $0x13c] sm:$0xf]
  %v95 = vld [vmem:[%s0 + $0x140] sm:$0xf]
  %v96 = vld [vmem:[%s0 + $0x144] sm:$0xf]
  %v97 = vld [vmem:[%s0 + $0x148] sm:$0xf]
  %v98 = vld [vmem:[%s0 + $0x14c] sm:$0xf]
  %v99 = vld [vmem:[%s0 + $0x150] sm:$0xf]
  %v100 = vld [vmem:[%s0 + $0x154] sm:$0xf]
  %v101 = vld [vmem:[%s0 + $0x158] sm:$0xf]
  %v102 = vld [vmem:[%s0 + $0x15c] sm:$0xf]
  %v103 = vld [vmem:[%s0 + $0x160] sm:$0xf]
  %v104 = vld [vmem:[%s0 + $0x164] sm:$0xf]
  %v105 = vld [vmem:[%s0 + $0x168] sm:$0xf]
  %v106 = vld [vmem:[%s0 + $0x16c] sm:$0xf]
  %v107 = vld [vmem:[%s0 + $0x170] sm:$0xf]
  %v108 = vld [vmem:[%s0 + $0x174] sm:$0xf]
  %v109 = vld [vmem:[%s0 + $0x178] sm:$0xf]
  %v110 = vld [vmem:[%s0 + $0x17c] sm:$0xf]
  %v111 = vld [vmem:[%s0 + $0x180] sm:$0xf]
  %v112 = vld [vmem:[%s0 + $0x184] sm:$0xf]
  %v113 = vld [vmem:[%s0 + $0x188] sm:$0xf]
  %v114 = vld [vmem:[%s0 + $0x18c] sm:$0xf]
  %v115 = vld [vmem:[%s0 + $0x190] sm:$0xf]
  %v116 = vld [vmem:[%s0 + $0x194] sm:$0xf]
  %v117 = vld [vmem:[%s0 + $0x198] sm:$0xf]
  %v118 = vld [vmem:[%s0 + $0x19c] sm:$0xf]
  %v119 = vld [vmem:[%s0 + $0x1a0] sm:$0xf]
  %v120 = vld [vmem:[%s0 + $0x1a4] sm:$0xf]
  %v121 = vld [vmem:[%s0 + $0x1a8] sm:$0xf]
  %v122 = vld [vmem:[%s0 + $0x1ac] sm:$0xf]
  %v123 = vld [vmem:[%s0 + $0x1b0] sm:$0xf]
  %v124 = vld [vmem:[%s0 + $0x1b4] sm:$0xf]
  %v125 = vld [vmem:[%s0 + $0x1b8] sm:$0xf]
  %v126 = vld [vmem:[%s0 + $0x1bc] sm:$0xf]
  %v127 = vld [vmem:[%s0 + $0x1c0] sm:$0xf]
  %v128 = vld [vmem:[%s0 + $0x1c4] sm:$0xf]
  %v129 = vld [vmem:[%s0 + $0x1c8] sm:$0xf]
  %v130 = vld [vmem:[%s0 + $0x1cc] sm:$0xf]
  %v131 = vld [vmem:[%s0 + $0x1d0] sm:$0xf]
  %v132 = vld [vmem:[%s0 + $0x1d4] sm:$0xf]
  %v133 = vld [vmem:[%s0 + $0x1d8] sm:$0xf]
  %v134 = vld [vmem:[%s0 + $0x1dc] sm:$0xf]
  %v135 = vld [vmem:[%s0 + $0x1e0] sm:$0xf]
  %v136 = vld [vmem:[%s0 + $0x1e4] sm:$0xf]
  %v137 = vld [vmem:[%s0 + $0x1e8] sm:$0xf]
  %v138 = vld [vmem:[%s0 + $0x1ec] sm:$0xf]
  %v139 = vld [vmem:[%s0 + $0x1f0] sm:$0xf]
  %v140 = vld [vmem:[%s0 + $0x1f4] sm:$0xf]
  %v141 = vld [vmem:[%s0 + $0x1f8] sm:$0xf]
  %v142 = vld [vmem:[%s0 + $0x1fc] sm:$0xf]
  %v143 = vld [vmem:[%s0 + $0x200] sm:$0xf]
  %v144 = vld [vmem:[%s0 + $0x204] sm:$0xf]
  %v145 = vld [vmem:[%s0 + $0x208] sm:$0xf]
  %v146 = vld [vmem:[%s0 + $0x20c] sm:$0xf]
  %v147 = vld [vmem:[%s0 + $0x210] sm:$0xf]
  %v148 = vld [vmem:[%s0 + $0x214] sm:$0xf]
  %v149 = vld [vmem:[%s0 + $0x218] sm:$0xf]
  %v150 = vld [vmem:[%s0 + $0x21c] sm:$0xf]
  %v151 = vld [vmem:[%s0 + $0x220] sm:$0xf]
  %v152 = vld [vmem:[%s0 + $0x224] sm:$0xf]
  %v153 = vld [vmem:[%s0 + $0x228] sm:$0xf]
  %v154 = vld [vmem:[%s0 + $0x22c] sm:$0xf]
  %v155 = vld [vmem:[%s0 + $0x230] sm:$0xf]
  %v156 = vld [vmem:[%s0 + $0x234] sm:$0xf]
  %v157 = vld [vmem:[%s0 + $0x238] sm:$0xf]
  %v158 = vld [vmem:[%s0 + $0x23c] sm:$0xf]
  %v159 = vld [vmem:[%s0 + $0x240] sm:$0xf]
  %v160 = vld [vmem:[%s0 + $0x244] sm:$0xf]
  %v161 = vld [vmem:[%s0 + $0x248] sm:$0xf]
  %v162 = vld [vmem:[%s0 + $0x24c] sm:$0xf]
  %v163 = vld [vmem:[%s0 + $0x250] sm:$0xf]
  %v164 = vld [vmem:[%s0 + $0x254] sm:$0xf]
  %v165 = vld [vmem:[%s0 + $0x258] sm:$0xf]
  %v166 = vld [vmem:[%s0 + $0x25c] sm:$0xf]
  %v167 = vld [vmem:[%s0 + $0x260] sm:$0xf]
  %v168 = vld [vmem:[%s0 + $0x264] sm:$0xf]
  %v169 = vld [vmem:[%s0 + $0x268] sm:$0xf]
  %v170 = vld [vmem:[%s0 + $0x26c] sm:$0xf]
  %v171 = vld [vmem:[%s0 + $0x270] sm:$0xf]
  %v172 = vld [vmem:[%s0 + $0x274] sm:$0xf]
  %v173 = vld [vmem:[%s0 + $0x278] sm:$0xf]
  %v174 = vld [vmem:[%s0 + $0x27c] sm:$0xf]
  %v175 = vld [vmem:[%s0 + $0x280] sm:$0xf]
  %v176 = vld [vmem:[%s0 + $0x284] sm:$0xf]
  %v177 = vld [vmem:[%s0 + $0x288] sm:$0xf]
  %v178 = vld [vmem:[%s0 + $0x28c] sm:$0xf]
  %v179 = vld [vmem:[%s0 + $0x290] sm:$0xf]
  %v180 = vld [vmem:[%s0 + $0x294] sm:$0xf]
  %v181 = vld [vmem:[%s0 + $0x298] sm:$0xf]
  %v182 = vld [vmem:[%s0 + $0x29c] sm:$0xf]
  %v183 = vld [vmem:[%s0 + $0x2a0] sm:$0xf]
  %v184 = vld [vmem:[%s0 + $0x2a4] sm:$0xf]
  %v185 = vld [vmem:[%s0 + $0x2a8] sm:$0xf]
  %v186 = vld [vmem:[%s0 + $0x2ac] sm:$0xf]
  %v187 = vld [vmem:[%s0 + $0x2b0] sm:$0xf]
  %v188 = vld [vmem:[%s0 + $0x2b4] sm:$0xf]
  %v189 = vld [vmem:[%s0 + $0x2b8] sm:$0xf]
  %v190 = vld [vmem:[%s0 + $0x2bc] sm:$0xf]
  %v191 = vld [vmem:[%s0 + $0x2c0] sm:$0xf]
  %v192 = vld [vmem:[%s0 + $0x2c4] sm:$0xf]
  %v193 = vld [vmem:[%s0 + $0x2c8] sm:$0xf]
  %v194 = vld [vmem:[%s0 + $0x2cc] sm:$0xf]
  %v195 = vld [vmem:[%s0 + $0x2d0] sm:$0xf]
  %v196 = vld [vmem:[%s0 + $0x2d4] sm:$0xf]
  %v197 = vld [vmem:[%s0 + $0x2d8] sm:$0xf]
  %v198 = vld [vmem:[%s0 + $0x2dc] sm:$0xf]
  %v199 = vld [vmem:[%s0 + $0x2e0] sm:$0xf]
  %v200 = vld [vmem:[%s0 + $0x2e4] sm:$0xf]
  %v201 = vld [vmem:[%s0 + $0x2e8] sm:$0xf]
  %v202 = vld [vmem:[%s0 + $0x2ec] sm:$0xf]
  %v203 = vld [vmem:[%s0 + $0x2f0] sm:$0xf]
  %v204 = vld [vmem:[%s0 + $0x2f4] sm:$0xf]
  %v205 = vld [vmem:[%s0 + $0x2f8] sm:$0xf]
  %v206 = vld [vmem:[%s0 + $0x2fc] sm:$0xf]
  %v207 = vld [vmem:[%s0 + $0x300] sm:$0xf]
  %v208 = vld [vmem:[%s0 + $0x304] sm:$0xf]
  %v209 = vld [vmem:[%s0 + $0x308] sm:$0xf]
  %v210 = vld [vmem:[%s0 + $0x30c] sm:$0xf]
  %v211 = vld [vmem:[%s0 + $0x310] sm:$0xf]
  %v212 = vld [vmem:[%s0 + $0x314] sm:$0xf]
  %v213 = vld [vmem:[%s0 + $0x318] sm:$0xf]
  %v214 = vld [vmem:[%s0 + $0x31c] sm:$0xf]
  %v215 = vld [vmem:[%s0 + $0x320] sm:$0xf]
  %v216 = vld [vmem:[%s0 + $0x324] sm:$0xf]
  %v217 = vld [vmem:[%s0 + $0x328] sm:$0xf]
  %v218 = vld [vmem:[%s0 + $0x32c] sm:$0xf]
  %v219 = vld [vmem:[%s0 + $0x330] sm:$0xf]
  %v220 = vld [vmem:[%s0 + $0x334] sm:$0xf]
  %v221 = vld [vmem:[%s0 + $0x338] sm:$0xf]
  %v222 = vld [vmem:[%s0 + $0x33c] sm:$0xf]
  %v223 = vld [vmem:[%s0 + $0x340] sm:$0xf]
  %v224 = vld [vmem:[%s0 + $0x344] sm:$0xf]
  %v225 = vld [vmem:[%s0 + $0x348] sm:$0xf]
  %v226 = vld [vmem:[%s0 + $0x34c] sm:$0xf]
  %v227 = vld [vmem:[%s0 + $0x350] sm:$0xf]
  %v228 = vld [vmem:[%s0 + $0x354] sm:$0xf]
  %v229 = vld [vmem:[%s0 + $0x358] sm:$0xf]
  %v230 = vld [vmem:[%s0 + $0x35c] sm:$0xf]
  %v231 = vld [vmem:[%s0 + $0x360] sm:$0xf]
  %v232 = vld [vmem:[%s0 + $0x364] sm:$0xf]
  %v233 = vld [vmem:[%s0 + $0x368] sm:$0xf]
  %v234 = vld [vmem:[%s0 + $0x36c] sm:$0xf]
  %v235 = vld [vmem:[%s0 + $0x370] sm:$0xf]
  %v236 = vld [vmem:[%s0 + $0x374] sm:$0xf]
  %v237 = vld [vmem:[%s0 + $0x378] sm:$0xf]
  %v238 = vld [vmem:[%s0 + $0x37c] sm:$0xf]
  %v239 = vld [vmem:[%s0 + $0x380] sm:$0xf]
  %v240 = vld [vmem:[%s0 + $0x384] sm:$0xf]
  %v241 = vld [vmem:[%s0 + $0x388] sm:$0xf]
  %v242 = vld [vmem:[%s0 + $0x38c] sm:$0xf]
  %v243 = vld [vmem:[%s0 + $0x390] sm:$0xf]
  %v244 = vld [vmem:[%s0 + $0x394] sm:$0xf]
  %v245 = vld [vmem:[%s0 + $0x398] sm:$0xf]
  %v246 = vld [vmem:[%s0 + $0x39c] sm:$0xf]
  %v247 = vld [vmem:[%s0 + $0x3a0] sm:$0xf]
  %v248 = vld [vmem:[%s0 + $0x3a4] sm:$0xf]
  %v249 = vld [vmem:[%s0 + $0x3a8] sm:$0xf]
  %v250 = vld [vmem:[%s0 + $0x3ac] sm:$0xf]
  %v251 = vld [vmem:[%s0 + $0x3b0] sm:$0xf]
  %v252 = vld [vmem:[%s0 + $0x3b4] sm:$0xf]
  %v253 = vld [vmem:[%s0 + $0x3b8] sm:$0xf]
  %v254 = vld [vmem:[%s0 + $0x3bc] sm:$0xf]
  %v255 = vld [vmem:[%s0 + $0x3c0] sm:$0xf]
  %v256 = vld [vmem:[%s0 + $0x3c4] sm:$0xf]
  %v257 = vld [vmem:[%s0 + $0x3c8] sm:$0xf]
  %v258 = vld [vmem:[%s0 + $0x3cc] sm:$0xf]
  %v259 = vld [vmem:[%s0 + $0x3d0] sm:$0xf]
  %v260 = vld [vmem:[%s0 + $0x3d4] sm:$0xf]
  %v261 = vld [vmem:[%s0 + $0x3d8] sm:$0xf]
  %v262 = vld [vmem:[%s0 + $0x3dc] sm:$0xf]
  %v263 = vld [vmem:[%s0 + $0x3e0] sm:$0xf]
  %v264 = vld [vmem:[%s0 + $0x3e4] sm:$0xf]
  %v265 = vld [vmem:[%s0 + $0x3e8] sm:$0xf]
  %v266 = vld [vmem:[%s0 + $0x3ec] sm:$0xf]
  %v267 = vld [vmem:[%s0 + $0x3f0] sm:$0xf]
  %v268 = vld [vmem:[%s0 + $0x3f4] sm:$0xf]
  %v269 = vld [vmem:[%s0 + $0x3f8] sm:$0xf]
  %v270 = vld [vmem:[%s0 + $0x3fc] sm:$0xf]
  %v271 = vld [vmem:[%s1] sm:$0xf]
  %v272 = vld [vmem:[%s1 + $0x4] sm:$0xf]
  %v273 = vld [vmem:[%s1 + $0x8] sm:$0xf]
  %v274 = vld [vmem:[%s1 + $0xc] sm:$0xf]
  %v275 = vld [vmem:[%s1 + $0x10] sm:$0xf]
  %v276 = vld [vmem:[%s1 + $0x14] sm:$0xf]
  %v277 = vld [vmem:[%s1 + $0x18] sm:$0xf]
  %v278 = vld [vmem:[%s1 + $0x1c] sm:$0xf]
  %v279 = vld [vmem:[%s1 + $0x20] sm:$0xf]
  %v280 = vld [vmem:[%s1 + $0x24] sm:$0xf]
  %v281 = vld [vmem:[%s1 + $0x28] sm:$0xf]
  %v282 = vld [vmem:[%s1 + $0x2c] sm:$0xf]
  %v283 = vld [vmem:[%s1 + $0x30] sm:$0xf]
  %v284 = vld [vmem:[%s1 + $0x34] sm:$0xf]
  %v285 = vld [vmem:[%s1 + $0x38] sm:$0xf]
  %v286 = vld [vmem:[%s1 + $0x3c] sm:$0xf]
  %v287 = vld [vmem:[%s2] sm:$0x1]
  %v289 = vlaneseq
  %v290 = vshrl.u32 %v289, 7
  %v291 = vsub.s32 0, %v290
  %v292 = vrot.slane %v287, %v291
  %v550 = vunpack.c.l.b16 %v15
  %v551 = vunpack.c.l.b16 %v16
  %v552 = vunpack.c.l.b16 %v17
  %v553 = vunpack.c.l.b16 %v18
  %v554 = vunpack.c.l.b16 %v19
  %v555 = vunpack.c.l.b16 %v20
  %v556 = vunpack.c.l.b16 %v21
  %v557 = vunpack.c.l.b16 %v22
  %v558 = vunpack.c.l.b16 %v23
  %v559 = vunpack.c.l.b16 %v24
  %v560 = vunpack.c.l.b16 %v25
  %v561 = vunpack.c.l.b16 %v26
  %v562 = vunpack.c.l.b16 %v27
  %v563 = vunpack.c.l.b16 %v28
  %v564 = vunpack.c.l.b16 %v29
  %v565 = vunpack.c.l.b16 %v30
  %v566 = vunpack.c.l.b16 %v31
  %v567 = vunpack.c.l.b16 %v32
  %v568 = vunpack.c.l.b16 %v33
  %v569 = vunpack.c.l.b16 %v34
  %v570 = vunpack.c.l.b16 %v35
  %v571 = vunpack.c.l.b16 %v36
  %v572 = vunpack.c.l.b16 %v37
  %v573 = vunpack.c.l.b16 %v38
  %v574 = vunpack.c.l.b16 %v39
  %v575 = vunpack.c.l.b16 %v40
  %v576 = vunpack.c.l.b16 %v41
  %v577 = vunpack.c.l.b16 %v42
  %v578 = vunpack.c.l.b16 %v43
  %v579 = vunpack.c.l.b16 %v44
  %v580 = vunpack.c.l.b16 %v45
  %v581 = vunpack.c.l.b16 %v46
  %v582 = vunpack.c.l.b16 %v47
  %v583 = vunpack.c.l.b16 %v48
  %v584 = vunpack.c.l.b16 %v49
  %v585 = vunpack.c.l.b16 %v50
  %v586 = vunpack.c.l.b16 %v51
  %v587 = vunpack.c.l.b16 %v52
  %v588 = vunpack.c.l.b16 %v53
  %v589 = vunpack.c.l.b16 %v54
  %v590 = vunpack.c.l.b16 %v55
  %v591 = vunpack.c.l.b16 %v56
  %v592 = vunpack.c.l.b16 %v57
  %v593 = vunpack.c.l.b16 %v58
  %v594 = vunpack.c.l.b16 %v59
  %v595 = vunpack.c.l.b16 %v60
  %v596 = vunpack.c.l.b16 %v61
  %v597 = vunpack.c.l.b16 %v62
  %v598 = vunpack.c.l.b16 %v63
  %v599 = vunpack.c.l.b16 %v64
  %v600 = vunpack.c.l.b16 %v65
  %v601 = vunpack.c.l.b16 %v66
  %v602 = vunpack.c.l.b16 %v67
  %v603 = vunpack.c.l.b16 %v68
  %v604 = vunpack.c.l.b16 %v69
  %v605 = vunpack.c.l.b16 %v70
  %v606 = vunpack.c.l.b16 %v71
  %v607 = vunpack.c.l.b16 %v72
  %v608 = vunpack.c.l.b16 %v73
  %v609 = vunpack.c.l.b16 %v74
  %v610 = vunpack.c.l.b16 %v75
  %v611 = vunpack.c.l.b16 %v76
  %v612 = vunpack.c.l.b16 %v77
  %v613 = vunpack.c.l.b16 %v78
  %v614 = vunpack.c.l.b16 %v79
  %v615 = vunpack.c.l.b16 %v80
  %v616 = vunpack.c.l.b16 %v81
  %v617 = vunpack.c.l.b16 %v82
  %v618 = vunpack.c.l.b16 %v83
  %v619 = vunpack.c.l.b16 %v84
  %v620 = vunpack.c.l.b16 %v85
  %v621 = vunpack.c.l.b16 %v86
  %v622 = vunpack.c.l.b16 %v87
  %v623 = vunpack.c.l.b16 %v88
  %v624 = vunpack.c.l.b16 %v89
  %v625 = vunpack.c.l.b16 %v90
  %v626 = vunpack.c.l.b16 %v91
  %v627 = vunpack.c.l.b16 %v92
  %v628 = vunpack.c.l.b16 %v93
  %v629 = vunpack.c.l.b16 %v94
  %v630 = vunpack.c.l.b16 %v95
  %v631 = vunpack.c.l.b16 %v96
  %v632 = vunpack.c.l.b16 %v97
  %v633 = vunpack.c.l.b16 %v98
  %v634 = vunpack.c.l.b16 %v99
  %v635 = vunpack.c.l.b16 %v100
  %v636 = vunpack.c.l.b16 %v101
  %v637 = vunpack.c.l.b16 %v102
  %v638 = vunpack.c.l.b16 %v103
  %v639 = vunpack.c.l.b16 %v104
  %v640 = vunpack.c.l.b16 %v105
  %v641 = vunpack.c.l.b16 %v106
  %v642 = vunpack.c.l.b16 %v107
  %v643 = vunpack.c.l.b16 %v108
  %v644 = vunpack.c.l.b16 %v109
  %v645 = vunpack.c.l.b16 %v110
  %v646 = vunpack.c.l.b16 %v111
  %v647 = vunpack.c.l.b16 %v112
  %v648 = vunpack.c.l.b16 %v113
  %v649 = vunpack.c.l.b16 %v114
  %v650 = vunpack.c.l.b16 %v115
  %v651 = vunpack.c.l.b16 %v116
  %v652 = vunpack.c.l.b16 %v117
  %v653 = vunpack.c.l.b16 %v118
  %v654 = vunpack.c.l.b16 %v119
  %v655 = vunpack.c.l.b16 %v120
  %v656 = vunpack.c.l.b16 %v121
  %v657 = vunpack.c.l.b16 %v122
  %v658 = vunpack.c.l.b16 %v123
  %v659 = vunpack.c.l.b16 %v124
  %v660 = vunpack.c.l.b16 %v125
  %v661 = vunpack.c.l.b16 %v126
  %v662 = vunpack.c.l.b16 %v127
  %v663 = vunpack.c.l.b16 %v128
  %v664 = vunpack.c.l.b16 %v129
  %v665 = vunpack.c.l.b16 %v130
  %v666 = vunpack.c.l.b16 %v131
  %v667 = vunpack.c.l.b16 %v132
  %v668 = vunpack.c.l.b16 %v133
  %v669 = vunpack.c.l.b16 %v134
  %v670 = vunpack.c.l.b16 %v135
  %v671 = vunpack.c.l.b16 %v136
  %v672 = vunpack.c.l.b16 %v137
  %v673 = vunpack.c.l.b16 %v138
  %v674 = vunpack.c.l.b16 %v139
  %v675 = vunpack.c.l.b16 %v140
  %v676 = vunpack.c.l.b16 %v141
  %v677 = vunpack.c.l.b16 %v142
  %v678 = vunpack.c.l.b16 %v143
  %v679 = vunpack.c.l.b16 %v144
  %v680 = vunpack.c.l.b16 %v145
  %v681 = vunpack.c.l.b16 %v146
  %v682 = vunpack.c.l.b16 %v147
  %v683 = vunpack.c.l.b16 %v148
  %v684 = vunpack.c.l.b16 %v149
  %v685 = vunpack.c.l.b16 %v150
  %v686 = vunpack.c.l.b16 %v151
  %v687 = vunpack.c.l.b16 %v152
  %v688 = vunpack.c.l.b16 %v153
  %v689 = vunpack.c.l.b16 %v154
  %v690 = vunpack.c.l.b16 %v155
  %v691 = vunpack.c.l.b16 %v156
  %v692 = vunpack.c.l.b16 %v157
  %v693 = vunpack.c.l.b16 %v158
  %v694 = vunpack.c.l.b16 %v159
  %v695 = vunpack.c.l.b16 %v160
  %v696 = vunpack.c.l.b16 %v161
  %v697 = vunpack.c.l.b16 %v162
  %v698 = vunpack.c.l.b16 %v163
  %v699 = vunpack.c.l.b16 %v164
  %v700 = vunpack.c.l.b16 %v165
  %v701 = vunpack.c.l.b16 %v166
  %v702 = vunpack.c.l.b16 %v167
  %v703 = vunpack.c.l.b16 %v168
  %v704 = vunpack.c.l.b16 %v169
  %v705 = vunpack.c.l.b16 %v170
  %v706 = vunpack.c.l.b16 %v171
  %v707 = vunpack.c.l.b16 %v172
  %v708 = vunpack.c.l.b16 %v173
  %v709 = vunpack.c.l.b16 %v174
  %v710 = vunpack.c.l.b16 %v175
  %v711 = vunpack.c.l.b16 %v176
  %v712 = vunpack.c.l.b16 %v177
  %v713 = vunpack.c.l.b16 %v178
  %v714 = vunpack.c.l.b16 %v179
  %v715 = vunpack.c.l.b16 %v180
  %v716 = vunpack.c.l.b16 %v181
  %v717 = vunpack.c.l.b16 %v182
  %v718 = vunpack.c.l.b16 %v183
  %v719 = vunpack.c.l.b16 %v184
  %v720 = vunpack.c.l.b16 %v185
  %v721 = vunpack.c.l.b16 %v186
  %v722 = vunpack.c.l.b16 %v187
  %v723 = vunpack.c.l.b16 %v188
  %v724 = vunpack.c.l.b16 %v189
  %v725 = vunpack.c.l.b16 %v190
  %v726 = vunpack.c.l.b16 %v191
  %v727 = vunpack.c.l.b16 %v192
  %v728 = vunpack.c.l.b16 %v193
  %v729 = vunpack.c.l.b16 %v194
  %v730 = vunpack.c.l.b16 %v195
  %v731 = vunpack.c.l.b16 %v196
  %v732 = vunpack.c.l.b16 %v197
  %v733 = vunpack.c.l.b16 %v198
  %v734 = vunpack.c.l.b16 %v199
  %v735 = vunpack.c.l.b16 %v200
  %v736 = vunpack.c.l.b16 %v201
  %v737 = vunpack.c.l.b16 %v202
  %v738 = vunpack.c.l.b16 %v203
  %v739 = vunpack.c.l.b16 %v204
  %v740 = vunpack.c.l.b16 %v205
  %v741 = vunpack.c.l.b16 %v206
  %v742 = vunpack.c.l.b16 %v207
  %v743 = vunpack.c.l.b16 %v208
  %v744 = vunpack.c.l.b16 %v209
  %v745 = vunpack.c.l.b16 %v210
  %v746 = vunpack.c.l.b16 %v211
  %v747 = vunpack.c.l.b16 %v212
  %v748 = vunpack.c.l.b16 %v213
  %v749 = vunpack.c.l.b16 %v214
  %v750 = vunpack.c.l.b16 %v215
  %v751 = vunpack.c.l.b16 %v216
  %v752 = vunpack.c.l.b16 %v217
  %v753 = vunpack.c.l.b16 %v218
  %v754 = vunpack.c.l.b16 %v219
  %v755 = vunpack.c.l.b16 %v220
  %v756 = vunpack.c.l.b16 %v221
  %v757 = vunpack.c.l.b16 %v222
  %v758 = vunpack.c.l.b16 %v223
  %v759 = vunpack.c.l.b16 %v224
  %v760 = vunpack.c.l.b16 %v225
  %v761 = vunpack.c.l.b16 %v226
  %v762 = vunpack.c.l.b16 %v227
  %v763 = vunpack.c.l.b16 %v228
  %v764 = vunpack.c.l.b16 %v229
  %v765 = vunpack.c.l.b16 %v230
  %v766 = vunpack.c.l.b16 %v231
  %v767 = vunpack.c.l.b16 %v232
  %v768 = vunpack.c.l.b16 %v233
  %v769 = vunpack.c.l.b16 %v234
  %v770 = vunpack.c.l.b16 %v235
  %v771 = vunpack.c.l.b16 %v236
  %v772 = vunpack.c.l.b16 %v237
  %v773 = vunpack.c.l.b16 %v238
  %v774 = vunpack.c.l.b16 %v239
  %v775 = vunpack.c.l.b16 %v240
  %v776 = vunpack.c.l.b16 %v241
  %v777 = vunpack.c.l.b16 %v242
  %v778 = vunpack.c.l.b16 %v243
  %v779 = vunpack.c.l.b16 %v244
  %v780 = vunpack.c.l.b16 %v245
  %v781 = vunpack.c.l.b16 %v246
  %v782 = vunpack.c.l.b16 %v247
  %v783 = vunpack.c.l.b16 %v248
  %v784 = vunpack.c.l.b16 %v249
  %v785 = vunpack.c.l.b16 %v250
  %v786 = vunpack.c.l.b16 %v251
  %v787 = vunpack.c.l.b16 %v252
  %v788 = vunpack.c.l.b16 %v253
  %v789 = vunpack.c.l.b16 %v254
  %v790 = vunpack.c.l.b16 %v255
  %v791 = vunpack.c.l.b16 %v256
  %v792 = vunpack.c.l.b16 %v257
  %v793 = vunpack.c.l.b16 %v258
  %v794 = vunpack.c.l.b16 %v259
  %v795 = vunpack.c.l.b16 %v260
  %v796 = vunpack.c.l.b16 %v261
  %v797 = vunpack.c.l.b16 %v262
  %v798 = vunpack.c.l.b16 %v263
  %v799 = vunpack.c.l.b16 %v264
  %v800 = vunpack.c.l.b16 %v265
  %v801 = vunpack.c.l.b16 %v266
  %v802 = vunpack.c.l.b16 %v267
  %v803 = vunpack.c.l.b16 %v268
  %v804 = vunpack.c.l.b16 %v269
  %v805 = vunpack.c.l.b16 %v270
  %v806 = vpack.c.b16 %v551, %v550
  %v807 = vpack.c.b16 %v553, %v552
  %v808 = vpack.c.b16 %v555, %v554
  %v809 = vpack.c.b16 %v557, %v556
  %v810 = vpack.c.b16 %v559, %v558
  %v811 = vpack.c.b16 %v561, %v560
  %v812 = vpack.c.b16 %v563, %v562
  %v813 = vpack.c.b16 %v565, %v564
  %v814 = vpack.c.b16 %v567, %v566
  %v815 = vpack.c.b16 %v569, %v568
  %v816 = vpack.c.b16 %v571, %v570
  %v817 = vpack.c.b16 %v573, %v572
  %v818 = vpack.c.b16 %v575, %v574
  %v819 = vpack.c.b16 %v577, %v576
  %v820 = vpack.c.b16 %v579, %v578
  %v821 = vpack.c.b16 %v581, %v580
  %v822 = vpack.c.b16 %v583, %v582
  %v823 = vpack.c.b16 %v585, %v584
  %v824 = vpack.c.b16 %v587, %v586
  %v825 = vpack.c.b16 %v589, %v588
  %v826 = vpack.c.b16 %v591, %v590
  %v827 = vpack.c.b16 %v593, %v592
  %v828 = vpack.c.b16 %v595, %v594
  %v829 = vpack.c.b16 %v597, %v596
  %v830 = vpack.c.b16 %v599, %v598
  %v831 = vpack.c.b16 %v601, %v600
  %v832 = vpack.c.b16 %v603, %v602
  %v833 = vpack.c.b16 %v605, %v604
  %v834 = vpack.c.b16 %v607, %v606
  %v835 = vpack.c.b16 %v609, %v608
  %v836 = vpack.c.b16 %v611, %v610
  %v837 = vpack.c.b16 %v613, %v612
  %v838 = vpack.c.b16 %v615, %v614
  %v839 = vpack.c.b16 %v617, %v616
  %v840 = vpack.c.b16 %v619, %v618
  %v841 = vpack.c.b16 %v621, %v620
  %v842 = vpack.c.b16 %v623, %v622
  %v843 = vpack.c.b16 %v625, %v624
  %v844 = vpack.c.b16 %v627, %v626
  %v845 = vpack.c.b16 %v629, %v628
  %v846 = vpack.c.b16 %v631, %v630
  %v847 = vpack.c.b16 %v633, %v632
  %v848 = vpack.c.b16 %v635, %v634
  %v849 = vpack.c.b16 %v637, %v636
  %v850 = vpack.c.b16 %v639, %v638
  %v851 = vpack.c.b16 %v641, %v640
  %v852 = vpack.c.b16 %v643, %v642
  %v853 = vpack.c.b16 %v645, %v644
  %v854 = vpack.c.b16 %v647, %v646
  %v855 = vpack.c.b16 %v649, %v648
  %v856 = vpack.c.b16 %v651, %v650
  %v857 = vpack.c.b16 %v653, %v652
  %v858 = vpack.c.b16 %v655, %v654
  %v859 = vpack.c.b16 %v657, %v656
  %v860 = vpack.c.b16 %v659, %v658
  %v861 = vpack.c.b16 %v661, %v660
  %v862 = vpack.c.b16 %v663, %v662
  %v863 = vpack.c.b16 %v665, %v664
  %v864 = vpack.c.b16 %v667, %v666
  %v865 = vpack.c.b16 %v669, %v668
  %v866 = vpack.c.b16 %v671, %v670
  %v867 = vpack.c.b16 %v673, %v672
  %v868 = vpack.c.b16 %v675, %v674
  %v869 = vpack.c.b16 %v677, %v676
  %v870 = vpack.c.b16 %v679, %v678
  %v871 = vpack.c.b16 %v681, %v680
  %v872 = vpack.c.b16 %v683, %v682
  %v873 = vpack.c.b16 %v685, %v684
  %v874 = vpack.c.b16 %v687, %v686
  %v875 = vpack.c.b16 %v689, %v688
  %v876 = vpack.c.b16 %v691, %v690
  %v877 = vpack.c.b16 %v693, %v692
  %v878 = vpack.c.b16 %v695, %v694
  %v879 = vpack.c.b16 %v697, %v696
  %v880 = vpack.c.b16 %v699, %v698
  %v881 = vpack.c.b16 %v701, %v700
  %v882 = vpack.c.b16 %v703, %v702
  %v883 = vpack.c.b16 %v705, %v704
  %v884 = vpack.c.b16 %v707, %v706
  %v885 = vpack.c.b16 %v709, %v708
  %v886 = vpack.c.b16 %v711, %v710
  %v887 = vpack.c.b16 %v713, %v712
  %v888 = vpack.c.b16 %v715, %v714
  %v889 = vpack.c.b16 %v717, %v716
  %v890 = vpack.c.b16 %v719, %v718
  %v891 = vpack.c.b16 %v721, %v720
  %v892 = vpack.c.b16 %v723, %v722
  %v893 = vpack.c.b16 %v725, %v724
  %v894 = vpack.c.b16 %v727, %v726
  %v895 = vpack.c.b16 %v729, %v728
  %v896 = vpack.c.b16 %v731, %v730
  %v897 = vpack.c.b16 %v733, %v732
  %v898 = vpack.c.b16 %v735, %v734
  %v899 = vpack.c.b16 %v737, %v736
  %v900 = vpack.c.b16 %v739, %v738
  %v901 = vpack.c.b16 %v741, %v740
  %v902 = vpack.c.b16 %v743, %v742
  %v903 = vpack.c.b16 %v745, %v744
  %v904 = vpack.c.b16 %v747, %v746
  %v905 = vpack.c.b16 %v749, %v748
  %v906 = vpack.c.b16 %v751, %v750
  %v907 = vpack.c.b16 %v753, %v752
  %v908 = vpack.c.b16 %v755, %v754
  %v909 = vpack.c.b16 %v757, %v756
  %v910 = vpack.c.b16 %v759, %v758
  %v911 = vpack.c.b16 %v761, %v760
  %v912 = vpack.c.b16 %v763, %v762
  %v913 = vpack.c.b16 %v765, %v764
  %v914 = vpack.c.b16 %v767, %v766
  %v915 = vpack.c.b16 %v769, %v768
  %v916 = vpack.c.b16 %v771, %v770
  %v917 = vpack.c.b16 %v773, %v772
  %v918 = vpack.c.b16 %v775, %v774
  %v919 = vpack.c.b16 %v777, %v776
  %v920 = vpack.c.b16 %v779, %v778
  %v921 = vpack.c.b16 %v781, %v780
  %v922 = vpack.c.b16 %v783, %v782
  %v923 = vpack.c.b16 %v785, %v784
  %v924 = vpack.c.b16 %v787, %v786
  %v925 = vpack.c.b16 %v789, %v788
  %v926 = vpack.c.b16 %v791, %v790
  %v927 = vpack.c.b16 %v793, %v792
  %v928 = vpack.c.b16 %v795, %v794
  %v929 = vpack.c.b16 %v797, %v796
  %v930 = vpack.c.b16 %v799, %v798
  %v931 = vpack.c.b16 %v801, %v800
  %v932 = vpack.c.b16 %v803, %v802
  %v933 = vpack.c.b16 %v805, %v804
  %v1078 = vunpack.c.l.b16 %v271
  %v1079 = vunpack.c.l.b16 %v272
  %v1080 = vunpack.c.l.b16 %v273
  %v1081 = vunpack.c.l.b16 %v274
  %v1082 = vunpack.c.l.b16 %v275
  %v1083 = vunpack.c.l.b16 %v276
  %v1084 = vunpack.c.l.b16 %v277
  %v1085 = vunpack.c.l.b16 %v278
  %v1086 = vunpack.c.l.b16 %v279
  %v1087 = vunpack.c.l.b16 %v280
  %v1088 = vunpack.c.l.b16 %v281
  %v1089 = vunpack.c.l.b16 %v282
  %v1090 = vunpack.c.l.b16 %v283
  %v1091 = vunpack.c.l.b16 %v284
  %v1092 = vunpack.c.l.b16 %v285
  %v1093 = vunpack.c.l.b16 %v286
  %v1094 = vpack.c.b16 %v1079, %v1078
  %v1095 = vpack.c.b16 %v1081, %v1080
  %v1096 = vpack.c.b16 %v1083, %v1082
  %v1097 = vpack.c.b16 %v1085, %v1084
  %v1098 = vpack.c.b16 %v1087, %v1086
  %v1099 = vpack.c.b16 %v1089, %v1088
  %v1100 = vpack.c.b16 %v1091, %v1090
  %v1101 = vpack.c.b16 %v1093, %v1092
  %1110 = vmatprep.subr.bf16.mxu0 0
  %1111 = vmatpush1.bf16.msra.mxu0 %v1094
  %1112 = vmatprep.subr.bf16.mxu0 0
  %1113 = vmatpush1.bf16.msra.mxu0 %v1095
  %1114 = vmatprep.subr.bf16.mxu0 0
  %1115 = vmatpush1.bf16.msra.mxu0 %v1096
  %1116 = vmatprep.subr.bf16.mxu0 0
  %1117 = vmatpush1.bf16.msra.mxu0 %v1097
  %1118 = vmatprep.subr.bf16.mxu0 0
  %1119 = vmatpush1.bf16.msra.mxu0 %v1098
  %1120 = vmatprep.subr.bf16.mxu0 0
  %1121 = vmatpush1.bf16.msra.mxu0 %v1099
  %1122 = vmatprep.subr.bf16.mxu0 0
  %1123 = vmatpush1.bf16.msra.mxu0 %v1100
  %1124 = vmatprep.subr.bf16.mxu0 0
  %1125 = vmatpush1.bf16.msra.mxu0 %v1101
  %1126 = vmatprep.subr.bf16.mxu0 0
  %1127 = vmatpush1.bf16.msra.mxu0 0
  %1128 = vmatprep.subr.bf16.mxu0 0
  %1129 = vmatpush1.bf16.msra.mxu0 0
  %1130 = vmatprep.subr.bf16.mxu0 0
  %1131 = vmatpush1.bf16.msra.mxu0 0
  %1132 = vmatprep.subr.bf16.mxu0 0
  %1133 = vmatpush1.bf16.msra.mxu0 0
  %1134 = vmatprep.subr.bf16.mxu0 0
  %1135 = vmatpush1.bf16.msra.mxu0 0
  %1136 = vmatprep.subr.bf16.mxu0 0
  %1137 = vmatpush1.bf16.msra.mxu0 0
  %1138 = vmatprep.subr.bf16.mxu0 0
  %1139 = vmatpush1.bf16.msra.mxu0 0
  %1140 = vmatprep.subr.bf16.mxu0 0
  %1141 = vmatpush1.bf16.msra.mxu0 0
  %1142 = vmatprep.mubr.bf16.mxu0 0
  %1143 = vmatmul.mubr.bf16.gmra.mrb[0].mxu0 %v806
  %v1144 = vpop.f32.mrb[0].mxu0
  %v1145 = vadd.f32 %v292, %v1144
  %v1146 = vpop.f32.mrb[0].mxu0
  %v1147 = vpop.f32.mrb[0].mxu0
  %v1148 = vadd.f32 %v292, %v1147
  %v1149 = vpop.f32.mrb[0].mxu0
  %1150 = vmatprep.mubr.bf16.mxu0 0
  %1151 = vmatmul.mubr.bf16.gmra.mrb[0].mxu0 %v807
  %v1152 = vpop.f32.mrb[0].mxu0
  %v1153 = vadd.f32 %v292, %v1152
  %v1154 = vpop.f32.mrb[0].mxu0
  %v1155 = vpop.f32.mrb[0].mxu0
  %v1156 = vadd.f32 %v292, %v1155
  %v1157 = vpop.f32.mrb[0].mxu0
  %1158 = vmatprep.mubr.bf16.mxu0 0
  %1159 = vmatmul.mubr.bf16.gmra.mrb[0].mxu0 %v808
  %v1160 = vpop.f32.mrb[0].mxu0
  %v1161 = vadd.f32 %v292, %v1160
  %v1162 = vpop.f32.mrb[0].mxu0
  %v1163 = vpop.f32.mrb[0].mxu0
  %v1164 = vadd.f32 %v292, %v1163
  %v1165 = vpop.f32.mrb[0].mxu0
  %1166 = vmatprep.mubr.bf16.mxu0 0
  %1167 = vmatmul.mubr.bf16.gmra.mrb[0].mxu0 %v809
  %v1168 = vpop.f32.mrb[0].mxu0
  %v1169 = vadd.f32 %v292, %v1168
  %v1170 = vpop.f32.mrb[0].mxu0
  %v1171 = vpop.f32.mrb[0].mxu0
  %v1172 = vadd.f32 %v292, %v1171
  %v1173 = vpop.f32.mrb[0].mxu0
  %1174 = vmatprep.mubr.bf16.mxu0 0
  %1175 = vmatmul.mubr.bf16.gmra.mrb[0].mxu0 %v810
  %v1176 = vpop.f32.mrb[0].mxu0
  %v1177 = vadd.f32 %v292, %v1176
  %v1178 = vpop.f32.mrb[0].mxu0
  %v1179 = vpop.f32.mrb[0].mxu0
  %v1180 = vadd.f32 %v292, %v1179
  %v1181 = vpop.f32.mrb[0].mxu0
  %1182 = vmatprep.mubr.bf16.mxu0 0
  %1183 = vmatmul.mubr.bf16.gmra.mrb[0].mxu0 %v811
  %v1184 = vpop.f32.mrb[0].mxu0
  %v1185 = vadd.f32 %v292, %v1184
  %v1186 = vpop.f32.mrb[0].mxu0
  %v1187 = vpop.f32.mrb[0].mxu0
  %v1188 = vadd.f32 %v292, %v1187
  %v1189 = vpop.f32.mrb[0].mxu0
  %1190 = vmatprep.mubr.bf16.mxu0 0
  %1191 = vmatmul.mubr.bf16.gmra.mrb[0].mxu0 %v812
  %v1192 = vpop.f32.mrb[0].mxu0
  %v1193 = vadd.f32 %v292, %v1192
  %v1194 = vpop.f32.mrb[0].mxu0
  %v1195 = vpop.f32.mrb[0].mxu0
  %v1196 = vadd.f32 %v292, %v1195
  %v1197 = vpop.f32.mrb[0].mxu0
  %1198 = vmatprep.mubr.bf16.mxu0 0
  %1199 = vmatmul.mubr.bf16.gmra.mrb[0].mxu0 %v813
  %v1200 = vpop.f32.mrb[0].mxu0
  %v1201 = vadd.f32 %v292, %v1200
  %v1202 = vpop.f32.mrb[0].mxu0
  %v1203 = vpop.f32.mrb[0].mxu0
  %v1204 = vadd.f32 %v292, %v1203
  %v1205 = vpop.f32.mrb[0].mxu0
  %1206 = vmatprep.mubr.bf16.mxu0 0
  %1207 = vmatmul.mubr.bf16.gmra.mrb[0].mxu0 %v814
  %v1208 = vpop.f32.mrb[0].mxu0
  %v1209 = vadd.f32 %v292, %v1208
  %v1210 = vpop.f32.mrb[0].mxu0
  %v1211 = vpop.f32.mrb[0].mxu0
  %v1212 = vadd.f32 %v292, %v1211
  %v1213 = vpop.f32.mrb[0].mxu0
  %1214 = vmatprep.mubr.bf16.mxu0 0
  %1215 = vmatmul.mubr.bf16.gmra.mrb[0].mxu0 %v815
  %v1216 = vpop.f32.mrb[0].mxu0
  %v1217 = vadd.f32 %v292, %v1216
  %v1218 = vpop.f32.mrb[0].mxu0
  %v1219 = vpop.f32.mrb[0].mxu0
  %v1220 = vadd.f32 %v292, %v1219
  %v1221 = vpop.f32.mrb[0].mxu0
  %1222 = vmatprep.mubr.bf16.mxu0 0
  %1223 = vmatmul.mubr.bf16.gmra.mrb[0].mxu0 %v816
  %v1224 = vpop.f32.mrb[0].mxu0
  %v1225 = vadd.f32 %v292, %v1224
  %v1226 = vpop.f32.mrb[0].mxu0
  %v1227 = vpop.f32.mrb[0].mxu0
  %v1228 = vadd.f32 %v292, %v1227
  %v1229 = vpop.f32.mrb[0].mxu0
  %1230 = vmatprep.mubr.bf16.mxu0 0
  %1231 = vmatmul.mubr.bf16.gmra.mrb[0].mxu0 %v817
  %v1232 = vpop.f32.mrb[0].mxu0
  %v1233 = vadd.f32 %v292, %v1232
  %v1234 = vpop.f32.mrb[0].mxu0
  %v1235 = vpop.f32.mrb[0].mxu0
  %v1236 = vadd.f32 %v292, %v1235
  %v1237 = vpop.f32.mrb[0].mxu0
  %1238 = vmatprep.mubr.bf16.mxu0 0
  %1239 = vmatmul.mubr.bf16.gmra.mrb[0].mxu0 %v818
  %v1240 = vpop.f32.mrb[0].mxu0
  %v1241 = vadd.f32 %v292, %v1240
  %v1242 = vpop.f32.mrb[0].mxu0
  %v1243 = vpop.f32.mrb[0].mxu0
  %v1244 = vadd.f32 %v292, %v1243
  %v1245 = vpop.f32.mrb[0].mxu0
  %1246 = vmatprep.mubr.bf16.mxu0 0
  %1247 = vmatmul.mubr.bf16.gmra.mrb[0].mxu0 %v819
  %v1248 = vpop.f32.mrb[0].mxu0
  %v1249 = vadd.f32 %v292, %v1248
  %v1250 = vpop.f32.mrb[0].mxu0
  %v1251 = vpop.f32.mrb[0].mxu0
  %v1252 = vadd.f32 %v292, %v1251
  %v1253 = vpop.f32.mrb[0].mxu0
  %1254 = vmatprep.mubr.bf16.mxu0 0
  %1255 = vmatmul.mubr.bf16.gmra.mrb[0].mxu0 %v820
  %v1256 = vpop.f32.mrb[0].mxu0
  %v1257 = vadd.f32 %v292, %v1256
  %v1258 = vpop.f32.mrb[0].mxu0
  %v1259 = vpop.f32.mrb[0].mxu0
  %v1260 = vadd.f32 %v292, %v1259
  %v1261 = vpop.f32.mrb[0].mxu0
  %1262 = vmatprep.mubr.bf16.mxu0 0
  %1263 = vmatmul.mubr.bf16.gmra.mrb[0].mxu0 %v821
  %v1264 = vpop.f32.mrb[0].mxu0
  %v1265 = vadd.f32 %v292, %v1264
  %v1266 = vpop.f32.mrb[0].mxu0
  %v1267 = vpop.f32.mrb[0].mxu0
  %v1268 = vadd.f32 %v292, %v1267
  %v1269 = vpop.f32.mrb[0].mxu0
  %1270 = vmatprep.mubr.bf16.mxu0 0
  %1271 = vmatmul.mubr.bf16.gmra.mrb[0].mxu0 %v822
  %v1272 = vpop.f32.mrb[0].mxu0
  %v1273 = vadd.f32 %v292, %v1272
  %v1274 = vpop.f32.mrb[0].mxu0
  %v1275 = vpop.f32.mrb[0].mxu0
  %v1276 = vadd.f32 %v292, %v1275
  %v1277 = vpop.f32.mrb[0].mxu0
  %1278 = vmatprep.mubr.bf16.mxu0 0
  %1279 = vmatmul.mubr.bf16.gmra.mrb[0].mxu0 %v823
  %v1280 = vpop.f32.mrb[0].mxu0
  %v1281 = vadd.f32 %v292, %v1280
  %v1282 = vpop.f32.mrb[0].mxu0
  %v1283 = vpop.f32.mrb[0].mxu0
  %v1284 = vadd.f32 %v292, %v1283
  %v1285 = vpop.f32.mrb[0].mxu0
  %1286 = vmatprep.mubr.bf16.mxu0 0
  %1287 = vmatmul.mubr.bf16.gmra.mrb[0].mxu0 %v824
  %v1288 = vpop.f32.mrb[0].mxu0
  %v1289 = vadd.f32 %v292, %v1288
  %v1290 = vpop.f32.mrb[0].mxu0
  %v1291 = vpop.f32.mrb[0].mxu0
  %v1292 = vadd.f32 %v292, %v1291
  %v1293 = vpop.f32.mrb[0].mxu0
  %1294 = vmatprep.mubr.bf16.mxu0 0
  %1295 = vmatmul.mubr.bf16.gmra.mrb[0].mxu0 %v825
  %v1296 = vpop.f32.mrb[0].mxu0
  %v1297 = vadd.f32 %v292, %v1296
  %v1298 = vpop.f32.mrb[0].mxu0
  %v1299 = vpop.f32.mrb[0].mxu0
  %v1300 = vadd.f32 %v292, %v1299
  %v1301 = vpop.f32.mrb[0].mxu0
  %1302 = vmatprep.mubr.bf16.mxu0 0
  %1303 = vmatmul.mubr.bf16.gmra.mrb[0].mxu0 %v826
  %v1304 = vpop.f32.mrb[0].mxu0
  %v1305 = vadd.f32 %v292, %v1304
  %v1306 = vpop.f32.mrb[0].mxu0
  %v1307 = vpop.f32.mrb[0].mxu0
  %v1308 = vadd.f32 %v292, %v1307
  %v1309 = vpop.f32.mrb[0].mxu0
  %1310 = vmatprep.mubr.bf16.mxu0 0
  %1311 = vmatmul.mubr.bf16.gmra.mrb[0].mxu0 %v827
  %v1312 = vpop.f32.mrb[0].mxu0
  %v1313 = vadd.f32 %v292, %v1312
  %v1314 = vpop.f32.mrb[0].mxu0
  %v1315 = vpop.f32.mrb[0].mxu0
  %v1316 = vadd.f32 %v292, %v1315
  %v1317 = vpop.f32.mrb[0].mxu0
  %1318 = vmatprep.mubr.bf16.mxu0 0
  %1319 = vmatmul.mubr.bf16.gmra.mrb[0].mxu0 %v828
  %v1320 = vpop.f32.mrb[0].mxu0
  %v1321 = vadd.f32 %v292, %v1320
  %v1322 = vpop.f32.mrb[0].mxu0
  %v1323 = vpop.f32.mrb[0].mxu0
  %v1324 = vadd.f32 %v292, %v1323
  %v1325 = vpop.f32.mrb[0].mxu0
  %1326 = vmatprep.mubr.bf16.mxu0 0
  %1327 = vmatmul.mubr.bf16.gmra.mrb[0].mxu0 %v829
  %v1328 = vpop.f32.mrb[0].mxu0
  %v1329 = vadd.f32 %v292, %v1328
  %v1330 = vpop.f32.mrb[0].mxu0
  %v1331 = vpop.f32.mrb[0].mxu0
  %v1332 = vadd.f32 %v292, %v1331
  %v1333 = vpop.f32.mrb[0].mxu0
  %1334 = vmatprep.mubr.bf16.mxu0 0
  %1335 = vmatmul.mubr.bf16.gmra.mrb[0].mxu0 %v830
  %v1336 = vpop.f32.mrb[0].mxu0
  %v1337 = vadd.f32 %v292, %v1336
  %v1338 = vpop.f32.mrb[0].mxu0
  %v1339 = vpop.f32.mrb[0].mxu0
  %v1340 = vadd.f32 %v292, %v1339
  %v1341 = vpop.f32.mrb[0].mxu0
  %1342 = vmatprep.mubr.bf16.mxu0 0
  %1343 = vmatmul.mubr.bf16.gmra.mrb[0].mxu0 %v831
  %v1344 = vpop.f32.mrb[0].mxu0
  %v1345 = vadd.f32 %v292, %v1344
  %v1346 = vpop.f32.mrb[0].mxu0
  %v1347 = vpop.f32.mrb[0].mxu0
  %v1348 = vadd.f32 %v292, %v1347
  %v1349 = vpop.f32.mrb[0].mxu0
  %1350 = vmatprep.mubr.bf16.mxu0 0
  %1351 = vmatmul.mubr.bf16.gmra.mrb[0].mxu0 %v832
  %v1352 = vpop.f32.mrb[0].mxu0
  %v1353 = vadd.f32 %v292, %v1352
  %v1354 = vpop.f32.mrb[0].mxu0
  %v1355 = vpop.f32.mrb[0].mxu0
  %v1356 = vadd.f32 %v292, %v1355
  %v1357 = vpop.f32.mrb[0].mxu0
  %1358 = vmatprep.mubr.bf16.mxu0 0
  %1359 = vmatmul.mubr.bf16.gmra.mrb[0].mxu0 %v833
  %v1360 = vpop.f32.mrb[0].mxu0
  %v1361 = vadd.f32 %v292, %v1360
  %v1362 = vpop.f32.mrb[0].mxu0
  %v1363 = vpop.f32.mrb[0].mxu0
  %v1364 = vadd.f32 %v292, %v1363
  %v1365 = vpop.f32.mrb[0].mxu0
  %1366 = vmatprep.mubr.bf16.mxu0 0
  %1367 = vmatmul.mubr.bf16.gmra.mrb[0].mxu0 %v834
  %v1368 = vpop.f32.mrb[0].mxu0
  %v1369 = vadd.f32 %v292, %v1368
  %v1370 = vpop.f32.mrb[0].mxu0
  %v1371 = vpop.f32.mrb[0].mxu0
  %v1372 = vadd.f32 %v292, %v1371
  %v1373 = vpop.f32.mrb[0].mxu0
  %1374 = vmatprep.mubr.bf16.mxu0 0
  %1375 = vmatmul.mubr.bf16.gmra.mrb[0].mxu0 %v835
  %v1376 = vpop.f32.mrb[0].mxu0
  %v1377 = vadd.f32 %v292, %v1376
  %v1378 = vpop.f32.mrb[0].mxu0
  %v1379 = vpop.f32.mrb[0].mxu0
  %v1380 = vadd.f32 %v292, %v1379
  %v1381 = vpop.f32.mrb[0].mxu0
  %1382 = vmatprep.mubr.bf16.mxu0 0
  %1383 = vmatmul.mubr.bf16.gmra.mrb[0].mxu0 %v836
  %v1384 = vpop.f32.mrb[0].mxu0
  %v1385 = vadd.f32 %v292, %v1384
  %v1386 = vpop.f32.mrb[0].mxu0
  %v1387 = vpop.f32.mrb[0].mxu0
  %v1388 = vadd.f32 %v292, %v1387
  %v1389 = vpop.f32.mrb[0].mxu0
  %1390 = vmatprep.mubr.bf16.mxu0 0
  %1391 = vmatmul.mubr.bf16.gmra.mrb[0].mxu0 %v837
  %v1392 = vpop.f32.mrb[0].mxu0
  %v1393 = vadd.f32 %v292, %v1392
  %v1394 = vpop.f32.mrb[0].mxu0
  %v1395 = vpop.f32.mrb[0].mxu0
  %v1396 = vadd.f32 %v292, %v1395
  %v1397 = vpop.f32.mrb[0].mxu0
  %1398 = vmatprep.mubr.bf16.mxu0 0
  %1399 = vmatmul.mubr.bf16.gmra.mrb[0].mxu0 %v838
  %v1400 = vpop.f32.mrb[0].mxu0
  %v1401 = vadd.f32 %v292, %v1400
  %v1402 = vpop.f32.mrb[0].mxu0
  %v1403 = vpop.f32.mrb[0].mxu0
  %v1404 = vadd.f32 %v292, %v1403
  %v1405 = vpop.f32.mrb[0].mxu0
  %1406 = vmatprep.mubr.bf16.mxu0 0
  %1407 = vmatmul.mubr.bf16.gmra.mrb[0].mxu0 %v839
  %v1408 = vpop.f32.mrb[0].mxu0
  %v1409 = vadd.f32 %v292, %v1408
  %v1410 = vpop.f32.mrb[0].mxu0
  %v1411 = vpop.f32.mrb[0].mxu0
  %v1412 = vadd.f32 %v292, %v1411
  %v1413 = vpop.f32.mrb[0].mxu0
  %1414 = vmatprep.mubr.bf16.mxu0 0
  %1415 = vmatmul.mubr.bf16.gmra.mrb[0].mxu0 %v840
  %v1416 = vpop.f32.mrb[0].mxu0
  %v1417 = vadd.f32 %v292, %v1416
  %v1418 = vpop.f32.mrb[0].mxu0
  %v1419 = vpop.f32.mrb[0].mxu0
  %v1420 = vadd.f32 %v292, %v1419
  %v1421 = vpop.f32.mrb[0].mxu0
  %1422 = vmatprep.mubr.bf16.mxu0 0
  %1423 = vmatmul.mubr.bf16.gmra.mrb[0].mxu0 %v841
  %v1424 = vpop.f32.mrb[0].mxu0
  %v1425 = vadd.f32 %v292, %v1424
  %v1426 = vpop.f32.mrb[0].mxu0
  %v1427 = vpop.f32.mrb[0].mxu0
  %v1428 = vadd.f32 %v292, %v1427
  %v1429 = vpop.f32.mrb[0].mxu0
  %1430 = vmatprep.mubr.bf16.mxu0 0
  %1431 = vmatmul.mubr.bf16.gmra.mrb[0].mxu0 %v842
  %v1432 = vpop.f32.mrb[0].mxu0
  %v1433 = vadd.f32 %v292, %v1432
  %v1434 = vpop.f32.mrb[0].mxu0
  %v1435 = vpop.f32.mrb[0].mxu0
  %v1436 = vadd.f32 %v292, %v1435
  %v1437 = vpop.f32.mrb[0].mxu0
  %1438 = vmatprep.mubr.bf16.mxu0 0
  %1439 = vmatmul.mubr.bf16.gmra.mrb[0].mxu0 %v843
  %v1440 = vpop.f32.mrb[0].mxu0
  %v1441 = vadd.f32 %v292, %v1440
  %v1442 = vpop.f32.mrb[0].mxu0
  %v1443 = vpop.f32.mrb[0].mxu0
  %v1444 = vadd.f32 %v292, %v1443
  %v1445 = vpop.f32.mrb[0].mxu0
  %1446 = vmatprep.mubr.bf16.mxu0 0
  %1447 = vmatmul.mubr.bf16.gmra.mrb[0].mxu0 %v844
  %v1448 = vpop.f32.mrb[0].mxu0
  %v1449 = vadd.f32 %v292, %v1448
  %v1450 = vpop.f32.mrb[0].mxu0
  %v1451 = vpop.f32.mrb[0].mxu0
  %v1452 = vadd.f32 %v292, %v1451
  %v1453 = vpop.f32.mrb[0].mxu0
  %1454 = vmatprep.mubr.bf16.mxu0 0
  %1455 = vmatmul.mubr.bf16.gmra.mrb[0].mxu0 %v845
  %v1456 = vpop.f32.mrb[0].mxu0
  %v1457 = vadd.f32 %v292, %v1456
  %v1458 = vpop.f32.mrb[0].mxu0
  %v1459 = vpop.f32.mrb[0].mxu0
  %v1460 = vadd.f32 %v292, %v1459
  %v1461 = vpop.f32.mrb[0].mxu0
  %1462 = vmatprep.mubr.bf16.mxu0 0
  %1463 = vmatmul.mubr.bf16.gmra.mrb[0].mxu0 %v846
  %v1464 = vpop.f32.mrb[0].mxu0
  %v1465 = vadd.f32 %v292, %v1464
  %v1466 = vpop.f32.mrb[0].mxu0
  %v1467 = vpop.f32.mrb[0].mxu0
  %v1468 = vadd.f32 %v292, %v1467
  %v1469 = vpop.f32.mrb[0].mxu0
  %1470 = vmatprep.mubr.bf16.mxu0 0
  %1471 = vmatmul.mubr.bf16.gmra.mrb[0].mxu0 %v847
  %v1472 = vpop.f32.mrb[0].mxu0
  %v1473 = vadd.f32 %v292, %v1472
  %v1474 = vpop.f32.mrb[0].mxu0
  %v1475 = vpop.f32.mrb[0].mxu0
  %v1476 = vadd.f32 %v292, %v1475
  %v1477 = vpop.f32.mrb[0].mxu0
  %1478 = vmatprep.mubr.bf16.mxu0 0
  %1479 = vmatmul.mubr.bf16.gmra.mrb[0].mxu0 %v848
  %v1480 = vpop.f32.mrb[0].mxu0
  %v1481 = vadd.f32 %v292, %v1480
  %v1482 = vpop.f32.mrb[0].mxu0
  %v1483 = vpop.f32.mrb[0].mxu0
  %v1484 = vadd.f32 %v292, %v1483
  %v1485 = vpop.f32.mrb[0].mxu0
  %1486 = vmatprep.mubr.bf16.mxu0 0
  %1487 = vmatmul.mubr.bf16.gmra.mrb[0].mxu0 %v849
  %v1488 = vpop.f32.mrb[0].mxu0
  %v1489 = vadd.f32 %v292, %v1488
  %v1490 = vpop.f32.mrb[0].mxu0
  %v1491 = vpop.f32.mrb[0].mxu0
  %v1492 = vadd.f32 %v292, %v1491
  %v1493 = vpop.f32.mrb[0].mxu0
  %1494 = vmatprep.mubr.bf16.mxu0 0
  %1495 = vmatmul.mubr.bf16.gmra.mrb[0].mxu0 %v850
  %v1496 = vpop.f32.mrb[0].mxu0
  %v1497 = vadd.f32 %v292, %v1496
  %v1498 = vpop.f32.mrb[0].mxu0
  %v1499 = vpop.f32.mrb[0].mxu0
  %v1500 = vadd.f32 %v292, %v1499
  %v1501 = vpop.f32.mrb[0].mxu0
  %1502 = vmatprep.mubr.bf16.mxu0 0
  %1503 = vmatmul.mubr.bf16.gmra.mrb[0].mxu0 %v851
  %v1504 = vpop.f32.mrb[0].mxu0
  %v1505 = vadd.f32 %v292, %v1504
  %v1506 = vpop.f32.mrb[0].mxu0
  %v1507 = vpop.f32.mrb[0].mxu0
  %v1508 = vadd.f32 %v292, %v1507
  %v1509 = vpop.f32.mrb[0].mxu0
  %1510 = vmatprep.mubr.bf16.mxu0 0
  %1511 = vmatmul.mubr.bf16.gmra.mrb[0].mxu0 %v852
  %v1512 = vpop.f32.mrb[0].mxu0
  %v1513 = vadd.f32 %v292, %v1512
  %v1514 = vpop.f32.mrb[0].mxu0
  %v1515 = vpop.f32.mrb[0].mxu0
  %v1516 = vadd.f32 %v292, %v1515
  %v1517 = vpop.f32.mrb[0].mxu0
  %1518 = vmatprep.mubr.bf16.mxu0 0
  %1519 = vmatmul.mubr.bf16.gmra.mrb[0].mxu0 %v853
  %v1520 = vpop.f32.mrb[0].mxu0
  %v1521 = vadd.f32 %v292, %v1520
  %v1522 = vpop.f32.mrb[0].mxu0
  %v1523 = vpop.f32.mrb[0].mxu0
  %v1524 = vadd.f32 %v292, %v1523
  %v1525 = vpop.f32.mrb[0].mxu0
  %1526 = vmatprep.mubr.bf16.mxu0 0
  %1527 = vmatmul.mubr.bf16.gmra.mrb[0].mxu0 %v854
  %v1528 = vpop.f32.mrb[0].mxu0
  %v1529 = vadd.f32 %v292, %v1528
  %v1530 = vpop.f32.mrb[0].mxu0
  %v1531 = vpop.f32.mrb[0].mxu0
  %v1532 = vadd.f32 %v292, %v1531
  %v1533 = vpop.f32.mrb[0].mxu0
  %1534 = vmatprep.mubr.bf16.mxu0 0
  %1535 = vmatmul.mubr.bf16.gmra.mrb[0].mxu0 %v855
  %v1536 = vpop.f32.mrb[0].mxu0
  %v1537 = vadd.f32 %v292, %v1536
  %v1538 = vpop.f32.mrb[0].mxu0
  %v1539 = vpop.f32.mrb[0].mxu0
  %v1540 = vadd.f32 %v292, %v1539
  %v1541 = vpop.f32.mrb[0].mxu0
  %1542 = vmatprep.mubr.bf16.mxu0 0
  %1543 = vmatmul.mubr.bf16.gmra.mrb[0].mxu0 %v856
  %v1544 = vpop.f32.mrb[0].mxu0
  %v1545 = vadd.f32 %v292, %v1544
  %v1546 = vpop.f32.mrb[0].mxu0
  %v1547 = vpop.f32.mrb[0].mxu0
  %v1548 = vadd.f32 %v292, %v1547
  %v1549 = vpop.f32.mrb[0].mxu0
  %1550 = vmatprep.mubr.bf16.mxu0 0
  %1551 = vmatmul.mubr.bf16.gmra.mrb[0].mxu0 %v857
  %v1552 = vpop.f32.mrb[0].mxu0
  %v1553 = vadd.f32 %v292, %v1552
  %v1554 = vpop.f32.mrb[0].mxu0
  %v1555 = vpop.f32.mrb[0].mxu0
  %v1556 = vadd.f32 %v292, %v1555
  %v1557 = vpop.f32.mrb[0].mxu0
  %1558 = vmatprep.mubr.bf16.mxu0 0
  %1559 = vmatmul.mubr.bf16.gmra.mrb[0].mxu0 %v858
  %v1560 = vpop.f32.mrb[0].mxu0
  %v1561 = vadd.f32 %v292, %v1560
  %v1562 = vpop.f32.mrb[0].mxu0
  %v1563 = vpop.f32.mrb[0].mxu0
  %v1564 = vadd.f32 %v292, %v1563
  %v1565 = vpop.f32.mrb[0].mxu0
  %1566 = vmatprep.mubr.bf16.mxu0 0
  %1567 = vmatmul.mubr.bf16.gmra.mrb[0].mxu0 %v859
  %v1568 = vpop.f32.mrb[0].mxu0
  %v1569 = vadd.f32 %v292, %v1568
  %v1570 = vpop.f32.mrb[0].mxu0
  %v1571 = vpop.f32.mrb[0].mxu0
  %v1572 = vadd.f32 %v292, %v1571
  %v1573 = vpop.f32.mrb[0].mxu0
  %1574 = vmatprep.mubr.bf16.mxu0 0
  %1575 = vmatmul.mubr.bf16.gmra.mrb[0].mxu0 %v860
  %v1576 = vpop.f32.mrb[0].mxu0
  %v1577 = vadd.f32 %v292, %v1576
  %v1578 = vpop.f32.mrb[0].mxu0
  %v1579 = vpop.f32.mrb[0].mxu0
  %v1580 = vadd.f32 %v292, %v1579
  %v1581 = vpop.f32.mrb[0].mxu0
  %1582 = vmatprep.mubr.bf16.mxu0 0
  %1583 = vmatmul.mubr.bf16.gmra.mrb[0].mxu0 %v861
  %v1584 = vpop.f32.mrb[0].mxu0
  %v1585 = vadd.f32 %v292, %v1584
  %v1586 = vpop.f32.mrb[0].mxu0
  %v1587 = vpop.f32.mrb[0].mxu0
  %v1588 = vadd.f32 %v292, %v1587
  %v1589 = vpop.f32.mrb[0].mxu0
  %1590 = vmatprep.mubr.bf16.mxu0 0
  %1591 = vmatmul.mubr.bf16.gmra.mrb[0].mxu0 %v862
  %v1592 = vpop.f32.mrb[0].mxu0
  %v1593 = vadd.f32 %v292, %v1592
  %v1594 = vpop.f32.mrb[0].mxu0
  %v1595 = vpop.f32.mrb[0].mxu0
  %v1596 = vadd.f32 %v292, %v1595
  %v1597 = vpop.f32.mrb[0].mxu0
  %1598 = vmatprep.mubr.bf16.mxu0 0
  %1599 = vmatmul.mubr.bf16.gmra.mrb[0].mxu0 %v863
  %v1600 = vpop.f32.mrb[0].mxu0
  %v1601 = vadd.f32 %v292, %v1600
  %v1602 = vpop.f32.mrb[0].mxu0
  %v1603 = vpop.f32.mrb[0].mxu0
  %v1604 = vadd.f32 %v292, %v1603
  %v1605 = vpop.f32.mrb[0].mxu0
  %1606 = vmatprep.mubr.bf16.mxu0 0
  %1607 = vmatmul.mubr.bf16.gmra.mrb[0].mxu0 %v864
  %v1608 = vpop.f32.mrb[0].mxu0
  %v1609 = vadd.f32 %v292, %v1608
  %v1610 = vpop.f32.mrb[0].mxu0
  %v1611 = vpop.f32.mrb[0].mxu0
  %v1612 = vadd.f32 %v292, %v1611
  %v1613 = vpop.f32.mrb[0].mxu0
  %1614 = vmatprep.mubr.bf16.mxu0 0
  %1615 = vmatmul.mubr.bf16.gmra.mrb[0].mxu0 %v865
  %v1616 = vpop.f32.mrb[0].mxu0
  %v1617 = vadd.f32 %v292, %v1616
  %v1618 = vpop.f32.mrb[0].mxu0
  %v1619 = vpop.f32.mrb[0].mxu0
  %v1620 = vadd.f32 %v292, %v1619
  %v1621 = vpop.f32.mrb[0].mxu0
  %1622 = vmatprep.mubr.bf16.mxu0 0
  %1623 = vmatmul.mubr.bf16.gmra.mrb[0].mxu0 %v866
  %v1624 = vpop.f32.mrb[0].mxu0
  %v1625 = vadd.f32 %v292, %v1624
  %v1626 = vpop.f32.mrb[0].mxu0
  %v1627 = vpop.f32.mrb[0].mxu0
  %v1628 = vadd.f32 %v292, %v1627
  %v1629 = vpop.f32.mrb[0].mxu0
  %1630 = vmatprep.mubr.bf16.mxu0 0
  %1631 = vmatmul.mubr.bf16.gmra.mrb[0].mxu0 %v867
  %v1632 = vpop.f32.mrb[0].mxu0
  %v1633 = vadd.f32 %v292, %v1632
  %v1634 = vpop.f32.mrb[0].mxu0
  %v1635 = vpop.f32.mrb[0].mxu0
  %v1636 = vadd.f32 %v292, %v1635
  %v1637 = vpop.f32.mrb[0].mxu0
  %1638 = vmatprep.mubr.bf16.mxu0 0
  %1639 = vmatmul.mubr.bf16.gmra.mrb[0].mxu0 %v868
  %v1640 = vpop.f32.mrb[0].mxu0
  %v1641 = vadd.f32 %v292, %v1640
  %v1642 = vpop.f32.mrb[0].mxu0
  %v1643 = vpop.f32.mrb[0].mxu0
  %v1644 = vadd.f32 %v292, %v1643
  %v1645 = vpop.f32.mrb[0].mxu0
  %1646 = vmatprep.mubr.bf16.mxu0 0
  %1647 = vmatmul.mubr.bf16.gmra.mrb[0].mxu0 %v869
  %v1648 = vpop.f32.mrb[0].mxu0
  %v1649 = vadd.f32 %v292, %v1648
  %v1650 = vpop.f32.mrb[0].mxu0
  %v1651 = vpop.f32.mrb[0].mxu0
  %v1652 = vadd.f32 %v292, %v1651
  %v1653 = vpop.f32.mrb[0].mxu0
  %1654 = vmatprep.mubr.bf16.mxu0 0
  %1655 = vmatmul.mubr.bf16.gmra.mrb[0].mxu0 %v870
  %v1656 = vpop.f32.mrb[0].mxu0
  %v1657 = vadd.f32 %v292, %v1656
  %v1658 = vpop.f32.mrb[0].mxu0
  %v1659 = vpop.f32.mrb[0].mxu0
  %v1660 = vadd.f32 %v292, %v1659
  %v1661 = vpop.f32.mrb[0].mxu0
  %1662 = vmatprep.mubr.bf16.mxu0 0
  %1663 = vmatmul.mubr.bf16.gmra.mrb[0].mxu0 %v871
  %v1664 = vpop.f32.mrb[0].mxu0
  %v1665 = vadd.f32 %v292, %v1664
  %v1666 = vpop.f32.mrb[0].mxu0
  %v1667 = vpop.f32.mrb[0].mxu0
  %v1668 = vadd.f32 %v292, %v1667
  %v1669 = vpop.f32.mrb[0].mxu0
  %1670 = vmatprep.mubr.bf16.mxu0 0
  %1671 = vmatmul.mubr.bf16.gmra.mrb[0].mxu0 %v872
  %v1672 = vpop.f32.mrb[0].mxu0
  %v1673 = vadd.f32 %v292, %v1672
  %v1674 = vpop.f32.mrb[0].mxu0
  %v1675 = vpop.f32.mrb[0].mxu0
  %v1676 = vadd.f32 %v292, %v1675
  %v1677 = vpop.f32.mrb[0].mxu0
  %1678 = vmatprep.mubr.bf16.mxu0 0
  %1679 = vmatmul.mubr.bf16.gmra.mrb[0].mxu0 %v873
  %v1680 = vpop.f32.mrb[0].mxu0
  %v1681 = vadd.f32 %v292, %v1680
  %v1682 = vpop.f32.mrb[0].mxu0
  %v1683 = vpop.f32.mrb[0].mxu0
  %v1684 = vadd.f32 %v292, %v1683
  %v1685 = vpop.f32.mrb[0].mxu0
  %1686 = vmatprep.mubr.bf16.mxu0 0
  %1687 = vmatmul.mubr.bf16.gmra.mrb[0].mxu0 %v874
  %v1688 = vpop.f32.mrb[0].mxu0
  %v1689 = vadd.f32 %v292, %v1688
  %v1690 = vpop.f32.mrb[0].mxu0
  %v1691 = vpop.f32.mrb[0].mxu0
  %v1692 = vadd.f32 %v292, %v1691
  %v1693 = vpop.f32.mrb[0].mxu0
  %1694 = vmatprep.mubr.bf16.mxu0 0
  %1695 = vmatmul.mubr.bf16.gmra.mrb[0].mxu0 %v875
  %v1696 = vpop.f32.mrb[0].mxu0
  %v1697 = vadd.f32 %v292, %v1696
  %v1698 = vpop.f32.mrb[0].mxu0
  %v1699 = vpop.f32.mrb[0].mxu0
  %v1700 = vadd.f32 %v292, %v1699
  %v1701 = vpop.f32.mrb[0].mxu0
  %1702 = vmatprep.mubr.bf16.mxu0 0
  %1703 = vmatmul.mubr.bf16.gmra.mrb[0].mxu0 %v876
  %v1704 = vpop.f32.mrb[0].mxu0
  %v1705 = vadd.f32 %v292, %v1704
  %v1706 = vpop.f32.mrb[0].mxu0
  %v1707 = vpop.f32.mrb[0].mxu0
  %v1708 = vadd.f32 %v292, %v1707
  %v1709 = vpop.f32.mrb[0].mxu0
  %1710 = vmatprep.mubr.bf16.mxu0 0
  %1711 = vmatmul.mubr.bf16.gmra.mrb[0].mxu0 %v877
  %v1712 = vpop.f32.mrb[0].mxu0
  %v1713 = vadd.f32 %v292, %v1712
  %v1714 = vpop.f32.mrb[0].mxu0
  %v1715 = vpop.f32.mrb[0].mxu0
  %v1716 = vadd.f32 %v292, %v1715
  %v1717 = vpop.f32.mrb[0].mxu0
  %1718 = vmatprep.mubr.bf16.mxu0 0
  %1719 = vmatmul.mubr.bf16.gmra.mrb[0].mxu0 %v878
  %v1720 = vpop.f32.mrb[0].mxu0
  %v1721 = vadd.f32 %v292, %v1720
  %v1722 = vpop.f32.mrb[0].mxu0
  %v1723 = vpop.f32.mrb[0].mxu0
  %v1724 = vadd.f32 %v292, %v1723
  %v1725 = vpop.f32.mrb[0].mxu0
  %1726 = vmatprep.mubr.bf16.mxu0 0
  %1727 = vmatmul.mubr.bf16.gmra.mrb[0].mxu0 %v879
  %v1728 = vpop.f32.mrb[0].mxu0
  %v1729 = vadd.f32 %v292, %v1728
  %v1730 = vpop.f32.mrb[0].mxu0
  %v1731 = vpop.f32.mrb[0].mxu0
  %v1732 = vadd.f32 %v292, %v1731
  %v1733 = vpop.f32.mrb[0].mxu0
  %1734 = vmatprep.mubr.bf16.mxu0 0
  %1735 = vmatmul.mubr.bf16.gmra.mrb[0].mxu0 %v880
  %v1736 = vpop.f32.mrb[0].mxu0
  %v1737 = vadd.f32 %v292, %v1736
  %v1738 = vpop.f32.mrb[0].mxu0
  %v1739 = vpop.f32.mrb[0].mxu0
  %v1740 = vadd.f32 %v292, %v1739
  %v1741 = vpop.f32.mrb[0].mxu0
  %1742 = vmatprep.mubr.bf16.mxu0 0
  %1743 = vmatmul.mubr.bf16.gmra.mrb[0].mxu0 %v881
  %v1744 = vpop.f32.mrb[0].mxu0
  %v1745 = vadd.f32 %v292, %v1744
  %v1746 = vpop.f32.mrb[0].mxu0
  %v1747 = vpop.f32.mrb[0].mxu0
  %v1748 = vadd.f32 %v292, %v1747
  %v1749 = vpop.f32.mrb[0].mxu0
  %1750 = vmatprep.mubr.bf16.mxu0 0
  %1751 = vmatmul.mubr.bf16.gmra.mrb[0].mxu0 %v882
  %v1752 = vpop.f32.mrb[0].mxu0
  %v1753 = vadd.f32 %v292, %v1752
  %v1754 = vpop.f32.mrb[0].mxu0
  %v1755 = vpop.f32.mrb[0].mxu0
  %v1756 = vadd.f32 %v292, %v1755
  %v1757 = vpop.f32.mrb[0].mxu0
  %1758 = vmatprep.mubr.bf16.mxu0 0
  %1759 = vmatmul.mubr.bf16.gmra.mrb[0].mxu0 %v883
  %v1760 = vpop.f32.mrb[0].mxu0
  %v1761 = vadd.f32 %v292, %v1760
  %v1762 = vpop.f32.mrb[0].mxu0
  %v1763 = vpop.f32.mrb[0].mxu0
  %v1764 = vadd.f32 %v292, %v1763
  %v1765 = vpop.f32.mrb[0].mxu0
  %1766 = vmatprep.mubr.bf16.mxu0 0
  %1767 = vmatmul.mubr.bf16.gmra.mrb[0].mxu0 %v884
  %v1768 = vpop.f32.mrb[0].mxu0
  %v1769 = vadd.f32 %v292, %v1768
  %v1770 = vpop.f32.mrb[0].mxu0
  %v1771 = vpop.f32.mrb[0].mxu0
  %v1772 = vadd.f32 %v292, %v1771
  %v1773 = vpop.f32.mrb[0].mxu0
  %1774 = vmatprep.mubr.bf16.mxu0 0
  %1775 = vmatmul.mubr.bf16.gmra.mrb[0].mxu0 %v885
  %v1776 = vpop.f32.mrb[0].mxu0
  %v1777 = vadd.f32 %v292, %v1776
  %v1778 = vpop.f32.mrb[0].mxu0
  %v1779 = vpop.f32.mrb[0].mxu0
  %v1780 = vadd.f32 %v292, %v1779
  %v1781 = vpop.f32.mrb[0].mxu0
  %1782 = vmatprep.mubr.bf16.mxu0 0
  %1783 = vmatmul.mubr.bf16.gmra.mrb[0].mxu0 %v886
  %v1784 = vpop.f32.mrb[0].mxu0
  %v1785 = vadd.f32 %v292, %v1784
  %v1786 = vpop.f32.mrb[0].mxu0
  %v1787 = vpop.f32.mrb[0].mxu0
  %v1788 = vadd.f32 %v292, %v1787
  %v1789 = vpop.f32.mrb[0].mxu0
  %1790 = vmatprep.mubr.bf16.mxu0 0
  %1791 = vmatmul.mubr.bf16.gmra.mrb[0].mxu0 %v887
  %v1792 = vpop.f32.mrb[0].mxu0
  %v1793 = vadd.f32 %v292, %v1792
  %v1794 = vpop.f32.mrb[0].mxu0
  %v1795 = vpop.f32.mrb[0].mxu0
  %v1796 = vadd.f32 %v292, %v1795
  %v1797 = vpop.f32.mrb[0].mxu0
  %1798 = vmatprep.mubr.bf16.mxu0 0
  %1799 = vmatmul.mubr.bf16.gmra.mrb[0].mxu0 %v888
  %v1800 = vpop.f32.mrb[0].mxu0
  %v1801 = vadd.f32 %v292, %v1800
  %v1802 = vpop.f32.mrb[0].mxu0
  %v1803 = vpop.f32.mrb[0].mxu0
  %v1804 = vadd.f32 %v292, %v1803
  %v1805 = vpop.f32.mrb[0].mxu0
  %1806 = vmatprep.mubr.bf16.mxu0 0
  %1807 = vmatmul.mubr.bf16.gmra.mrb[0].mxu0 %v889
  %v1808 = vpop.f32.mrb[0].mxu0
  %v1809 = vadd.f32 %v292, %v1808
  %v1810 = vpop.f32.mrb[0].mxu0
  %v1811 = vpop.f32.mrb[0].mxu0
  %v1812 = vadd.f32 %v292, %v1811
  %v1813 = vpop.f32.mrb[0].mxu0
  %1814 = vmatprep.mubr.bf16.mxu0 0
  %1815 = vmatmul.mubr.bf16.gmra.mrb[0].mxu0 %v890
  %v1816 = vpop.f32.mrb[0].mxu0
  %v1817 = vadd.f32 %v292, %v1816
  %v1818 = vpop.f32.mrb[0].mxu0
  %v1819 = vpop.f32.mrb[0].mxu0
  %v1820 = vadd.f32 %v292, %v1819
  %v1821 = vpop.f32.mrb[0].mxu0
  %1822 = vmatprep.mubr.bf16.mxu0 0
  %1823 = vmatmul.mubr.bf16.gmra.mrb[0].mxu0 %v891
  %v1824 = vpop.f32.mrb[0].mxu0
  %v1825 = vadd.f32 %v292, %v1824
  %v1826 = vpop.f32.mrb[0].mxu0
  %v1827 = vpop.f32.mrb[0].mxu0
  %v1828 = vadd.f32 %v292, %v1827
  %v1829 = vpop.f32.mrb[0].mxu0
  %1830 = vmatprep.mubr.bf16.mxu0 0
  %1831 = vmatmul.mubr.bf16.gmra.mrb[0].mxu0 %v892
  %v1832 = vpop.f32.mrb[0].mxu0
  %v1833 = vadd.f32 %v292, %v1832
  %v1834 = vpop.f32.mrb[0].mxu0
  %v1835 = vpop.f32.mrb[0].mxu0
  %v1836 = vadd.f32 %v292, %v1835
  %v1837 = vpop.f32.mrb[0].mxu0
  %1838 = vmatprep.mubr.bf16.mxu0 0
  %1839 = vmatmul.mubr.bf16.gmra.mrb[0].mxu0 %v893
  %v1840 = vpop.f32.mrb[0].mxu0
  %v1841 = vadd.f32 %v292, %v1840
  %v1842 = vpop.f32.mrb[0].mxu0
  %v1843 = vpop.f32.mrb[0].mxu0
  %v1844 = vadd.f32 %v292, %v1843
  %v1845 = vpop.f32.mrb[0].mxu0
  %1846 = vmatprep.mubr.bf16.mxu0 0
  %1847 = vmatmul.mubr.bf16.gmra.mrb[0].mxu0 %v894
  %v1848 = vpop.f32.mrb[0].mxu0
  %v1849 = vadd.f32 %v292, %v1848
  %v1850 = vpop.f32.mrb[0].mxu0
  %v1851 = vpop.f32.mrb[0].mxu0
  %v1852 = vadd.f32 %v292, %v1851
  %v1853 = vpop.f32.mrb[0].mxu0
  %1854 = vmatprep.mubr.bf16.mxu0 0
  %1855 = vmatmul.mubr.bf16.gmra.mrb[0].mxu0 %v895
  %v1856 = vpop.f32.mrb[0].mxu0
  %v1857 = vadd.f32 %v292, %v1856
  %v1858 = vpop.f32.mrb[0].mxu0
  %v1859 = vpop.f32.mrb[0].mxu0
  %v1860 = vadd.f32 %v292, %v1859
  %v1861 = vpop.f32.mrb[0].mxu0
  %1862 = vmatprep.mubr.bf16.mxu0 0
  %1863 = vmatmul.mubr.bf16.gmra.mrb[0].mxu0 %v896
  %v1864 = vpop.f32.mrb[0].mxu0
  %v1865 = vadd.f32 %v292, %v1864
  %v1866 = vpop.f32.mrb[0].mxu0
  %v1867 = vpop.f32.mrb[0].mxu0
  %v1868 = vadd.f32 %v292, %v1867
  %v1869 = vpop.f32.mrb[0].mxu0
  %1870 = vmatprep.mubr.bf16.mxu0 0
  %1871 = vmatmul.mubr.bf16.gmra.mrb[0].mxu0 %v897
  %v1872 = vpop.f32.mrb[0].mxu0
  %v1873 = vadd.f32 %v292, %v1872
  %v1874 = vpop.f32.mrb[0].mxu0
  %v1875 = vpop.f32.mrb[0].mxu0
  %v1876 = vadd.f32 %v292, %v1875
  %v1877 = vpop.f32.mrb[0].mxu0
  %1878 = vmatprep.mubr.bf16.mxu0 0
  %1879 = vmatmul.mubr.bf16.gmra.mrb[0].mxu0 %v898
  %v1880 = vpop.f32.mrb[0].mxu0
  %v1881 = vadd.f32 %v292, %v1880
  %v1882 = vpop.f32.mrb[0].mxu0
  %v1883 = vpop.f32.mrb[0].mxu0
  %v1884 = vadd.f32 %v292, %v1883
  %v1885 = vpop.f32.mrb[0].mxu0
  %1886 = vmatprep.mubr.bf16.mxu0 0
  %1887 = vmatmul.mubr.bf16.gmra.mrb[0].mxu0 %v899
  %v1888 = vpop.f32.mrb[0].mxu0
  %v1889 = vadd.f32 %v292, %v1888
  %v1890 = vpop.f32.mrb[0].mxu0
  %v1891 = vpop.f32.mrb[0].mxu0
  %v1892 = vadd.f32 %v292, %v1891
  %v1893 = vpop.f32.mrb[0].mxu0
  %1894 = vmatprep.mubr.bf16.mxu0 0
  %1895 = vmatmul.mubr.bf16.gmra.mrb[0].mxu0 %v900
  %v1896 = vpop.f32.mrb[0].mxu0
  %v1897 = vadd.f32 %v292, %v1896
  %v1898 = vpop.f32.mrb[0].mxu0
  %v1899 = vpop.f32.mrb[0].mxu0
  %v1900 = vadd.f32 %v292, %v1899
  %v1901 = vpop.f32.mrb[0].mxu0
  %1902 = vmatprep.mubr.bf16.mxu0 0
  %1903 = vmatmul.mubr.bf16.gmra.mrb[0].mxu0 %v901
  %v1904 = vpop.f32.mrb[0].mxu0
  %v1905 = vadd.f32 %v292, %v1904
  %v1906 = vpop.f32.mrb[0].mxu0
  %v1907 = vpop.f32.mrb[0].mxu0
  %v1908 = vadd.f32 %v292, %v1907
  %v1909 = vpop.f32.mrb[0].mxu0
  %1910 = vmatprep.mubr.bf16.mxu0 0
  %1911 = vmatmul.mubr.bf16.gmra.mrb[0].mxu0 %v902
  %v1912 = vpop.f32.mrb[0].mxu0
  %v1913 = vadd.f32 %v292, %v1912
  %v1914 = vpop.f32.mrb[0].mxu0
  %v1915 = vpop.f32.mrb[0].mxu0
  %v1916 = vadd.f32 %v292, %v1915
  %v1917 = vpop.f32.mrb[0].mxu0
  %1918 = vmatprep.mubr.bf16.mxu0 0
  %1919 = vmatmul.mubr.bf16.gmra.mrb[0].mxu0 %v903
  %v1920 = vpop.f32.mrb[0].mxu0
  %v1921 = vadd.f32 %v292, %v1920
  %v1922 = vpop.f32.mrb[0].mxu0
  %v1923 = vpop.f32.mrb[0].mxu0
  %v1924 = vadd.f32 %v292, %v1923
  %v1925 = vpop.f32.mrb[0].mxu0
  %1926 = vmatprep.mubr.bf16.mxu0 0
  %1927 = vmatmul.mubr.bf16.gmra.mrb[0].mxu0 %v904
  %v1928 = vpop.f32.mrb[0].mxu0
  %v1929 = vadd.f32 %v292, %v1928
  %v1930 = vpop.f32.mrb[0].mxu0
  %v1931 = vpop.f32.mrb[0].mxu0
  %v1932 = vadd.f32 %v292, %v1931
  %v1933 = vpop.f32.mrb[0].mxu0
  %1934 = vmatprep.mubr.bf16.mxu0 0
  %1935 = vmatmul.mubr.bf16.gmra.mrb[0].mxu0 %v905
  %v1936 = vpop.f32.mrb[0].mxu0
  %v1937 = vadd.f32 %v292, %v1936
  %v1938 = vpop.f32.mrb[0].mxu0
  %v1939 = vpop.f32.mrb[0].mxu0
  %v1940 = vadd.f32 %v292, %v1939
  %v1941 = vpop.f32.mrb[0].mxu0
  %1942 = vmatprep.mubr.bf16.mxu0 0
  %1943 = vmatmul.mubr.bf16.gmra.mrb[0].mxu0 %v906
  %v1944 = vpop.f32.mrb[0].mxu0
  %v1945 = vadd.f32 %v292, %v1944
  %v1946 = vpop.f32.mrb[0].mxu0
  %v1947 = vpop.f32.mrb[0].mxu0
  %v1948 = vadd.f32 %v292, %v1947
  %v1949 = vpop.f32.mrb[0].mxu0
  %1950 = vmatprep.mubr.bf16.mxu0 0
  %1951 = vmatmul.mubr.bf16.gmra.mrb[0].mxu0 %v907
  %v1952 = vpop.f32.mrb[0].mxu0
  %v1953 = vadd.f32 %v292, %v1952
  %v1954 = vpop.f32.mrb[0].mxu0
  %v1955 = vpop.f32.mrb[0].mxu0
  %v1956 = vadd.f32 %v292, %v1955
  %v1957 = vpop.f32.mrb[0].mxu0
  %1958 = vmatprep.mubr.bf16.mxu0 0
  %1959 = vmatmul.mubr.bf16.gmra.mrb[0].mxu0 %v908
  %v1960 = vpop.f32.mrb[0].mxu0
  %v1961 = vadd.f32 %v292, %v1960
  %v1962 = vpop.f32.mrb[0].mxu0
  %v1963 = vpop.f32.mrb[0].mxu0
  %v1964 = vadd.f32 %v292, %v1963
  %v1965 = vpop.f32.mrb[0].mxu0
  %1966 = vmatprep.mubr.bf16.mxu0 0
  %1967 = vmatmul.mubr.bf16.gmra.mrb[0].mxu0 %v909
  %v1968 = vpop.f32.mrb[0].mxu0
  %v1969 = vadd.f32 %v292, %v1968
  %v1970 = vpop.f32.mrb[0].mxu0
  %v1971 = vpop.f32.mrb[0].mxu0
  %v1972 = vadd.f32 %v292, %v1971
  %v1973 = vpop.f32.mrb[0].mxu0
  %1974 = vmatprep.mubr.bf16.mxu0 0
  %1975 = vmatmul.mubr.bf16.gmra.mrb[0].mxu0 %v910
  %v1976 = vpop.f32.mrb[0].mxu0
  %v1977 = vadd.f32 %v292, %v1976
  %v1978 = vpop.f32.mrb[0].mxu0
  %v1979 = vpop.f32.mrb[0].mxu0
  %v1980 = vadd.f32 %v292, %v1979
  %v1981 = vpop.f32.mrb[0].mxu0
  %1982 = vmatprep.mubr.bf16.mxu0 0
  %1983 = vmatmul.mubr.bf16.gmra.mrb[0].mxu0 %v911
  %v1984 = vpop.f32.mrb[0].mxu0
  %v1985 = vadd.f32 %v292, %v1984
  %v1986 = vpop.f32.mrb[0].mxu0
  %v1987 = vpop.f32.mrb[0].mxu0
  %v1988 = vadd.f32 %v292, %v1987
  %v1989 = vpop.f32.mrb[0].mxu0
  %1990 = vmatprep.mubr.bf16.mxu0 0
  %1991 = vmatmul.mubr.bf16.gmra.mrb[0].mxu0 %v912
  %v1992 = vpop.f32.mrb[0].mxu0
  %v1993 = vadd.f32 %v292, %v1992
  %v1994 = vpop.f32.mrb[0].mxu0
  %v1995 = vpop.f32.mrb[0].mxu0
  %v1996 = vadd.f32 %v292, %v1995
  %v1997 = vpop.f32.mrb[0].mxu0
  %1998 = vmatprep.mubr.bf16.mxu0 0
  %1999 = vmatmul.mubr.bf16.gmra.mrb[0].mxu0 %v913
  %v2000 = vpop.f32.mrb[0].mxu0
  %v2001 = vadd.f32 %v292, %v2000
  %v2002 = vpop.f32.mrb[0].mxu0
  %v2003 = vpop.f32.mrb[0].mxu0
  %v2004 = vadd.f32 %v292, %v2003
  %v2005 = vpop.f32.mrb[0].mxu0
  %2006 = vmatprep.mubr.bf16.mxu0 0
  %2007 = vmatmul.mubr.bf16.gmra.mrb[0].mxu0 %v914
  %v2008 = vpop.f32.mrb[0].mxu0
  %v2009 = vadd.f32 %v292, %v2008
  %v2010 = vpop.f32.mrb[0].mxu0
  %v2011 = vpop.f32.mrb[0].mxu0
  %v2012 = vadd.f32 %v292, %v2011
  %v2013 = vpop.f32.mrb[0].mxu0
  %2014 = vmatprep.mubr.bf16.mxu0 0
  %2015 = vmatmul.mubr.bf16.gmra.mrb[0].mxu0 %v915
  %v2016 = vpop.f32.mrb[0].mxu0
  %v2017 = vadd.f32 %v292, %v2016
  %v2018 = vpop.f32.mrb[0].mxu0
  %v2019 = vpop.f32.mrb[0].mxu0
  %v2020 = vadd.f32 %v292, %v2019
  %v2021 = vpop.f32.mrb[0].mxu0
  %2022 = vmatprep.mubr.bf16.mxu0 0
  %2023 = vmatmul.mubr.bf16.gmra.mrb[0].mxu0 %v916
  %v2024 = vpop.f32.mrb[0].mxu0
  %v2025 = vadd.f32 %v292, %v2024
  %v2026 = vpop.f32.mrb[0].mxu0
  %v2027 = vpop.f32.mrb[0].mxu0
  %v2028 = vadd.f32 %v292, %v2027
  %v2029 = vpop.f32.mrb[0].mxu0
  %2030 = vmatprep.mubr.bf16.mxu0 0
  %2031 = vmatmul.mubr.bf16.gmra.mrb[0].mxu0 %v917
  %v2032 = vpop.f32.mrb[0].mxu0
  %v2033 = vadd.f32 %v292, %v2032
  %v2034 = vpop.f32.mrb[0].mxu0
  %v2035 = vpop.f32.mrb[0].mxu0
  %v2036 = vadd.f32 %v292, %v2035
  %v2037 = vpop.f32.mrb[0].mxu0
  %2038 = vmatprep.mubr.bf16.mxu0 0
  %2039 = vmatmul.mubr.bf16.gmra.mrb[0].mxu0 %v918
  %v2040 = vpop.f32.mrb[0].mxu0
  %v2041 = vadd.f32 %v292, %v2040
  %v2042 = vpop.f32.mrb[0].mxu0
  %v2043 = vpop.f32.mrb[0].mxu0
  %v2044 = vadd.f32 %v292, %v2043
  %v2045 = vpop.f32.mrb[0].mxu0
  %2046 = vmatprep.mubr.bf16.mxu0 0
  %2047 = vmatmul.mubr.bf16.gmra.mrb[0].mxu0 %v919
  %v2048 = vpop.f32.mrb[0].mxu0
  %v2049 = vadd.f32 %v292, %v2048
  %v2050 = vpop.f32.mrb[0].mxu0
  %v2051 = vpop.f32.mrb[0].mxu0
  %v2052 = vadd.f32 %v292, %v2051
  %v2053 = vpop.f32.mrb[0].mxu0
  %2054 = vmatprep.mubr.bf16.mxu0 0
  %2055 = vmatmul.mubr.bf16.gmra.mrb[0].mxu0 %v920
  %v2056 = vpop.f32.mrb[0].mxu0
  %v2057 = vadd.f32 %v292, %v2056
  %v2058 = vpop.f32.mrb[0].mxu0
  %v2059 = vpop.f32.mrb[0].mxu0
  %v2060 = vadd.f32 %v292, %v2059
  %v2061 = vpop.f32.mrb[0].mxu0
  %2062 = vmatprep.mubr.bf16.mxu0 0
  %2063 = vmatmul.mubr.bf16.gmra.mrb[0].mxu0 %v921
  %v2064 = vpop.f32.mrb[0].mxu0
  %v2065 = vadd.f32 %v292, %v2064
  %v2066 = vpop.f32.mrb[0].mxu0
  %v2067 = vpop.f32.mrb[0].mxu0
  %v2068 = vadd.f32 %v292, %v2067
  %v2069 = vpop.f32.mrb[0].mxu0
  %2070 = vmatprep.mubr.bf16.mxu0 0
  %2071 = vmatmul.mubr.bf16.gmra.mrb[0].mxu0 %v922
  %v2072 = vpop.f32.mrb[0].mxu0
  %v2073 = vadd.f32 %v292, %v2072
  %v2074 = vpop.f32.mrb[0].mxu0
  %v2075 = vpop.f32.mrb[0].mxu0
  %v2076 = vadd.f32 %v292, %v2075
  %v2077 = vpop.f32.mrb[0].mxu0
  %2078 = vmatprep.mubr.bf16.mxu0 0
  %2079 = vmatmul.mubr.bf16.gmra.mrb[0].mxu0 %v923
  %v2080 = vpop.f32.mrb[0].mxu0
  %v2081 = vadd.f32 %v292, %v2080
  %v2082 = vpop.f32.mrb[0].mxu0
  %v2083 = vpop.f32.mrb[0].mxu0
  %v2084 = vadd.f32 %v292, %v2083
  %v2085 = vpop.f32.mrb[0].mxu0
  %2086 = vmatprep.mubr.bf16.mxu0 0
  %2087 = vmatmul.mubr.bf16.gmra.mrb[0].mxu0 %v924
  %v2088 = vpop.f32.mrb[0].mxu0
  %v2089 = vadd.f32 %v292, %v2088
  %v2090 = vpop.f32.mrb[0].mxu0
  %v2091 = vpop.f32.mrb[0].mxu0
  %v2092 = vadd.f32 %v292, %v2091
  %v2093 = vpop.f32.mrb[0].mxu0
  %2094 = vmatprep.mubr.bf16.mxu0 0
  %2095 = vmatmul.mubr.bf16.gmra.mrb[0].mxu0 %v925
  %v2096 = vpop.f32.mrb[0].mxu0
  %v2097 = vadd.f32 %v292, %v2096
  %v2098 = vpop.f32.mrb[0].mxu0
  %v2099 = vpop.f32.mrb[0].mxu0
  %v2100 = vadd.f32 %v292, %v2099
  %v2101 = vpop.f32.mrb[0].mxu0
  %2102 = vmatprep.mubr.bf16.mxu0 0
  %2103 = vmatmul.mubr.bf16.gmra.mrb[0].mxu0 %v926
  %v2104 = vpop.f32.mrb[0].mxu0
  %v2105 = vadd.f32 %v292, %v2104
  %v2106 = vpop.f32.mrb[0].mxu0
  %v2107 = vpop.f32.mrb[0].mxu0
  %v2108 = vadd.f32 %v292, %v2107
  %v2109 = vpop.f32.mrb[0].mxu0
  %2110 = vmatprep.mubr.bf16.mxu0 0
  %2111 = vmatmul.mubr.bf16.gmra.mrb[0].mxu0 %v927
  %v2112 = vpop.f32.mrb[0].mxu0
  %v2113 = vadd.f32 %v292, %v2112
  %v2114 = vpop.f32.mrb[0].mxu0
  %v2115 = vpop.f32.mrb[0].mxu0
  %v2116 = vadd.f32 %v292, %v2115
  %v2117 = vpop.f32.mrb[0].mxu0
  %2118 = vmatprep.mubr.bf16.mxu0 0
  %2119 = vmatmul.mubr.bf16.gmra.mrb[0].mxu0 %v928
  %v2120 = vpop.f32.mrb[0].mxu0
  %v2121 = vadd.f32 %v292, %v2120
  %v2122 = vpop.f32.mrb[0].mxu0
  %v2123 = vpop.f32.mrb[0].mxu0
  %v2124 = vadd.f32 %v292, %v2123
  %v2125 = vpop.f32.mrb[0].mxu0
  %2126 = vmatprep.mubr.bf16.mxu0 0
  %2127 = vmatmul.mubr.bf16.gmra.mrb[0].mxu0 %v929
  %v2128 = vpop.f32.mrb[0].mxu0
  %v2129 = vadd.f32 %v292, %v2128
  %v2130 = vpop.f32.mrb[0].mxu0
  %v2131 = vpop.f32.mrb[0].mxu0
  %v2132 = vadd.f32 %v292, %v2131
  %v2133 = vpop.f32.mrb[0].mxu0
  %2134 = vmatprep.mubr.bf16.mxu0 0
  %2135 = vmatmul.mubr.bf16.gmra.mrb[0].mxu0 %v930
  %v2136 = vpop.f32.mrb[0].mxu0
  %v2137 = vadd.f32 %v292, %v2136
  %v2138 = vpop.f32.mrb[0].mxu0
  %v2139 = vpop.f32.mrb[0].mxu0
  %v2140 = vadd.f32 %v292, %v2139
  %v2141 = vpop.f32.mrb[0].mxu0
  %2142 = vmatprep.mubr.bf16.mxu0 0
  %2143 = vmatmul.mubr.bf16.gmra.mrb[0].mxu0 %v931
  %v2144 = vpop.f32.mrb[0].mxu0
  %v2145 = vadd.f32 %v292, %v2144
  %v2146 = vpop.f32.mrb[0].mxu0
  %v2147 = vpop.f32.mrb[0].mxu0
  %v2148 = vadd.f32 %v292, %v2147
  %v2149 = vpop.f32.mrb[0].mxu0
  %2150 = vmatprep.mubr.bf16.mxu0 0
  %2151 = vmatmul.mubr.bf16.gmra.mrb[0].mxu0 %v932
  %v2152 = vpop.f32.mrb[0].mxu0
  %v2153 = vadd.f32 %v292, %v2152
  %v2154 = vpop.f32.mrb[0].mxu0
  %v2155 = vpop.f32.mrb[0].mxu0
  %v2156 = vadd.f32 %v292, %v2155
  %v2157 = vpop.f32.mrb[0].mxu0
  %2158 = vmatprep.mubr.bf16.mxu0 0
  %2159 = vmatmul.mubr.bf16.gmra.mrb[0].mxu0 %v933
  %v2160 = vpop.f32.mrb[0].mxu0
  %v2161 = vadd.f32 %v292, %v2160
  %v2162 = vpop.f32.mrb[0].mxu0
  %v2163 = vpop.f32.mrb[0].mxu0
  %v2164 = vadd.f32 %v292, %v2163
  %v2165 = vpop.f32.mrb[0].mxu0
  %2166 = vdwg.mxu0
  %vm2167 = vcmp.ge.f32.partialorder %v1145, 0.0
  %vm2168 = vcmp.ge.f32.partialorder %v1148, 0.0
  %vm2169 = vcmp.ge.f32.partialorder %v1153, 0.0
  %vm2170 = vcmp.ge.f32.partialorder %v1156, 0.0
  %vm2171 = vcmp.ge.f32.partialorder %v1161, 0.0
  %vm2172 = vcmp.ge.f32.partialorder %v1164, 0.0
  %vm2173 = vcmp.ge.f32.partialorder %v1169, 0.0
  %vm2174 = vcmp.ge.f32.partialorder %v1172, 0.0
  %vm2175 = vcmp.ge.f32.partialorder %v1177, 0.0
  %vm2176 = vcmp.ge.f32.partialorder %v1180, 0.0
  %vm2177 = vcmp.ge.f32.partialorder %v1185, 0.0
  %vm2178 = vcmp.ge.f32.partialorder %v1188, 0.0
  %vm2179 = vcmp.ge.f32.partialorder %v1193, 0.0
  %vm2180 = vcmp.ge.f32.partialorder %v1196, 0.0
  %vm2181 = vcmp.ge.f32.partialorder %v1201, 0.0
  %vm2182 = vcmp.ge.f32.partialorder %v1204, 0.0
  %vm2183 = vcmp.ge.f32.partialorder %v1209, 0.0
  %vm2184 = vcmp.ge.f32.partialorder %v1212, 0.0
  %vm2185 = vcmp.ge.f32.partialorder %v1217, 0.0
  %vm2186 = vcmp.ge.f32.partialorder %v1220, 0.0
  %vm2187 = vcmp.ge.f32.partialorder %v1225, 0.0
  %vm2188 = vcmp.ge.f32.partialorder %v1228, 0.0
  %vm2189 = vcmp.ge.f32.partialorder %v1233, 0.0
  %vm2190 = vcmp.ge.f32.partialorder %v1236, 0.0
  %vm2191 = vcmp.ge.f32.partialorder %v1241, 0.0
  %vm2192 = vcmp.ge.f32.partialorder %v1244, 0.0
  %vm2193 = vcmp.ge.f32.partialorder %v1249, 0.0
  %vm2194 = vcmp.ge.f32.partialorder %v1252, 0.0
  %vm2195 = vcmp.ge.f32.partialorder %v1257, 0.0
  %vm2196 = vcmp.ge.f32.partialorder %v1260, 0.0
  %vm2197 = vcmp.ge.f32.partialorder %v1265, 0.0
  %vm2198 = vcmp.ge.f32.partialorder %v1268, 0.0
  %vm2199 = vcmp.ge.f32.partialorder %v1273, 0.0
  %vm2200 = vcmp.ge.f32.partialorder %v1276, 0.0
  %vm2201 = vcmp.ge.f32.partialorder %v1281, 0.0
  %vm2202 = vcmp.ge.f32.partialorder %v1284, 0.0
  %vm2203 = vcmp.ge.f32.partialorder %v1289, 0.0
  %vm2204 = vcmp.ge.f32.partialorder %v1292, 0.0
  %vm2205 = vcmp.ge.f32.partialorder %v1297, 0.0
  %vm2206 = vcmp.ge.f32.partialorder %v1300, 0.0
  %vm2207 = vcmp.ge.f32.partialorder %v1305, 0.0
  %vm2208 = vcmp.ge.f32.partialorder %v1308, 0.0
  %vm2209 = vcmp.ge.f32.partialorder %v1313, 0.0
  %vm2210 = vcmp.ge.f32.partialorder %v1316, 0.0
  %vm2211 = vcmp.ge.f32.partialorder %v1321, 0.0
  %vm2212 = vcmp.ge.f32.partialorder %v1324, 0.0
  %vm2213 = vcmp.ge.f32.partialorder %v1329, 0.0
  %vm2214 = vcmp.ge.f32.partialorder %v1332, 0.0
  %vm2215 = vcmp.ge.f32.partialorder %v1337, 0.0
  %vm2216 = vcmp.ge.f32.partialorder %v1340, 0.0
  %vm2217 = vcmp.ge.f32.partialorder %v1345, 0.0
  %vm2218 = vcmp.ge.f32.partialorder %v1348, 0.0
  %vm2219 = vcmp.ge.f32.partialorder %v1353, 0.0
  %vm2220 = vcmp.ge.f32.partialorder %v1356, 0.0
  %vm2221 = vcmp.ge.f32.partialorder %v1361, 0.0
  %vm2222 = vcmp.ge.f32.partialorder %v1364, 0.0
  %vm2223 = vcmp.ge.f32.partialorder %v1369, 0.0
  %vm2224 = vcmp.ge.f32.partialorder %v1372, 0.0
  %vm2225 = vcmp.ge.f32.partialorder %v1377, 0.0
  %vm2226 = vcmp.ge.f32.partialorder %v1380, 0.0
  %vm2227 = vcmp.ge.f32.partialorder %v1385, 0.0
  %vm2228 = vcmp.ge.f32.partialorder %v1388, 0.0
  %vm2229 = vcmp.ge.f32.partialorder %v1393, 0.0
  %vm2230 = vcmp.ge.f32.partialorder %v1396, 0.0
  %vm2231 = vcmp.ge.f32.partialorder %v1401, 0.0
  %vm2232 = vcmp.ge.f32.partialorder %v1404, 0.0
  %vm2233 = vcmp.ge.f32.partialorder %v1409, 0.0
  %vm2234 = vcmp.ge.f32.partialorder %v1412, 0.0
  %vm2235 = vcmp.ge.f32.partialorder %v1417, 0.0
  %vm2236 = vcmp.ge.f32.partialorder %v1420, 0.0
  %vm2237 = vcmp.ge.f32.partialorder %v1425, 0.0
  %vm2238 = vcmp.ge.f32.partialorder %v1428, 0.0
  %vm2239 = vcmp.ge.f32.partialorder %v1433, 0.0
  %vm2240 = vcmp.ge.f32.partialorder %v1436, 0.0
  %vm2241 = vcmp.ge.f32.partialorder %v1441, 0.0
  %vm2242 = vcmp.ge.f32.partialorder %v1444, 0.0
  %vm2243 = vcmp.ge.f32.partialorder %v1449, 0.0
  %vm2244 = vcmp.ge.f32.partialorder %v1452, 0.0
  %vm2245 = vcmp.ge.f32.partialorder %v1457, 0.0
  %vm2246 = vcmp.ge.f32.partialorder %v1460, 0.0
  %vm2247 = vcmp.ge.f32.partialorder %v1465, 0.0
  %vm2248 = vcmp.ge.f32.partialorder %v1468, 0.0
  %vm2249 = vcmp.ge.f32.partialorder %v1473, 0.0
  %vm2250 = vcmp.ge.f32.partialorder %v1476, 0.0
  %vm2251 = vcmp.ge.f32.partialorder %v1481, 0.0
  %vm2252 = vcmp.ge.f32.partialorder %v1484, 0.0
  %vm2253 = vcmp.ge.f32.partialorder %v1489, 0.0
  %vm2254 = vcmp.ge.f32.partialorder %v1492, 0.0
  %vm2255 = vcmp.ge.f32.partialorder %v1497, 0.0
  %vm2256 = vcmp.ge.f32.partialorder %v1500, 0.0
  %vm2257 = vcmp.ge.f32.partialorder %v1505, 0.0
  %vm2258 = vcmp.ge.f32.partialorder %v1508, 0.0
  %vm2259 = vcmp.ge.f32.partialorder %v1513, 0.0
  %vm2260 = vcmp.ge.f32.partialorder %v1516, 0.0
  %vm2261 = vcmp.ge.f32.partialorder %v1521, 0.0
  %vm2262 = vcmp.ge.f32.partialorder %v1524, 0.0
  %vm2263 = vcmp.ge.f32.partialorder %v1529, 0.0
  %vm2264 = vcmp.ge.f32.partialorder %v1532, 0.0
  %vm2265 = vcmp.ge.f32.partialorder %v1537, 0.0
  %vm2266 = vcmp.ge.f32.partialorder %v1540, 0.0
  %vm2267 = vcmp.ge.f32.partialorder %v1545, 0.0
  %vm2268 = vcmp.ge.f32.partialorder %v1548, 0.0
  %vm2269 = vcmp.ge.f32.partialorder %v1553, 0.0
  %vm2270 = vcmp.ge.f32.partialorder %v1556, 0.0
  %vm2271 = vcmp.ge.f32.partialorder %v1561, 0.0
  %vm2272 = vcmp.ge.f32.partialorder %v1564, 0.0
  %vm2273 = vcmp.ge.f32.partialorder %v1569, 0.0
  %vm2274 = vcmp.ge.f32.partialorder %v1572, 0.0
  %vm2275 = vcmp.ge.f32.partialorder %v1577, 0.0
  %vm2276 = vcmp.ge.f32.partialorder %v1580, 0.0
  %vm2277 = vcmp.ge.f32.partialorder %v1585, 0.0
  %vm2278 = vcmp.ge.f32.partialorder %v1588, 0.0
  %vm2279 = vcmp.ge.f32.partialorder %v1593, 0.0
  %vm2280 = vcmp.ge.f32.partialorder %v1596, 0.0
  %vm2281 = vcmp.ge.f32.partialorder %v1601, 0.0
  %vm2282 = vcmp.ge.f32.partialorder %v1604, 0.0
  %vm2283 = vcmp.ge.f32.partialorder %v1609, 0.0
  %vm2284 = vcmp.ge.f32.partialorder %v1612, 0.0
  %vm2285 = vcmp.ge.f32.partialorder %v1617, 0.0
  %vm2286 = vcmp.ge.f32.partialorder %v1620, 0.0
  %vm2287 = vcmp.ge.f32.partialorder %v1625, 0.0
  %vm2288 = vcmp.ge.f32.partialorder %v1628, 0.0
  %vm2289 = vcmp.ge.f32.partialorder %v1633, 0.0
  %vm2290 = vcmp.ge.f32.partialorder %v1636, 0.0
  %vm2291 = vcmp.ge.f32.partialorder %v1641, 0.0
  %vm2292 = vcmp.ge.f32.partialorder %v1644, 0.0
  %vm2293 = vcmp.ge.f32.partialorder %v1649, 0.0
  %vm2294 = vcmp.ge.f32.partialorder %v1652, 0.0
  %vm2295 = vcmp.ge.f32.partialorder %v1657, 0.0
  %vm2296 = vcmp.ge.f32.partialorder %v1660, 0.0
  %vm2297 = vcmp.ge.f32.partialorder %v1665, 0.0
  %vm2298 = vcmp.ge.f32.partialorder %v1668, 0.0
  %vm2299 = vcmp.ge.f32.partialorder %v1673, 0.0
  %vm2300 = vcmp.ge.f32.partialorder %v1676, 0.0
  %vm2301 = vcmp.ge.f32.partialorder %v1681, 0.0
  %vm2302 = vcmp.ge.f32.partialorder %v1684, 0.0
  %vm2303 = vcmp.ge.f32.partialorder %v1689, 0.0
  %vm2304 = vcmp.ge.f32.partialorder %v1692, 0.0
  %vm2305 = vcmp.ge.f32.partialorder %v1697, 0.0
  %vm2306 = vcmp.ge.f32.partialorder %v1700, 0.0
  %vm2307 = vcmp.ge.f32.partialorder %v1705, 0.0
  %vm2308 = vcmp.ge.f32.partialorder %v1708, 0.0
  %vm2309 = vcmp.ge.f32.partialorder %v1713, 0.0
  %vm2310 = vcmp.ge.f32.partialorder %v1716, 0.0
  %vm2311 = vcmp.ge.f32.partialorder %v1721, 0.0
  %vm2312 = vcmp.ge.f32.partialorder %v1724, 0.0
  %vm2313 = vcmp.ge.f32.partialorder %v1729, 0.0
  %vm2314 = vcmp.ge.f32.partialorder %v1732, 0.0
  %vm2315 = vcmp.ge.f32.partialorder %v1737, 0.0
  %vm2316 = vcmp.ge.f32.partialorder %v1740, 0.0
  %vm2317 = vcmp.ge.f32.partialorder %v1745, 0.0
  %vm2318 = vcmp.ge.f32.partialorder %v1748, 0.0
  %vm2319 = vcmp.ge.f32.partialorder %v1753, 0.0
  %vm2320 = vcmp.ge.f32.partialorder %v1756, 0.0
  %vm2321 = vcmp.ge.f32.partialorder %v1761, 0.0
  %vm2322 = vcmp.ge.f32.partialorder %v1764, 0.0
  %vm2323 = vcmp.ge.f32.partialorder %v1769, 0.0
  %vm2324 = vcmp.ge.f32.partialorder %v1772, 0.0
  %vm2325 = vcmp.ge.f32.partialorder %v1777, 0.0
  %vm2326 = vcmp.ge.f32.partialorder %v1780, 0.0
  %vm2327 = vcmp.ge.f32.partialorder %v1785, 0.0
  %vm2328 = vcmp.ge.f32.partialorder %v1788, 0.0
  %vm2329 = vcmp.ge.f32.partialorder %v1793, 0.0
  %vm2330 = vcmp.ge.f32.partialorder %v1796, 0.0
  %vm2331 = vcmp.ge.f32.partialorder %v1801, 0.0
  %vm2332 = vcmp.ge.f32.partialorder %v1804, 0.0
  %vm2333 = vcmp.ge.f32.partialorder %v1809, 0.0
  %vm2334 = vcmp.ge.f32.partialorder %v1812, 0.0
  %vm2335 = vcmp.ge.f32.partialorder %v1817, 0.0
  %vm2336 = vcmp.ge.f32.partialorder %v1820, 0.0
  %vm2337 = vcmp.ge.f32.partialorder %v1825, 0.0
  %vm2338 = vcmp.ge.f32.partialorder %v1828, 0.0
  %vm2339 = vcmp.ge.f32.partialorder %v1833, 0.0
  %vm2340 = vcmp.ge.f32.partialorder %v1836, 0.0
  %vm2341 = vcmp.ge.f32.partialorder %v1841, 0.0
  %vm2342 = vcmp.ge.f32.partialorder %v1844, 0.0
  %vm2343 = vcmp.ge.f32.partialorder %v1849, 0.0
  %vm2344 = vcmp.ge.f32.partialorder %v1852, 0.0
  %vm2345 = vcmp.ge.f32.partialorder %v1857, 0.0
  %vm2346 = vcmp.ge.f32.partialorder %v1860, 0.0
  %vm2347 = vcmp.ge.f32.partialorder %v1865, 0.0
  %vm2348 = vcmp.ge.f32.partialorder %v1868, 0.0
  %vm2349 = vcmp.ge.f32.partialorder %v1873, 0.0
  %vm2350 = vcmp.ge.f32.partialorder %v1876, 0.0
  %vm2351 = vcmp.ge.f32.partialorder %v1881, 0.0
  %vm2352 = vcmp.ge.f32.partialorder %v1884, 0.0
  %vm2353 = vcmp.ge.f32.partialorder %v1889, 0.0
  %vm2354 = vcmp.ge.f32.partialorder %v1892, 0.0
  %vm2355 = vcmp.ge.f32.partialorder %v1897, 0.0
  %vm2356 = vcmp.ge.f32.partialorder %v1900, 0.0
  %vm2357 = vcmp.ge.f32.partialorder %v1905, 0.0
  %vm2358 = vcmp.ge.f32.partialorder %v1908, 0.0
  %vm2359 = vcmp.ge.f32.partialorder %v1913, 0.0
  %vm2360 = vcmp.ge.f32.partialorder %v1916, 0.0
  %vm2361 = vcmp.ge.f32.partialorder %v1921, 0.0
  %vm2362 = vcmp.ge.f32.partialorder %v1924, 0.0
  %vm2363 = vcmp.ge.f32.partialorder %v1929, 0.0
  %vm2364 = vcmp.ge.f32.partialorder %v1932, 0.0
  %vm2365 = vcmp.ge.f32.partialorder %v1937, 0.0
  %vm2366 = vcmp.ge.f32.partialorder %v1940, 0.0
  %vm2367 = vcmp.ge.f32.partialorder %v1945, 0.0
  %vm2368 = vcmp.ge.f32.partialorder %v1948, 0.0
  %vm2369 = vcmp.ge.f32.partialorder %v1953, 0.0
  %vm2370 = vcmp.ge.f32.partialorder %v1956, 0.0
  %vm2371 = vcmp.ge.f32.partialorder %v1961, 0.0
  %vm2372 = vcmp.ge.f32.partialorder %v1964, 0.0
  %vm2373 = vcmp.ge.f32.partialorder %v1969, 0.0
  %vm2374 = vcmp.ge.f32.partialorder %v1972, 0.0
  %vm2375 = vcmp.ge.f32.partialorder %v1977, 0.0
  %vm2376 = vcmp.ge.f32.partialorder %v1980, 0.0
  %vm2377 = vcmp.ge.f32.partialorder %v1985, 0.0
  %vm2378 = vcmp.ge.f32.partialorder %v1988, 0.0
  %vm2379 = vcmp.ge.f32.partialorder %v1993, 0.0
  %vm2380 = vcmp.ge.f32.partialorder %v1996, 0.0
  %vm2381 = vcmp.ge.f32.partialorder %v2001, 0.0
  %vm2382 = vcmp.ge.f32.partialorder %v2004, 0.0
  %vm2383 = vcmp.ge.f32.partialorder %v2009, 0.0
  %vm2384 = vcmp.ge.f32.partialorder %v2012, 0.0
  %vm2385 = vcmp.ge.f32.partialorder %v2017, 0.0
  %vm2386 = vcmp.ge.f32.partialorder %v2020, 0.0
  %vm2387 = vcmp.ge.f32.partialorder %v2025, 0.0
  %vm2388 = vcmp.ge.f32.partialorder %v2028, 0.0
  %vm2389 = vcmp.ge.f32.partialorder %v2033, 0.0
  %vm2390 = vcmp.ge.f32.partialorder %v2036, 0.0
  %vm2391 = vcmp.ge.f32.partialorder %v2041, 0.0
  %vm2392 = vcmp.ge.f32.partialorder %v2044, 0.0
  %vm2393 = vcmp.ge.f32.partialorder %v2049, 0.0
  %vm2394 = vcmp.ge.f32.partialorder %v2052, 0.0
  %vm2395 = vcmp.ge.f32.partialorder %v2057, 0.0
  %vm2396 = vcmp.ge.f32.partialorder %v2060, 0.0
  %vm2397 = vcmp.ge.f32.partialorder %v2065, 0.0
  %vm2398 = vcmp.ge.f32.partialorder %v2068, 0.0
  %vm2399 = vcmp.ge.f32.partialorder %v2073, 0.0
  %vm2400 = vcmp.ge.f32.partialorder %v2076, 0.0
  %vm2401 = vcmp.ge.f32.partialorder %v2081, 0.0
  %vm2402 = vcmp.ge.f32.partialorder %v2084, 0.0
  %vm2403 = vcmp.ge.f32.partialorder %v2089, 0.0
  %vm2404 = vcmp.ge.f32.partialorder %v2092, 0.0
  %vm2405 = vcmp.ge.f32.partialorder %v2097, 0.0
  %vm2406 = vcmp.ge.f32.partialorder %v2100, 0.0
  %vm2407 = vcmp.ge.f32.partialorder %v2105, 0.0
  %vm2408 = vcmp.ge.f32.partialorder %v2108, 0.0
  %vm2409 = vcmp.ge.f32.partialorder %v2113, 0.0
  %vm2410 = vcmp.ge.f32.partialorder %v2116, 0.0
  %vm2411 = vcmp.ge.f32.partialorder %v2121, 0.0
  %vm2412 = vcmp.ge.f32.partialorder %v2124, 0.0
  %vm2413 = vcmp.ge.f32.partialorder %v2129, 0.0
  %vm2414 = vcmp.ge.f32.partialorder %v2132, 0.0
  %vm2415 = vcmp.ge.f32.partialorder %v2137, 0.0
  %vm2416 = vcmp.ge.f32.partialorder %v2140, 0.0
  %vm2417 = vcmp.ge.f32.partialorder %v2145, 0.0
  %vm2418 = vcmp.ge.f32.partialorder %v2148, 0.0
  %vm2419 = vcmp.ge.f32.partialorder %v2153, 0.0
  %vm2420 = vcmp.ge.f32.partialorder %v2156, 0.0
  %vm2421 = vcmp.ge.f32.partialorder %v2161, 0.0
  %vm2422 = vcmp.ge.f32.partialorder %v2164, 0.0
  %v2423 = vmul.f32 %v1145, 0.2
  %v2424 = vmul.f32 %v1148, 0.2
  %v2425 = vmul.f32 %v1153, 0.2
  %v2426 = vmul.f32 %v1156, 0.2
  %v2427 = vmul.f32 %v1161, 0.2
  %v2428 = vmul.f32 %v1164, 0.2
  %v2429 = vmul.f32 %v1169, 0.2
  %v2430 = vmul.f32 %v1172, 0.2
  %v2431 = vmul.f32 %v1177, 0.2
  %v2432 = vmul.f32 %v1180, 0.2
  %v2433 = vmul.f32 %v1185, 0.2
  %v2434 = vmul.f32 %v1188, 0.2
  %v2435 = vmul.f32 %v1193, 0.2
  %v2436 = vmul.f32 %v1196, 0.2
  %v2437 = vmul.f32 %v1201, 0.2
  %v2438 = vmul.f32 %v1204, 0.2
  %v2439 = vmul.f32 %v1209, 0.2
  %v2440 = vmul.f32 %v1212, 0.2
  %v2441 = vmul.f32 %v1217, 0.2
  %v2442 = vmul.f32 %v1220, 0.2
  %v2443 = vmul.f32 %v1225, 0.2
  %v2444 = vmul.f32 %v1228, 0.2
  %v2445 = vmul.f32 %v1233, 0.2
  %v2446 = vmul.f32 %v1236, 0.2
  %v2447 = vmul.f32 %v1241, 0.2
  %v2448 = vmul.f32 %v1244, 0.2
  %v2449 = vmul.f32 %v1249, 0.2
  %v2450 = vmul.f32 %v1252, 0.2
  %v2451 = vmul.f32 %v1257, 0.2
  %v2452 = vmul.f32 %v1260, 0.2
  %v2453 = vmul.f32 %v1265, 0.2
  %v2454 = vmul.f32 %v1268, 0.2
  %v2455 = vmul.f32 %v1273, 0.2
  %v2456 = vmul.f32 %v1276, 0.2
  %v2457 = vmul.f32 %v1281, 0.2
  %v2458 = vmul.f32 %v1284, 0.2
  %v2459 = vmul.f32 %v1289, 0.2
  %v2460 = vmul.f32 %v1292, 0.2
  %v2461 = vmul.f32 %v1297, 0.2
  %v2462 = vmul.f32 %v1300, 0.2
  %v2463 = vmul.f32 %v1305, 0.2
  %v2464 = vmul.f32 %v1308, 0.2
  %v2465 = vmul.f32 %v1313, 0.2
  %v2466 = vmul.f32 %v1316, 0.2
  %v2467 = vmul.f32 %v1321, 0.2
  %v2468 = vmul.f32 %v1324, 0.2
  %v2469 = vmul.f32 %v1329, 0.2
  %v2470 = vmul.f32 %v1332, 0.2
  %v2471 = vmul.f32 %v1337, 0.2
  %v2472 = vmul.f32 %v1340, 0.2
  %v2473 = vmul.f32 %v1345, 0.2
  %v2474 = vmul.f32 %v1348, 0.2
  %v2475 = vmul.f32 %v1353, 0.2
  %v2476 = vmul.f32 %v1356, 0.2
  %v2477 = vmul.f32 %v1361, 0.2
  %v2478 = vmul.f32 %v1364, 0.2
  %v2479 = vmul.f32 %v1369, 0.2
  %v2480 = vmul.f32 %v1372, 0.2
  %v2481 = vmul.f32 %v1377, 0.2
  %v2482 = vmul.f32 %v1380, 0.2
  %v2483 = vmul.f32 %v1385, 0.2
  %v2484 = vmul.f32 %v1388, 0.2
  %v2485 = vmul.f32 %v1393, 0.2
  %v2486 = vmul.f32 %v1396, 0.2
  %v2487 = vmul.f32 %v1401, 0.2
  %v2488 = vmul.f32 %v1404, 0.2
  %v2489 = vmul.f32 %v1409, 0.2
  %v2490 = vmul.f32 %v1412, 0.2
  %v2491 = vmul.f32 %v1417, 0.2
  %v2492 = vmul.f32 %v1420, 0.2
  %v2493 = vmul.f32 %v1425, 0.2
  %v2494 = vmul.f32 %v1428, 0.2
  %v2495 = vmul.f32 %v1433, 0.2
  %v2496 = vmul.f32 %v1436, 0.2
  %v2497 = vmul.f32 %v1441, 0.2
  %v2498 = vmul.f32 %v1444, 0.2
  %v2499 = vmul.f32 %v1449, 0.2
  %v2500 = vmul.f32 %v1452, 0.2
  %v2501 = vmul.f32 %v1457, 0.2
  %v2502 = vmul.f32 %v1460, 0.2
  %v2503 = vmul.f32 %v1465, 0.2
  %v2504 = vmul.f32 %v1468, 0.2
  %v2505 = vmul.f32 %v1473, 0.2
  %v2506 = vmul.f32 %v1476, 0.2
  %v2507 = vmul.f32 %v1481, 0.2
  %v2508 = vmul.f32 %v1484, 0.2
  %v2509 = vmul.f32 %v1489, 0.2
  %v2510 = vmul.f32 %v1492, 0.2
  %v2511 = vmul.f32 %v1497, 0.2
  %v2512 = vmul.f32 %v1500, 0.2
  %v2513 = vmul.f32 %v1505, 0.2
  %v2514 = vmul.f32 %v1508, 0.2
  %v2515 = vmul.f32 %v1513, 0.2
  %v2516 = vmul.f32 %v1516, 0.2
  %v2517 = vmul.f32 %v1521, 0.2
  %v2518 = vmul.f32 %v1524, 0.2
  %v2519 = vmul.f32 %v1529, 0.2
  %v2520 = vmul.f32 %v1532, 0.2
  %v2521 = vmul.f32 %v1537, 0.2
  %v2522 = vmul.f32 %v1540, 0.2
  %v2523 = vmul.f32 %v1545, 0.2
  %v2524 = vmul.f32 %v1548, 0.2
  %v2525 = vmul.f32 %v1553, 0.2
  %v2526 = vmul.f32 %v1556, 0.2
  %v2527 = vmul.f32 %v1561, 0.2
  %v2528 = vmul.f32 %v1564, 0.2
  %v2529 = vmul.f32 %v1569, 0.2
  %v2530 = vmul.f32 %v1572, 0.2
  %v2531 = vmul.f32 %v1577, 0.2
  %v2532 = vmul.f32 %v1580, 0.2
  %v2533 = vmul.f32 %v1585, 0.2
  %v2534 = vmul.f32 %v1588, 0.2
  %v2535 = vmul.f32 %v1593, 0.2
  %v2536 = vmul.f32 %v1596, 0.2
  %v2537 = vmul.f32 %v1601, 0.2
  %v2538 = vmul.f32 %v1604, 0.2
  %v2539 = vmul.f32 %v1609, 0.2
  %v2540 = vmul.f32 %v1612, 0.2
  %v2541 = vmul.f32 %v1617, 0.2
  %v2542 = vmul.f32 %v1620, 0.2
  %v2543 = vmul.f32 %v1625, 0.2
  %v2544 = vmul.f32 %v1628, 0.2
  %v2545 = vmul.f32 %v1633, 0.2
  %v2546 = vmul.f32 %v1636, 0.2
  %v2547 = vmul.f32 %v1641, 0.2
  %v2548 = vmul.f32 %v1644, 0.2
  %v2549 = vmul.f32 %v1649, 0.2
  %v2550 = vmul.f32 %v1652, 0.2
  %v2551 = vmul.f32 %v1657, 0.2
  %v2552 = vmul.f32 %v1660, 0.2
  %v2553 = vmul.f32 %v1665, 0.2
  %v2554 = vmul.f32 %v1668, 0.2
  %v2555 = vmul.f32 %v1673, 0.2
  %v2556 = vmul.f32 %v1676, 0.2
  %v2557 = vmul.f32 %v1681, 0.2
  %v2558 = vmul.f32 %v1684, 0.2
  %v2559 = vmul.f32 %v1689, 0.2
  %v2560 = vmul.f32 %v1692, 0.2
  %v2561 = vmul.f32 %v1697, 0.2
  %v2562 = vmul.f32 %v1700, 0.2
  %v2563 = vmul.f32 %v1705, 0.2
  %v2564 = vmul.f32 %v1708, 0.2
  %v2565 = vmul.f32 %v1713, 0.2
  %v2566 = vmul.f32 %v1716, 0.2
  %v2567 = vmul.f32 %v1721, 0.2
  %v2568 = vmul.f32 %v1724, 0.2
  %v2569 = vmul.f32 %v1729, 0.2
  %v2570 = vmul.f32 %v1732, 0.2
  %v2571 = vmul.f32 %v1737, 0.2
  %v2572 = vmul.f32 %v1740, 0.2
  %v2573 = vmul.f32 %v1745, 0.2
  %v2574 = vmul.f32 %v1748, 0.2
  %v2575 = vmul.f32 %v1753, 0.2
  %v2576 = vmul.f32 %v1756, 0.2
  %v2577 = vmul.f32 %v1761, 0.2
  %v2578 = vmul.f32 %v1764, 0.2
  %v2579 = vmul.f32 %v1769, 0.2
  %v2580 = vmul.f32 %v1772, 0.2
  %v2581 = vmul.f32 %v1777, 0.2
  %v2582 = vmul.f32 %v1780, 0.2
  %v2583 = vmul.f32 %v1785, 0.2
  %v2584 = vmul.f32 %v1788, 0.2
  %v2585 = vmul.f32 %v1793, 0.2
  %v2586 = vmul.f32 %v1796, 0.2
  %v2587 = vmul.f32 %v1801, 0.2
  %v2588 = vmul.f32 %v1804, 0.2
  %v2589 = vmul.f32 %v1809, 0.2
  %v2590 = vmul.f32 %v1812, 0.2
  %v2591 = vmul.f32 %v1817, 0.2
  %v2592 = vmul.f32 %v1820, 0.2
  %v2593 = vmul.f32 %v1825, 0.2
  %v2594 = vmul.f32 %v1828, 0.2
  %v2595 = vmul.f32 %v1833, 0.2
  %v2596 = vmul.f32 %v1836, 0.2
  %v2597 = vmul.f32 %v1841, 0.2
  %v2598 = vmul.f32 %v1844, 0.2
  %v2599 = vmul.f32 %v1849, 0.2
  %v2600 = vmul.f32 %v1852, 0.2
  %v2601 = vmul.f32 %v1857, 0.2
  %v2602 = vmul.f32 %v1860, 0.2
  %v2603 = vmul.f32 %v1865, 0.2
  %v2604 = vmul.f32 %v1868, 0.2
  %v2605 = vmul.f32 %v1873, 0.2
  %v2606 = vmul.f32 %v1876, 0.2
  %v2607 = vmul.f32 %v1881, 0.2
  %v2608 = vmul.f32 %v1884, 0.2
  %v2609 = vmul.f32 %v1889, 0.2
  %v2610 = vmul.f32 %v1892, 0.2
  %v2611 = vmul.f32 %v1897, 0.2
  %v2612 = vmul.f32 %v1900, 0.2
  %v2613 = vmul.f32 %v1905, 0.2
  %v2614 = vmul.f32 %v1908, 0.2
  %v2615 = vmul.f32 %v1913, 0.2
  %v2616 = vmul.f32 %v1916, 0.2
  %v2617 = vmul.f32 %v1921, 0.2
  %v2618 = vmul.f32 %v1924, 0.2
  %v2619 = vmul.f32 %v1929, 0.2
  %v2620 = vmul.f32 %v1932, 0.2
  %v2621 = vmul.f32 %v1937, 0.2
  %v2622 = vmul.f32 %v1940, 0.2
  %v2623 = vmul.f32 %v1945, 0.2
  %v2624 = vmul.f32 %v1948, 0.2
  %v2625 = vmul.f32 %v1953, 0.2
  %v2626 = vmul.f32 %v1956, 0.2
  %v2627 = vmul.f32 %v1961, 0.2
  %v2628 = vmul.f32 %v1964, 0.2
  %v2629 = vmul.f32 %v1969, 0.2
  %v2630 = vmul.f32 %v1972, 0.2
  %v2631 = vmul.f32 %v1977, 0.2
  %v2632 = vmul.f32 %v1980, 0.2
  %v2633 = vmul.f32 %v1985, 0.2
  %v2634 = vmul.f32 %v1988, 0.2
  %v2635 = vmul.f32 %v1993, 0.2
  %v2636 = vmul.f32 %v1996, 0.2
  %v2637 = vmul.f32 %v2001, 0.2
  %v2638 = vmul.f32 %v2004, 0.2
  %v2639 = vmul.f32 %v2009, 0.2
  %v2640 = vmul.f32 %v2012, 0.2
  %v2641 = vmul.f32 %v2017, 0.2
  %v2642 = vmul.f32 %v2020, 0.2
  %v2643 = vmul.f32 %v2025, 0.2
  %v2644 = vmul.f32 %v2028, 0.2
  %v2645 = vmul.f32 %v2033, 0.2
  %v2646 = vmul.f32 %v2036, 0.2
  %v2647 = vmul.f32 %v2041, 0.2
  %v2648 = vmul.f32 %v2044, 0.2
  %v2649 = vmul.f32 %v2049, 0.2
  %v2650 = vmul.f32 %v2052, 0.2
  %v2651 = vmul.f32 %v2057, 0.2
  %v2652 = vmul.f32 %v2060, 0.2
  %v2653 = vmul.f32 %v2065, 0.2
  %v2654 = vmul.f32 %v2068, 0.2
  %v2655 = vmul.f32 %v2073, 0.2
  %v2656 = vmul.f32 %v2076, 0.2
  %v2657 = vmul.f32 %v2081, 0.2
  %v2658 = vmul.f32 %v2084, 0.2
  %v2659 = vmul.f32 %v2089, 0.2
  %v2660 = vmul.f32 %v2092, 0.2
  %v2661 = vmul.f32 %v2097, 0.2
  %v2662 = vmul.f32 %v2100, 0.2
  %v2663 = vmul.f32 %v2105, 0.2
  %v2664 = vmul.f32 %v2108, 0.2
  %v2665 = vmul.f32 %v2113, 0.2
  %v2666 = vmul.f32 %v2116, 0.2
  %v2667 = vmul.f32 %v2121, 0.2
  %v2668 = vmul.f32 %v2124, 0.2
  %v2669 = vmul.f32 %v2129, 0.2
  %v2670 = vmul.f32 %v2132, 0.2
  %v2671 = vmul.f32 %v2137, 0.2
  %v2672 = vmul.f32 %v2140, 0.2
  %v2673 = vmul.f32 %v2145, 0.2
  %v2674 = vmul.f32 %v2148, 0.2
  %v2675 = vmul.f32 %v2153, 0.2
  %v2676 = vmul.f32 %v2156, 0.2
  %v2677 = vmul.f32 %v2161, 0.2
  %v2678 = vmul.f32 %v2164, 0.2
  %v2679 = vsel %vm2167, %v1145, %v2423
  %v2680 = vsel %vm2168, %v1148, %v2424
  %v2681 = vsel %vm2169, %v1153, %v2425
  %v2682 = vsel %vm2170, %v1156, %v2426
  %v2683 = vsel %vm2171, %v1161, %v2427
  %v2684 = vsel %vm2172, %v1164, %v2428
  %v2685 = vsel %vm2173, %v1169, %v2429
  %v2686 = vsel %vm2174, %v1172, %v2430
  %v2687 = vsel %vm2175, %v1177, %v2431
  %v2688 = vsel %vm2176, %v1180, %v2432
  %v2689 = vsel %vm2177, %v1185, %v2433
  %v2690 = vsel %vm2178, %v1188, %v2434
  %v2691 = vsel %vm2179, %v1193, %v2435
  %v2692 = vsel %vm2180, %v1196, %v2436
  %v2693 = vsel %vm2181, %v1201, %v2437
  %v2694 = vsel %vm2182, %v1204, %v2438
  %v2695 = vsel %vm2183, %v1209, %v2439
  %v2696 = vsel %vm2184, %v1212, %v2440
  %v2697 = vsel %vm2185, %v1217, %v2441
  %v2698 = vsel %vm2186, %v1220, %v2442
  %v2699 = vsel %vm2187, %v1225, %v2443
  %v2700 = vsel %vm2188, %v1228, %v2444
  %v2701 = vsel %vm2189, %v1233, %v2445
  %v2702 = vsel %vm2190, %v1236, %v2446
  %v2703 = vsel %vm2191, %v1241, %v2447
  %v2704 = vsel %vm2192, %v1244, %v2448
  %v2705 = vsel %vm2193, %v1249, %v2449
  %v2706 = vsel %vm2194, %v1252, %v2450
  %v2707 = vsel %vm2195, %v1257, %v2451
  %v2708 = vsel %vm2196, %v1260, %v2452
  %v2709 = vsel %vm2197, %v1265, %v2453
  %v2710 = vsel %vm2198, %v1268, %v2454
  %v2711 = vsel %vm2199, %v1273, %v2455
  %v2712 = vsel %vm2200, %v1276, %v2456
  %v2713 = vsel %vm2201, %v1281, %v2457
  %v2714 = vsel %vm2202, %v1284, %v2458
  %v2715 = vsel %vm2203, %v1289, %v2459
  %v2716 = vsel %vm2204, %v1292, %v2460
  %v2717 = vsel %vm2205, %v1297, %v2461
  %v2718 = vsel %vm2206, %v1300, %v2462
  %v2719 = vsel %vm2207, %v1305, %v2463
  %v2720 = vsel %vm2208, %v1308, %v2464
  %v2721 = vsel %vm2209, %v1313, %v2465
  %v2722 = vsel %vm2210, %v1316, %v2466
  %v2723 = vsel %vm2211, %v1321, %v2467
  %v2724 = vsel %vm2212, %v1324, %v2468
  %v2725 = vsel %vm2213, %v1329, %v2469
  %v2726 = vsel %vm2214, %v1332, %v2470
  %v2727 = vsel %vm2215, %v1337, %v2471
  %v2728 = vsel %vm2216, %v1340, %v2472
  %v2729 = vsel %vm2217, %v1345, %v2473
  %v2730 = vsel %vm2218, %v1348, %v2474
  %v2731 = vsel %vm2219, %v1353, %v2475
  %v2732 = vsel %vm2220, %v1356, %v2476
  %v2733 = vsel %vm2221, %v1361, %v2477
  %v2734 = vsel %vm2222, %v1364, %v2478
  %v2735 = vsel %vm2223, %v1369, %v2479
  %v2736 = vsel %vm2224, %v1372, %v2480
  %v2737 = vsel %vm2225, %v1377, %v2481
  %v2738 = vsel %vm2226, %v1380, %v2482
  %v2739 = vsel %vm2227, %v1385, %v2483
  %v2740 = vsel %vm2228, %v1388, %v2484
  %v2741 = vsel %vm2229, %v1393, %v2485
  %v2742 = vsel %vm2230, %v1396, %v2486
  %v2743 = vsel %vm2231, %v1401, %v2487
  %v2744 = vsel %vm2232, %v1404, %v2488
  %v2745 = vsel %vm2233, %v1409, %v2489
  %v2746 = vsel %vm2234, %v1412, %v2490
  %v2747 = vsel %vm2235, %v1417, %v2491
  %v2748 = vsel %vm2236, %v1420, %v2492
  %v2749 = vsel %vm2237, %v1425, %v2493
  %v2750 = vsel %vm2238, %v1428, %v2494
  %v2751 = vsel %vm2239, %v1433, %v2495
  %v2752 = vsel %vm2240, %v1436, %v2496
  %v2753 = vsel %vm2241, %v1441, %v2497
  %v2754 = vsel %vm2242, %v1444, %v2498
  %v2755 = vsel %vm2243, %v1449, %v2499
  %v2756 = vsel %vm2244, %v1452, %v2500
  %v2757 = vsel %vm2245, %v1457, %v2501
  %v2758 = vsel %vm2246, %v1460, %v2502
  %v2759 = vsel %vm2247, %v1465, %v2503
  %v2760 = vsel %vm2248, %v1468, %v2504
  %v2761 = vsel %vm2249, %v1473, %v2505
  %v2762 = vsel %vm2250, %v1476, %v2506
  %v2763 = vsel %vm2251, %v1481, %v2507
  %v2764 = vsel %vm2252, %v1484, %v2508
  %v2765 = vsel %vm2253, %v1489, %v2509
  %v2766 = vsel %vm2254, %v1492, %v2510
  %v2767 = vsel %vm2255, %v1497, %v2511
  %v2768 = vsel %vm2256, %v1500, %v2512
  %v2769 = vsel %vm2257, %v1505, %v2513
  %v2770 = vsel %vm2258, %v1508, %v2514
  %v2771 = vsel %vm2259, %v1513, %v2515
  %v2772 = vsel %vm2260, %v1516, %v2516
  %v2773 = vsel %vm2261, %v1521, %v2517
  %v2774 = vsel %vm2262, %v1524, %v2518
  %v2775 = vsel %vm2263, %v1529, %v2519
  %v2776 = vsel %vm2264, %v1532, %v2520
  %v2777 = vsel %vm2265, %v1537, %v2521
  %v2778 = vsel %vm2266, %v1540, %v2522
  %v2779 = vsel %vm2267, %v1545, %v2523
  %v2780 = vsel %vm2268, %v1548, %v2524
  %v2781 = vsel %vm2269, %v1553, %v2525
  %v2782 = vsel %vm2270, %v1556, %v2526
  %v2783 = vsel %vm2271, %v1561, %v2527
  %v2784 = vsel %vm2272, %v1564, %v2528
  %v2785 = vsel %vm2273, %v1569, %v2529
  %v2786 = vsel %vm2274, %v1572, %v2530
  %v2787 = vsel %vm2275, %v1577, %v2531
  %v2788 = vsel %vm2276, %v1580, %v2532
  %v2789 = vsel %vm2277, %v1585, %v2533
  %v2790 = vsel %vm2278, %v1588, %v2534
  %v2791 = vsel %vm2279, %v1593, %v2535
  %v2792 = vsel %vm2280, %v1596, %v2536
  %v2793 = vsel %vm2281, %v1601, %v2537
  %v2794 = vsel %vm2282, %v1604, %v2538
  %v2795 = vsel %vm2283, %v1609, %v2539
  %v2796 = vsel %vm2284, %v1612, %v2540
  %v2797 = vsel %vm2285, %v1617, %v2541
  %v2798 = vsel %vm2286, %v1620, %v2542
  %v2799 = vsel %vm2287, %v1625, %v2543
  %v2800 = vsel %vm2288, %v1628, %v2544
  %v2801 = vsel %vm2289, %v1633, %v2545
  %v2802 = vsel %vm2290, %v1636, %v2546
  %v2803 = vsel %vm2291, %v1641, %v2547
  %v2804 = vsel %vm2292, %v1644, %v2548
  %v2805 = vsel %vm2293, %v1649, %v2549
  %v2806 = vsel %vm2294, %v1652, %v2550
  %v2807 = vsel %vm2295, %v1657, %v2551
  %v2808 = vsel %vm2296, %v1660, %v2552
  %v2809 = vsel %vm2297, %v1665, %v2553
  %v2810 = vsel %vm2298, %v1668, %v2554
  %v2811 = vsel %vm2299, %v1673, %v2555
  %v2812 = vsel %vm2300, %v1676, %v2556
  %v2813 = vsel %vm2301, %v1681, %v2557
  %v2814 = vsel %vm2302, %v1684, %v2558
  %v2815 = vsel %vm2303, %v1689, %v2559
  %v2816 = vsel %vm2304, %v1692, %v2560
  %v2817 = vsel %vm2305, %v1697, %v2561
  %v2818 = vsel %vm2306, %v1700, %v2562
  %v2819 = vsel %vm2307, %v1705, %v2563
  %v2820 = vsel %vm2308, %v1708, %v2564
  %v2821 = vsel %vm2309, %v1713, %v2565
  %v2822 = vsel %vm2310, %v1716, %v2566
  %v2823 = vsel %vm2311, %v1721, %v2567
  %v2824 = vsel %vm2312, %v1724, %v2568
  %v2825 = vsel %vm2313, %v1729, %v2569
  %v2826 = vsel %vm2314, %v1732, %v2570
  %v2827 = vsel %vm2315, %v1737, %v2571
  %v2828 = vsel %vm2316, %v1740, %v2572
  %v2829 = vsel %vm2317, %v1745, %v2573
  %v2830 = vsel %vm2318, %v1748, %v2574
  %v2831 = vsel %vm2319, %v1753, %v2575
  %v2832 = vsel %vm2320, %v1756, %v2576
  %v2833 = vsel %vm2321, %v1761, %v2577
  %v2834 = vsel %vm2322, %v1764, %v2578
  %v2835 = vsel %vm2323, %v1769, %v2579
  %v2836 = vsel %vm2324, %v1772, %v2580
  %v2837 = vsel %vm2325, %v1777, %v2581
  %v2838 = vsel %vm2326, %v1780, %v2582
  %v2839 = vsel %vm2327, %v1785, %v2583
  %v2840 = vsel %vm2328, %v1788, %v2584
  %v2841 = vsel %vm2329, %v1793, %v2585
  %v2842 = vsel %vm2330, %v1796, %v2586
  %v2843 = vsel %vm2331, %v1801, %v2587
  %v2844 = vsel %vm2332, %v1804, %v2588
  %v2845 = vsel %vm2333, %v1809, %v2589
  %v2846 = vsel %vm2334, %v1812, %v2590
  %v2847 = vsel %vm2335, %v1817, %v2591
  %v2848 = vsel %vm2336, %v1820, %v2592
  %v2849 = vsel %vm2337, %v1825, %v2593
  %v2850 = vsel %vm2338, %v1828, %v2594
  %v2851 = vsel %vm2339, %v1833, %v2595
  %v2852 = vsel %vm2340, %v1836, %v2596
  %v2853 = vsel %vm2341, %v1841, %v2597
  %v2854 = vsel %vm2342, %v1844, %v2598
  %v2855 = vsel %vm2343, %v1849, %v2599
  %v2856 = vsel %vm2344, %v1852, %v2600
  %v2857 = vsel %vm2345, %v1857, %v2601
  %v2858 = vsel %vm2346, %v1860, %v2602
  %v2859 = vsel %vm2347, %v1865, %v2603
  %v2860 = vsel %vm2348, %v1868, %v2604
  %v2861 = vsel %vm2349, %v1873, %v2605
  %v2862 = vsel %vm2350, %v1876, %v2606
  %v2863 = vsel %vm2351, %v1881, %v2607
  %v2864 = vsel %vm2352, %v1884, %v2608
  %v2865 = vsel %vm2353, %v1889, %v2609
  %v2866 = vsel %vm2354, %v1892, %v2610
  %v2867 = vsel %vm2355, %v1897, %v2611
  %v2868 = vsel %vm2356, %v1900, %v2612
  %v2869 = vsel %vm2357, %v1905, %v2613
  %v2870 = vsel %vm2358, %v1908, %v2614
  %v2871 = vsel %vm2359, %v1913, %v2615
  %v2872 = vsel %vm2360, %v1916, %v2616
  %v2873 = vsel %vm2361, %v1921, %v2617
  %v2874 = vsel %vm2362, %v1924, %v2618
  %v2875 = vsel %vm2363, %v1929, %v2619
  %v2876 = vsel %vm2364, %v1932, %v2620
  %v2877 = vsel %vm2365, %v1937, %v2621
  %v2878 = vsel %vm2366, %v1940, %v2622
  %v2879 = vsel %vm2367, %v1945, %v2623
  %v2880 = vsel %vm2368, %v1948, %v2624
  %v2881 = vsel %vm2369, %v1953, %v2625
  %v2882 = vsel %vm2370, %v1956, %v2626
  %v2883 = vsel %vm2371, %v1961, %v2627
  %v2884 = vsel %vm2372, %v1964, %v2628
  %v2885 = vsel %vm2373, %v1969, %v2629
  %v2886 = vsel %vm2374, %v1972, %v2630
  %v2887 = vsel %vm2375, %v1977, %v2631
  %v2888 = vsel %vm2376, %v1980, %v2632
  %v2889 = vsel %vm2377, %v1985, %v2633
  %v2890 = vsel %vm2378, %v1988, %v2634
  %v2891 = vsel %vm2379, %v1993, %v2635
  %v2892 = vsel %vm2380, %v1996, %v2636
  %v2893 = vsel %vm2381, %v2001, %v2637
  %v2894 = vsel %vm2382, %v2004, %v2638
  %v2895 = vsel %vm2383, %v2009, %v2639
  %v2896 = vsel %vm2384, %v2012, %v2640
  %v2897 = vsel %vm2385, %v2017, %v2641
  %v2898 = vsel %vm2386, %v2020, %v2642
  %v2899 = vsel %vm2387, %v2025, %v2643
  %v2900 = vsel %vm2388, %v2028, %v2644
  %v2901 = vsel %vm2389, %v2033, %v2645
  %v2902 = vsel %vm2390, %v2036, %v2646
  %v2903 = vsel %vm2391, %v2041, %v2647
  %v2904 = vsel %vm2392, %v2044, %v2648
  %v2905 = vsel %vm2393, %v2049, %v2649
  %v2906 = vsel %vm2394, %v2052, %v2650
  %v2907 = vsel %vm2395, %v2057, %v2651
  %v2908 = vsel %vm2396, %v2060, %v2652
  %v2909 = vsel %vm2397, %v2065, %v2653
  %v2910 = vsel %vm2398, %v2068, %v2654
  %v2911 = vsel %vm2399, %v2073, %v2655
  %v2912 = vsel %vm2400, %v2076, %v2656
  %v2913 = vsel %vm2401, %v2081, %v2657
  %v2914 = vsel %vm2402, %v2084, %v2658
  %v2915 = vsel %vm2403, %v2089, %v2659
  %v2916 = vsel %vm2404, %v2092, %v2660
  %v2917 = vsel %vm2405, %v2097, %v2661
  %v2918 = vsel %vm2406, %v2100, %v2662
  %v2919 = vsel %vm2407, %v2105, %v2663
  %v2920 = vsel %vm2408, %v2108, %v2664
  %v2921 = vsel %vm2409, %v2113, %v2665
  %v2922 = vsel %vm2410, %v2116, %v2666
  %v2923 = vsel %vm2411, %v2121, %v2667
  %v2924 = vsel %vm2412, %v2124, %v2668
  %v2925 = vsel %vm2413, %v2129, %v2669
  %v2926 = vsel %vm2414, %v2132, %v2670
  %v2927 = vsel %vm2415, %v2137, %v2671
  %v2928 = vsel %vm2416, %v2140, %v2672
  %v2929 = vsel %vm2417, %v2145, %v2673
  %v2930 = vsel %vm2418, %v2148, %v2674
  %v2931 = vsel %vm2419, %v2153, %v2675
  %v2932 = vsel %vm2420, %v2156, %v2676
  %v2933 = vsel %vm2421, %v2161, %v2677
  %v2934 = vsel %vm2422, %v2164, %v2678
  %v2935 = vpack.c.bf16 %v2680, %v2679
  %v2936 = vpack.c.bf16 %v2682, %v2681
  %v2937 = vpack.c.bf16 %v2684, %v2683
  %v2938 = vpack.c.bf16 %v2686, %v2685
  %v2939 = vpack.c.bf16 %v2688, %v2687
  %v2940 = vpack.c.bf16 %v2690, %v2689
  %v2941 = vpack.c.bf16 %v2692, %v2691
  %v2942 = vpack.c.bf16 %v2694, %v2693
  %v2943 = vpack.c.bf16 %v2696, %v2695
  %v2944 = vpack.c.bf16 %v2698, %v2697
  %v2945 = vpack.c.bf16 %v2700, %v2699
  %v2946 = vpack.c.bf16 %v2702, %v2701
  %v2947 = vpack.c.bf16 %v2704, %v2703
  %v2948 = vpack.c.bf16 %v2706, %v2705
  %v2949 = vpack.c.bf16 %v2708, %v2707
  %v2950 = vpack.c.bf16 %v2710, %v2709
  %v2951 = vpack.c.bf16 %v2712, %v2711
  %v2952 = vpack.c.bf16 %v2714, %v2713
  %v2953 = vpack.c.bf16 %v2716, %v2715
  %v2954 = vpack.c.bf16 %v2718, %v2717
  %v2955 = vpack.c.bf16 %v2720, %v2719
  %v2956 = vpack.c.bf16 %v2722, %v2721
  %v2957 = vpack.c.bf16 %v2724, %v2723
  %v2958 = vpack.c.bf16 %v2726, %v2725
  %v2959 = vpack.c.bf16 %v2728, %v2727
  %v2960 = vpack.c.bf16 %v2730, %v2729
  %v2961 = vpack.c.bf16 %v2732, %v2731
  %v2962 = vpack.c.bf16 %v2734, %v2733
  %v2963 = vpack.c.bf16 %v2736, %v2735
  %v2964 = vpack.c.bf16 %v2738, %v2737
  %v2965 = vpack.c.bf16 %v2740, %v2739
  %v2966 = vpack.c.bf16 %v2742, %v2741
  %v2967 = vpack.c.bf16 %v2744, %v2743
  %v2968 = vpack.c.bf16 %v2746, %v2745
  %v2969 = vpack.c.bf16 %v2748, %v2747
  %v2970 = vpack.c.bf16 %v2750, %v2749
  %v2971 = vpack.c.bf16 %v2752, %v2751
  %v2972 = vpack.c.bf16 %v2754, %v2753
  %v2973 = vpack.c.bf16 %v2756, %v2755
  %v2974 = vpack.c.bf16 %v2758, %v2757
  %v2975 = vpack.c.bf16 %v2760, %v2759
  %v2976 = vpack.c.bf16 %v2762, %v2761
  %v2977 = vpack.c.bf16 %v2764, %v2763
  %v2978 = vpack.c.bf16 %v2766, %v2765
  %v2979 = vpack.c.bf16 %v2768, %v2767
  %v2980 = vpack.c.bf16 %v2770, %v2769
  %v2981 = vpack.c.bf16 %v2772, %v2771
  %v2982 = vpack.c.bf16 %v2774, %v2773
  %v2983 = vpack.c.bf16 %v2776, %v2775
  %v2984 = vpack.c.bf16 %v2778, %v2777
  %v2985 = vpack.c.bf16 %v2780, %v2779
  %v2986 = vpack.c.bf16 %v2782, %v2781
  %v2987 = vpack.c.bf16 %v2784, %v2783
  %v2988 = vpack.c.bf16 %v2786, %v2785
  %v2989 = vpack.c.bf16 %v2788, %v2787
  %v2990 = vpack.c.bf16 %v2790, %v2789
  %v2991 = vpack.c.bf16 %v2792, %v2791
  %v2992 = vpack.c.bf16 %v2794, %v2793
  %v2993 = vpack.c.bf16 %v2796, %v2795
  %v2994 = vpack.c.bf16 %v2798, %v2797
  %v2995 = vpack.c.bf16 %v2800, %v2799
  %v2996 = vpack.c.bf16 %v2802, %v2801
  %v2997 = vpack.c.bf16 %v2804, %v2803
  %v2998 = vpack.c.bf16 %v2806, %v2805
  %v2999 = vpack.c.bf16 %v2808, %v2807
  %v3000 = vpack.c.bf16 %v2810, %v2809
  %v3001 = vpack.c.bf16 %v2812, %v2811
  %v3002 = vpack.c.bf16 %v2814, %v2813
  %v3003 = vpack.c.bf16 %v2816, %v2815
  %v3004 = vpack.c.bf16 %v2818, %v2817
  %v3005 = vpack.c.bf16 %v2820, %v2819
  %v3006 = vpack.c.bf16 %v2822, %v2821
  %v3007 = vpack.c.bf16 %v2824, %v2823
  %v3008 = vpack.c.bf16 %v2826, %v2825
  %v3009 = vpack.c.bf16 %v2828, %v2827
  %v3010 = vpack.c.bf16 %v2830, %v2829
  %v3011 = vpack.c.bf16 %v2832, %v2831
  %v3012 = vpack.c.bf16 %v2834, %v2833
  %v3013 = vpack.c.bf16 %v2836, %v2835
  %v3014 = vpack.c.bf16 %v2838, %v2837
  %v3015 = vpack.c.bf16 %v2840, %v2839
  %v3016 = vpack.c.bf16 %v2842, %v2841
  %v3017 = vpack.c.bf16 %v2844, %v2843
  %v3018 = vpack.c.bf16 %v2846, %v2845
  %v3019 = vpack.c.bf16 %v2848, %v2847
  %v3020 = vpack.c.bf16 %v2850, %v2849
  %v3021 = vpack.c.bf16 %v2852, %v2851
  %v3022 = vpack.c.bf16 %v2854, %v2853
  %v3023 = vpack.c.bf16 %v2856, %v2855
  %v3024 = vpack.c.bf16 %v2858, %v2857
  %v3025 = vpack.c.bf16 %v2860, %v2859
  %v3026 = vpack.c.bf16 %v2862, %v2861
  %v3027 = vpack.c.bf16 %v2864, %v2863
  %v3028 = vpack.c.bf16 %v2866, %v2865
  %v3029 = vpack.c.bf16 %v2868, %v2867
  %v3030 = vpack.c.bf16 %v2870, %v2869
  %v3031 = vpack.c.bf16 %v2872, %v2871
  %v3032 = vpack.c.bf16 %v2874, %v2873
  %v3033 = vpack.c.bf16 %v2876, %v2875
  %v3034 = vpack.c.bf16 %v2878, %v2877
  %v3035 = vpack.c.bf16 %v2880, %v2879
  %v3036 = vpack.c.bf16 %v2882, %v2881
  %v3037 = vpack.c.bf16 %v2884, %v2883
  %v3038 = vpack.c.bf16 %v2886, %v2885
  %v3039 = vpack.c.bf16 %v2888, %v2887
  %v3040 = vpack.c.bf16 %v2890, %v2889
  %v3041 = vpack.c.bf16 %v2892, %v2891
  %v3042 = vpack.c.bf16 %v2894, %v2893
  %v3043 = vpack.c.bf16 %v2896, %v2895
  %v3044 = vpack.c.bf16 %v2898, %v2897
  %v3045 = vpack.c.bf16 %v2900, %v2899
  %v3046 = vpack.c.bf16 %v2902, %v2901
  %v3047 = vpack.c.bf16 %v2904, %v2903
  %v3048 = vpack.c.bf16 %v2906, %v2905
  %v3049 = vpack.c.bf16 %v2908, %v2907
  %v3050 = vpack.c.bf16 %v2910, %v2909
  %v3051 = vpack.c.bf16 %v2912, %v2911
  %v3052 = vpack.c.bf16 %v2914, %v2913
  %v3053 = vpack.c.bf16 %v2916, %v2915
  %v3054 = vpack.c.bf16 %v2918, %v2917
  %v3055 = vpack.c.bf16 %v2920, %v2919
  %v3056 = vpack.c.bf16 %v2922, %v2921
  %v3057 = vpack.c.bf16 %v2924, %v2923
  %v3058 = vpack.c.bf16 %v2926, %v2925
  %v3059 = vpack.c.bf16 %v2928, %v2927
  %v3060 = vpack.c.bf16 %v2930, %v2929
  %v3061 = vpack.c.bf16 %v2932, %v2931
  %v3062 = vpack.c.bf16 %v2934, %v2933
  %v3191 = vunpack.c.l.b16 %v2935
  %v3192 = vunpack.c.h.b16 %v2935
  %v3193 = vunpack.c.l.b16 %v2936
  %v3194 = vunpack.c.h.b16 %v2936
  %v3195 = vunpack.c.l.b16 %v2937
  %v3196 = vunpack.c.h.b16 %v2937
  %v3197 = vunpack.c.l.b16 %v2938
  %v3198 = vunpack.c.h.b16 %v2938
  %v3199 = vunpack.c.l.b16 %v2939
  %v3200 = vunpack.c.h.b16 %v2939
  %v3201 = vunpack.c.l.b16 %v2940
  %v3202 = vunpack.c.h.b16 %v2940
  %v3203 = vunpack.c.l.b16 %v2941
  %v3204 = vunpack.c.h.b16 %v2941
  %v3205 = vunpack.c.l.b16 %v2942
  %v3206 = vunpack.c.h.b16 %v2942
  %v3207 = vunpack.c.l.b16 %v2943
  %v3208 = vunpack.c.h.b16 %v2943
  %v3209 = vunpack.c.l.b16 %v2944
  %v3210 = vunpack.c.h.b16 %v2944
  %v3211 = vunpack.c.l.b16 %v2945
  %v3212 = vunpack.c.h.b16 %v2945
  %v3213 = vunpack.c.l.b16 %v2946
  %v3214 = vunpack.c.h.b16 %v2946
  %v3215 = vunpack.c.l.b16 %v2947
  %v3216 = vunpack.c.h.b16 %v2947
  %v3217 = vunpack.c.l.b16 %v2948
  %v3218 = vunpack.c.h.b16 %v2948
  %v3219 = vunpack.c.l.b16 %v2949
  %v3220 = vunpack.c.h.b16 %v2949
  %v3221 = vunpack.c.l.b16 %v2950
  %v3222 = vunpack.c.h.b16 %v2950
  %v3223 = vunpack.c.l.b16 %v2951
  %v3224 = vunpack.c.h.b16 %v2951
  %v3225 = vunpack.c.l.b16 %v2952
  %v3226 = vunpack.c.h.b16 %v2952
  %v3227 = vunpack.c.l.b16 %v2953
  %v3228 = vunpack.c.h.b16 %v2953
  %v3229 = vunpack.c.l.b16 %v2954
  %v3230 = vunpack.c.h.b16 %v2954
  %v3231 = vunpack.c.l.b16 %v2955
  %v3232 = vunpack.c.h.b16 %v2955
  %v3233 = vunpack.c.l.b16 %v2956
  %v3234 = vunpack.c.h.b16 %v2956
  %v3235 = vunpack.c.l.b16 %v2957
  %v3236 = vunpack.c.h.b16 %v2957
  %v3237 = vunpack.c.l.b16 %v2958
  %v3238 = vunpack.c.h.b16 %v2958
  %v3239 = vunpack.c.l.b16 %v2959
  %v3240 = vunpack.c.h.b16 %v2959
  %v3241 = vunpack.c.l.b16 %v2960
  %v3242 = vunpack.c.h.b16 %v2960
  %v3243 = vunpack.c.l.b16 %v2961
  %v3244 = vunpack.c.h.b16 %v2961
  %v3245 = vunpack.c.l.b16 %v2962
  %v3246 = vunpack.c.h.b16 %v2962
  %v3247 = vunpack.c.l.b16 %v2963
  %v3248 = vunpack.c.h.b16 %v2963
  %v3249 = vunpack.c.l.b16 %v2964
  %v3250 = vunpack.c.h.b16 %v2964
  %v3251 = vunpack.c.l.b16 %v2965
  %v3252 = vunpack.c.h.b16 %v2965
  %v3253 = vunpack.c.l.b16 %v2966
  %v3254 = vunpack.c.h.b16 %v2966
  %v3255 = vunpack.c.l.b16 %v2967
  %v3256 = vunpack.c.h.b16 %v2967
  %v3257 = vunpack.c.l.b16 %v2968
  %v3258 = vunpack.c.h.b16 %v2968
  %v3259 = vunpack.c.l.b16 %v2969
  %v3260 = vunpack.c.h.b16 %v2969
  %v3261 = vunpack.c.l.b16 %v2970
  %v3262 = vunpack.c.h.b16 %v2970
  %v3263 = vunpack.c.l.b16 %v2971
  %v3264 = vunpack.c.h.b16 %v2971
  %v3265 = vunpack.c.l.b16 %v2972
  %v3266 = vunpack.c.h.b16 %v2972
  %v3267 = vunpack.c.l.b16 %v2973
  %v3268 = vunpack.c.h.b16 %v2973
  %v3269 = vunpack.c.l.b16 %v2974
  %v3270 = vunpack.c.h.b16 %v2974
  %v3271 = vunpack.c.l.b16 %v2975
  %v3272 = vunpack.c.h.b16 %v2975
  %v3273 = vunpack.c.l.b16 %v2976
  %v3274 = vunpack.c.h.b16 %v2976
  %v3275 = vunpack.c.l.b16 %v2977
  %v3276 = vunpack.c.h.b16 %v2977
  %v3277 = vunpack.c.l.b16 %v2978
  %v3278 = vunpack.c.h.b16 %v2978
  %v3279 = vunpack.c.l.b16 %v2979
  %v3280 = vunpack.c.h.b16 %v2979
  %v3281 = vunpack.c.l.b16 %v2980
  %v3282 = vunpack.c.h.b16 %v2980
  %v3283 = vunpack.c.l.b16 %v2981
  %v3284 = vunpack.c.h.b16 %v2981
  %v3285 = vunpack.c.l.b16 %v2982
  %v3286 = vunpack.c.h.b16 %v2982
  %v3287 = vunpack.c.l.b16 %v2983
  %v3288 = vunpack.c.h.b16 %v2983
  %v3289 = vunpack.c.l.b16 %v2984
  %v3290 = vunpack.c.h.b16 %v2984
  %v3291 = vunpack.c.l.b16 %v2985
  %v3292 = vunpack.c.h.b16 %v2985
  %v3293 = vunpack.c.l.b16 %v2986
  %v3294 = vunpack.c.h.b16 %v2986
  %v3295 = vunpack.c.l.b16 %v2987
  %v3296 = vunpack.c.h.b16 %v2987
  %v3297 = vunpack.c.l.b16 %v2988
  %v3298 = vunpack.c.h.b16 %v2988
  %v3299 = vunpack.c.l.b16 %v2989
  %v3300 = vunpack.c.h.b16 %v2989
  %v3301 = vunpack.c.l.b16 %v2990
  %v3302 = vunpack.c.h.b16 %v2990
  %v3303 = vunpack.c.l.b16 %v2991
  %v3304 = vunpack.c.h.b16 %v2991
  %v3305 = vunpack.c.l.b16 %v2992
  %v3306 = vunpack.c.h.b16 %v2992
  %v3307 = vunpack.c.l.b16 %v2993
  %v3308 = vunpack.c.h.b16 %v2993
  %v3309 = vunpack.c.l.b16 %v2994
  %v3310 = vunpack.c.h.b16 %v2994
  %v3311 = vunpack.c.l.b16 %v2995
  %v3312 = vunpack.c.h.b16 %v2995
  %v3313 = vunpack.c.l.b16 %v2996
  %v3314 = vunpack.c.h.b16 %v2996
  %v3315 = vunpack.c.l.b16 %v2997
  %v3316 = vunpack.c.h.b16 %v2997
  %v3317 = vunpack.c.l.b16 %v2998
  %v3318 = vunpack.c.h.b16 %v2998
  %v3319 = vunpack.c.l.b16 %v2999
  %v3320 = vunpack.c.h.b16 %v2999
  %v3321 = vunpack.c.l.b16 %v3000
  %v3322 = vunpack.c.h.b16 %v3000
  %v3323 = vunpack.c.l.b16 %v3001
  %v3324 = vunpack.c.h.b16 %v3001
  %v3325 = vunpack.c.l.b16 %v3002
  %v3326 = vunpack.c.h.b16 %v3002
  %v3327 = vunpack.c.l.b16 %v3003
  %v3328 = vunpack.c.h.b16 %v3003
  %v3329 = vunpack.c.l.b16 %v3004
  %v3330 = vunpack.c.h.b16 %v3004
  %v3331 = vunpack.c.l.b16 %v3005
  %v3332 = vunpack.c.h.b16 %v3005
  %v3333 = vunpack.c.l.b16 %v3006
  %v3334 = vunpack.c.h.b16 %v3006
  %v3335 = vunpack.c.l.b16 %v3007
  %v3336 = vunpack.c.h.b16 %v3007
  %v3337 = vunpack.c.l.b16 %v3008
  %v3338 = vunpack.c.h.b16 %v3008
  %v3339 = vunpack.c.l.b16 %v3009
  %v3340 = vunpack.c.h.b16 %v3009
  %v3341 = vunpack.c.l.b16 %v3010
  %v3342 = vunpack.c.h.b16 %v3010
  %v3343 = vunpack.c.l.b16 %v3011
  %v3344 = vunpack.c.h.b16 %v3011
  %v3345 = vunpack.c.l.b16 %v3012
  %v3346 = vunpack.c.h.b16 %v3012
  %v3347 = vunpack.c.l.b16 %v3013
  %v3348 = vunpack.c.h.b16 %v3013
  %v3349 = vunpack.c.l.b16 %v3014
  %v3350 = vunpack.c.h.b16 %v3014
  %v3351 = vunpack.c.l.b16 %v3015
  %v3352 = vunpack.c.h.b16 %v3015
  %v3353 = vunpack.c.l.b16 %v3016
  %v3354 = vunpack.c.h.b16 %v3016
  %v3355 = vunpack.c.l.b16 %v3017
  %v3356 = vunpack.c.h.b16 %v3017
  %v3357 = vunpack.c.l.b16 %v3018
  %v3358 = vunpack.c.h.b16 %v3018
  %v3359 = vunpack.c.l.b16 %v3019
  %v3360 = vunpack.c.h.b16 %v3019
  %v3361 = vunpack.c.l.b16 %v3020
  %v3362 = vunpack.c.h.b16 %v3020
  %v3363 = vunpack.c.l.b16 %v3021
  %v3364 = vunpack.c.h.b16 %v3021
  %v3365 = vunpack.c.l.b16 %v3022
  %v3366 = vunpack.c.h.b16 %v3022
  %v3367 = vunpack.c.l.b16 %v3023
  %v3368 = vunpack.c.h.b16 %v3023
  %v3369 = vunpack.c.l.b16 %v3024
  %v3370 = vunpack.c.h.b16 %v3024
  %v3371 = vunpack.c.l.b16 %v3025
  %v3372 = vunpack.c.h.b16 %v3025
  %v3373 = vunpack.c.l.b16 %v3026
  %v3374 = vunpack.c.h.b16 %v3026
  %v3375 = vunpack.c.l.b16 %v3027
  %v3376 = vunpack.c.h.b16 %v3027
  %v3377 = vunpack.c.l.b16 %v3028
  %v3378 = vunpack.c.h.b16 %v3028
  %v3379 = vunpack.c.l.b16 %v3029
  %v3380 = vunpack.c.h.b16 %v3029
  %v3381 = vunpack.c.l.b16 %v3030
  %v3382 = vunpack.c.h.b16 %v3030
  %v3383 = vunpack.c.l.b16 %v3031
  %v3384 = vunpack.c.h.b16 %v3031
  %v3385 = vunpack.c.l.b16 %v3032
  %v3386 = vunpack.c.h.b16 %v3032
  %v3387 = vunpack.c.l.b16 %v3033
  %v3388 = vunpack.c.h.b16 %v3033
  %v3389 = vunpack.c.l.b16 %v3034
  %v3390 = vunpack.c.h.b16 %v3034
  %v3391 = vunpack.c.l.b16 %v3035
  %v3392 = vunpack.c.h.b16 %v3035
  %v3393 = vunpack.c.l.b16 %v3036
  %v3394 = vunpack.c.h.b16 %v3036
  %v3395 = vunpack.c.l.b16 %v3037
  %v3396 = vunpack.c.h.b16 %v3037
  %v3397 = vunpack.c.l.b16 %v3038
  %v3398 = vunpack.c.h.b16 %v3038
  %v3399 = vunpack.c.l.b16 %v3039
  %v3400 = vunpack.c.h.b16 %v3039
  %v3401 = vunpack.c.l.b16 %v3040
  %v3402 = vunpack.c.h.b16 %v3040
  %v3403 = vunpack.c.l.b16 %v3041
  %v3404 = vunpack.c.h.b16 %v3041
  %v3405 = vunpack.c.l.b16 %v3042
  %v3406 = vunpack.c.h.b16 %v3042
  %v3407 = vunpack.c.l.b16 %v3043
  %v3408 = vunpack.c.h.b16 %v3043
  %v3409 = vunpack.c.l.b16 %v3044
  %v3410 = vunpack.c.h.b16 %v3044
  %v3411 = vunpack.c.l.b16 %v3045
  %v3412 = vunpack.c.h.b16 %v3045
  %v3413 = vunpack.c.l.b16 %v3046
  %v3414 = vunpack.c.h.b16 %v3046
  %v3415 = vunpack.c.l.b16 %v3047
  %v3416 = vunpack.c.h.b16 %v3047
  %v3417 = vunpack.c.l.b16 %v3048
  %v3418 = vunpack.c.h.b16 %v3048
  %v3419 = vunpack.c.l.b16 %v3049
  %v3420 = vunpack.c.h.b16 %v3049
  %v3421 = vunpack.c.l.b16 %v3050
  %v3422 = vunpack.c.h.b16 %v3050
  %v3423 = vunpack.c.l.b16 %v3051
  %v3424 = vunpack.c.h.b16 %v3051
  %v3425 = vunpack.c.l.b16 %v3052
  %v3426 = vunpack.c.h.b16 %v3052
  %v3427 = vunpack.c.l.b16 %v3053
  %v3428 = vunpack.c.h.b16 %v3053
  %v3429 = vunpack.c.l.b16 %v3054
  %v3430 = vunpack.c.h.b16 %v3054
  %v3431 = vunpack.c.l.b16 %v3055
  %v3432 = vunpack.c.h.b16 %v3055
  %v3433 = vunpack.c.l.b16 %v3056
  %v3434 = vunpack.c.h.b16 %v3056
  %v3435 = vunpack.c.l.b16 %v3057
  %v3436 = vunpack.c.h.b16 %v3057
  %v3437 = vunpack.c.l.b16 %v3058
  %v3438 = vunpack.c.h.b16 %v3058
  %v3439 = vunpack.c.l.b16 %v3059
  %v3440 = vunpack.c.h.b16 %v3059
  %v3441 = vunpack.c.l.b16 %v3060
  %v3442 = vunpack.c.h.b16 %v3060
  %v3443 = vunpack.c.l.b16 %v3061
  %v3444 = vunpack.c.h.b16 %v3061
  %v3445 = vunpack.c.l.b16 %v3062
  %v3446 = vunpack.c.h.b16 %v3062
  %v3447 = vpack.c.b16 %v3191, %v3191
  %v3448 = vpack.c.b16 %v3192, %v3192
  %v3449 = vpack.c.b16 %v3193, %v3193
  %v3450 = vpack.c.b16 %v3194, %v3194
  %v3451 = vpack.c.b16 %v3195, %v3195
  %v3452 = vpack.c.b16 %v3196, %v3196
  %v3453 = vpack.c.b16 %v3197, %v3197
  %v3454 = vpack.c.b16 %v3198, %v3198
  %v3455 = vpack.c.b16 %v3199, %v3199
  %v3456 = vpack.c.b16 %v3200, %v3200
  %v3457 = vpack.c.b16 %v3201, %v3201
  %v3458 = vpack.c.b16 %v3202, %v3202
  %v3459 = vpack.c.b16 %v3203, %v3203
  %v3460 = vpack.c.b16 %v3204, %v3204
  %v3461 = vpack.c.b16 %v3205, %v3205
  %v3462 = vpack.c.b16 %v3206, %v3206
  %v3463 = vpack.c.b16 %v3207, %v3207
  %v3464 = vpack.c.b16 %v3208, %v3208
  %v3465 = vpack.c.b16 %v3209, %v3209
  %v3466 = vpack.c.b16 %v3210, %v3210
  %v3467 = vpack.c.b16 %v3211, %v3211
  %v3468 = vpack.c.b16 %v3212, %v3212
  %v3469 = vpack.c.b16 %v3213, %v3213
  %v3470 = vpack.c.b16 %v3214, %v3214
  %v3471 = vpack.c.b16 %v3215, %v3215
  %v3472 = vpack.c.b16 %v3216, %v3216
  %v3473 = vpack.c.b16 %v3217, %v3217
  %v3474 = vpack.c.b16 %v3218, %v3218
  %v3475 = vpack.c.b16 %v3219, %v3219
  %v3476 = vpack.c.b16 %v3220, %v3220
  %v3477 = vpack.c.b16 %v3221, %v3221
  %v3478 = vpack.c.b16 %v3222, %v3222
  %v3479 = vpack.c.b16 %v3223, %v3223
  %v3480 = vpack.c.b16 %v3224, %v3224
  %v3481 = vpack.c.b16 %v3225, %v3225
  %v3482 = vpack.c.b16 %v3226, %v3226
  %v3483 = vpack.c.b16 %v3227, %v3227
  %v3484 = vpack.c.b16 %v3228, %v3228
  %v3485 = vpack.c.b16 %v3229, %v3229
  %v3486 = vpack.c.b16 %v3230, %v3230
  %v3487 = vpack.c.b16 %v3231, %v3231
  %v3488 = vpack.c.b16 %v3232, %v3232
  %v3489 = vpack.c.b16 %v3233, %v3233
  %v3490 = vpack.c.b16 %v3234, %v3234
  %v3491 = vpack.c.b16 %v3235, %v3235
  %v3492 = vpack.c.b16 %v3236, %v3236
  %v3493 = vpack.c.b16 %v3237, %v3237
  %v3494 = vpack.c.b16 %v3238, %v3238
  %v3495 = vpack.c.b16 %v3239, %v3239
  %v3496 = vpack.c.b16 %v3240, %v3240
  %v3497 = vpack.c.b16 %v3241, %v3241
  %v3498 = vpack.c.b16 %v3242, %v3242
  %v3499 = vpack.c.b16 %v3243, %v3243
  %v3500 = vpack.c.b16 %v3244, %v3244
  %v3501 = vpack.c.b16 %v3245, %v3245
  %v3502 = vpack.c.b16 %v3246, %v3246
  %v3503 = vpack.c.b16 %v3247, %v3247
  %v3504 = vpack.c.b16 %v3248, %v3248
  %v3505 = vpack.c.b16 %v3249, %v3249
  %v3506 = vpack.c.b16 %v3250, %v3250
  %v3507 = vpack.c.b16 %v3251, %v3251
  %v3508 = vpack.c.b16 %v3252, %v3252
  %v3509 = vpack.c.b16 %v3253, %v3253
  %v3510 = vpack.c.b16 %v3254, %v3254
  %v3511 = vpack.c.b16 %v3255, %v3255
  %v3512 = vpack.c.b16 %v3256, %v3256
  %v3513 = vpack.c.b16 %v3257, %v3257
  %v3514 = vpack.c.b16 %v3258, %v3258
  %v3515 = vpack.c.b16 %v3259, %v3259
  %v3516 = vpack.c.b16 %v3260, %v3260
  %v3517 = vpack.c.b16 %v3261, %v3261
  %v3518 = vpack.c.b16 %v3262, %v3262
  %v3519 = vpack.c.b16 %v3263, %v3263
  %v3520 = vpack.c.b16 %v3264, %v3264
  %v3521 = vpack.c.b16 %v3265, %v3265
  %v3522 = vpack.c.b16 %v3266, %v3266
  %v3523 = vpack.c.b16 %v3267, %v3267
  %v3524 = vpack.c.b16 %v3268, %v3268
  %v3525 = vpack.c.b16 %v3269, %v3269
  %v3526 = vpack.c.b16 %v3270, %v3270
  %v3527 = vpack.c.b16 %v3271, %v3271
  %v3528 = vpack.c.b16 %v3272, %v3272
  %v3529 = vpack.c.b16 %v3273, %v3273
  %v3530 = vpack.c.b16 %v3274, %v3274
  %v3531 = vpack.c.b16 %v3275, %v3275
  %v3532 = vpack.c.b16 %v3276, %v3276
  %v3533 = vpack.c.b16 %v3277, %v3277
  %v3534 = vpack.c.b16 %v3278, %v3278
  %v3535 = vpack.c.b16 %v3279, %v3279
  %v3536 = vpack.c.b16 %v3280, %v3280
  %v3537 = vpack.c.b16 %v3281, %v3281
  %v3538 = vpack.c.b16 %v3282, %v3282
  %v3539 = vpack.c.b16 %v3283, %v3283
  %v3540 = vpack.c.b16 %v3284, %v3284
  %v3541 = vpack.c.b16 %v3285, %v3285
  %v3542 = vpack.c.b16 %v3286, %v3286
  %v3543 = vpack.c.b16 %v3287, %v3287
  %v3544 = vpack.c.b16 %v3288, %v3288
  %v3545 = vpack.c.b16 %v3289, %v3289
  %v3546 = vpack.c.b16 %v3290, %v3290
  %v3547 = vpack.c.b16 %v3291, %v3291
  %v3548 = vpack.c.b16 %v3292, %v3292
  %v3549 = vpack.c.b16 %v3293, %v3293
  %v3550 = vpack.c.b16 %v3294, %v3294
  %v3551 = vpack.c.b16 %v3295, %v3295
  %v3552 = vpack.c.b16 %v3296, %v3296
  %v3553 = vpack.c.b16 %v3297, %v3297
  %v3554 = vpack.c.b16 %v3298, %v3298
  %v3555 = vpack.c.b16 %v3299, %v3299
  %v3556 = vpack.c.b16 %v3300, %v3300
  %v3557 = vpack.c.b16 %v3301, %v3301
  %v3558 = vpack.c.b16 %v3302, %v3302
  %v3559 = vpack.c.b16 %v3303, %v3303
  %v3560 = vpack.c.b16 %v3304, %v3304
  %v3561 = vpack.c.b16 %v3305, %v3305
  %v3562 = vpack.c.b16 %v3306, %v3306
  %v3563 = vpack.c.b16 %v3307, %v3307
  %v3564 = vpack.c.b16 %v3308, %v3308
  %v3565 = vpack.c.b16 %v3309, %v3309
  %v3566 = vpack.c.b16 %v3310, %v3310
  %v3567 = vpack.c.b16 %v3311, %v3311
  %v3568 = vpack.c.b16 %v3312, %v3312
  %v3569 = vpack.c.b16 %v3313, %v3313
  %v3570 = vpack.c.b16 %v3314, %v3314
  %v3571 = vpack.c.b16 %v3315, %v3315
  %v3572 = vpack.c.b16 %v3316, %v3316
  %v3573 = vpack.c.b16 %v3317, %v3317
  %v3574 = vpack.c.b16 %v3318, %v3318
  %v3575 = vpack.c.b16 %v3319, %v3319
  %v3576 = vpack.c.b16 %v3320, %v3320
  %v3577 = vpack.c.b16 %v3321, %v3321
  %v3578 = vpack.c.b16 %v3322, %v3322
  %v3579 = vpack.c.b16 %v3323, %v3323
  %v3580 = vpack.c.b16 %v3324, %v3324
  %v3581 = vpack.c.b16 %v3325, %v3325
  %v3582 = vpack.c.b16 %v3326, %v3326
  %v3583 = vpack.c.b16 %v3327, %v3327
  %v3584 = vpack.c.b16 %v3328, %v3328
  %v3585 = vpack.c.b16 %v3329, %v3329
  %v3586 = vpack.c.b16 %v3330, %v3330
  %v3587 = vpack.c.b16 %v3331, %v3331
  %v3588 = vpack.c.b16 %v3332, %v3332
  %v3589 = vpack.c.b16 %v3333, %v3333
  %v3590 = vpack.c.b16 %v3334, %v3334
  %v3591 = vpack.c.b16 %v3335, %v3335
  %v3592 = vpack.c.b16 %v3336, %v3336
  %v3593 = vpack.c.b16 %v3337, %v3337
  %v3594 = vpack.c.b16 %v3338, %v3338
  %v3595 = vpack.c.b16 %v3339, %v3339
  %v3596 = vpack.c.b16 %v3340, %v3340
  %v3597 = vpack.c.b16 %v3341, %v3341
  %v3598 = vpack.c.b16 %v3342, %v3342
  %v3599 = vpack.c.b16 %v3343, %v3343
  %v3600 = vpack.c.b16 %v3344, %v3344
  %v3601 = vpack.c.b16 %v3345, %v3345
  %v3602 = vpack.c.b16 %v3346, %v3346
  %v3603 = vpack.c.b16 %v3347, %v3347
  %v3604 = vpack.c.b16 %v3348, %v3348
  %v3605 = vpack.c.b16 %v3349, %v3349
  %v3606 = vpack.c.b16 %v3350, %v3350
  %v3607 = vpack.c.b16 %v3351, %v3351
  %v3608 = vpack.c.b16 %v3352, %v3352
  %v3609 = vpack.c.b16 %v3353, %v3353
  %v3610 = vpack.c.b16 %v3354, %v3354
  %v3611 = vpack.c.b16 %v3355, %v3355
  %v3612 = vpack.c.b16 %v3356, %v3356
  %v3613 = vpack.c.b16 %v3357, %v3357
  %v3614 = vpack.c.b16 %v3358, %v3358
  %v3615 = vpack.c.b16 %v3359, %v3359
  %v3616 = vpack.c.b16 %v3360, %v3360
  %v3617 = vpack.c.b16 %v3361, %v3361
  %v3618 = vpack.c.b16 %v3362, %v3362
  %v3619 = vpack.c.b16 %v3363, %v3363
  %v3620 = vpack.c.b16 %v3364, %v3364
  %v3621 = vpack.c.b16 %v3365, %v3365
  %v3622 = vpack.c.b16 %v3366, %v3366
  %v3623 = vpack.c.b16 %v3367, %v3367
  %v3624 = vpack.c.b16 %v3368, %v3368
  %v3625 = vpack.c.b16 %v3369, %v3369
  %v3626 = vpack.c.b16 %v3370, %v3370
  %v3627 = vpack.c.b16 %v3371, %v3371
  %v3628 = vpack.c.b16 %v3372, %v3372
  %v3629 = vpack.c.b16 %v3373, %v3373
  %v3630 = vpack.c.b16 %v3374, %v3374
  %v3631 = vpack.c.b16 %v3375, %v3375
  %v3632 = vpack.c.b16 %v3376, %v3376
  %v3633 = vpack.c.b16 %v3377, %v3377
  %v3634 = vpack.c.b16 %v3378, %v3378
  %v3635 = vpack.c.b16 %v3379, %v3379
  %v3636 = vpack.c.b16 %v3380, %v3380
  %v3637 = vpack.c.b16 %v3381, %v3381
  %v3638 = vpack.c.b16 %v3382, %v3382
  %v3639 = vpack.c.b16 %v3383, %v3383
  %v3640 = vpack.c.b16 %v3384, %v3384
  %v3641 = vpack.c.b16 %v3385, %v3385
  %v3642 = vpack.c.b16 %v3386, %v3386
  %v3643 = vpack.c.b16 %v3387, %v3387
  %v3644 = vpack.c.b16 %v3388, %v3388
  %v3645 = vpack.c.b16 %v3389, %v3389
  %v3646 = vpack.c.b16 %v3390, %v3390
  %v3647 = vpack.c.b16 %v3391, %v3391
  %v3648 = vpack.c.b16 %v3392, %v3392
  %v3649 = vpack.c.b16 %v3393, %v3393
  %v3650 = vpack.c.b16 %v3394, %v3394
  %v3651 = vpack.c.b16 %v3395, %v3395
  %v3652 = vpack.c.b16 %v3396, %v3396
  %v3653 = vpack.c.b16 %v3397, %v3397
  %v3654 = vpack.c.b16 %v3398, %v3398
  %v3655 = vpack.c.b16 %v3399, %v3399
  %v3656 = vpack.c.b16 %v3400, %v3400
  %v3657 = vpack.c.b16 %v3401, %v3401
  %v3658 = vpack.c.b16 %v3402, %v3402
  %v3659 = vpack.c.b16 %v3403, %v3403
  %v3660 = vpack.c.b16 %v3404, %v3404
  %v3661 = vpack.c.b16 %v3405, %v3405
  %v3662 = vpack.c.b16 %v3406, %v3406
  %v3663 = vpack.c.b16 %v3407, %v3407
  %v3664 = vpack.c.b16 %v3408, %v3408
  %v3665 = vpack.c.b16 %v3409, %v3409
  %v3666 = vpack.c.b16 %v3410, %v3410
  %v3667 = vpack.c.b16 %v3411, %v3411
  %v3668 = vpack.c.b16 %v3412, %v3412
  %v3669 = vpack.c.b16 %v3413, %v3413
  %v3670 = vpack.c.b16 %v3414, %v3414
  %v3671 = vpack.c.b16 %v3415, %v3415
  %v3672 = vpack.c.b16 %v3416, %v3416
  %v3673 = vpack.c.b16 %v3417, %v3417
  %v3674 = vpack.c.b16 %v3418, %v3418
  %v3675 = vpack.c.b16 %v3419, %v3419
  %v3676 = vpack.c.b16 %v3420, %v3420
  %v3677 = vpack.c.b16 %v3421, %v3421
  %v3678 = vpack.c.b16 %v3422, %v3422
  %v3679 = vpack.c.b16 %v3423, %v3423
  %v3680 = vpack.c.b16 %v3424, %v3424
  %v3681 = vpack.c.b16 %v3425, %v3425
  %v3682 = vpack.c.b16 %v3426, %v3426
  %v3683 = vpack.c.b16 %v3427, %v3427
  %v3684 = vpack.c.b16 %v3428, %v3428
  %v3685 = vpack.c.b16 %v3429, %v3429
  %v3686 = vpack.c.b16 %v3430, %v3430
  %v3687 = vpack.c.b16 %v3431, %v3431
  %v3688 = vpack.c.b16 %v3432, %v3432
  %v3689 = vpack.c.b16 %v3433, %v3433
  %v3690 = vpack.c.b16 %v3434, %v3434
  %v3691 = vpack.c.b16 %v3435, %v3435
  %v3692 = vpack.c.b16 %v3436, %v3436
  %v3693 = vpack.c.b16 %v3437, %v3437
  %v3694 = vpack.c.b16 %v3438, %v3438
  %v3695 = vpack.c.b16 %v3439, %v3439
  %v3696 = vpack.c.b16 %v3440, %v3440
  %v3697 = vpack.c.b16 %v3441, %v3441
  %v3698 = vpack.c.b16 %v3442, %v3442
  %v3699 = vpack.c.b16 %v3443, %v3443
  %v3700 = vpack.c.b16 %v3444, %v3444
  %v3701 = vpack.c.b16 %v3445, %v3445
  %v3702 = vpack.c.b16 %v3446, %v3446
  %vm3959 = vcmask 60416
  %3960 = vst.msk [vmem:[%s3] sm:$0xf] %vm3959, %v3447
  %3961 = vst.msk [vmem:[%s3 + $0x4] sm:$0xf] %vm3959, %v3448
  %3962 = vst.msk [vmem:[%s3 + $0x8] sm:$0xf] %vm3959, %v3449
  %3963 = vst.msk [vmem:[%s3 + $0xc] sm:$0xf] %vm3959, %v3450
  %3964 = vst.msk [vmem:[%s3 + $0x10] sm:$0xf] %vm3959, %v3451
  %3965 = vst.msk [vmem:[%s3 + $0x14] sm:$0xf] %vm3959, %v3452
  %3966 = vst.msk [vmem:[%s3 + $0x18] sm:$0xf] %vm3959, %v3453
  %3967 = vst.msk [vmem:[%s3 + $0x1c] sm:$0xf] %vm3959, %v3454
  %3968 = vst.msk [vmem:[%s3 + $0x20] sm:$0xf] %vm3959, %v3455
  %3969 = vst.msk [vmem:[%s3 + $0x24] sm:$0xf] %vm3959, %v3456
  %3970 = vst.msk [vmem:[%s3 + $0x28] sm:$0xf] %vm3959, %v3457
  %3971 = vst.msk [vmem:[%s3 + $0x2c] sm:$0xf] %vm3959, %v3458
  %3972 = vst.msk [vmem:[%s3 + $0x30] sm:$0xf] %vm3959, %v3459
  %3973 = vst.msk [vmem:[%s3 + $0x34] sm:$0xf] %vm3959, %v3460
  %3974 = vst.msk [vmem:[%s3 + $0x38] sm:$0xf] %vm3959, %v3461
  %3975 = vst.msk [vmem:[%s3 + $0x3c] sm:$0xf] %vm3959, %v3462
  %3976 = vst.msk [vmem:[%s3 + $0x40] sm:$0xf] %vm3959, %v3463
  %3977 = vst.msk [vmem:[%s3 + $0x44] sm:$0xf] %vm3959, %v3464
  %3978 = vst.msk [vmem:[%s3 + $0x48] sm:$0xf] %vm3959, %v3465
  %3979 = vst.msk [vmem:[%s3 + $0x4c] sm:$0xf] %vm3959, %v3466
  %3980 = vst.msk [vmem:[%s3 + $0x50] sm:$0xf] %vm3959, %v3467
  %3981 = vst.msk [vmem:[%s3 + $0x54] sm:$0xf] %vm3959, %v3468
  %3982 = vst.msk [vmem:[%s3 + $0x58] sm:$0xf] %vm3959, %v3469
  %3983 = vst.msk [vmem:[%s3 + $0x5c] sm:$0xf] %vm3959, %v3470
  %3984 = vst.msk [vmem:[%s3 + $0x60] sm:$0xf] %vm3959, %v3471
  %3985 = vst.msk [vmem:[%s3 + $0x64] sm:$0xf] %vm3959, %v3472
  %3986 = vst.msk [vmem:[%s3 + $0x68] sm:$0xf] %vm3959, %v3473
  %3987 = vst.msk [vmem:[%s3 + $0x6c] sm:$0xf] %vm3959, %v3474
  %3988 = vst.msk [vmem:[%s3 + $0x70] sm:$0xf] %vm3959, %v3475
  %3989 = vst.msk [vmem:[%s3 + $0x74] sm:$0xf] %vm3959, %v3476
  %3990 = vst.msk [vmem:[%s3 + $0x78] sm:$0xf] %vm3959, %v3477
  %3991 = vst.msk [vmem:[%s3 + $0x7c] sm:$0xf] %vm3959, %v3478
  %3992 = vst.msk [vmem:[%s3 + $0x80] sm:$0xf] %vm3959, %v3479
  %3993 = vst.msk [vmem:[%s3 + $0x84] sm:$0xf] %vm3959, %v3480
  %3994 = vst.msk [vmem:[%s3 + $0x88] sm:$0xf] %vm3959, %v3481
  %3995 = vst.msk [vmem:[%s3 + $0x8c] sm:$0xf] %vm3959, %v3482
  %3996 = vst.msk [vmem:[%s3 + $0x90] sm:$0xf] %vm3959, %v3483
  %3997 = vst.msk [vmem:[%s3 + $0x94] sm:$0xf] %vm3959, %v3484
  %3998 = vst.msk [vmem:[%s3 + $0x98] sm:$0xf] %vm3959, %v3485
  %3999 = vst.msk [vmem:[%s3 + $0x9c] sm:$0xf] %vm3959, %v3486
  %4000 = vst.msk [vmem:[%s3 + $0xa0] sm:$0xf] %vm3959, %v3487
  %4001 = vst.msk [vmem:[%s3 + $0xa4] sm:$0xf] %vm3959, %v3488
  %4002 = vst.msk [vmem:[%s3 + $0xa8] sm:$0xf] %vm3959, %v3489
  %4003 = vst.msk [vmem:[%s3 + $0xac] sm:$0xf] %vm3959, %v3490
  %4004 = vst.msk [vmem:[%s3 + $0xb0] sm:$0xf] %vm3959, %v3491
  %4005 = vst.msk [vmem:[%s3 + $0xb4] sm:$0xf] %vm3959, %v3492
  %4006 = vst.msk [vmem:[%s3 + $0xb8] sm:$0xf] %vm3959, %v3493
  %4007 = vst.msk [vmem:[%s3 + $0xbc] sm:$0xf] %vm3959, %v3494
  %4008 = vst.msk [vmem:[%s3 + $0xc0] sm:$0xf] %vm3959, %v3495
  %4009 = vst.msk [vmem:[%s3 + $0xc4] sm:$0xf] %vm3959, %v3496
  %4010 = vst.msk [vmem:[%s3 + $0xc8] sm:$0xf] %vm3959, %v3497
  %4011 = vst.msk [vmem:[%s3 + $0xcc] sm:$0xf] %vm3959, %v3498
  %4012 = vst.msk [vmem:[%s3 + $0xd0] sm:$0xf] %vm3959, %v3499
  %4013 = vst.msk [vmem:[%s3 + $0xd4] sm:$0xf] %vm3959, %v3500
  %4014 = vst.msk [vmem:[%s3 + $0xd8] sm:$0xf] %vm3959, %v3501
  %4015 = vst.msk [vmem:[%s3 + $0xdc] sm:$0xf] %vm3959, %v3502
  %4016 = vst.msk [vmem:[%s3 + $0xe0] sm:$0xf] %vm3959, %v3503
  %4017 = vst.msk [vmem:[%s3 + $0xe4] sm:$0xf] %vm3959, %v3504
  %4018 = vst.msk [vmem:[%s3 + $0xe8] sm:$0xf] %vm3959, %v3505
  %4019 = vst.msk [vmem:[%s3 + $0xec] sm:$0xf] %vm3959, %v3506
  %4020 = vst.msk [vmem:[%s3 + $0xf0] sm:$0xf] %vm3959, %v3507
  %4021 = vst.msk [vmem:[%s3 + $0xf4] sm:$0xf] %vm3959, %v3508
  %4022 = vst.msk [vmem:[%s3 + $0xf8] sm:$0xf] %vm3959, %v3509
  %4023 = vst.msk [vmem:[%s3 + $0xfc] sm:$0xf] %vm3959, %v3510
  %4024 = vst.msk [vmem:[%s3 + $0x100] sm:$0xf] %vm3959, %v3511
  %4025 = vst.msk [vmem:[%s3 + $0x104] sm:$0xf] %vm3959, %v3512
  %4026 = vst.msk [vmem:[%s3 + $0x108] sm:$0xf] %vm3959, %v3513
  %4027 = vst.msk [vmem:[%s3 + $0x10c] sm:$0xf] %vm3959, %v3514
  %4028 = vst.msk [vmem:[%s3 + $0x110] sm:$0xf] %vm3959, %v3515
  %4029 = vst.msk [vmem:[%s3 + $0x114] sm:$0xf] %vm3959, %v3516
  %4030 = vst.msk [vmem:[%s3 + $0x118] sm:$0xf] %vm3959, %v3517
  %4031 = vst.msk [vmem:[%s3 + $0x11c] sm:$0xf] %vm3959, %v3518
  %4032 = vst.msk [vmem:[%s3 + $0x120] sm:$0xf] %vm3959, %v3519
  %4033 = vst.msk [vmem:[%s3 + $0x124] sm:$0xf] %vm3959, %v3520
  %4034 = vst.msk [vmem:[%s3 + $0x128] sm:$0xf] %vm3959, %v3521
  %4035 = vst.msk [vmem:[%s3 + $0x12c] sm:$0xf] %vm3959, %v3522
  %4036 = vst.msk [vmem:[%s3 + $0x130] sm:$0xf] %vm3959, %v3523
  %4037 = vst.msk [vmem:[%s3 + $0x134] sm:$0xf] %vm3959, %v3524
  %4038 = vst.msk [vmem:[%s3 + $0x138] sm:$0xf] %vm3959, %v3525
  %4039 = vst.msk [vmem:[%s3 + $0x13c] sm:$0xf] %vm3959, %v3526
  %4040 = vst.msk [vmem:[%s3 + $0x140] sm:$0xf] %vm3959, %v3527
  %4041 = vst.msk [vmem:[%s3 + $0x144] sm:$0xf] %vm3959, %v3528
  %4042 = vst.msk [vmem:[%s3 + $0x148] sm:$0xf] %vm3959, %v3529
  %4043 = vst.msk [vmem:[%s3 + $0x14c] sm:$0xf] %vm3959, %v3530
  %4044 = vst.msk [vmem:[%s3 + $0x150] sm:$0xf] %vm3959, %v3531
  %4045 = vst.msk [vmem:[%s3 + $0x154] sm:$0xf] %vm3959, %v3532
  %4046 = vst.msk [vmem:[%s3 + $0x158] sm:$0xf] %vm3959, %v3533
  %4047 = vst.msk [vmem:[%s3 + $0x15c] sm:$0xf] %vm3959, %v3534
  %4048 = vst.msk [vmem:[%s3 + $0x160] sm:$0xf] %vm3959, %v3535
  %4049 = vst.msk [vmem:[%s3 + $0x164] sm:$0xf] %vm3959, %v3536
  %4050 = vst.msk [vmem:[%s3 + $0x168] sm:$0xf] %vm3959, %v3537
  %4051 = vst.msk [vmem:[%s3 + $0x16c] sm:$0xf] %vm3959, %v3538
  %4052 = vst.msk [vmem:[%s3 + $0x170] sm:$0xf] %vm3959, %v3539
  %4053 = vst.msk [vmem:[%s3 + $0x174] sm:$0xf] %vm3959, %v3540
  %4054 = vst.msk [vmem:[%s3 + $0x178] sm:$0xf] %vm3959, %v3541
  %4055 = vst.msk [vmem:[%s3 + $0x17c] sm:$0xf] %vm3959, %v3542
  %4056 = vst.msk [vmem:[%s3 + $0x180] sm:$0xf] %vm3959, %v3543
  %4057 = vst.msk [vmem:[%s3 + $0x184] sm:$0xf] %vm3959, %v3544
  %4058 = vst.msk [vmem:[%s3 + $0x188] sm:$0xf] %vm3959, %v3545
  %4059 = vst.msk [vmem:[%s3 + $0x18c] sm:$0xf] %vm3959, %v3546
  %4060 = vst.msk [vmem:[%s3 + $0x190] sm:$0xf] %vm3959, %v3547
  %4061 = vst.msk [vmem:[%s3 + $0x194] sm:$0xf] %vm3959, %v3548
  %4062 = vst.msk [vmem:[%s3 + $0x198] sm:$0xf] %vm3959, %v3549
  %4063 = vst.msk [vmem:[%s3 + $0x19c] sm:$0xf] %vm3959, %v3550
  %4064 = vst.msk [vmem:[%s3 + $0x1a0] sm:$0xf] %vm3959, %v3551
  %4065 = vst.msk [vmem:[%s3 + $0x1a4] sm:$0xf] %vm3959, %v3552
  %4066 = vst.msk [vmem:[%s3 + $0x1a8] sm:$0xf] %vm3959, %v3553
  %4067 = vst.msk [vmem:[%s3 + $0x1ac] sm:$0xf] %vm3959, %v3554
  %4068 = vst.msk [vmem:[%s3 + $0x1b0] sm:$0xf] %vm3959, %v3555
  %4069 = vst.msk [vmem:[%s3 + $0x1b4] sm:$0xf] %vm3959, %v3556
  %4070 = vst.msk [vmem:[%s3 + $0x1b8] sm:$0xf] %vm3959, %v3557
  %4071 = vst.msk [vmem:[%s3 + $0x1bc] sm:$0xf] %vm3959, %v3558
  %4072 = vst.msk [vmem:[%s3 + $0x1c0] sm:$0xf] %vm3959, %v3559
  %4073 = vst.msk [vmem:[%s3 + $0x1c4] sm:$0xf] %vm3959, %v3560
  %4074 = vst.msk [vmem:[%s3 + $0x1c8] sm:$0xf] %vm3959, %v3561
  %4075 = vst.msk [vmem:[%s3 + $0x1cc] sm:$0xf] %vm3959, %v3562
  %4076 = vst.msk [vmem:[%s3 + $0x1d0] sm:$0xf] %vm3959, %v3563
  %4077 = vst.msk [vmem:[%s3 + $0x1d4] sm:$0xf] %vm3959, %v3564
  %4078 = vst.msk [vmem:[%s3 + $0x1d8] sm:$0xf] %vm3959, %v3565
  %4079 = vst.msk [vmem:[%s3 + $0x1dc] sm:$0xf] %vm3959, %v3566
  %4080 = vst.msk [vmem:[%s3 + $0x1e0] sm:$0xf] %vm3959, %v3567
  %4081 = vst.msk [vmem:[%s3 + $0x1e4] sm:$0xf] %vm3959, %v3568
  %4082 = vst.msk [vmem:[%s3 + $0x1e8] sm:$0xf] %vm3959, %v3569
  %4083 = vst.msk [vmem:[%s3 + $0x1ec] sm:$0xf] %vm3959, %v3570
  %4084 = vst.msk [vmem:[%s3 + $0x1f0] sm:$0xf] %vm3959, %v3571
  %4085 = vst.msk [vmem:[%s3 + $0x1f4] sm:$0xf] %vm3959, %v3572
  %4086 = vst.msk [vmem:[%s3 + $0x1f8] sm:$0xf] %vm3959, %v3573
  %4087 = vst.msk [vmem:[%s3 + $0x1fc] sm:$0xf] %vm3959, %v3574
  %4088 = vst.msk [vmem:[%s3 + $0x200] sm:$0xf] %vm3959, %v3575
  %4089 = vst.msk [vmem:[%s3 + $0x204] sm:$0xf] %vm3959, %v3576
  %4090 = vst.msk [vmem:[%s3 + $0x208] sm:$0xf] %vm3959, %v3577
  %4091 = vst.msk [vmem:[%s3 + $0x20c] sm:$0xf] %vm3959, %v3578
  %4092 = vst.msk [vmem:[%s3 + $0x210] sm:$0xf] %vm3959, %v3579
  %4093 = vst.msk [vmem:[%s3 + $0x214] sm:$0xf] %vm3959, %v3580
  %4094 = vst.msk [vmem:[%s3 + $0x218] sm:$0xf] %vm3959, %v3581
  %4095 = vst.msk [vmem:[%s3 + $0x21c] sm:$0xf] %vm3959, %v3582
  %4096 = vst.msk [vmem:[%s3 + $0x220] sm:$0xf] %vm3959, %v3583
  %4097 = vst.msk [vmem:[%s3 + $0x224] sm:$0xf] %vm3959, %v3584
  %4098 = vst.msk [vmem:[%s3 + $0x228] sm:$0xf] %vm3959, %v3585
  %4099 = vst.msk [vmem:[%s3 + $0x22c] sm:$0xf] %vm3959, %v3586
  %4100 = vst.msk [vmem:[%s3 + $0x230] sm:$0xf] %vm3959, %v3587
  %4101 = vst.msk [vmem:[%s3 + $0x234] sm:$0xf] %vm3959, %v3588
  %4102 = vst.msk [vmem:[%s3 + $0x238] sm:$0xf] %vm3959, %v3589
  %4103 = vst.msk [vmem:[%s3 + $0x23c] sm:$0xf] %vm3959, %v3590
  %4104 = vst.msk [vmem:[%s3 + $0x240] sm:$0xf] %vm3959, %v3591
  %4105 = vst.msk [vmem:[%s3 + $0x244] sm:$0xf] %vm3959, %v3592
  %4106 = vst.msk [vmem:[%s3 + $0x248] sm:$0xf] %vm3959, %v3593
  %4107 = vst.msk [vmem:[%s3 + $0x24c] sm:$0xf] %vm3959, %v3594
  %4108 = vst.msk [vmem:[%s3 + $0x250] sm:$0xf] %vm3959, %v3595
  %4109 = vst.msk [vmem:[%s3 + $0x254] sm:$0xf] %vm3959, %v3596
  %4110 = vst.msk [vmem:[%s3 + $0x258] sm:$0xf] %vm3959, %v3597
  %4111 = vst.msk [vmem:[%s3 + $0x25c] sm:$0xf] %vm3959, %v3598
  %4112 = vst.msk [vmem:[%s3 + $0x260] sm:$0xf] %vm3959, %v3599
  %4113 = vst.msk [vmem:[%s3 + $0x264] sm:$0xf] %vm3959, %v3600
  %4114 = vst.msk [vmem:[%s3 + $0x268] sm:$0xf] %vm3959, %v3601
  %4115 = vst.msk [vmem:[%s3 + $0x26c] sm:$0xf] %vm3959, %v3602
  %4116 = vst.msk [vmem:[%s3 + $0x270] sm:$0xf] %vm3959, %v3603
  %4117 = vst.msk [vmem:[%s3 + $0x274] sm:$0xf] %vm3959, %v3604
  %4118 = vst.msk [vmem:[%s3 + $0x278] sm:$0xf] %vm3959, %v3605
  %4119 = vst.msk [vmem:[%s3 + $0x27c] sm:$0xf] %vm3959, %v3606
  %4120 = vst.msk [vmem:[%s3 + $0x280] sm:$0xf] %vm3959, %v3607
  %4121 = vst.msk [vmem:[%s3 + $0x284] sm:$0xf] %vm3959, %v3608
  %4122 = vst.msk [vmem:[%s3 + $0x288] sm:$0xf] %vm3959, %v3609
  %4123 = vst.msk [vmem:[%s3 + $0x28c] sm:$0xf] %vm3959, %v3610
  %4124 = vst.msk [vmem:[%s3 + $0x290] sm:$0xf] %vm3959, %v3611
  %4125 = vst.msk [vmem:[%s3 + $0x294] sm:$0xf] %vm3959, %v3612
  %4126 = vst.msk [vmem:[%s3 + $0x298] sm:$0xf] %vm3959, %v3613
  %4127 = vst.msk [vmem:[%s3 + $0x29c] sm:$0xf] %vm3959, %v3614
  %4128 = vst.msk [vmem:[%s3 + $0x2a0] sm:$0xf] %vm3959, %v3615
  %4129 = vst.msk [vmem:[%s3 + $0x2a4] sm:$0xf] %vm3959, %v3616
  %4130 = vst.msk [vmem:[%s3 + $0x2a8] sm:$0xf] %vm3959, %v3617
  %4131 = vst.msk [vmem:[%s3 + $0x2ac] sm:$0xf] %vm3959, %v3618
  %4132 = vst.msk [vmem:[%s3 + $0x2b0] sm:$0xf] %vm3959, %v3619
  %4133 = vst.msk [vmem:[%s3 + $0x2b4] sm:$0xf] %vm3959, %v3620
  %4134 = vst.msk [vmem:[%s3 + $0x2b8] sm:$0xf] %vm3959, %v3621
  %4135 = vst.msk [vmem:[%s3 + $0x2bc] sm:$0xf] %vm3959, %v3622
  %4136 = vst.msk [vmem:[%s3 + $0x2c0] sm:$0xf] %vm3959, %v3623
  %4137 = vst.msk [vmem:[%s3 + $0x2c4] sm:$0xf] %vm3959, %v3624
  %4138 = vst.msk [vmem:[%s3 + $0x2c8] sm:$0xf] %vm3959, %v3625
  %4139 = vst.msk [vmem:[%s3 + $0x2cc] sm:$0xf] %vm3959, %v3626
  %4140 = vst.msk [vmem:[%s3 + $0x2d0] sm:$0xf] %vm3959, %v3627
  %4141 = vst.msk [vmem:[%s3 + $0x2d4] sm:$0xf] %vm3959, %v3628
  %4142 = vst.msk [vmem:[%s3 + $0x2d8] sm:$0xf] %vm3959, %v3629
  %4143 = vst.msk [vmem:[%s3 + $0x2dc] sm:$0xf] %vm3959, %v3630
  %4144 = vst.msk [vmem:[%s3 + $0x2e0] sm:$0xf] %vm3959, %v3631
  %4145 = vst.msk [vmem:[%s3 + $0x2e4] sm:$0xf] %vm3959, %v3632
  %4146 = vst.msk [vmem:[%s3 + $0x2e8] sm:$0xf] %vm3959, %v3633
  %4147 = vst.msk [vmem:[%s3 + $0x2ec] sm:$0xf] %vm3959, %v3634
  %4148 = vst.msk [vmem:[%s3 + $0x2f0] sm:$0xf] %vm3959, %v3635
  %4149 = vst.msk [vmem:[%s3 + $0x2f4] sm:$0xf] %vm3959, %v3636
  %4150 = vst.msk [vmem:[%s3 + $0x2f8] sm:$0xf] %vm3959, %v3637
  %4151 = vst.msk [vmem:[%s3 + $0x2fc] sm:$0xf] %vm3959, %v3638
  %4152 = vst.msk [vmem:[%s3 + $0x300] sm:$0xf] %vm3959, %v3639
  %4153 = vst.msk [vmem:[%s3 + $0x304] sm:$0xf] %vm3959, %v3640
  %4154 = vst.msk [vmem:[%s3 + $0x308] sm:$0xf] %vm3959, %v3641
  %4155 = vst.msk [vmem:[%s3 + $0x30c] sm:$0xf] %vm3959, %v3642
  %4156 = vst.msk [vmem:[%s3 + $0x310] sm:$0xf] %vm3959, %v3643
  %4157 = vst.msk [vmem:[%s3 + $0x314] sm:$0xf] %vm3959, %v3644
  %4158 = vst.msk [vmem:[%s3 + $0x318] sm:$0xf] %vm3959, %v3645
  %4159 = vst.msk [vmem:[%s3 + $0x31c] sm:$0xf] %vm3959, %v3646
  %4160 = vst.msk [vmem:[%s3 + $0x320] sm:$0xf] %vm3959, %v3647
  %4161 = vst.msk [vmem:[%s3 + $0x324] sm:$0xf] %vm3959, %v3648
  %4162 = vst.msk [vmem:[%s3 + $0x328] sm:$0xf] %vm3959, %v3649
  %4163 = vst.msk [vmem:[%s3 + $0x32c] sm:$0xf] %vm3959, %v3650
  %4164 = vst.msk [vmem:[%s3 + $0x330] sm:$0xf] %vm3959, %v3651
  %4165 = vst.msk [vmem:[%s3 + $0x334] sm:$0xf] %vm3959, %v3652
  %4166 = vst.msk [vmem:[%s3 + $0x338] sm:$0xf] %vm3959, %v3653
  %4167 = vst.msk [vmem:[%s3 + $0x33c] sm:$0xf] %vm3959, %v3654
  %4168 = vst.msk [vmem:[%s3 + $0x340] sm:$0xf] %vm3959, %v3655
  %4169 = vst.msk [vmem:[%s3 + $0x344] sm:$0xf] %vm3959, %v3656
  %4170 = vst.msk [vmem:[%s3 + $0x348] sm:$0xf] %vm3959, %v3657
  %4171 = vst.msk [vmem:[%s3 + $0x34c] sm:$0xf] %vm3959, %v3658
  %4172 = vst.msk [vmem:[%s3 + $0x350] sm:$0xf] %vm3959, %v3659
  %4173 = vst.msk [vmem:[%s3 + $0x354] sm:$0xf] %vm3959, %v3660
  %4174 = vst.msk [vmem:[%s3 + $0x358] sm:$0xf] %vm3959, %v3661
  %4175 = vst.msk [vmem:[%s3 + $0x35c] sm:$0xf] %vm3959, %v3662
  %4176 = vst.msk [vmem:[%s3 + $0x360] sm:$0xf] %vm3959, %v3663
  %4177 = vst.msk [vmem:[%s3 + $0x364] sm:$0xf] %vm3959, %v3664
  %4178 = vst.msk [vmem:[%s3 + $0x368] sm:$0xf] %vm3959, %v3665
  %4179 = vst.msk [vmem:[%s3 + $0x36c] sm:$0xf] %vm3959, %v3666
  %4180 = vst.msk [vmem:[%s3 + $0x370] sm:$0xf] %vm3959, %v3667
  %4181 = vst.msk [vmem:[%s3 + $0x374] sm:$0xf] %vm3959, %v3668
  %4182 = vst.msk [vmem:[%s3 + $0x378] sm:$0xf] %vm3959, %v3669
  %4183 = vst.msk [vmem:[%s3 + $0x37c] sm:$0xf] %vm3959, %v3670
  %4184 = vst.msk [vmem:[%s3 + $0x380] sm:$0xf] %vm3959, %v3671
  %4185 = vst.msk [vmem:[%s3 + $0x384] sm:$0xf] %vm3959, %v3672
  %4186 = vst.msk [vmem:[%s3 + $0x388] sm:$0xf] %vm3959, %v3673
  %4187 = vst.msk [vmem:[%s3 + $0x38c] sm:$0xf] %vm3959, %v3674
  %4188 = vst.msk [vmem:[%s3 + $0x390] sm:$0xf] %vm3959, %v3675
  %4189 = vst.msk [vmem:[%s3 + $0x394] sm:$0xf] %vm3959, %v3676
  %4190 = vst.msk [vmem:[%s3 + $0x398] sm:$0xf] %vm3959, %v3677
  %4191 = vst.msk [vmem:[%s3 + $0x39c] sm:$0xf] %vm3959, %v3678
  %4192 = vst.msk [vmem:[%s3 + $0x3a0] sm:$0xf] %vm3959, %v3679
  %4193 = vst.msk [vmem:[%s3 + $0x3a4] sm:$0xf] %vm3959, %v3680
  %4194 = vst.msk [vmem:[%s3 + $0x3a8] sm:$0xf] %vm3959, %v3681
  %4195 = vst.msk [vmem:[%s3 + $0x3ac] sm:$0xf] %vm3959, %v3682
  %4196 = vst.msk [vmem:[%s3 + $0x3b0] sm:$0xf] %vm3959, %v3683
  %4197 = vst.msk [vmem:[%s3 + $0x3b4] sm:$0xf] %vm3959, %v3684
  %4198 = vst.msk [vmem:[%s3 + $0x3b8] sm:$0xf] %vm3959, %v3685
  %4199 = vst.msk [vmem:[%s3 + $0x3bc] sm:$0xf] %vm3959, %v3686
  %4200 = vst.msk [vmem:[%s3 + $0x3c0] sm:$0xf] %vm3959, %v3687
  %4201 = vst.msk [vmem:[%s3 + $0x3c4] sm:$0xf] %vm3959, %v3688
  %4202 = vst.msk [vmem:[%s3 + $0x3c8] sm:$0xf] %vm3959, %v3689
  %4203 = vst.msk [vmem:[%s3 + $0x3cc] sm:$0xf] %vm3959, %v3690
  %4204 = vst.msk [vmem:[%s3 + $0x3d0] sm:$0xf] %vm3959, %v3691
  %4205 = vst.msk [vmem:[%s3 + $0x3d4] sm:$0xf] %vm3959, %v3692
  %4206 = vst.msk [vmem:[%s3 + $0x3d8] sm:$0xf] %vm3959, %v3693
  %4207 = vst.msk [vmem:[%s3 + $0x3dc] sm:$0xf] %vm3959, %v3694
  %4208 = vst.msk [vmem:[%s3 + $0x3e0] sm:$0xf] %vm3959, %v3695
  %4209 = vst.msk [vmem:[%s3 + $0x3e4] sm:$0xf] %vm3959, %v3696
  %4210 = vst.msk [vmem:[%s3 + $0x3e8] sm:$0xf] %vm3959, %v3697
  %4211 = vst.msk [vmem:[%s3 + $0x3ec] sm:$0xf] %vm3959, %v3698
  %4212 = vst.msk [vmem:[%s3 + $0x3f0] sm:$0xf] %vm3959, %v3699
  %4213 = vst.msk [vmem:[%s3 + $0x3f4] sm:$0xf] %vm3959, %v3700
  %4214 = vst.msk [vmem:[%s3 + $0x3f8] sm:$0xf] %vm3959, %v3701
  %4215 = vst.msk [vmem:[%s3 + $0x3fc] sm:$0xf] %vm3959, %v3702
  // Predicated region
  $region14: #{vgg_discriminator.11} parent=0 // pred_check
    _
  $region15: #{vgg_discriminator.11} parent=0 // pred_check_branch
    %4217 = sbr.rel (0) target = $region17
  $region16: #{vgg_discriminator.11} parent=0 // pred_region
    _
  $region17: #{vgg_discriminator.11} parent=0 // pred_fallthru
    _
  // Predicated region
  $region18: #{vgg_discriminator.11} parent=0 // pred_check
    _
  $region19: #{vgg_discriminator.11} parent=0 // pred_check_branch
    %4219 = sbr.rel (0) target = $region21
  $region20: #{vgg_discriminator.11} parent=0 // pred_region
    _
  $region21: #{vgg_discriminator.11} parent=0 // pred_fallthru
    _

// kernel: vgg_discriminator.12
$region0: #{vgg_discriminator.12}
  #allocation0 [shape = 'u32[]', space=smem, size = 0x4, offset = 0x4, fixed_abs, tag = 'smem constant byte address 0x4 - core index']
  #allocation1 [shape = 'u32[144,128]{1,0:T(1,128)}', space=vmem, size = 0x12000, scoped, tag = 'internal scratch']
  %s0 = inlined_call_operand.vmem [shape: bf16[512,128], index: 0, kind: input, shape index: {}]
  %s1 = inlined_call_operand.vmem [shape: bf16[128,8], index: 1, kind: input, shape index: {}]
  %s2 = inlined_call_operand.vmem [shape: f32[1,8], index: 2, kind: input, shape index: {}]
  %s3 = inlined_call_operand.vmem [shape: f32[1,8], index: 3, kind: input, shape index: {}]
  %s4 = inlined_call_operand.vmem [shape: bf16[512,8], index: 4, kind: output, shape index: {}]
  %s5 = sld [smem:[#allocation0]]
  $region26: #{vgg_discriminator.12} parent=0
    _
  %s7 = ssub.s32 1, %s5
  %s8 = scalar_select 0, %s7, %s5
  // Predicated region
  $region2: #{vgg_discriminator.12} parent=0 // pred_check
    _
  $region3: #{vgg_discriminator.12} parent=0 // pred_check_branch
    %10 = sbr.rel (0) target = $region5
  $region4: #{vgg_discriminator.12} parent=0 // pred_region
    _
  $region5: #{vgg_discriminator.12} parent=0 // pred_fallthru
    _
  // Predicated region
  $region6: #{vgg_discriminator.12} parent=0 // pred_check
    _
  $region7: #{vgg_discriminator.12} parent=0 // pred_check_branch
    %12 = sbr.rel (0) target = $region9
  $region8: #{vgg_discriminator.12} parent=0 // pred_region
    _
  $region9: #{vgg_discriminator.12} parent=0 // pred_fallthru
    _
  // Predicated region
  $region10: #{vgg_discriminator.12} parent=0 // pred_check
    _
  $region11: #{vgg_discriminator.12} parent=0 // pred_check_branch
    %14 = sbr.rel (0) target = $region13
  $region12: #{vgg_discriminator.12} parent=0 // pred_region
    _
  $region13: #{vgg_discriminator.12} parent=0 // pred_fallthru
    _
  // Predicated region
  $region14: #{vgg_discriminator.12} parent=0 // pred_check
    _
  $region15: #{vgg_discriminator.12} parent=0 // pred_check_branch
    %16 = sbr.rel (0) target = $region17
  $region16: #{vgg_discriminator.12} parent=0 // pred_region
    _
  $region17: #{vgg_discriminator.12} parent=0 // pred_fallthru
    _
  %v18 = vld [vmem:[%s0] sm:$0xf]
  %v19 = vld [vmem:[%s0 + $0x4] sm:$0xf]
  %v20 = vld [vmem:[%s0 + $0x8] sm:$0xf]
  %v21 = vld [vmem:[%s0 + $0xc] sm:$0xf]
  %v22 = vld [vmem:[%s0 + $0x10] sm:$0xf]
  %v23 = vld [vmem:[%s0 + $0x14] sm:$0xf]
  %v24 = vld [vmem:[%s0 + $0x18] sm:$0xf]
  %v25 = vld [vmem:[%s0 + $0x1c] sm:$0xf]
  %v26 = vld [vmem:[%s0 + $0x20] sm:$0xf]
  %v27 = vld [vmem:[%s0 + $0x24] sm:$0xf]
  %v28 = vld [vmem:[%s0 + $0x28] sm:$0xf]
  %v29 = vld [vmem:[%s0 + $0x2c] sm:$0xf]
  %v30 = vld [vmem:[%s0 + $0x30] sm:$0xf]
  %v31 = vld [vmem:[%s0 + $0x34] sm:$0xf]
  %v32 = vld [vmem:[%s0 + $0x38] sm:$0xf]
  %v33 = vld [vmem:[%s0 + $0x3c] sm:$0xf]
  %v34 = vld [vmem:[%s0 + $0x40] sm:$0xf]
  %v35 = vld [vmem:[%s0 + $0x44] sm:$0xf]
  %v36 = vld [vmem:[%s0 + $0x48] sm:$0xf]
  %v37 = vld [vmem:[%s0 + $0x4c] sm:$0xf]
  %v38 = vld [vmem:[%s0 + $0x50] sm:$0xf]
  %v39 = vld [vmem:[%s0 + $0x54] sm:$0xf]
  %v40 = vld [vmem:[%s0 + $0x58] sm:$0xf]
  %v41 = vld [vmem:[%s0 + $0x5c] sm:$0xf]
  %v42 = vld [vmem:[%s0 + $0x60] sm:$0xf]
  %v43 = vld [vmem:[%s0 + $0x64] sm:$0xf]
  %v44 = vld [vmem:[%s0 + $0x68] sm:$0xf]
  %v45 = vld [vmem:[%s0 + $0x6c] sm:$0xf]
  %v46 = vld [vmem:[%s0 + $0x70] sm:$0xf]
  %v47 = vld [vmem:[%s0 + $0x74] sm:$0xf]
  %v48 = vld [vmem:[%s0 + $0x78] sm:$0xf]
  %v49 = vld [vmem:[%s0 + $0x7c] sm:$0xf]
  %v50 = vld [vmem:[%s0 + $0x80] sm:$0xf]
  %v51 = vld [vmem:[%s0 + $0x84] sm:$0xf]
  %v52 = vld [vmem:[%s0 + $0x88] sm:$0xf]
  %v53 = vld [vmem:[%s0 + $0x8c] sm:$0xf]
  %v54 = vld [vmem:[%s0 + $0x90] sm:$0xf]
  %v55 = vld [vmem:[%s0 + $0x94] sm:$0xf]
  %v56 = vld [vmem:[%s0 + $0x98] sm:$0xf]
  %v57 = vld [vmem:[%s0 + $0x9c] sm:$0xf]
  %v58 = vld [vmem:[%s0 + $0xa0] sm:$0xf]
  %v59 = vld [vmem:[%s0 + $0xa4] sm:$0xf]
  %v60 = vld [vmem:[%s0 + $0xa8] sm:$0xf]
  %v61 = vld [vmem:[%s0 + $0xac] sm:$0xf]
  %v62 = vld [vmem:[%s0 + $0xb0] sm:$0xf]
  %v63 = vld [vmem:[%s0 + $0xb4] sm:$0xf]
  %v64 = vld [vmem:[%s0 + $0xb8] sm:$0xf]
  %v65 = vld [vmem:[%s0 + $0xbc] sm:$0xf]
  %v66 = vld [vmem:[%s0 + $0xc0] sm:$0xf]
  %v67 = vld [vmem:[%s0 + $0xc4] sm:$0xf]
  %v68 = vld [vmem:[%s0 + $0xc8] sm:$0xf]
  %v69 = vld [vmem:[%s0 + $0xcc] sm:$0xf]
  %v70 = vld [vmem:[%s0 + $0xd0] sm:$0xf]
  %v71 = vld [vmem:[%s0 + $0xd4] sm:$0xf]
  %v72 = vld [vmem:[%s0 + $0xd8] sm:$0xf]
  %v73 = vld [vmem:[%s0 + $0xdc] sm:$0xf]
  %v74 = vld [vmem:[%s0 + $0xe0] sm:$0xf]
  %v75 = vld [vmem:[%s0 + $0xe4] sm:$0xf]
  %v76 = vld [vmem:[%s0 + $0xe8] sm:$0xf]
  %v77 = vld [vmem:[%s0 + $0xec] sm:$0xf]
  %v78 = vld [vmem:[%s0 + $0xf0] sm:$0xf]
  %v79 = vld [vmem:[%s0 + $0xf4] sm:$0xf]
  %v80 = vld [vmem:[%s0 + $0xf8] sm:$0xf]
  %v81 = vld [vmem:[%s0 + $0xfc] sm:$0xf]
  %v82 = vld [vmem:[%s1] sm:$0xf]
  %v83 = vld [vmem:[%s1 + $0x4] sm:$0xf]
  %v84 = vld [vmem:[%s1 + $0x8] sm:$0xf]
  %v85 = vld [vmem:[%s1 + $0xc] sm:$0xf]
  %v86 = vld [vmem:[%s1 + $0x10] sm:$0xf]
  %v87 = vld [vmem:[%s1 + $0x14] sm:$0xf]
  %v88 = vld [vmem:[%s1 + $0x18] sm:$0xf]
  %v89 = vld [vmem:[%s1 + $0x1c] sm:$0xf]
  %v90 = vld [vmem:[%s1 + $0x20] sm:$0xf]
  %v91 = vld [vmem:[%s1 + $0x24] sm:$0xf]
  %v92 = vld [vmem:[%s1 + $0x28] sm:$0xf]
  %v93 = vld [vmem:[%s1 + $0x2c] sm:$0xf]
  %v94 = vld [vmem:[%s1 + $0x30] sm:$0xf]
  %v95 = vld [vmem:[%s1 + $0x34] sm:$0xf]
  %v96 = vld [vmem:[%s1 + $0x38] sm:$0xf]
  %v97 = vld [vmem:[%s1 + $0x3c] sm:$0xf]
  %v162 = vunpack.c.l.b16 %v18
  %v163 = vunpack.c.l.b16 %v19
  %v164 = vunpack.c.l.b16 %v20
  %v165 = vunpack.c.l.b16 %v21
  %v166 = vunpack.c.l.b16 %v22
  %v167 = vunpack.c.l.b16 %v23
  %v168 = vunpack.c.l.b16 %v24
  %v169 = vunpack.c.l.b16 %v25
  %v170 = vunpack.c.l.b16 %v26
  %v171 = vunpack.c.l.b16 %v27
  %v172 = vunpack.c.l.b16 %v28
  %v173 = vunpack.c.l.b16 %v29
  %v174 = vunpack.c.l.b16 %v30
  %v175 = vunpack.c.l.b16 %v31
  %v176 = vunpack.c.l.b16 %v32
  %v177 = vunpack.c.l.b16 %v33
  %v178 = vunpack.c.l.b16 %v34
  %v179 = vunpack.c.l.b16 %v35
  %v180 = vunpack.c.l.b16 %v36
  %v181 = vunpack.c.l.b16 %v37
  %v182 = vunpack.c.l.b16 %v38
  %v183 = vunpack.c.l.b16 %v39
  %v184 = vunpack.c.l.b16 %v40
  %v185 = vunpack.c.l.b16 %v41
  %v186 = vunpack.c.l.b16 %v42
  %v187 = vunpack.c.l.b16 %v43
  %v188 = vunpack.c.l.b16 %v44
  %v189 = vunpack.c.l.b16 %v45
  %v190 = vunpack.c.l.b16 %v46
  %v191 = vunpack.c.l.b16 %v47
  %v192 = vunpack.c.l.b16 %v48
  %v193 = vunpack.c.l.b16 %v49
  %v194 = vunpack.c.l.b16 %v50
  %v195 = vunpack.c.l.b16 %v51
  %v196 = vunpack.c.l.b16 %v52
  %v197 = vunpack.c.l.b16 %v53
  %v198 = vunpack.c.l.b16 %v54
  %v199 = vunpack.c.l.b16 %v55
  %v200 = vunpack.c.l.b16 %v56
  %v201 = vunpack.c.l.b16 %v57
  %v202 = vunpack.c.l.b16 %v58
  %v203 = vunpack.c.l.b16 %v59
  %v204 = vunpack.c.l.b16 %v60
  %v205 = vunpack.c.l.b16 %v61
  %v206 = vunpack.c.l.b16 %v62
  %v207 = vunpack.c.l.b16 %v63
  %v208 = vunpack.c.l.b16 %v64
  %v209 = vunpack.c.l.b16 %v65
  %v210 = vunpack.c.l.b16 %v66
  %v211 = vunpack.c.l.b16 %v67
  %v212 = vunpack.c.l.b16 %v68
  %v213 = vunpack.c.l.b16 %v69
  %v214 = vunpack.c.l.b16 %v70
  %v215 = vunpack.c.l.b16 %v71
  %v216 = vunpack.c.l.b16 %v72
  %v217 = vunpack.c.l.b16 %v73
  %v218 = vunpack.c.l.b16 %v74
  %v219 = vunpack.c.l.b16 %v75
  %v220 = vunpack.c.l.b16 %v76
  %v221 = vunpack.c.l.b16 %v77
  %v222 = vunpack.c.l.b16 %v78
  %v223 = vunpack.c.l.b16 %v79
  %v224 = vunpack.c.l.b16 %v80
  %v225 = vunpack.c.l.b16 %v81
  %v226 = vpack.c.b16 %v163, %v162
  %v227 = vpack.c.b16 %v165, %v164
  %v228 = vpack.c.b16 %v167, %v166
  %v229 = vpack.c.b16 %v169, %v168
  %v230 = vpack.c.b16 %v171, %v170
  %v231 = vpack.c.b16 %v173, %v172
  %v232 = vpack.c.b16 %v175, %v174
  %v233 = vpack.c.b16 %v177, %v176
  %v234 = vpack.c.b16 %v179, %v178
  %v235 = vpack.c.b16 %v181, %v180
  %v236 = vpack.c.b16 %v183, %v182
  %v237 = vpack.c.b16 %v185, %v184
  %v238 = vpack.c.b16 %v187, %v186
  %v239 = vpack.c.b16 %v189, %v188
  %v240 = vpack.c.b16 %v191, %v190
  %v241 = vpack.c.b16 %v193, %v192
  %v242 = vpack.c.b16 %v195, %v194
  %v243 = vpack.c.b16 %v197, %v196
  %v244 = vpack.c.b16 %v199, %v198
  %v245 = vpack.c.b16 %v201, %v200
  %v246 = vpack.c.b16 %v203, %v202
  %v247 = vpack.c.b16 %v205, %v204
  %v248 = vpack.c.b16 %v207, %v206
  %v249 = vpack.c.b16 %v209, %v208
  %v250 = vpack.c.b16 %v211, %v210
  %v251 = vpack.c.b16 %v213, %v212
  %v252 = vpack.c.b16 %v215, %v214
  %v253 = vpack.c.b16 %v217, %v216
  %v254 = vpack.c.b16 %v219, %v218
  %v255 = vpack.c.b16 %v221, %v220
  %v256 = vpack.c.b16 %v223, %v222
  %v257 = vpack.c.b16 %v225, %v224
  %v306 = vunpack.c.l.b16 %v82
  %v307 = vunpack.c.l.b16 %v83
  %v308 = vunpack.c.l.b16 %v84
  %v309 = vunpack.c.l.b16 %v85
  %v310 = vunpack.c.l.b16 %v86
  %v311 = vunpack.c.l.b16 %v87
  %v312 = vunpack.c.l.b16 %v88
  %v313 = vunpack.c.l.b16 %v89
  %v314 = vunpack.c.l.b16 %v90
  %v315 = vunpack.c.l.b16 %v91
  %v316 = vunpack.c.l.b16 %v92
  %v317 = vunpack.c.l.b16 %v93
  %v318 = vunpack.c.l.b16 %v94
  %v319 = vunpack.c.l.b16 %v95
  %v320 = vunpack.c.l.b16 %v96
  %v321 = vunpack.c.l.b16 %v97
  %v322 = vpack.c.b16 %v307, %v306
  %v323 = vpack.c.b16 %v309, %v308
  %v324 = vpack.c.b16 %v311, %v310
  %v325 = vpack.c.b16 %v313, %v312
  %v326 = vpack.c.b16 %v315, %v314
  %v327 = vpack.c.b16 %v317, %v316
  %v328 = vpack.c.b16 %v319, %v318
  %v329 = vpack.c.b16 %v321, %v320
  %338 = vmatprep.subr.bf16.mxu0 0
  %339 = vmatpush1.bf16.msra.mxu0 %v322
  %340 = vmatprep.subr.bf16.mxu0 0
  %341 = vmatpush1.bf16.msra.mxu0 %v323
  %342 = vmatprep.subr.bf16.mxu0 0
  %343 = vmatpush1.bf16.msra.mxu0 %v324
  %344 = vmatprep.subr.bf16.mxu0 0
  %345 = vmatpush1.bf16.msra.mxu0 %v325
  %346 = vmatprep.subr.bf16.mxu0 0
  %347 = vmatpush1.bf16.msra.mxu0 %v326
  %348 = vmatprep.subr.bf16.mxu0 0
  %349 = vmatpush1.bf16.msra.mxu0 %v327
  %350 = vmatprep.subr.bf16.mxu0 0
  %351 = vmatpush1.bf16.msra.mxu0 %v328
  %352 = vmatprep.subr.bf16.mxu0 0
  %353 = vmatpush1.bf16.msra.mxu0 %v329
  %354 = vmatprep.subr.bf16.mxu0 0
  %355 = vmatpush1.bf16.msra.mxu0 0
  %356 = vmatprep.subr.bf16.mxu0 0
  %357 = vmatpush1.bf16.msra.mxu0 0
  %358 = vmatprep.subr.bf16.mxu0 0
  %359 = vmatpush1.bf16.msra.mxu0 0
  %360 = vmatprep.subr.bf16.mxu0 0
  %361 = vmatpush1.bf16.msra.mxu0 0
  %362 = vmatprep.subr.bf16.mxu0 0
  %363 = vmatpush1.bf16.msra.mxu0 0
  %364 = vmatprep.subr.bf16.mxu0 0
  %365 = vmatpush1.bf16.msra.mxu0 0
  %366 = vmatprep.subr.bf16.mxu0 0
  %367 = vmatpush1.bf16.msra.mxu0 0
  %368 = vmatprep.subr.bf16.mxu0 0
  %369 = vmatpush1.bf16.msra.mxu0 0
  %370 = vmatprep.mubr.bf16.mxu0 0
  %371 = vmatmul.mubr.bf16.gmra.mrb[0].mxu0 %v226
  %v372 = vpop.f32.mrb[0].mxu0
  %v373 = vadd.f32 0.0, %v372
  %v374 = vpop.f32.mrb[0].mxu0
  %v375 = vpop.f32.mrb[0].mxu0
  %v376 = vadd.f32 0.0, %v375
  %v377 = vpop.f32.mrb[0].mxu0
  %378 = vmatprep.mubr.bf16.mxu0 0
  %379 = vmatmul.mubr.bf16.gmra.mrb[0].mxu0 %v227
  %v380 = vpop.f32.mrb[0].mxu0
  %v381 = vadd.f32 0.0, %v380
  %v382 = vpop.f32.mrb[0].mxu0
  %v383 = vpop.f32.mrb[0].mxu0
  %v384 = vadd.f32 0.0, %v383
  %v385 = vpop.f32.mrb[0].mxu0
  %386 = vmatprep.mubr.bf16.mxu0 0
  %387 = vmatmul.mubr.bf16.gmra.mrb[0].mxu0 %v228
  %v388 = vpop.f32.mrb[0].mxu0
  %v389 = vadd.f32 0.0, %v388
  %v390 = vpop.f32.mrb[0].mxu0
  %v391 = vpop.f32.mrb[0].mxu0
  %v392 = vadd.f32 0.0, %v391
  %v393 = vpop.f32.mrb[0].mxu0
  %394 = vmatprep.mubr.bf16.mxu0 0
  %395 = vmatmul.mubr.bf16.gmra.mrb[0].mxu0 %v229
  %v396 = vpop.f32.mrb[0].mxu0
  %v397 = vadd.f32 0.0, %v396
  %v398 = vpop.f32.mrb[0].mxu0
  %v399 = vpop.f32.mrb[0].mxu0
  %v400 = vadd.f32 0.0, %v399
  %v401 = vpop.f32.mrb[0].mxu0
  %402 = vmatprep.mubr.bf16.mxu0 0
  %403 = vmatmul.mubr.bf16.gmra.mrb[0].mxu0 %v230
  %v404 = vpop.f32.mrb[0].mxu0
  %v405 = vadd.f32 0.0, %v404
  %v406 = vpop.f32.mrb[0].mxu0
  %v407 = vpop.f32.mrb[0].mxu0
  %v408 = vadd.f32 0.0, %v407
  %v409 = vpop.f32.mrb[0].mxu0
  %410 = vmatprep.mubr.bf16.mxu0 0
  %411 = vmatmul.mubr.bf16.gmra.mrb[0].mxu0 %v231
  %v412 = vpop.f32.mrb[0].mxu0
  %v413 = vadd.f32 0.0, %v412
  %v414 = vpop.f32.mrb[0].mxu0
  %v415 = vpop.f32.mrb[0].mxu0
  %v416 = vadd.f32 0.0, %v415
  %v417 = vpop.f32.mrb[0].mxu0
  %418 = vmatprep.mubr.bf16.mxu0 0
  %419 = vmatmul.mubr.bf16.gmra.mrb[0].mxu0 %v232
  %v420 = vpop.f32.mrb[0].mxu0
  %v421 = vadd.f32 0.0, %v420
  %v422 = vpop.f32.mrb[0].mxu0
  %v423 = vpop.f32.mrb[0].mxu0
  %v424 = vadd.f32 0.0, %v423
  %v425 = vpop.f32.mrb[0].mxu0
  %426 = vmatprep.mubr.bf16.mxu0 0
  %427 = vmatmul.mubr.bf16.gmra.mrb[0].mxu0 %v233
  %v428 = vpop.f32.mrb[0].mxu0
  %v429 = vadd.f32 0.0, %v428
  %v430 = vpop.f32.mrb[0].mxu0
  %v431 = vpop.f32.mrb[0].mxu0
  %v432 = vadd.f32 0.0, %v431
  %v433 = vpop.f32.mrb[0].mxu0
  %434 = vmatprep.mubr.bf16.mxu0 0
  %435 = vmatmul.mubr.bf16.gmra.mrb[0].mxu0 %v234
  %v436 = vpop.f32.mrb[0].mxu0
  %v437 = vadd.f32 0.0, %v436
  %v438 = vpop.f32.mrb[0].mxu0
  %v439 = vpop.f32.mrb[0].mxu0
  %v440 = vadd.f32 0.0, %v439
  %v441 = vpop.f32.mrb[0].mxu0
  %442 = vmatprep.mubr.bf16.mxu0 0
  %443 = vmatmul.mubr.bf16.gmra.mrb[0].mxu0 %v235
  %v444 = vpop.f32.mrb[0].mxu0
  %v445 = vadd.f32 0.0, %v444
  %v446 = vpop.f32.mrb[0].mxu0
  %v447 = vpop.f32.mrb[0].mxu0
  %v448 = vadd.f32 0.0, %v447
  %v449 = vpop.f32.mrb[0].mxu0
  %450 = vmatprep.mubr.bf16.mxu0 0
  %451 = vmatmul.mubr.bf16.gmra.mrb[0].mxu0 %v236
  %v452 = vpop.f32.mrb[0].mxu0
  %v453 = vadd.f32 0.0, %v452
  %v454 = vpop.f32.mrb[0].mxu0
  %v455 = vpop.f32.mrb[0].mxu0
  %v456 = vadd.f32 0.0, %v455
  %v457 = vpop.f32.mrb[0].mxu0
  %458 = vmatprep.mubr.bf16.mxu0 0
  %459 = vmatmul.mubr.bf16.gmra.mrb[0].mxu0 %v237
  %v460 = vpop.f32.mrb[0].mxu0
  %v461 = vadd.f32 0.0, %v460
  %v462 = vpop.f32.mrb[0].mxu0
  %v463 = vpop.f32.mrb[0].mxu0
  %v464 = vadd.f32 0.0, %v463
  %v465 = vpop.f32.mrb[0].mxu0
  %466 = vmatprep.mubr.bf16.mxu0 0
  %467 = vmatmul.mubr.bf16.gmra.mrb[0].mxu0 %v238
  %v468 = vpop.f32.mrb[0].mxu0
  %v469 = vadd.f32 0.0, %v468
  %v470 = vpop.f32.mrb[0].mxu0
  %v471 = vpop.f32.mrb[0].mxu0
  %v472 = vadd.f32 0.0, %v471
  %v473 = vpop.f32.mrb[0].mxu0
  %474 = vmatprep.mubr.bf16.mxu0 0
  %475 = vmatmul.mubr.bf16.gmra.mrb[0].mxu0 %v239
  %v476 = vpop.f32.mrb[0].mxu0
  %v477 = vadd.f32 0.0, %v476
  %v478 = vpop.f32.mrb[0].mxu0
  %v479 = vpop.f32.mrb[0].mxu0
  %v480 = vadd.f32 0.0, %v479
  %v481 = vpop.f32.mrb[0].mxu0
  %482 = vmatprep.mubr.bf16.mxu0 0
  %483 = vmatmul.mubr.bf16.gmra.mrb[0].mxu0 %v240
  %v484 = vpop.f32.mrb[0].mxu0
  %v485 = vadd.f32 0.0, %v484
  %v486 = vpop.f32.mrb[0].mxu0
  %v487 = vpop.f32.mrb[0].mxu0
  %v488 = vadd.f32 0.0, %v487
  %v489 = vpop.f32.mrb[0].mxu0
  %490 = vmatprep.mubr.bf16.mxu0 0
  %491 = vmatmul.mubr.bf16.gmra.mrb[0].mxu0 %v241
  %v492 = vpop.f32.mrb[0].mxu0
  %v493 = vadd.f32 0.0, %v492
  %v494 = vpop.f32.mrb[0].mxu0
  %v495 = vpop.f32.mrb[0].mxu0
  %v496 = vadd.f32 0.0, %v495
  %v497 = vpop.f32.mrb[0].mxu0
  %498 = vmatprep.mubr.bf16.mxu0 0
  %499 = vmatmul.mubr.bf16.gmra.mrb[0].mxu0 %v242
  %v500 = vpop.f32.mrb[0].mxu0
  %v501 = vadd.f32 0.0, %v500
  %v502 = vpop.f32.mrb[0].mxu0
  %v503 = vpop.f32.mrb[0].mxu0
  %v504 = vadd.f32 0.0, %v503
  %v505 = vpop.f32.mrb[0].mxu0
  %506 = vmatprep.mubr.bf16.mxu0 0
  %507 = vmatmul.mubr.bf16.gmra.mrb[0].mxu0 %v243
  %v508 = vpop.f32.mrb[0].mxu0
  %v509 = vadd.f32 0.0, %v508
  %v510 = vpop.f32.mrb[0].mxu0
  %v511 = vpop.f32.mrb[0].mxu0
  %v512 = vadd.f32 0.0, %v511
  %v513 = vpop.f32.mrb[0].mxu0
  %514 = vmatprep.mubr.bf16.mxu0 0
  %515 = vmatmul.mubr.bf16.gmra.mrb[0].mxu0 %v244
  %v516 = vpop.f32.mrb[0].mxu0
  %v517 = vadd.f32 0.0, %v516
  %v518 = vpop.f32.mrb[0].mxu0
  %v519 = vpop.f32.mrb[0].mxu0
  %v520 = vadd.f32 0.0, %v519
  %v521 = vpop.f32.mrb[0].mxu0
  %522 = vmatprep.mubr.bf16.mxu0 0
  %523 = vmatmul.mubr.bf16.gmra.mrb[0].mxu0 %v245
  %v524 = vpop.f32.mrb[0].mxu0
  %v525 = vadd.f32 0.0, %v524
  %v526 = vpop.f32.mrb[0].mxu0
  %v527 = vpop.f32.mrb[0].mxu0
  %v528 = vadd.f32 0.0, %v527
  %v529 = vpop.f32.mrb[0].mxu0
  %530 = vmatprep.mubr.bf16.mxu0 0
  %531 = vmatmul.mubr.bf16.gmra.mrb[0].mxu0 %v246
  %v532 = vpop.f32.mrb[0].mxu0
  %v533 = vadd.f32 0.0, %v532
  %v534 = vpop.f32.mrb[0].mxu0
  %v535 = vpop.f32.mrb[0].mxu0
  %v536 = vadd.f32 0.0, %v535
  %v537 = vpop.f32.mrb[0].mxu0
  %538 = vmatprep.mubr.bf16.mxu0 0
  %539 = vmatmul.mubr.bf16.gmra.mrb[0].mxu0 %v247
  %v540 = vpop.f32.mrb[0].mxu0
  %v541 = vadd.f32 0.0, %v540
  %v542 = vpop.f32.mrb[0].mxu0
  %v543 = vpop.f32.mrb[0].mxu0
  %v544 = vadd.f32 0.0, %v543
  %v545 = vpop.f32.mrb[0].mxu0
  %546 = vmatprep.mubr.bf16.mxu0 0
  %547 = vmatmul.mubr.bf16.gmra.mrb[0].mxu0 %v248
  %v548 = vpop.f32.mrb[0].mxu0
  %v549 = vadd.f32 0.0, %v548
  %v550 = vpop.f32.mrb[0].mxu0
  %v551 = vpop.f32.mrb[0].mxu0
  %v552 = vadd.f32 0.0, %v551
  %v553 = vpop.f32.mrb[0].mxu0
  %554 = vmatprep.mubr.bf16.mxu0 0
  %555 = vmatmul.mubr.bf16.gmra.mrb[0].mxu0 %v249
  %v556 = vpop.f32.mrb[0].mxu0
  %v557 = vadd.f32 0.0, %v556
  %v558 = vpop.f32.mrb[0].mxu0
  %v559 = vpop.f32.mrb[0].mxu0
  %v560 = vadd.f32 0.0, %v559
  %v561 = vpop.f32.mrb[0].mxu0
  %562 = vmatprep.mubr.bf16.mxu0 0
  %563 = vmatmul.mubr.bf16.gmra.mrb[0].mxu0 %v250
  %v564 = vpop.f32.mrb[0].mxu0
  %v565 = vadd.f32 0.0, %v564
  %v566 = vpop.f32.mrb[0].mxu0
  %v567 = vpop.f32.mrb[0].mxu0
  %v568 = vadd.f32 0.0, %v567
  %v569 = vpop.f32.mrb[0].mxu0
  %570 = vmatprep.mubr.bf16.mxu0 0
  %571 = vmatmul.mubr.bf16.gmra.mrb[0].mxu0 %v251
  %v572 = vpop.f32.mrb[0].mxu0
  %v573 = vadd.f32 0.0, %v572
  %v574 = vpop.f32.mrb[0].mxu0
  %v575 = vpop.f32.mrb[0].mxu0
  %v576 = vadd.f32 0.0, %v575
  %v577 = vpop.f32.mrb[0].mxu0
  %578 = vmatprep.mubr.bf16.mxu0 0
  %579 = vmatmul.mubr.bf16.gmra.mrb[0].mxu0 %v252
  %v580 = vpop.f32.mrb[0].mxu0
  %v581 = vadd.f32 0.0, %v580
  %v582 = vpop.f32.mrb[0].mxu0
  %v583 = vpop.f32.mrb[0].mxu0
  %v584 = vadd.f32 0.0, %v583
  %v585 = vpop.f32.mrb[0].mxu0
  %586 = vmatprep.mubr.bf16.mxu0 0
  %587 = vmatmul.mubr.bf16.gmra.mrb[0].mxu0 %v253
  %v588 = vpop.f32.mrb[0].mxu0
  %v589 = vadd.f32 0.0, %v588
  %v590 = vpop.f32.mrb[0].mxu0
  %v591 = vpop.f32.mrb[0].mxu0
  %v592 = vadd.f32 0.0, %v591
  %v593 = vpop.f32.mrb[0].mxu0
  %594 = vmatprep.mubr.bf16.mxu0 0
  %595 = vmatmul.mubr.bf16.gmra.mrb[0].mxu0 %v254
  %v596 = vpop.f32.mrb[0].mxu0
  %v597 = vadd.f32 0.0, %v596
  %v598 = vpop.f32.mrb[0].mxu0
  %v599 = vpop.f32.mrb[0].mxu0
  %v600 = vadd.f32 0.0, %v599
  %v601 = vpop.f32.mrb[0].mxu0
  %602 = vmatprep.mubr.bf16.mxu0 0
  %603 = vmatmul.mubr.bf16.gmra.mrb[0].mxu0 %v255
  %v604 = vpop.f32.mrb[0].mxu0
  %v605 = vadd.f32 0.0, %v604
  %v606 = vpop.f32.mrb[0].mxu0
  %v607 = vpop.f32.mrb[0].mxu0
  %v608 = vadd.f32 0.0, %v607
  %v609 = vpop.f32.mrb[0].mxu0
  %610 = vmatprep.mubr.bf16.mxu0 0
  %611 = vmatmul.mubr.bf16.gmra.mrb[0].mxu0 %v256
  %v612 = vpop.f32.mrb[0].mxu0
  %v613 = vadd.f32 0.0, %v612
  %v614 = vpop.f32.mrb[0].mxu0
  %v615 = vpop.f32.mrb[0].mxu0
  %v616 = vadd.f32 0.0, %v615
  %v617 = vpop.f32.mrb[0].mxu0
  %618 = vmatprep.mubr.bf16.mxu0 0
  %619 = vmatmul.mubr.bf16.gmra.mrb[0].mxu0 %v257
  %v620 = vpop.f32.mrb[0].mxu0
  %v621 = vadd.f32 0.0, %v620
  %v622 = vpop.f32.mrb[0].mxu0
  %v623 = vpop.f32.mrb[0].mxu0
  %v624 = vadd.f32 0.0, %v623
  %v625 = vpop.f32.mrb[0].mxu0
  %626 = vdwg.mxu0
  %vm627 = vcmask 64512
  %v628 = vsel %vm627, %v373, 0.0
  %v629 = vsel %vm627, %v376, 0.0
  %v630 = vadd.f32 %v628, %v629
  %v631 = vsel %vm627, %v381, 0.0
  %v632 = vadd.f32 %v630, %v631
  %v633 = vsel %vm627, %v384, 0.0
  %v634 = vadd.f32 %v632, %v633
  %v635 = vsel %vm627, %v389, 0.0
  %v636 = vadd.f32 %v634, %v635
  %v637 = vsel %vm627, %v392, 0.0
  %v638 = vadd.f32 %v636, %v637
  %v639 = vsel %vm627, %v397, 0.0
  %v640 = vadd.f32 %v638, %v639
  %v641 = vsel %vm627, %v400, 0.0
  %v642 = vadd.f32 %v640, %v641
  %v643 = vsel %vm627, %v405, 0.0
  %v644 = vadd.f32 %v642, %v643
  %v645 = vsel %vm627, %v408, 0.0
  %v646 = vadd.f32 %v644, %v645
  %v647 = vsel %vm627, %v413, 0.0
  %v648 = vadd.f32 %v646, %v647
  %v649 = vsel %vm627, %v416, 0.0
  %v650 = vadd.f32 %v648, %v649
  %v651 = vsel %vm627, %v421, 0.0
  %v652 = vadd.f32 %v650, %v651
  %v653 = vsel %vm627, %v424, 0.0
  %v654 = vadd.f32 %v652, %v653
  %v655 = vsel %vm627, %v429, 0.0
  %v656 = vadd.f32 %v654, %v655
  %v657 = vsel %vm627, %v432, 0.0
  %v658 = vadd.f32 %v656, %v657
  %v659 = vsel %vm627, %v437, 0.0
  %v660 = vadd.f32 %v658, %v659
  %v661 = vsel %vm627, %v440, 0.0
  %v662 = vadd.f32 %v660, %v661
  %v663 = vsel %vm627, %v445, 0.0
  %v664 = vadd.f32 %v662, %v663
  %v665 = vsel %vm627, %v448, 0.0
  %v666 = vadd.f32 %v664, %v665
  %v667 = vsel %vm627, %v453, 0.0
  %v668 = vadd.f32 %v666, %v667
  %v669 = vsel %vm627, %v456, 0.0
  %v670 = vadd.f32 %v668, %v669
  %v671 = vsel %vm627, %v461, 0.0
  %v672 = vadd.f32 %v670, %v671
  %v673 = vsel %vm627, %v464, 0.0
  %v674 = vadd.f32 %v672, %v673
  %v675 = vsel %vm627, %v469, 0.0
  %v676 = vadd.f32 %v674, %v675
  %v677 = vsel %vm627, %v472, 0.0
  %v678 = vadd.f32 %v676, %v677
  %v679 = vsel %vm627, %v477, 0.0
  %v680 = vadd.f32 %v678, %v679
  %v681 = vsel %vm627, %v480, 0.0
  %v682 = vadd.f32 %v680, %v681
  %v683 = vsel %vm627, %v485, 0.0
  %v684 = vadd.f32 %v682, %v683
  %v685 = vsel %vm627, %v488, 0.0
  %v686 = vadd.f32 %v684, %v685
  %v687 = vsel %vm627, %v493, 0.0
  %v688 = vadd.f32 %v686, %v687
  %v689 = vsel %vm627, %v496, 0.0
  %v690 = vadd.f32 %v688, %v689
  %v691 = vsel %vm627, %v501, 0.0
  %v692 = vadd.f32 %v690, %v691
  %v693 = vsel %vm627, %v504, 0.0
  %v694 = vadd.f32 %v692, %v693
  %v695 = vsel %vm627, %v509, 0.0
  %v696 = vadd.f32 %v694, %v695
  %v697 = vsel %vm627, %v512, 0.0
  %v698 = vadd.f32 %v696, %v697
  %v699 = vsel %vm627, %v517, 0.0
  %v700 = vadd.f32 %v698, %v699
  %v701 = vsel %vm627, %v520, 0.0
  %v702 = vadd.f32 %v700, %v701
  %v703 = vsel %vm627, %v525, 0.0
  %v704 = vadd.f32 %v702, %v703
  %v705 = vsel %vm627, %v528, 0.0
  %v706 = vadd.f32 %v704, %v705
  %v707 = vsel %vm627, %v533, 0.0
  %v708 = vadd.f32 %v706, %v707
  %v709 = vsel %vm627, %v536, 0.0
  %v710 = vadd.f32 %v708, %v709
  %v711 = vsel %vm627, %v541, 0.0
  %v712 = vadd.f32 %v710, %v711
  %v713 = vsel %vm627, %v544, 0.0
  %v714 = vadd.f32 %v712, %v713
  %v715 = vsel %vm627, %v549, 0.0
  %v716 = vadd.f32 %v714, %v715
  %v717 = vsel %vm627, %v552, 0.0
  %v718 = vadd.f32 %v716, %v717
  %v719 = vsel %vm627, %v557, 0.0
  %v720 = vadd.f32 %v718, %v719
  %v721 = vsel %vm627, %v560, 0.0
  %v722 = vadd.f32 %v720, %v721
  %v723 = vsel %vm627, %v565, 0.0
  %v724 = vadd.f32 %v722, %v723
  %v725 = vsel %vm627, %v568, 0.0
  %v726 = vadd.f32 %v724, %v725
  %v727 = vsel %vm627, %v573, 0.0
  %v728 = vadd.f32 %v726, %v727
  %v729 = vsel %vm627, %v576, 0.0
  %v730 = vadd.f32 %v728, %v729
  %v731 = vsel %vm627, %v581, 0.0
  %v732 = vadd.f32 %v730, %v731
  %v733 = vsel %vm627, %v584, 0.0
  %v734 = vadd.f32 %v732, %v733
  %v735 = vsel %vm627, %v589, 0.0
  %v736 = vadd.f32 %v734, %v735
  %v737 = vsel %vm627, %v592, 0.0
  %v738 = vadd.f32 %v736, %v737
  %v739 = vsel %vm627, %v597, 0.0
  %v740 = vadd.f32 %v738, %v739
  %v741 = vsel %vm627, %v600, 0.0
  %v742 = vadd.f32 %v740, %v741
  %v743 = vsel %vm627, %v605, 0.0
  %v744 = vadd.f32 %v742, %v743
  %v745 = vsel %vm627, %v608, 0.0
  %v746 = vadd.f32 %v744, %v745
  %v747 = vsel %vm627, %v613, 0.0
  %v748 = vadd.f32 %v746, %v747
  %v749 = vsel %vm627, %v616, 0.0
  %v750 = vadd.f32 %v748, %v749
  %v751 = vsel %vm627, %v621, 0.0
  %v752 = vadd.f32 %v750, %v751
  %v753 = vsel %vm627, %v624, 0.0
  %v754 = vadd.f32 %v752, %v753
  %v755 = vrot.slane %v754, 4
  %v756 = vadd.f32 %v754, %v755
  %v757 = vrot.slane %v756, 2
  %v758 = vadd.f32 %v756, %v757
  %v759 = vrot.slane %v758, 1
  %v760 = vadd.f32 %v758, %v759
  %v761 = vmul.f32 %v760, 0.001953125
  %v762 = vmul.f32 %v373, %v373
  %v763 = vmul.f32 %v376, %v376
  %v764 = vmul.f32 %v381, %v381
  %v765 = vmul.f32 %v384, %v384
  %v766 = vmul.f32 %v389, %v389
  %v767 = vmul.f32 %v392, %v392
  %v768 = vmul.f32 %v397, %v397
  %v769 = vmul.f32 %v400, %v400
  %v770 = vmul.f32 %v405, %v405
  %v771 = vmul.f32 %v408, %v408
  %v772 = vmul.f32 %v413, %v413
  %v773 = vmul.f32 %v416, %v416
  %v774 = vmul.f32 %v421, %v421
  %v775 = vmul.f32 %v424, %v424
  %v776 = vmul.f32 %v429, %v429
  %v777 = vmul.f32 %v432, %v432
  %v778 = vmul.f32 %v437, %v437
  %v779 = vmul.f32 %v440, %v440
  %v780 = vmul.f32 %v445, %v445
  %v781 = vmul.f32 %v448, %v448
  %v782 = vmul.f32 %v453, %v453
  %v783 = vmul.f32 %v456, %v456
  %v784 = vmul.f32 %v461, %v461
  %v785 = vmul.f32 %v464, %v464
  %v786 = vmul.f32 %v469, %v469
  %v787 = vmul.f32 %v472, %v472
  %v788 = vmul.f32 %v477, %v477
  %v789 = vmul.f32 %v480, %v480
  %v790 = vmul.f32 %v485, %v485
  %v791 = vmul.f32 %v488, %v488
  %v792 = vmul.f32 %v493, %v493
  %v793 = vmul.f32 %v496, %v496
  %v794 = vmul.f32 %v501, %v501
  %v795 = vmul.f32 %v504, %v504
  %v796 = vmul.f32 %v509, %v509
  %v797 = vmul.f32 %v512, %v512
  %v798 = vmul.f32 %v517, %v517
  %v799 = vmul.f32 %v520, %v520
  %v800 = vmul.f32 %v525, %v525
  %v801 = vmul.f32 %v528, %v528
  %v802 = vmul.f32 %v533, %v533
  %v803 = vmul.f32 %v536, %v536
  %v804 = vmul.f32 %v541, %v541
  %v805 = vmul.f32 %v544, %v544
  %v806 = vmul.f32 %v549, %v549
  %v807 = vmul.f32 %v552, %v552
  %v808 = vmul.f32 %v557, %v557
  %v809 = vmul.f32 %v560, %v560
  %v810 = vmul.f32 %v565, %v565
  %v811 = vmul.f32 %v568, %v568
  %v812 = vmul.f32 %v573, %v573
  %v813 = vmul.f32 %v576, %v576
  %v814 = vmul.f32 %v581, %v581
  %v815 = vmul.f32 %v584, %v584
  %v816 = vmul.f32 %v589, %v589
  %v817 = vmul.f32 %v592, %v592
  %v818 = vmul.f32 %v597, %v597
  %v819 = vmul.f32 %v600, %v600
  %v820 = vmul.f32 %v605, %v605
  %v821 = vmul.f32 %v608, %v608
  %v822 = vmul.f32 %v613, %v613
  %v823 = vmul.f32 %v616, %v616
  %v824 = vmul.f32 %v621, %v621
  %v825 = vmul.f32 %v624, %v624
  %v826 = vsel %vm627, %v762, 0.0
  %v827 = vsel %vm627, %v763, 0.0
  %v828 = vadd.f32 %v826, %v827
  %v829 = vsel %vm627, %v764, 0.0
  %v830 = vadd.f32 %v828, %v829
  %v831 = vsel %vm627, %v765, 0.0
  %v832 = vadd.f32 %v830, %v831
  %v833 = vsel %vm627, %v766, 0.0
  %v834 = vadd.f32 %v832, %v833
  %v835 = vsel %vm627, %v767, 0.0
  %v836 = vadd.f32 %v834, %v835
  %v837 = vsel %vm627, %v768, 0.0
  %v838 = vadd.f32 %v836, %v837
  %v839 = vsel %vm627, %v769, 0.0
  %v840 = vadd.f32 %v838, %v839
  %v841 = vsel %vm627, %v770, 0.0
  %v842 = vadd.f32 %v840, %v841
  %v843 = vsel %vm627, %v771, 0.0
  %v844 = vadd.f32 %v842, %v843
  %v845 = vsel %vm627, %v772, 0.0
  %v846 = vadd.f32 %v844, %v845
  %v847 = vsel %vm627, %v773, 0.0
  %v848 = vadd.f32 %v846, %v847
  %v849 = vsel %vm627, %v774, 0.0
  %v850 = vadd.f32 %v848, %v849
  %v851 = vsel %vm627, %v775, 0.0
  %v852 = vadd.f32 %v850, %v851
  %v853 = vsel %vm627, %v776, 0.0
  %v854 = vadd.f32 %v852, %v853
  %v855 = vsel %vm627, %v777, 0.0
  %v856 = vadd.f32 %v854, %v855
  %v857 = vsel %vm627, %v778, 0.0
  %v858 = vadd.f32 %v856, %v857
  %v859 = vsel %vm627, %v779, 0.0
  %v860 = vadd.f32 %v858, %v859
  %v861 = vsel %vm627, %v780, 0.0
  %v862 = vadd.f32 %v860, %v861
  %v863 = vsel %vm627, %v781, 0.0
  %v864 = vadd.f32 %v862, %v863
  %v865 = vsel %vm627, %v782, 0.0
  %v866 = vadd.f32 %v864, %v865
  %v867 = vsel %vm627, %v783, 0.0
  %v868 = vadd.f32 %v866, %v867
  %v869 = vsel %vm627, %v784, 0.0
  %v870 = vadd.f32 %v868, %v869
  %v871 = vsel %vm627, %v785, 0.0
  %v872 = vadd.f32 %v870, %v871
  %v873 = vsel %vm627, %v786, 0.0
  %v874 = vadd.f32 %v872, %v873
  %v875 = vsel %vm627, %v787, 0.0
  %v876 = vadd.f32 %v874, %v875
  %v877 = vsel %vm627, %v788, 0.0
  %v878 = vadd.f32 %v876, %v877
  %v879 = vsel %vm627, %v789, 0.0
  %v880 = vadd.f32 %v878, %v879
  %v881 = vsel %vm627, %v790, 0.0
  %v882 = vadd.f32 %v880, %v881
  %v883 = vsel %vm627, %v791, 0.0
  %v884 = vadd.f32 %v882, %v883
  %v885 = vsel %vm627, %v792, 0.0
  %v886 = vadd.f32 %v884, %v885
  %v887 = vsel %vm627, %v793, 0.0
  %v888 = vadd.f32 %v886, %v887
  %v889 = vsel %vm627, %v794, 0.0
  %v890 = vadd.f32 %v888, %v889
  %v891 = vsel %vm627, %v795, 0.0
  %v892 = vadd.f32 %v890, %v891
  %v893 = vsel %vm627, %v796, 0.0
  %v894 = vadd.f32 %v892, %v893
  %v895 = vsel %vm627, %v797, 0.0
  %v896 = vadd.f32 %v894, %v895
  %v897 = vsel %vm627, %v798, 0.0
  %v898 = vadd.f32 %v896, %v897
  %v899 = vsel %vm627, %v799, 0.0
  %v900 = vadd.f32 %v898, %v899
  %v901 = vsel %vm627, %v800, 0.0
  %v902 = vadd.f32 %v900, %v901
  %v903 = vsel %vm627, %v801, 0.0
  %v904 = vadd.f32 %v902, %v903
  %v905 = vsel %vm627, %v802, 0.0
  %v906 = vadd.f32 %v904, %v905
  %v907 = vsel %vm627, %v803, 0.0
  %v908 = vadd.f32 %v906, %v907
  %v909 = vsel %vm627, %v804, 0.0
  %v910 = vadd.f32 %v908, %v909
  %v911 = vsel %vm627, %v805, 0.0
  %v912 = vadd.f32 %v910, %v911
  %v913 = vsel %vm627, %v806, 0.0
  %v914 = vadd.f32 %v912, %v913
  %v915 = vsel %vm627, %v807, 0.0
  %v916 = vadd.f32 %v914, %v915
  %v917 = vsel %vm627, %v808, 0.0
  %v918 = vadd.f32 %v916, %v917
  %v919 = vsel %vm627, %v809, 0.0
  %v920 = vadd.f32 %v918, %v919
  %v921 = vsel %vm627, %v810, 0.0
  %v922 = vadd.f32 %v920, %v921
  %v923 = vsel %vm627, %v811, 0.0
  %v924 = vadd.f32 %v922, %v923
  %v925 = vsel %vm627, %v812, 0.0
  %v926 = vadd.f32 %v924, %v925
  %v927 = vsel %vm627, %v813, 0.0
  %v928 = vadd.f32 %v926, %v927
  %v929 = vsel %vm627, %v814, 0.0
  %v930 = vadd.f32 %v928, %v929
  %v931 = vsel %vm627, %v815, 0.0
  %v932 = vadd.f32 %v930, %v931
  %v933 = vsel %vm627, %v816, 0.0
  %v934 = vadd.f32 %v932, %v933
  %v935 = vsel %vm627, %v817, 0.0
  %v936 = vadd.f32 %v934, %v935
  %v937 = vsel %vm627, %v818, 0.0
  %v938 = vadd.f32 %v936, %v937
  %v939 = vsel %vm627, %v819, 0.0
  %v940 = vadd.f32 %v938, %v939
  %v941 = vsel %vm627, %v820, 0.0
  %v942 = vadd.f32 %v940, %v941
  %v943 = vsel %vm627, %v821, 0.0
  %v944 = vadd.f32 %v942, %v943
  %v945 = vsel %vm627, %v822, 0.0
  %v946 = vadd.f32 %v944, %v945
  %v947 = vsel %vm627, %v823, 0.0
  %v948 = vadd.f32 %v946, %v947
  %v949 = vsel %vm627, %v824, 0.0
  %v950 = vadd.f32 %v948, %v949
  %v951 = vsel %vm627, %v825, 0.0
  %v952 = vadd.f32 %v950, %v951
  %v953 = vrot.slane %v952, 4
  %v954 = vadd.f32 %v952, %v953
  %v955 = vrot.slane %v954, 2
  %v956 = vadd.f32 %v954, %v955
  %v957 = vrot.slane %v956, 1
  %v958 = vadd.f32 %v956, %v957
  %v959 = vmul.f32 %v958, 0.001953125
  %v960 = vmul.f32 %v761, %v761
  %v961 = vsub.f32 %v959, %v960
  %v962 = vmax.f32 %v961, 0.0
  %v963 = vadd.f32 %v962, 1e-05
  %v964 = vrsqrt.pop %v963
  %v965 = vld [vmem:[%s2] sm:$0x1]
  %v966 = vmul.f32 %v965, %v964
  %v967 = vld [vmem:[%s3] sm:$0x1]
  %v968 = vmul.f32 %v761, %v966
  %v969 = vsub.f32 %v967, %v968
  %v971 = vlaneseq
  %v972 = vshrl.u32 %v971, 7
  %v973 = vsub.s32 0, %v972
  %v974 = vrot.slane %v966, %v973
  %v976 = vmul.f32 %v373, %v974
  %v977 = vmul.f32 %v376, %v974
  %v978 = vmul.f32 %v381, %v974
  %v979 = vmul.f32 %v384, %v974
  %v980 = vmul.f32 %v389, %v974
  %v981 = vmul.f32 %v392, %v974
  %v982 = vmul.f32 %v397, %v974
  %v983 = vmul.f32 %v400, %v974
  %v984 = vmul.f32 %v405, %v974
  %v985 = vmul.f32 %v408, %v974
  %v986 = vmul.f32 %v413, %v974
  %v987 = vmul.f32 %v416, %v974
  %v988 = vmul.f32 %v421, %v974
  %v989 = vmul.f32 %v424, %v974
  %v990 = vmul.f32 %v429, %v974
  %v991 = vmul.f32 %v432, %v974
  %v992 = vmul.f32 %v437, %v974
  %v993 = vmul.f32 %v440, %v974
  %v994 = vmul.f32 %v445, %v974
  %v995 = vmul.f32 %v448, %v974
  %v996 = vmul.f32 %v453, %v974
  %v997 = vmul.f32 %v456, %v974
  %v998 = vmul.f32 %v461, %v974
  %v999 = vmul.f32 %v464, %v974
  %v1000 = vmul.f32 %v469, %v974
  %v1001 = vmul.f32 %v472, %v974
  %v1002 = vmul.f32 %v477, %v974
  %v1003 = vmul.f32 %v480, %v974
  %v1004 = vmul.f32 %v485, %v974
  %v1005 = vmul.f32 %v488, %v974
  %v1006 = vmul.f32 %v493, %v974
  %v1007 = vmul.f32 %v496, %v974
  %v1008 = vmul.f32 %v501, %v974
  %v1009 = vmul.f32 %v504, %v974
  %v1010 = vmul.f32 %v509, %v974
  %v1011 = vmul.f32 %v512, %v974
  %v1012 = vmul.f32 %v517, %v974
  %v1013 = vmul.f32 %v520, %v974
  %v1014 = vmul.f32 %v525, %v974
  %v1015 = vmul.f32 %v528, %v974
  %v1016 = vmul.f32 %v533, %v974
  %v1017 = vmul.f32 %v536, %v974
  %v1018 = vmul.f32 %v541, %v974
  %v1019 = vmul.f32 %v544, %v974
  %v1020 = vmul.f32 %v549, %v974
  %v1021 = vmul.f32 %v552, %v974
  %v1022 = vmul.f32 %v557, %v974
  %v1023 = vmul.f32 %v560, %v974
  %v1024 = vmul.f32 %v565, %v974
  %v1025 = vmul.f32 %v568, %v974
  %v1026 = vmul.f32 %v573, %v974
  %v1027 = vmul.f32 %v576, %v974
  %v1028 = vmul.f32 %v581, %v974
  %v1029 = vmul.f32 %v584, %v974
  %v1030 = vmul.f32 %v589, %v974
  %v1031 = vmul.f32 %v592, %v974
  %v1032 = vmul.f32 %v597, %v974
  %v1033 = vmul.f32 %v600, %v974
  %v1034 = vmul.f32 %v605, %v974
  %v1035 = vmul.f32 %v608, %v974
  %v1036 = vmul.f32 %v613, %v974
  %v1037 = vmul.f32 %v616, %v974
  %v1038 = vmul.f32 %v621, %v974
  %v1039 = vmul.f32 %v624, %v974
  %v1041 = vlaneseq
  %v1042 = vshrl.u32 %v1041, 7
  %v1043 = vsub.s32 0, %v1042
  %v1044 = vrot.slane %v969, %v1043
  %v1046 = vadd.f32 %v976, %v1044
  %v1047 = vadd.f32 %v977, %v1044
  %v1048 = vadd.f32 %v978, %v1044
  %v1049 = vadd.f32 %v979, %v1044
  %v1050 = vadd.f32 %v980, %v1044
  %v1051 = vadd.f32 %v981, %v1044
  %v1052 = vadd.f32 %v982, %v1044
  %v1053 = vadd.f32 %v983, %v1044
  %v1054 = vadd.f32 %v984, %v1044
  %v1055 = vadd.f32 %v985, %v1044
  %v1056 = vadd.f32 %v986, %v1044
  %v1057 = vadd.f32 %v987, %v1044
  %v1058 = vadd.f32 %v988, %v1044
  %v1059 = vadd.f32 %v989, %v1044
  %v1060 = vadd.f32 %v990, %v1044
  %v1061 = vadd.f32 %v991, %v1044
  %v1062 = vadd.f32 %v992, %v1044
  %v1063 = vadd.f32 %v993, %v1044
  %v1064 = vadd.f32 %v994, %v1044
  %v1065 = vadd.f32 %v995, %v1044
  %v1066 = vadd.f32 %v996, %v1044
  %v1067 = vadd.f32 %v997, %v1044
  %v1068 = vadd.f32 %v998, %v1044
  %v1069 = vadd.f32 %v999, %v1044
  %v1070 = vadd.f32 %v1000, %v1044
  %v1071 = vadd.f32 %v1001, %v1044
  %v1072 = vadd.f32 %v1002, %v1044
  %v1073 = vadd.f32 %v1003, %v1044
  %v1074 = vadd.f32 %v1004, %v1044
  %v1075 = vadd.f32 %v1005, %v1044
  %v1076 = vadd.f32 %v1006, %v1044
  %v1077 = vadd.f32 %v1007, %v1044
  %v1078 = vadd.f32 %v1008, %v1044
  %v1079 = vadd.f32 %v1009, %v1044
  %v1080 = vadd.f32 %v1010, %v1044
  %v1081 = vadd.f32 %v1011, %v1044
  %v1082 = vadd.f32 %v1012, %v1044
  %v1083 = vadd.f32 %v1013, %v1044
  %v1084 = vadd.f32 %v1014, %v1044
  %v1085 = vadd.f32 %v1015, %v1044
  %v1086 = vadd.f32 %v1016, %v1044
  %v1087 = vadd.f32 %v1017, %v1044
  %v1088 = vadd.f32 %v1018, %v1044
  %v1089 = vadd.f32 %v1019, %v1044
  %v1090 = vadd.f32 %v1020, %v1044
  %v1091 = vadd.f32 %v1021, %v1044
  %v1092 = vadd.f32 %v1022, %v1044
  %v1093 = vadd.f32 %v1023, %v1044
  %v1094 = vadd.f32 %v1024, %v1044
  %v1095 = vadd.f32 %v1025, %v1044
  %v1096 = vadd.f32 %v1026, %v1044
  %v1097 = vadd.f32 %v1027, %v1044
  %v1098 = vadd.f32 %v1028, %v1044
  %v1099 = vadd.f32 %v1029, %v1044
  %v1100 = vadd.f32 %v1030, %v1044
  %v1101 = vadd.f32 %v1031, %v1044
  %v1102 = vadd.f32 %v1032, %v1044
  %v1103 = vadd.f32 %v1033, %v1044
  %v1104 = vadd.f32 %v1034, %v1044
  %v1105 = vadd.f32 %v1035, %v1044
  %v1106 = vadd.f32 %v1036, %v1044
  %v1107 = vadd.f32 %v1037, %v1044
  %v1108 = vadd.f32 %v1038, %v1044
  %v1109 = vadd.f32 %v1039, %v1044
  %vm1110 = vcmp.ge.f32.partialorder %v1046, 0.0
  %vm1111 = vcmp.ge.f32.partialorder %v1047, 0.0
  %vm1112 = vcmp.ge.f32.partialorder %v1048, 0.0
  %vm1113 = vcmp.ge.f32.partialorder %v1049, 0.0
  %vm1114 = vcmp.ge.f32.partialorder %v1050, 0.0
  %vm1115 = vcmp.ge.f32.partialorder %v1051, 0.0
  %vm1116 = vcmp.ge.f32.partialorder %v1052, 0.0
  %vm1117 = vcmp.ge.f32.partialorder %v1053, 0.0
  %vm1118 = vcmp.ge.f32.partialorder %v1054, 0.0
  %vm1119 = vcmp.ge.f32.partialorder %v1055, 0.0
  %vm1120 = vcmp.ge.f32.partialorder %v1056, 0.0
  %vm1121 = vcmp.ge.f32.partialorder %v1057, 0.0
  %vm1122 = vcmp.ge.f32.partialorder %v1058, 0.0
  %vm1123 = vcmp.ge.f32.partialorder %v1059, 0.0
  %vm1124 = vcmp.ge.f32.partialorder %v1060, 0.0
  %vm1125 = vcmp.ge.f32.partialorder %v1061, 0.0
  %vm1126 = vcmp.ge.f32.partialorder %v1062, 0.0
  %vm1127 = vcmp.ge.f32.partialorder %v1063, 0.0
  %vm1128 = vcmp.ge.f32.partialorder %v1064, 0.0
  %vm1129 = vcmp.ge.f32.partialorder %v1065, 0.0
  %vm1130 = vcmp.ge.f32.partialorder %v1066, 0.0
  %vm1131 = vcmp.ge.f32.partialorder %v1067, 0.0
  %vm1132 = vcmp.ge.f32.partialorder %v1068, 0.0
  %vm1133 = vcmp.ge.f32.partialorder %v1069, 0.0
  %vm1134 = vcmp.ge.f32.partialorder %v1070, 0.0
  %vm1135 = vcmp.ge.f32.partialorder %v1071, 0.0
  %vm1136 = vcmp.ge.f32.partialorder %v1072, 0.0
  %vm1137 = vcmp.ge.f32.partialorder %v1073, 0.0
  %vm1138 = vcmp.ge.f32.partialorder %v1074, 0.0
  %vm1139 = vcmp.ge.f32.partialorder %v1075, 0.0
  %vm1140 = vcmp.ge.f32.partialorder %v1076, 0.0
  %vm1141 = vcmp.ge.f32.partialorder %v1077, 0.0
  %vm1142 = vcmp.ge.f32.partialorder %v1078, 0.0
  %vm1143 = vcmp.ge.f32.partialorder %v1079, 0.0
  %vm1144 = vcmp.ge.f32.partialorder %v1080, 0.0
  %vm1145 = vcmp.ge.f32.partialorder %v1081, 0.0
  %vm1146 = vcmp.ge.f32.partialorder %v1082, 0.0
  %vm1147 = vcmp.ge.f32.partialorder %v1083, 0.0
  %vm1148 = vcmp.ge.f32.partialorder %v1084, 0.0
  %vm1149 = vcmp.ge.f32.partialorder %v1085, 0.0
  %vm1150 = vcmp.ge.f32.partialorder %v1086, 0.0
  %vm1151 = vcmp.ge.f32.partialorder %v1087, 0.0
  %vm1152 = vcmp.ge.f32.partialorder %v1088, 0.0
  %vm1153 = vcmp.ge.f32.partialorder %v1089, 0.0
  %vm1154 = vcmp.ge.f32.partialorder %v1090, 0.0
  %vm1155 = vcmp.ge.f32.partialorder %v1091, 0.0
  %vm1156 = vcmp.ge.f32.partialorder %v1092, 0.0
  %vm1157 = vcmp.ge.f32.partialorder %v1093, 0.0
  %vm1158 = vcmp.ge.f32.partialorder %v1094, 0.0
  %vm1159 = vcmp.ge.f32.partialorder %v1095, 0.0
  %vm1160 = vcmp.ge.f32.partialorder %v1096, 0.0
  %vm1161 = vcmp.ge.f32.partialorder %v1097, 0.0
  %vm1162 = vcmp.ge.f32.partialorder %v1098, 0.0
  %vm1163 = vcmp.ge.f32.partialorder %v1099, 0.0
  %vm1164 = vcmp.ge.f32.partialorder %v1100, 0.0
  %vm1165 = vcmp.ge.f32.partialorder %v1101, 0.0
  %vm1166 = vcmp.ge.f32.partialorder %v1102, 0.0
  %vm1167 = vcmp.ge.f32.partialorder %v1103, 0.0
  %vm1168 = vcmp.ge.f32.partialorder %v1104, 0.0
  %vm1169 = vcmp.ge.f32.partialorder %v1105, 0.0
  %vm1170 = vcmp.ge.f32.partialorder %v1106, 0.0
  %vm1171 = vcmp.ge.f32.partialorder %v1107, 0.0
  %vm1172 = vcmp.ge.f32.partialorder %v1108, 0.0
  %vm1173 = vcmp.ge.f32.partialorder %v1109, 0.0
  %v1174 = vmul.f32 %v1046, 0.2
  %v1175 = vmul.f32 %v1047, 0.2
  %v1176 = vmul.f32 %v1048, 0.2
  %v1177 = vmul.f32 %v1049, 0.2
  %v1178 = vmul.f32 %v1050, 0.2
  %v1179 = vmul.f32 %v1051, 0.2
  %v1180 = vmul.f32 %v1052, 0.2
  %v1181 = vmul.f32 %v1053, 0.2
  %v1182 = vmul.f32 %v1054, 0.2
  %v1183 = vmul.f32 %v1055, 0.2
  %v1184 = vmul.f32 %v1056, 0.2
  %v1185 = vmul.f32 %v1057, 0.2
  %v1186 = vmul.f32 %v1058, 0.2
  %v1187 = vmul.f32 %v1059, 0.2
  %v1188 = vmul.f32 %v1060, 0.2
  %v1189 = vmul.f32 %v1061, 0.2
  %v1190 = vmul.f32 %v1062, 0.2
  %v1191 = vmul.f32 %v1063, 0.2
  %v1192 = vmul.f32 %v1064, 0.2
  %v1193 = vmul.f32 %v1065, 0.2
  %v1194 = vmul.f32 %v1066, 0.2
  %v1195 = vmul.f32 %v1067, 0.2
  %v1196 = vmul.f32 %v1068, 0.2
  %v1197 = vmul.f32 %v1069, 0.2
  %v1198 = vmul.f32 %v1070, 0.2
  %v1199 = vmul.f32 %v1071, 0.2
  %v1200 = vmul.f32 %v1072, 0.2
  %v1201 = vmul.f32 %v1073, 0.2
  %v1202 = vmul.f32 %v1074, 0.2
  %v1203 = vmul.f32 %v1075, 0.2
  %v1204 = vmul.f32 %v1076, 0.2
  %v1205 = vmul.f32 %v1077, 0.2
  %v1206 = vmul.f32 %v1078, 0.2
  %v1207 = vmul.f32 %v1079, 0.2
  %v1208 = vmul.f32 %v1080, 0.2
  %v1209 = vmul.f32 %v1081, 0.2
  %v1210 = vmul.f32 %v1082, 0.2
  %v1211 = vmul.f32 %v1083, 0.2
  %v1212 = vmul.f32 %v1084, 0.2
  %v1213 = vmul.f32 %v1085, 0.2
  %v1214 = vmul.f32 %v1086, 0.2
  %v1215 = vmul.f32 %v1087, 0.2
  %v1216 = vmul.f32 %v1088, 0.2
  %v1217 = vmul.f32 %v1089, 0.2
  %v1218 = vmul.f32 %v1090, 0.2
  %v1219 = vmul.f32 %v1091, 0.2
  %v1220 = vmul.f32 %v1092, 0.2
  %v1221 = vmul.f32 %v1093, 0.2
  %v1222 = vmul.f32 %v1094, 0.2
  %v1223 = vmul.f32 %v1095, 0.2
  %v1224 = vmul.f32 %v1096, 0.2
  %v1225 = vmul.f32 %v1097, 0.2
  %v1226 = vmul.f32 %v1098, 0.2
  %v1227 = vmul.f32 %v1099, 0.2
  %v1228 = vmul.f32 %v1100, 0.2
  %v1229 = vmul.f32 %v1101, 0.2
  %v1230 = vmul.f32 %v1102, 0.2
  %v1231 = vmul.f32 %v1103, 0.2
  %v1232 = vmul.f32 %v1104, 0.2
  %v1233 = vmul.f32 %v1105, 0.2
  %v1234 = vmul.f32 %v1106, 0.2
  %v1235 = vmul.f32 %v1107, 0.2
  %v1236 = vmul.f32 %v1108, 0.2
  %v1237 = vmul.f32 %v1109, 0.2
  %v1238 = vsel %vm1110, %v1046, %v1174
  %v1239 = vsel %vm1111, %v1047, %v1175
  %v1240 = vsel %vm1112, %v1048, %v1176
  %v1241 = vsel %vm1113, %v1049, %v1177
  %v1242 = vsel %vm1114, %v1050, %v1178
  %v1243 = vsel %vm1115, %v1051, %v1179
  %v1244 = vsel %vm1116, %v1052, %v1180
  %v1245 = vsel %vm1117, %v1053, %v1181
  %v1246 = vsel %vm1118, %v1054, %v1182
  %v1247 = vsel %vm1119, %v1055, %v1183
  %v1248 = vsel %vm1120, %v1056, %v1184
  %v1249 = vsel %vm1121, %v1057, %v1185
  %v1250 = vsel %vm1122, %v1058, %v1186
  %v1251 = vsel %vm1123, %v1059, %v1187
  %v1252 = vsel %vm1124, %v1060, %v1188
  %v1253 = vsel %vm1125, %v1061, %v1189
  %v1254 = vsel %vm1126, %v1062, %v1190
  %v1255 = vsel %vm1127, %v1063, %v1191
  %v1256 = vsel %vm1128, %v1064, %v1192
  %v1257 = vsel %vm1129, %v1065, %v1193
  %v1258 = vsel %vm1130, %v1066, %v1194
  %v1259 = vsel %vm1131, %v1067, %v1195
  %v1260 = vsel %vm1132, %v1068, %v1196
  %v1261 = vsel %vm1133, %v1069, %v1197
  %v1262 = vsel %vm1134, %v1070, %v1198
  %v1263 = vsel %vm1135, %v1071, %v1199
  %v1264 = vsel %vm1136, %v1072, %v1200
  %v1265 = vsel %vm1137, %v1073, %v1201
  %v1266 = vsel %vm1138, %v1074, %v1202
  %v1267 = vsel %vm1139, %v1075, %v1203
  %v1268 = vsel %vm1140, %v1076, %v1204
  %v1269 = vsel %vm1141, %v1077, %v1205
  %v1270 = vsel %vm1142, %v1078, %v1206
  %v1271 = vsel %vm1143, %v1079, %v1207
  %v1272 = vsel %vm1144, %v1080, %v1208
  %v1273 = vsel %vm1145, %v1081, %v1209
  %v1274 = vsel %vm1146, %v1082, %v1210
  %v1275 = vsel %vm1147, %v1083, %v1211
  %v1276 = vsel %vm1148, %v1084, %v1212
  %v1277 = vsel %vm1149, %v1085, %v1213
  %v1278 = vsel %vm1150, %v1086, %v1214
  %v1279 = vsel %vm1151, %v1087, %v1215
  %v1280 = vsel %vm1152, %v1088, %v1216
  %v1281 = vsel %vm1153, %v1089, %v1217
  %v1282 = vsel %vm1154, %v1090, %v1218
  %v1283 = vsel %vm1155, %v1091, %v1219
  %v1284 = vsel %vm1156, %v1092, %v1220
  %v1285 = vsel %vm1157, %v1093, %v1221
  %v1286 = vsel %vm1158, %v1094, %v1222
  %v1287 = vsel %vm1159, %v1095, %v1223
  %v1288 = vsel %vm1160, %v1096, %v1224
  %v1289 = vsel %vm1161, %v1097, %v1225
  %v1290 = vsel %vm1162, %v1098, %v1226
  %v1291 = vsel %vm1163, %v1099, %v1227
  %v1292 = vsel %vm1164, %v1100, %v1228
  %v1293 = vsel %vm1165, %v1101, %v1229
  %v1294 = vsel %vm1166, %v1102, %v1230
  %v1295 = vsel %vm1167, %v1103, %v1231
  %v1296 = vsel %vm1168, %v1104, %v1232
  %v1297 = vsel %vm1169, %v1105, %v1233
  %v1298 = vsel %vm1170, %v1106, %v1234
  %v1299 = vsel %vm1171, %v1107, %v1235
  %v1300 = vsel %vm1172, %v1108, %v1236
  %v1301 = vsel %vm1173, %v1109, %v1237
  %v1302 = vpack.c.bf16 %v1239, %v1238
  %v1303 = vpack.c.bf16 %v1241, %v1240
  %v1304 = vpack.c.bf16 %v1243, %v1242
  %v1305 = vpack.c.bf16 %v1245, %v1244
  %v1306 = vpack.c.bf16 %v1247, %v1246
  %v1307 = vpack.c.bf16 %v1249, %v1248
  %v1308 = vpack.c.bf16 %v1251, %v1250
  %v1309 = vpack.c.bf16 %v1253, %v1252
  %v1310 = vpack.c.bf16 %v1255, %v1254
  %v1311 = vpack.c.bf16 %v1257, %v1256
  %v1312 = vpack.c.bf16 %v1259, %v1258
  %v1313 = vpack.c.bf16 %v1261, %v1260
  %v1314 = vpack.c.bf16 %v1263, %v1262
  %v1315 = vpack.c.bf16 %v1265, %v1264
  %v1316 = vpack.c.bf16 %v1267, %v1266
  %v1317 = vpack.c.bf16 %v1269, %v1268
  %v1318 = vpack.c.bf16 %v1271, %v1270
  %v1319 = vpack.c.bf16 %v1273, %v1272
  %v1320 = vpack.c.bf16 %v1275, %v1274
  %v1321 = vpack.c.bf16 %v1277, %v1276
  %v1322 = vpack.c.bf16 %v1279, %v1278
  %v1323 = vpack.c.bf16 %v1281, %v1280
  %v1324 = vpack.c.bf16 %v1283, %v1282
  %v1325 = vpack.c.bf16 %v1285, %v1284
  %v1326 = vpack.c.bf16 %v1287, %v1286
  %v1327 = vpack.c.bf16 %v1289, %v1288
  %v1328 = vpack.c.bf16 %v1291, %v1290
  %v1329 = vpack.c.bf16 %v1293, %v1292
  %v1330 = vpack.c.bf16 %v1295, %v1294
  %v1331 = vpack.c.bf16 %v1297, %v1296
  %v1332 = vpack.c.bf16 %v1299, %v1298
  %v1333 = vpack.c.bf16 %v1301, %v1300
  %v1366 = vunpack.c.l.b16 %v1302
  %v1367 = vunpack.c.h.b16 %v1302
  %v1368 = vunpack.c.l.b16 %v1303
  %v1369 = vunpack.c.h.b16 %v1303
  %v1370 = vunpack.c.l.b16 %v1304
  %v1371 = vunpack.c.h.b16 %v1304
  %v1372 = vunpack.c.l.b16 %v1305
  %v1373 = vunpack.c.h.b16 %v1305
  %v1374 = vunpack.c.l.b16 %v1306
  %v1375 = vunpack.c.h.b16 %v1306
  %v1376 = vunpack.c.l.b16 %v1307
  %v1377 = vunpack.c.h.b16 %v1307
  %v1378 = vunpack.c.l.b16 %v1308
  %v1379 = vunpack.c.h.b16 %v1308
  %v1380 = vunpack.c.l.b16 %v1309
  %v1381 = vunpack.c.h.b16 %v1309
  %v1382 = vunpack.c.l.b16 %v1310
  %v1383 = vunpack.c.h.b16 %v1310
  %v1384 = vunpack.c.l.b16 %v1311
  %v1385 = vunpack.c.h.b16 %v1311
  %v1386 = vunpack.c.l.b16 %v1312
  %v1387 = vunpack.c.h.b16 %v1312
  %v1388 = vunpack.c.l.b16 %v1313
  %v1389 = vunpack.c.h.b16 %v1313
  %v1390 = vunpack.c.l.b16 %v1314
  %v1391 = vunpack.c.h.b16 %v1314
  %v1392 = vunpack.c.l.b16 %v1315
  %v1393 = vunpack.c.h.b16 %v1315
  %v1394 = vunpack.c.l.b16 %v1316
  %v1395 = vunpack.c.h.b16 %v1316
  %v1396 = vunpack.c.l.b16 %v1317
  %v1397 = vunpack.c.h.b16 %v1317
  %v1398 = vunpack.c.l.b16 %v1318
  %v1399 = vunpack.c.h.b16 %v1318
  %v1400 = vunpack.c.l.b16 %v1319
  %v1401 = vunpack.c.h.b16 %v1319
  %v1402 = vunpack.c.l.b16 %v1320
  %v1403 = vunpack.c.h.b16 %v1320
  %v1404 = vunpack.c.l.b16 %v1321
  %v1405 = vunpack.c.h.b16 %v1321
  %v1406 = vunpack.c.l.b16 %v1322
  %v1407 = vunpack.c.h.b16 %v1322
  %v1408 = vunpack.c.l.b16 %v1323
  %v1409 = vunpack.c.h.b16 %v1323
  %v1410 = vunpack.c.l.b16 %v1324
  %v1411 = vunpack.c.h.b16 %v1324
  %v1412 = vunpack.c.l.b16 %v1325
  %v1413 = vunpack.c.h.b16 %v1325
  %v1414 = vunpack.c.l.b16 %v1326
  %v1415 = vunpack.c.h.b16 %v1326
  %v1416 = vunpack.c.l.b16 %v1327
  %v1417 = vunpack.c.h.b16 %v1327
  %v1418 = vunpack.c.l.b16 %v1328
  %v1419 = vunpack.c.h.b16 %v1328
  %v1420 = vunpack.c.l.b16 %v1329
  %v1421 = vunpack.c.h.b16 %v1329
  %v1422 = vunpack.c.l.b16 %v1330
  %v1423 = vunpack.c.h.b16 %v1330
  %v1424 = vunpack.c.l.b16 %v1331
  %v1425 = vunpack.c.h.b16 %v1331
  %v1426 = vunpack.c.l.b16 %v1332
  %v1427 = vunpack.c.h.b16 %v1332
  %v1428 = vunpack.c.l.b16 %v1333
  %v1429 = vunpack.c.h.b16 %v1333
  %v1430 = vpack.c.b16 %v1366, %v1366
  %v1431 = vpack.c.b16 %v1367, %v1367
  %v1432 = vpack.c.b16 %v1368, %v1368
  %v1433 = vpack.c.b16 %v1369, %v1369
  %v1434 = vpack.c.b16 %v1370, %v1370
  %v1435 = vpack.c.b16 %v1371, %v1371
  %v1436 = vpack.c.b16 %v1372, %v1372
  %v1437 = vpack.c.b16 %v1373, %v1373
  %v1438 = vpack.c.b16 %v1374, %v1374
  %v1439 = vpack.c.b16 %v1375, %v1375
  %v1440 = vpack.c.b16 %v1376, %v1376
  %v1441 = vpack.c.b16 %v1377, %v1377
  %v1442 = vpack.c.b16 %v1378, %v1378
  %v1443 = vpack.c.b16 %v1379, %v1379
  %v1444 = vpack.c.b16 %v1380, %v1380
  %v1445 = vpack.c.b16 %v1381, %v1381
  %v1446 = vpack.c.b16 %v1382, %v1382
  %v1447 = vpack.c.b16 %v1383, %v1383
  %v1448 = vpack.c.b16 %v1384, %v1384
  %v1449 = vpack.c.b16 %v1385, %v1385
  %v1450 = vpack.c.b16 %v1386, %v1386
  %v1451 = vpack.c.b16 %v1387, %v1387
  %v1452 = vpack.c.b16 %v1388, %v1388
  %v1453 = vpack.c.b16 %v1389, %v1389
  %v1454 = vpack.c.b16 %v1390, %v1390
  %v1455 = vpack.c.b16 %v1391, %v1391
  %v1456 = vpack.c.b16 %v1392, %v1392
  %v1457 = vpack.c.b16 %v1393, %v1393
  %v1458 = vpack.c.b16 %v1394, %v1394
  %v1459 = vpack.c.b16 %v1395, %v1395
  %v1460 = vpack.c.b16 %v1396, %v1396
  %v1461 = vpack.c.b16 %v1397, %v1397
  %v1462 = vpack.c.b16 %v1398, %v1398
  %v1463 = vpack.c.b16 %v1399, %v1399
  %v1464 = vpack.c.b16 %v1400, %v1400
  %v1465 = vpack.c.b16 %v1401, %v1401
  %v1466 = vpack.c.b16 %v1402, %v1402
  %v1467 = vpack.c.b16 %v1403, %v1403
  %v1468 = vpack.c.b16 %v1404, %v1404
  %v1469 = vpack.c.b16 %v1405, %v1405
  %v1470 = vpack.c.b16 %v1406, %v1406
  %v1471 = vpack.c.b16 %v1407, %v1407
  %v1472 = vpack.c.b16 %v1408, %v1408
  %v1473 = vpack.c.b16 %v1409, %v1409
  %v1474 = vpack.c.b16 %v1410, %v1410
  %v1475 = vpack.c.b16 %v1411, %v1411
  %v1476 = vpack.c.b16 %v1412, %v1412
  %v1477 = vpack.c.b16 %v1413, %v1413
  %v1478 = vpack.c.b16 %v1414, %v1414
  %v1479 = vpack.c.b16 %v1415, %v1415
  %v1480 = vpack.c.b16 %v1416, %v1416
  %v1481 = vpack.c.b16 %v1417, %v1417
  %v1482 = vpack.c.b16 %v1418, %v1418
  %v1483 = vpack.c.b16 %v1419, %v1419
  %v1484 = vpack.c.b16 %v1420, %v1420
  %v1485 = vpack.c.b16 %v1421, %v1421
  %v1486 = vpack.c.b16 %v1422, %v1422
  %v1487 = vpack.c.b16 %v1423, %v1423
  %v1488 = vpack.c.b16 %v1424, %v1424
  %v1489 = vpack.c.b16 %v1425, %v1425
  %v1490 = vpack.c.b16 %v1426, %v1426
  %v1491 = vpack.c.b16 %v1427, %v1427
  %v1492 = vpack.c.b16 %v1428, %v1428
  %v1493 = vpack.c.b16 %v1429, %v1429
  %vm1558 = vcmask 60416
  %1559 = vst.msk [vmem:[%s4] sm:$0xf] %vm1558, %v1430
  %1560 = vst.msk [vmem:[%s4 + $0x4] sm:$0xf] %vm1558, %v1431
  %1561 = vst.msk [vmem:[%s4 + $0x8] sm:$0xf] %vm1558, %v1432
  %1562 = vst.msk [vmem:[%s4 + $0xc] sm:$0xf] %vm1558, %v1433
  %1563 = vst.msk [vmem:[%s4 + $0x10] sm:$0xf] %vm1558, %v1434
  %1564 = vst.msk [vmem:[%s4 + $0x14] sm:$0xf] %vm1558, %v1435
  %1565 = vst.msk [vmem:[%s4 + $0x18] sm:$0xf] %vm1558, %v1436
  %1566 = vst.msk [vmem:[%s4 + $0x1c] sm:$0xf] %vm1558, %v1437
  %1567 = vst.msk [vmem:[%s4 + $0x20] sm:$0xf] %vm1558, %v1438
  %1568 = vst.msk [vmem:[%s4 + $0x24] sm:$0xf] %vm1558, %v1439
  %1569 = vst.msk [vmem:[%s4 + $0x28] sm:$0xf] %vm1558, %v1440
  %1570 = vst.msk [vmem:[%s4 + $0x2c] sm:$0xf] %vm1558, %v1441
  %1571 = vst.msk [vmem:[%s4 + $0x30] sm:$0xf] %vm1558, %v1442
  %1572 = vst.msk [vmem:[%s4 + $0x34] sm:$0xf] %vm1558, %v1443
  %1573 = vst.msk [vmem:[%s4 + $0x38] sm:$0xf] %vm1558, %v1444
  %1574 = vst.msk [vmem:[%s4 + $0x3c] sm:$0xf] %vm1558, %v1445
  %1575 = vst.msk [vmem:[%s4 + $0x40] sm:$0xf] %vm1558, %v1446
  %1576 = vst.msk [vmem:[%s4 + $0x44] sm:$0xf] %vm1558, %v1447
  %1577 = vst.msk [vmem:[%s4 + $0x48] sm:$0xf] %vm1558, %v1448
  %1578 = vst.msk [vmem:[%s4 + $0x4c] sm:$0xf] %vm1558, %v1449
  %1579 = vst.msk [vmem:[%s4 + $0x50] sm:$0xf] %vm1558, %v1450
  %1580 = vst.msk [vmem:[%s4 + $0x54] sm:$0xf] %vm1558, %v1451
  %1581 = vst.msk [vmem:[%s4 + $0x58] sm:$0xf] %vm1558, %v1452
  %1582 = vst.msk [vmem:[%s4 + $0x5c] sm:$0xf] %vm1558, %v1453
  %1583 = vst.msk [vmem:[%s4 + $0x60] sm:$0xf] %vm1558, %v1454
  %1584 = vst.msk [vmem:[%s4 + $0x64] sm:$0xf] %vm1558, %v1455
  %1585 = vst.msk [vmem:[%s4 + $0x68] sm:$0xf] %vm1558, %v1456
  %1586 = vst.msk [vmem:[%s4 + $0x6c] sm:$0xf] %vm1558, %v1457
  %1587 = vst.msk [vmem:[%s4 + $0x70] sm:$0xf] %vm1558, %v1458
  %1588 = vst.msk [vmem:[%s4 + $0x74] sm:$0xf] %vm1558, %v1459
  %1589 = vst.msk [vmem:[%s4 + $0x78] sm:$0xf] %vm1558, %v1460
  %1590 = vst.msk [vmem:[%s4 + $0x7c] sm:$0xf] %vm1558, %v1461
  %1591 = vst.msk [vmem:[%s4 + $0x80] sm:$0xf] %vm1558, %v1462
  %1592 = vst.msk [vmem:[%s4 + $0x84] sm:$0xf] %vm1558, %v1463
  %1593 = vst.msk [vmem:[%s4 + $0x88] sm:$0xf] %vm1558, %v1464
  %1594 = vst.msk [vmem:[%s4 + $0x8c] sm:$0xf] %vm1558, %v1465
  %1595 = vst.msk [vmem:[%s4 + $0x90] sm:$0xf] %vm1558, %v1466
  %1596 = vst.msk [vmem:[%s4 + $0x94] sm:$0xf] %vm1558, %v1467
  %1597 = vst.msk [vmem:[%s4 + $0x98] sm:$0xf] %vm1558, %v1468
  %1598 = vst.msk [vmem:[%s4 + $0x9c] sm:$0xf] %vm1558, %v1469
  %1599 = vst.msk [vmem:[%s4 + $0xa0] sm:$0xf] %vm1558, %v1470
  %1600 = vst.msk [vmem:[%s4 + $0xa4] sm:$0xf] %vm1558, %v1471
  %1601 = vst.msk [vmem:[%s4 + $0xa8] sm:$0xf] %vm1558, %v1472
  %1602 = vst.msk [vmem:[%s4 + $0xac] sm:$0xf] %vm1558, %v1473
  %1603 = vst.msk [vmem:[%s4 + $0xb0] sm:$0xf] %vm1558, %v1474
  %1604 = vst.msk [vmem:[%s4 + $0xb4] sm:$0xf] %vm1558, %v1475
  %1605 = vst.msk [vmem:[%s4 + $0xb8] sm:$0xf] %vm1558, %v1476
  %1606 = vst.msk [vmem:[%s4 + $0xbc] sm:$0xf] %vm1558, %v1477
  %1607 = vst.msk [vmem:[%s4 + $0xc0] sm:$0xf] %vm1558, %v1478
  %1608 = vst.msk [vmem:[%s4 + $0xc4] sm:$0xf] %vm1558, %v1479
  %1609 = vst.msk [vmem:[%s4 + $0xc8] sm:$0xf] %vm1558, %v1480
  %1610 = vst.msk [vmem:[%s4 + $0xcc] sm:$0xf] %vm1558, %v1481
  %1611 = vst.msk [vmem:[%s4 + $0xd0] sm:$0xf] %vm1558, %v1482
  %1612 = vst.msk [vmem:[%s4 + $0xd4] sm:$0xf] %vm1558, %v1483
  %1613 = vst.msk [vmem:[%s4 + $0xd8] sm:$0xf] %vm1558, %v1484
  %1614 = vst.msk [vmem:[%s4 + $0xdc] sm:$0xf] %vm1558, %v1485
  %1615 = vst.msk [vmem:[%s4 + $0xe0] sm:$0xf] %vm1558, %v1486
  %1616 = vst.msk [vmem:[%s4 + $0xe4] sm:$0xf] %vm1558, %v1487
  %1617 = vst.msk [vmem:[%s4 + $0xe8] sm:$0xf] %vm1558, %v1488
  %1618 = vst.msk [vmem:[%s4 + $0xec] sm:$0xf] %vm1558, %v1489
  %1619 = vst.msk [vmem:[%s4 + $0xf0] sm:$0xf] %vm1558, %v1490
  %1620 = vst.msk [vmem:[%s4 + $0xf4] sm:$0xf] %vm1558, %v1491
  %1621 = vst.msk [vmem:[%s4 + $0xf8] sm:$0xf] %vm1558, %v1492
  %1622 = vst.msk [vmem:[%s4 + $0xfc] sm:$0xf] %vm1558, %v1493
  // Predicated region
  $region18: #{vgg_discriminator.12} parent=0 // pred_check
    _
  $region19: #{vgg_discriminator.12} parent=0 // pred_check_branch
    %1624 = sbr.rel (0) target = $region21
  $region20: #{vgg_discriminator.12} parent=0 // pred_region
    _
  $region21: #{vgg_discriminator.12} parent=0 // pred_fallthru
    _
  // Predicated region
  $region22: #{vgg_discriminator.12} parent=0 // pred_check
    _
  $region23: #{vgg_discriminator.12} parent=0 // pred_check_branch
    %1626 = sbr.rel (0) target = $region25
  $region24: #{vgg_discriminator.12} parent=0 // pred_region
    _
  $region25: #{vgg_discriminator.12} parent=0 // pred_fallthru
    _

// kernel: vgg_discriminator.13
$region0: #{vgg_discriminator.13}
  #allocation0 [shape = 'u32[]', space=smem, size = 0x4, offset = 0x4, fixed_abs, tag = 'smem constant byte address 0x4 - core index']
  #allocation1 [shape = 'u32[144,128]{1,0:T(1,128)}', space=vmem, size = 0x12000, scoped, tag = 'internal scratch']
  %s0 = inlined_call_operand.vmem [shape: bf16[512,128], index: 0, kind: input, shape index: {}]
  %s1 = inlined_call_operand.vmem [shape: bf16[128,16], index: 1, kind: input, shape index: {}]
  %s2 = inlined_call_operand.vmem [shape: f32[1,16], index: 2, kind: input, shape index: {}]
  %s3 = inlined_call_operand.vmem [shape: f32[1,16], index: 3, kind: input, shape index: {}]
  %s4 = inlined_call_operand.vmem [shape: bf16[512,16], index: 4, kind: output, shape index: {}]
  %s5 = sld [smem:[#allocation0]]
  $region26: #{vgg_discriminator.13} parent=0
    _
  %s7 = ssub.s32 1, %s5
  %s8 = scalar_select 0, %s7, %s5
  // Predicated region
  $region2: #{vgg_discriminator.13} parent=0 // pred_check
    _
  $region3: #{vgg_discriminator.13} parent=0 // pred_check_branch
    %10 = sbr.rel (0) target = $region5
  $region4: #{vgg_discriminator.13} parent=0 // pred_region
    _
  $region5: #{vgg_discriminator.13} parent=0 // pred_fallthru
    _
  // Predicated region
  $region6: #{vgg_discriminator.13} parent=0 // pred_check
    _
  $region7: #{vgg_discriminator.13} parent=0 // pred_check_branch
    %12 = sbr.rel (0) target = $region9
  $region8: #{vgg_discriminator.13} parent=0 // pred_region
    _
  $region9: #{vgg_discriminator.13} parent=0 // pred_fallthru
    _
  // Predicated region
  $region10: #{vgg_discriminator.13} parent=0 // pred_check
    _
  $region11: #{vgg_discriminator.13} parent=0 // pred_check_branch
    %14 = sbr.rel (0) target = $region13
  $region12: #{vgg_discriminator.13} parent=0 // pred_region
    _
  $region13: #{vgg_discriminator.13} parent=0 // pred_fallthru
    _
  // Predicated region
  $region14: #{vgg_discriminator.13} parent=0 // pred_check
    _
  $region15: #{vgg_discriminator.13} parent=0 // pred_check_branch
    %16 = sbr.rel (0) target = $region17
  $region16: #{vgg_discriminator.13} parent=0 // pred_region
    _
  $region17: #{vgg_discriminator.13} parent=0 // pred_fallthru
    _
  %v18 = vld [vmem:[%s0] sm:$0xf]
  %v19 = vld [vmem:[%s0 + $0x4] sm:$0xf]
  %v20 = vld [vmem:[%s0 + $0x8] sm:$0xf]
  %v21 = vld [vmem:[%s0 + $0xc] sm:$0xf]
  %v22 = vld [vmem:[%s0 + $0x10] sm:$0xf]
  %v23 = vld [vmem:[%s0 + $0x14] sm:$0xf]
  %v24 = vld [vmem:[%s0 + $0x18] sm:$0xf]
  %v25 = vld [vmem:[%s0 + $0x1c] sm:$0xf]
  %v26 = vld [vmem:[%s0 + $0x20] sm:$0xf]
  %v27 = vld [vmem:[%s0 + $0x24] sm:$0xf]
  %v28 = vld [vmem:[%s0 + $0x28] sm:$0xf]
  %v29 = vld [vmem:[%s0 + $0x2c] sm:$0xf]
  %v30 = vld [vmem:[%s0 + $0x30] sm:$0xf]
  %v31 = vld [vmem:[%s0 + $0x34] sm:$0xf]
  %v32 = vld [vmem:[%s0 + $0x38] sm:$0xf]
  %v33 = vld [vmem:[%s0 + $0x3c] sm:$0xf]
  %v34 = vld [vmem:[%s0 + $0x40] sm:$0xf]
  %v35 = vld [vmem:[%s0 + $0x44] sm:$0xf]
  %v36 = vld [vmem:[%s0 + $0x48] sm:$0xf]
  %v37 = vld [vmem:[%s0 + $0x4c] sm:$0xf]
  %v38 = vld [vmem:[%s0 + $0x50] sm:$0xf]
  %v39 = vld [vmem:[%s0 + $0x54] sm:$0xf]
  %v40 = vld [vmem:[%s0 + $0x58] sm:$0xf]
  %v41 = vld [vmem:[%s0 + $0x5c] sm:$0xf]
  %v42 = vld [vmem:[%s0 + $0x60] sm:$0xf]
  %v43 = vld [vmem:[%s0 + $0x64] sm:$0xf]
  %v44 = vld [vmem:[%s0 + $0x68] sm:$0xf]
  %v45 = vld [vmem:[%s0 + $0x6c] sm:$0xf]
  %v46 = vld [vmem:[%s0 + $0x70] sm:$0xf]
  %v47 = vld [vmem:[%s0 + $0x74] sm:$0xf]
  %v48 = vld [vmem:[%s0 + $0x78] sm:$0xf]
  %v49 = vld [vmem:[%s0 + $0x7c] sm:$0xf]
  %v50 = vld [vmem:[%s0 + $0x80] sm:$0xf]
  %v51 = vld [vmem:[%s0 + $0x84] sm:$0xf]
  %v52 = vld [vmem:[%s0 + $0x88] sm:$0xf]
  %v53 = vld [vmem:[%s0 + $0x8c] sm:$0xf]
  %v54 = vld [vmem:[%s0 + $0x90] sm:$0xf]
  %v55 = vld [vmem:[%s0 + $0x94] sm:$0xf]
  %v56 = vld [vmem:[%s0 + $0x98] sm:$0xf]
  %v57 = vld [vmem:[%s0 + $0x9c] sm:$0xf]
  %v58 = vld [vmem:[%s0 + $0xa0] sm:$0xf]
  %v59 = vld [vmem:[%s0 + $0xa4] sm:$0xf]
  %v60 = vld [vmem:[%s0 + $0xa8] sm:$0xf]
  %v61 = vld [vmem:[%s0 + $0xac] sm:$0xf]
  %v62 = vld [vmem:[%s0 + $0xb0] sm:$0xf]
  %v63 = vld [vmem:[%s0 + $0xb4] sm:$0xf]
  %v64 = vld [vmem:[%s0 + $0xb8] sm:$0xf]
  %v65 = vld [vmem:[%s0 + $0xbc] sm:$0xf]
  %v66 = vld [vmem:[%s0 + $0xc0] sm:$0xf]
  %v67 = vld [vmem:[%s0 + $0xc4] sm:$0xf]
  %v68 = vld [vmem:[%s0 + $0xc8] sm:$0xf]
  %v69 = vld [vmem:[%s0 + $0xcc] sm:$0xf]
  %v70 = vld [vmem:[%s0 + $0xd0] sm:$0xf]
  %v71 = vld [vmem:[%s0 + $0xd4] sm:$0xf]
  %v72 = vld [vmem:[%s0 + $0xd8] sm:$0xf]
  %v73 = vld [vmem:[%s0 + $0xdc] sm:$0xf]
  %v74 = vld [vmem:[%s0 + $0xe0] sm:$0xf]
  %v75 = vld [vmem:[%s0 + $0xe4] sm:$0xf]
  %v76 = vld [vmem:[%s0 + $0xe8] sm:$0xf]
  %v77 = vld [vmem:[%s0 + $0xec] sm:$0xf]
  %v78 = vld [vmem:[%s0 + $0xf0] sm:$0xf]
  %v79 = vld [vmem:[%s0 + $0xf4] sm:$0xf]
  %v80 = vld [vmem:[%s0 + $0xf8] sm:$0xf]
  %v81 = vld [vmem:[%s0 + $0xfc] sm:$0xf]
  %v82 = vld [vmem:[%s1] sm:$0xf]
  %v83 = vld [vmem:[%s1 + $0x4] sm:$0xf]
  %v84 = vld [vmem:[%s1 + $0x8] sm:$0xf]
  %v85 = vld [vmem:[%s1 + $0xc] sm:$0xf]
  %v86 = vld [vmem:[%s1 + $0x10] sm:$0xf]
  %v87 = vld [vmem:[%s1 + $0x14] sm:$0xf]
  %v88 = vld [vmem:[%s1 + $0x18] sm:$0xf]
  %v89 = vld [vmem:[%s1 + $0x1c] sm:$0xf]
  %v90 = vld [vmem:[%s1 + $0x20] sm:$0xf]
  %v91 = vld [vmem:[%s1 + $0x24] sm:$0xf]
  %v92 = vld [vmem:[%s1 + $0x28] sm:$0xf]
  %v93 = vld [vmem:[%s1 + $0x2c] sm:$0xf]
  %v94 = vld [vmem:[%s1 + $0x30] sm:$0xf]
  %v95 = vld [vmem:[%s1 + $0x34] sm:$0xf]
  %v96 = vld [vmem:[%s1 + $0x38] sm:$0xf]
  %v97 = vld [vmem:[%s1 + $0x3c] sm:$0xf]
  %v162 = vunpack.c.l.b16 %v18
  %v163 = vunpack.c.l.b16 %v19
  %v164 = vunpack.c.l.b16 %v20
  %v165 = vunpack.c.l.b16 %v21
  %v166 = vunpack.c.l.b16 %v22
  %v167 = vunpack.c.l.b16 %v23
  %v168 = vunpack.c.l.b16 %v24
  %v169 = vunpack.c.l.b16 %v25
  %v170 = vunpack.c.l.b16 %v26
  %v171 = vunpack.c.l.b16 %v27
  %v172 = vunpack.c.l.b16 %v28
  %v173 = vunpack.c.l.b16 %v29
  %v174 = vunpack.c.l.b16 %v30
  %v175 = vunpack.c.l.b16 %v31
  %v176 = vunpack.c.l.b16 %v32
  %v177 = vunpack.c.l.b16 %v33
  %v178 = vunpack.c.l.b16 %v34
  %v179 = vunpack.c.l.b16 %v35
  %v180 = vunpack.c.l.b16 %v36
  %v181 = vunpack.c.l.b16 %v37
  %v182 = vunpack.c.l.b16 %v38
  %v183 = vunpack.c.l.b16 %v39
  %v184 = vunpack.c.l.b16 %v40
  %v185 = vunpack.c.l.b16 %v41
  %v186 = vunpack.c.l.b16 %v42
  %v187 = vunpack.c.l.b16 %v43
  %v188 = vunpack.c.l.b16 %v44
  %v189 = vunpack.c.l.b16 %v45
  %v190 = vunpack.c.l.b16 %v46
  %v191 = vunpack.c.l.b16 %v47
  %v192 = vunpack.c.l.b16 %v48
  %v193 = vunpack.c.l.b16 %v49
  %v194 = vunpack.c.l.b16 %v50
  %v195 = vunpack.c.l.b16 %v51
  %v196 = vunpack.c.l.b16 %v52
  %v197 = vunpack.c.l.b16 %v53
  %v198 = vunpack.c.l.b16 %v54
  %v199 = vunpack.c.l.b16 %v55
  %v200 = vunpack.c.l.b16 %v56
  %v201 = vunpack.c.l.b16 %v57
  %v202 = vunpack.c.l.b16 %v58
  %v203 = vunpack.c.l.b16 %v59
  %v204 = vunpack.c.l.b16 %v60
  %v205 = vunpack.c.l.b16 %v61
  %v206 = vunpack.c.l.b16 %v62
  %v207 = vunpack.c.l.b16 %v63
  %v208 = vunpack.c.l.b16 %v64
  %v209 = vunpack.c.l.b16 %v65
  %v210 = vunpack.c.l.b16 %v66
  %v211 = vunpack.c.l.b16 %v67
  %v212 = vunpack.c.l.b16 %v68
  %v213 = vunpack.c.l.b16 %v69
  %v214 = vunpack.c.l.b16 %v70
  %v215 = vunpack.c.l.b16 %v71
  %v216 = vunpack.c.l.b16 %v72
  %v217 = vunpack.c.l.b16 %v73
  %v218 = vunpack.c.l.b16 %v74
  %v219 = vunpack.c.l.b16 %v75
  %v220 = vunpack.c.l.b16 %v76
  %v221 = vunpack.c.l.b16 %v77
  %v222 = vunpack.c.l.b16 %v78
  %v223 = vunpack.c.l.b16 %v79
  %v224 = vunpack.c.l.b16 %v80
  %v225 = vunpack.c.l.b16 %v81
  %v226 = vpack.c.b16 %v163, %v162
  %v227 = vpack.c.b16 %v165, %v164
  %v228 = vpack.c.b16 %v167, %v166
  %v229 = vpack.c.b16 %v169, %v168
  %v230 = vpack.c.b16 %v171, %v170
  %v231 = vpack.c.b16 %v173, %v172
  %v232 = vpack.c.b16 %v175, %v174
  %v233 = vpack.c.b16 %v177, %v176
  %v234 = vpack.c.b16 %v179, %v178
  %v235 = vpack.c.b16 %v181, %v180
  %v236 = vpack.c.b16 %v183, %v182
  %v237 = vpack.c.b16 %v185, %v184
  %v238 = vpack.c.b16 %v187, %v186
  %v239 = vpack.c.b16 %v189, %v188
  %v240 = vpack.c.b16 %v191, %v190
  %v241 = vpack.c.b16 %v193, %v192
  %v242 = vpack.c.b16 %v195, %v194
  %v243 = vpack.c.b16 %v197, %v196
  %v244 = vpack.c.b16 %v199, %v198
  %v245 = vpack.c.b16 %v201, %v200
  %v246 = vpack.c.b16 %v203, %v202
  %v247 = vpack.c.b16 %v205, %v204
  %v248 = vpack.c.b16 %v207, %v206
  %v249 = vpack.c.b16 %v209, %v208
  %v250 = vpack.c.b16 %v211, %v210
  %v251 = vpack.c.b16 %v213, %v212
  %v252 = vpack.c.b16 %v215, %v214
  %v253 = vpack.c.b16 %v217, %v216
  %v254 = vpack.c.b16 %v219, %v218
  %v255 = vpack.c.b16 %v221, %v220
  %v256 = vpack.c.b16 %v223, %v222
  %v257 = vpack.c.b16 %v225, %v224
  %v306 = vunpack.c.l.b16 %v82
  %v307 = vunpack.c.l.b16 %v83
  %v308 = vunpack.c.l.b16 %v84
  %v309 = vunpack.c.l.b16 %v85
  %v310 = vunpack.c.l.b16 %v86
  %v311 = vunpack.c.l.b16 %v87
  %v312 = vunpack.c.l.b16 %v88
  %v313 = vunpack.c.l.b16 %v89
  %v314 = vunpack.c.l.b16 %v90
  %v315 = vunpack.c.l.b16 %v91
  %v316 = vunpack.c.l.b16 %v92
  %v317 = vunpack.c.l.b16 %v93
  %v318 = vunpack.c.l.b16 %v94
  %v319 = vunpack.c.l.b16 %v95
  %v320 = vunpack.c.l.b16 %v96
  %v321 = vunpack.c.l.b16 %v97
  %v322 = vpack.c.b16 %v307, %v306
  %v323 = vpack.c.b16 %v309, %v308
  %v324 = vpack.c.b16 %v311, %v310
  %v325 = vpack.c.b16 %v313, %v312
  %v326 = vpack.c.b16 %v315, %v314
  %v327 = vpack.c.b16 %v317, %v316
  %v328 = vpack.c.b16 %v319, %v318
  %v329 = vpack.c.b16 %v321, %v320
  %338 = vmatprep.subr.bf16.mxu0 0
  %339 = vmatpush1.bf16.msra.mxu0 %v322
  %340 = vmatprep.subr.bf16.mxu0 0
  %341 = vmatpush1.bf16.msra.mxu0 %v323
  %342 = vmatprep.subr.bf16.mxu0 0
  %343 = vmatpush1.bf16.msra.mxu0 %v324
  %344 = vmatprep.subr.bf16.mxu0 0
  %345 = vmatpush1.bf16.msra.mxu0 %v325
  %346 = vmatprep.subr.bf16.mxu0 0
  %347 = vmatpush1.bf16.msra.mxu0 %v326
  %348 = vmatprep.subr.bf16.mxu0 0
  %349 = vmatpush1.bf16.msra.mxu0 %v327
  %350 = vmatprep.subr.bf16.mxu0 0
  %351 = vmatpush1.bf16.msra.mxu0 %v328
  %352 = vmatprep.subr.bf16.mxu0 0
  %353 = vmatpush1.bf16.msra.mxu0 %v329
  %354 = vmatprep.subr.bf16.mxu0 0
  %355 = vmatpush1.bf16.msra.mxu0 0
  %356 = vmatprep.subr.bf16.mxu0 0
  %357 = vmatpush1.bf16.msra.mxu0 0
  %358 = vmatprep.subr.bf16.mxu0 0
  %359 = vmatpush1.bf16.msra.mxu0 0
  %360 = vmatprep.subr.bf16.mxu0 0
  %361 = vmatpush1.bf16.msra.mxu0 0
  %362 = vmatprep.subr.bf16.mxu0 0
  %363 = vmatpush1.bf16.msra.mxu0 0
  %364 = vmatprep.subr.bf16.mxu0 0
  %365 = vmatpush1.bf16.msra.mxu0 0
  %366 = vmatprep.subr.bf16.mxu0 0
  %367 = vmatpush1.bf16.msra.mxu0 0
  %368 = vmatprep.subr.bf16.mxu0 0
  %369 = vmatpush1.bf16.msra.mxu0 0
  %370 = vmatprep.mubr.bf16.mxu0 0
  %371 = vmatmul.mubr.bf16.gmra.mrb[0].mxu0 %v226
  %v372 = vpop.f32.mrb[0].mxu0
  %v373 = vadd.f32 0.0, %v372
  %v374 = vpop.f32.mrb[0].mxu0
  %v375 = vpop.f32.mrb[0].mxu0
  %v376 = vadd.f32 0.0, %v375
  %v377 = vpop.f32.mrb[0].mxu0
  %378 = vmatprep.mubr.bf16.mxu0 0
  %379 = vmatmul.mubr.bf16.gmra.mrb[0].mxu0 %v227
  %v380 = vpop.f32.mrb[0].mxu0
  %v381 = vadd.f32 0.0, %v380
  %v382 = vpop.f32.mrb[0].mxu0
  %v383 = vpop.f32.mrb[0].mxu0
  %v384 = vadd.f32 0.0, %v383
  %v385 = vpop.f32.mrb[0].mxu0
  %386 = vmatprep.mubr.bf16.mxu0 0
  %387 = vmatmul.mubr.bf16.gmra.mrb[0].mxu0 %v228
  %v388 = vpop.f32.mrb[0].mxu0
  %v389 = vadd.f32 0.0, %v388
  %v390 = vpop.f32.mrb[0].mxu0
  %v391 = vpop.f32.mrb[0].mxu0
  %v392 = vadd.f32 0.0, %v391
  %v393 = vpop.f32.mrb[0].mxu0
  %394 = vmatprep.mubr.bf16.mxu0 0
  %395 = vmatmul.mubr.bf16.gmra.mrb[0].mxu0 %v229
  %v396 = vpop.f32.mrb[0].mxu0
  %v397 = vadd.f32 0.0, %v396
  %v398 = vpop.f32.mrb[0].mxu0
  %v399 = vpop.f32.mrb[0].mxu0
  %v400 = vadd.f32 0.0, %v399
  %v401 = vpop.f32.mrb[0].mxu0
  %402 = vmatprep.mubr.bf16.mxu0 0
  %403 = vmatmul.mubr.bf16.gmra.mrb[0].mxu0 %v230
  %v404 = vpop.f32.mrb[0].mxu0
  %v405 = vadd.f32 0.0, %v404
  %v406 = vpop.f32.mrb[0].mxu0
  %v407 = vpop.f32.mrb[0].mxu0
  %v408 = vadd.f32 0.0, %v407
  %v409 = vpop.f32.mrb[0].mxu0
  %410 = vmatprep.mubr.bf16.mxu0 0
  %411 = vmatmul.mubr.bf16.gmra.mrb[0].mxu0 %v231
  %v412 = vpop.f32.mrb[0].mxu0
  %v413 = vadd.f32 0.0, %v412
  %v414 = vpop.f32.mrb[0].mxu0
  %v415 = vpop.f32.mrb[0].mxu0
  %v416 = vadd.f32 0.0, %v415
  %v417 = vpop.f32.mrb[0].mxu0
  %418 = vmatprep.mubr.bf16.mxu0 0
  %419 = vmatmul.mubr.bf16.gmra.mrb[0].mxu0 %v232
  %v420 = vpop.f32.mrb[0].mxu0
  %v421 = vadd.f32 0.0, %v420
  %v422 = vpop.f32.mrb[0].mxu0
  %v423 = vpop.f32.mrb[0].mxu0
  %v424 = vadd.f32 0.0, %v423
  %v425 = vpop.f32.mrb[0].mxu0
  %426 = vmatprep.mubr.bf16.mxu0 0
  %427 = vmatmul.mubr.bf16.gmra.mrb[0].mxu0 %v233
  %v428 = vpop.f32.mrb[0].mxu0
  %v429 = vadd.f32 0.0, %v428
  %v430 = vpop.f32.mrb[0].mxu0
  %v431 = vpop.f32.mrb[0].mxu0
  %v432 = vadd.f32 0.0, %v431
  %v433 = vpop.f32.mrb[0].mxu0
  %434 = vmatprep.mubr.bf16.mxu0 0
  %435 = vmatmul.mubr.bf16.gmra.mrb[0].mxu0 %v234
  %v436 = vpop.f32.mrb[0].mxu0
  %v437 = vadd.f32 0.0, %v436
  %v438 = vpop.f32.mrb[0].mxu0
  %v439 = vpop.f32.mrb[0].mxu0
  %v440 = vadd.f32 0.0, %v439
  %v441 = vpop.f32.mrb[0].mxu0
  %442 = vmatprep.mubr.bf16.mxu0 0
  %443 = vmatmul.mubr.bf16.gmra.mrb[0].mxu0 %v235
  %v444 = vpop.f32.mrb[0].mxu0
  %v445 = vadd.f32 0.0, %v444
  %v446 = vpop.f32.mrb[0].mxu0
  %v447 = vpop.f32.mrb[0].mxu0
  %v448 = vadd.f32 0.0, %v447
  %v449 = vpop.f32.mrb[0].mxu0
  %450 = vmatprep.mubr.bf16.mxu0 0
  %451 = vmatmul.mubr.bf16.gmra.mrb[0].mxu0 %v236
  %v452 = vpop.f32.mrb[0].mxu0
  %v453 = vadd.f32 0.0, %v452
  %v454 = vpop.f32.mrb[0].mxu0
  %v455 = vpop.f32.mrb[0].mxu0
  %v456 = vadd.f32 0.0, %v455
  %v457 = vpop.f32.mrb[0].mxu0
  %458 = vmatprep.mubr.bf16.mxu0 0
  %459 = vmatmul.mubr.bf16.gmra.mrb[0].mxu0 %v237
  %v460 = vpop.f32.mrb[0].mxu0
  %v461 = vadd.f32 0.0, %v460
  %v462 = vpop.f32.mrb[0].mxu0
  %v463 = vpop.f32.mrb[0].mxu0
  %v464 = vadd.f32 0.0, %v463
  %v465 = vpop.f32.mrb[0].mxu0
  %466 = vmatprep.mubr.bf16.mxu0 0
  %467 = vmatmul.mubr.bf16.gmra.mrb[0].mxu0 %v238
  %v468 = vpop.f32.mrb[0].mxu0
  %v469 = vadd.f32 0.0, %v468
  %v470 = vpop.f32.mrb[0].mxu0
  %v471 = vpop.f32.mrb[0].mxu0
  %v472 = vadd.f32 0.0, %v471
  %v473 = vpop.f32.mrb[0].mxu0
  %474 = vmatprep.mubr.bf16.mxu0 0
  %475 = vmatmul.mubr.bf16.gmra.mrb[0].mxu0 %v239
  %v476 = vpop.f32.mrb[0].mxu0
  %v477 = vadd.f32 0.0, %v476
  %v478 = vpop.f32.mrb[0].mxu0
  %v479 = vpop.f32.mrb[0].mxu0
  %v480 = vadd.f32 0.0, %v479
  %v481 = vpop.f32.mrb[0].mxu0
  %482 = vmatprep.mubr.bf16.mxu0 0
  %483 = vmatmul.mubr.bf16.gmra.mrb[0].mxu0 %v240
  %v484 = vpop.f32.mrb[0].mxu0
  %v485 = vadd.f32 0.0, %v484
  %v486 = vpop.f32.mrb[0].mxu0
  %v487 = vpop.f32.mrb[0].mxu0
  %v488 = vadd.f32 0.0, %v487
  %v489 = vpop.f32.mrb[0].mxu0
  %490 = vmatprep.mubr.bf16.mxu0 0
  %491 = vmatmul.mubr.bf16.gmra.mrb[0].mxu0 %v241
  %v492 = vpop.f32.mrb[0].mxu0
  %v493 = vadd.f32 0.0, %v492
  %v494 = vpop.f32.mrb[0].mxu0
  %v495 = vpop.f32.mrb[0].mxu0
  %v496 = vadd.f32 0.0, %v495
  %v497 = vpop.f32.mrb[0].mxu0
  %498 = vmatprep.mubr.bf16.mxu0 0
  %499 = vmatmul.mubr.bf16.gmra.mrb[0].mxu0 %v242
  %v500 = vpop.f32.mrb[0].mxu0
  %v501 = vadd.f32 0.0, %v500
  %v502 = vpop.f32.mrb[0].mxu0
  %v503 = vpop.f32.mrb[0].mxu0
  %v504 = vadd.f32 0.0, %v503
  %v505 = vpop.f32.mrb[0].mxu0
  %506 = vmatprep.mubr.bf16.mxu0 0
  %507 = vmatmul.mubr.bf16.gmra.mrb[0].mxu0 %v243
  %v508 = vpop.f32.mrb[0].mxu0
  %v509 = vadd.f32 0.0, %v508
  %v510 = vpop.f32.mrb[0].mxu0
  %v511 = vpop.f32.mrb[0].mxu0
  %v512 = vadd.f32 0.0, %v511
  %v513 = vpop.f32.mrb[0].mxu0
  %514 = vmatprep.mubr.bf16.mxu0 0
  %515 = vmatmul.mubr.bf16.gmra.mrb[0].mxu0 %v244
  %v516 = vpop.f32.mrb[0].mxu0
  %v517 = vadd.f32 0.0, %v516
  %v518 = vpop.f32.mrb[0].mxu0
  %v519 = vpop.f32.mrb[0].mxu0
  %v520 = vadd.f32 0.0, %v519
  %v521 = vpop.f32.mrb[0].mxu0
  %522 = vmatprep.mubr.bf16.mxu0 0
  %523 = vmatmul.mubr.bf16.gmra.mrb[0].mxu0 %v245
  %v524 = vpop.f32.mrb[0].mxu0
  %v525 = vadd.f32 0.0, %v524
  %v526 = vpop.f32.mrb[0].mxu0
  %v527 = vpop.f32.mrb[0].mxu0
  %v528 = vadd.f32 0.0, %v527
  %v529 = vpop.f32.mrb[0].mxu0
  %530 = vmatprep.mubr.bf16.mxu0 0
  %531 = vmatmul.mubr.bf16.gmra.mrb[0].mxu0 %v246
  %v532 = vpop.f32.mrb[0].mxu0
  %v533 = vadd.f32 0.0, %v532
  %v534 = vpop.f32.mrb[0].mxu0
  %v535 = vpop.f32.mrb[0].mxu0
  %v536 = vadd.f32 0.0, %v535
  %v537 = vpop.f32.mrb[0].mxu0
  %538 = vmatprep.mubr.bf16.mxu0 0
  %539 = vmatmul.mubr.bf16.gmra.mrb[0].mxu0 %v247
  %v540 = vpop.f32.mrb[0].mxu0
  %v541 = vadd.f32 0.0, %v540
  %v542 = vpop.f32.mrb[0].mxu0
  %v543 = vpop.f32.mrb[0].mxu0
  %v544 = vadd.f32 0.0, %v543
  %v545 = vpop.f32.mrb[0].mxu0
  %546 = vmatprep.mubr.bf16.mxu0 0
  %547 = vmatmul.mubr.bf16.gmra.mrb[0].mxu0 %v248
  %v548 = vpop.f32.mrb[0].mxu0
  %v549 = vadd.f32 0.0, %v548
  %v550 = vpop.f32.mrb[0].mxu0
  %v551 = vpop.f32.mrb[0].mxu0
  %v552 = vadd.f32 0.0, %v551
  %v553 = vpop.f32.mrb[0].mxu0
  %554 = vmatprep.mubr.bf16.mxu0 0
  %555 = vmatmul.mubr.bf16.gmra.mrb[0].mxu0 %v249
  %v556 = vpop.f32.mrb[0].mxu0
  %v557 = vadd.f32 0.0, %v556
  %v558 = vpop.f32.mrb[0].mxu0
  %v559 = vpop.f32.mrb[0].mxu0
  %v560 = vadd.f32 0.0, %v559
  %v561 = vpop.f32.mrb[0].mxu0
  %562 = vmatprep.mubr.bf16.mxu0 0
  %563 = vmatmul.mubr.bf16.gmra.mrb[0].mxu0 %v250
  %v564 = vpop.f32.mrb[0].mxu0
  %v565 = vadd.f32 0.0, %v564
  %v566 = vpop.f32.mrb[0].mxu0
  %v567 = vpop.f32.mrb[0].mxu0
  %v568 = vadd.f32 0.0, %v567
  %v569 = vpop.f32.mrb[0].mxu0
  %570 = vmatprep.mubr.bf16.mxu0 0
  %571 = vmatmul.mubr.bf16.gmra.mrb[0].mxu0 %v251
  %v572 = vpop.f32.mrb[0].mxu0
  %v573 = vadd.f32 0.0, %v572
  %v574 = vpop.f32.mrb[0].mxu0
  %v575 = vpop.f32.mrb[0].mxu0
  %v576 = vadd.f32 0.0, %v575
  %v577 = vpop.f32.mrb[0].mxu0
  %578 = vmatprep.mubr.bf16.mxu0 0
  %579 = vmatmul.mubr.bf16.gmra.mrb[0].mxu0 %v252
  %v580 = vpop.f32.mrb[0].mxu0
  %v581 = vadd.f32 0.0, %v580
  %v582 = vpop.f32.mrb[0].mxu0
  %v583 = vpop.f32.mrb[0].mxu0
  %v584 = vadd.f32 0.0, %v583
  %v585 = vpop.f32.mrb[0].mxu0
  %586 = vmatprep.mubr.bf16.mxu0 0
  %587 = vmatmul.mubr.bf16.gmra.mrb[0].mxu0 %v253
  %v588 = vpop.f32.mrb[0].mxu0
  %v589 = vadd.f32 0.0, %v588
  %v590 = vpop.f32.mrb[0].mxu0
  %v591 = vpop.f32.mrb[0].mxu0
  %v592 = vadd.f32 0.0, %v591
  %v593 = vpop.f32.mrb[0].mxu0
  %594 = vmatprep.mubr.bf16.mxu0 0
  %595 = vmatmul.mubr.bf16.gmra.mrb[0].mxu0 %v254
  %v596 = vpop.f32.mrb[0].mxu0
  %v597 = vadd.f32 0.0, %v596
  %v598 = vpop.f32.mrb[0].mxu0
  %v599 = vpop.f32.mrb[0].mxu0
  %v600 = vadd.f32 0.0, %v599
  %v601 = vpop.f32.mrb[0].mxu0
  %602 = vmatprep.mubr.bf16.mxu0 0
  %603 = vmatmul.mubr.bf16.gmra.mrb[0].mxu0 %v255
  %v604 = vpop.f32.mrb[0].mxu0
  %v605 = vadd.f32 0.0, %v604
  %v606 = vpop.f32.mrb[0].mxu0
  %v607 = vpop.f32.mrb[0].mxu0
  %v608 = vadd.f32 0.0, %v607
  %v609 = vpop.f32.mrb[0].mxu0
  %610 = vmatprep.mubr.bf16.mxu0 0
  %611 = vmatmul.mubr.bf16.gmra.mrb[0].mxu0 %v256
  %v612 = vpop.f32.mrb[0].mxu0
  %v613 = vadd.f32 0.0, %v612
  %v614 = vpop.f32.mrb[0].mxu0
  %v615 = vpop.f32.mrb[0].mxu0
  %v616 = vadd.f32 0.0, %v615
  %v617 = vpop.f32.mrb[0].mxu0
  %618 = vmatprep.mubr.bf16.mxu0 0
  %619 = vmatmul.mubr.bf16.gmra.mrb[0].mxu0 %v257
  %v620 = vpop.f32.mrb[0].mxu0
  %v621 = vadd.f32 0.0, %v620
  %v622 = vpop.f32.mrb[0].mxu0
  %v623 = vpop.f32.mrb[0].mxu0
  %v624 = vadd.f32 0.0, %v623
  %v625 = vpop.f32.mrb[0].mxu0
  %626 = vdwg.mxu0
  %vm627 = vcmask 130048
  %v628 = vsel %vm627, %v373, 0.0
  %v629 = vsel %vm627, %v376, 0.0
  %v630 = vadd.f32 %v628, %v629
  %v631 = vsel %vm627, %v381, 0.0
  %v632 = vadd.f32 %v630, %v631
  %v633 = vsel %vm627, %v384, 0.0
  %v634 = vadd.f32 %v632, %v633
  %v635 = vsel %vm627, %v389, 0.0
  %v636 = vadd.f32 %v634, %v635
  %v637 = vsel %vm627, %v392, 0.0
  %v638 = vadd.f32 %v636, %v637
  %v639 = vsel %vm627, %v397, 0.0
  %v640 = vadd.f32 %v638, %v639
  %v641 = vsel %vm627, %v400, 0.0
  %v642 = vadd.f32 %v640, %v641
  %v643 = vsel %vm627, %v405, 0.0
  %v644 = vadd.f32 %v642, %v643
  %v645 = vsel %vm627, %v408, 0.0
  %v646 = vadd.f32 %v644, %v645
  %v647 = vsel %vm627, %v413, 0.0
  %v648 = vadd.f32 %v646, %v647
  %v649 = vsel %vm627, %v416, 0.0
  %v650 = vadd.f32 %v648, %v649
  %v651 = vsel %vm627, %v421, 0.0
  %v652 = vadd.f32 %v650, %v651
  %v653 = vsel %vm627, %v424, 0.0
  %v654 = vadd.f32 %v652, %v653
  %v655 = vsel %vm627, %v429, 0.0
  %v656 = vadd.f32 %v654, %v655
  %v657 = vsel %vm627, %v432, 0.0
  %v658 = vadd.f32 %v656, %v657
  %v659 = vsel %vm627, %v437, 0.0
  %v660 = vadd.f32 %v658, %v659
  %v661 = vsel %vm627, %v440, 0.0
  %v662 = vadd.f32 %v660, %v661
  %v663 = vsel %vm627, %v445, 0.0
  %v664 = vadd.f32 %v662, %v663
  %v665 = vsel %vm627, %v448, 0.0
  %v666 = vadd.f32 %v664, %v665
  %v667 = vsel %vm627, %v453, 0.0
  %v668 = vadd.f32 %v666, %v667
  %v669 = vsel %vm627, %v456, 0.0
  %v670 = vadd.f32 %v668, %v669
  %v671 = vsel %vm627, %v461, 0.0
  %v672 = vadd.f32 %v670, %v671
  %v673 = vsel %vm627, %v464, 0.0
  %v674 = vadd.f32 %v672, %v673
  %v675 = vsel %vm627, %v469, 0.0
  %v676 = vadd.f32 %v674, %v675
  %v677 = vsel %vm627, %v472, 0.0
  %v678 = vadd.f32 %v676, %v677
  %v679 = vsel %vm627, %v477, 0.0
  %v680 = vadd.f32 %v678, %v679
  %v681 = vsel %vm627, %v480, 0.0
  %v682 = vadd.f32 %v680, %v681
  %v683 = vsel %vm627, %v485, 0.0
  %v684 = vadd.f32 %v682, %v683
  %v685 = vsel %vm627, %v488, 0.0
  %v686 = vadd.f32 %v684, %v685
  %v687 = vsel %vm627, %v493, 0.0
  %v688 = vadd.f32 %v686, %v687
  %v689 = vsel %vm627, %v496, 0.0
  %v690 = vadd.f32 %v688, %v689
  %v691 = vsel %vm627, %v501, 0.0
  %v692 = vadd.f32 %v690, %v691
  %v693 = vsel %vm627, %v504, 0.0
  %v694 = vadd.f32 %v692, %v693
  %v695 = vsel %vm627, %v509, 0.0
  %v696 = vadd.f32 %v694, %v695
  %v697 = vsel %vm627, %v512, 0.0
  %v698 = vadd.f32 %v696, %v697
  %v699 = vsel %vm627, %v517, 0.0
  %v700 = vadd.f32 %v698, %v699
  %v701 = vsel %vm627, %v520, 0.0
  %v702 = vadd.f32 %v700, %v701
  %v703 = vsel %vm627, %v525, 0.0
  %v704 = vadd.f32 %v702, %v703
  %v705 = vsel %vm627, %v528, 0.0
  %v706 = vadd.f32 %v704, %v705
  %v707 = vsel %vm627, %v533, 0.0
  %v708 = vadd.f32 %v706, %v707
  %v709 = vsel %vm627, %v536, 0.0
  %v710 = vadd.f32 %v708, %v709
  %v711 = vsel %vm627, %v541, 0.0
  %v712 = vadd.f32 %v710, %v711
  %v713 = vsel %vm627, %v544, 0.0
  %v714 = vadd.f32 %v712, %v713
  %v715 = vsel %vm627, %v549, 0.0
  %v716 = vadd.f32 %v714, %v715
  %v717 = vsel %vm627, %v552, 0.0
  %v718 = vadd.f32 %v716, %v717
  %v719 = vsel %vm627, %v557, 0.0
  %v720 = vadd.f32 %v718, %v719
  %v721 = vsel %vm627, %v560, 0.0
  %v722 = vadd.f32 %v720, %v721
  %v723 = vsel %vm627, %v565, 0.0
  %v724 = vadd.f32 %v722, %v723
  %v725 = vsel %vm627, %v568, 0.0
  %v726 = vadd.f32 %v724, %v725
  %v727 = vsel %vm627, %v573, 0.0
  %v728 = vadd.f32 %v726, %v727
  %v729 = vsel %vm627, %v576, 0.0
  %v730 = vadd.f32 %v728, %v729
  %v731 = vsel %vm627, %v581, 0.0
  %v732 = vadd.f32 %v730, %v731
  %v733 = vsel %vm627, %v584, 0.0
  %v734 = vadd.f32 %v732, %v733
  %v735 = vsel %vm627, %v589, 0.0
  %v736 = vadd.f32 %v734, %v735
  %v737 = vsel %vm627, %v592, 0.0
  %v738 = vadd.f32 %v736, %v737
  %v739 = vsel %vm627, %v597, 0.0
  %v740 = vadd.f32 %v738, %v739
  %v741 = vsel %vm627, %v600, 0.0
  %v742 = vadd.f32 %v740, %v741
  %v743 = vsel %vm627, %v605, 0.0
  %v744 = vadd.f32 %v742, %v743
  %v745 = vsel %vm627, %v608, 0.0
  %v746 = vadd.f32 %v744, %v745
  %v747 = vsel %vm627, %v613, 0.0
  %v748 = vadd.f32 %v746, %v747
  %v749 = vsel %vm627, %v616, 0.0
  %v750 = vadd.f32 %v748, %v749
  %v751 = vsel %vm627, %v621, 0.0
  %v752 = vadd.f32 %v750, %v751
  %v753 = vsel %vm627, %v624, 0.0
  %v754 = vadd.f32 %v752, %v753
  %v755 = vrot.slane %v754, 4
  %v756 = vadd.f32 %v754, %v755
  %v757 = vrot.slane %v756, 2
  %v758 = vadd.f32 %v756, %v757
  %v759 = vrot.slane %v758, 1
  %v760 = vadd.f32 %v758, %v759
  %v761 = vmul.f32 %v760, 0.001953125
  %v762 = vmul.f32 %v373, %v373
  %v763 = vmul.f32 %v376, %v376
  %v764 = vmul.f32 %v381, %v381
  %v765 = vmul.f32 %v384, %v384
  %v766 = vmul.f32 %v389, %v389
  %v767 = vmul.f32 %v392, %v392
  %v768 = vmul.f32 %v397, %v397
  %v769 = vmul.f32 %v400, %v400
  %v770 = vmul.f32 %v405, %v405
  %v771 = vmul.f32 %v408, %v408
  %v772 = vmul.f32 %v413, %v413
  %v773 = vmul.f32 %v416, %v416
  %v774 = vmul.f32 %v421, %v421
  %v775 = vmul.f32 %v424, %v424
  %v776 = vmul.f32 %v429, %v429
  %v777 = vmul.f32 %v432, %v432
  %v778 = vmul.f32 %v437, %v437
  %v779 = vmul.f32 %v440, %v440
  %v780 = vmul.f32 %v445, %v445
  %v781 = vmul.f32 %v448, %v448
  %v782 = vmul.f32 %v453, %v453
  %v783 = vmul.f32 %v456, %v456
  %v784 = vmul.f32 %v461, %v461
  %v785 = vmul.f32 %v464, %v464
  %v786 = vmul.f32 %v469, %v469
  %v787 = vmul.f32 %v472, %v472
  %v788 = vmul.f32 %v477, %v477
  %v789 = vmul.f32 %v480, %v480
  %v790 = vmul.f32 %v485, %v485
  %v791 = vmul.f32 %v488, %v488
  %v792 = vmul.f32 %v493, %v493
  %v793 = vmul.f32 %v496, %v496
  %v794 = vmul.f32 %v501, %v501
  %v795 = vmul.f32 %v504, %v504
  %v796 = vmul.f32 %v509, %v509
  %v797 = vmul.f32 %v512, %v512
  %v798 = vmul.f32 %v517, %v517
  %v799 = vmul.f32 %v520, %v520
  %v800 = vmul.f32 %v525, %v525
  %v801 = vmul.f32 %v528, %v528
  %v802 = vmul.f32 %v533, %v533
  %v803 = vmul.f32 %v536, %v536
  %v804 = vmul.f32 %v541, %v541
  %v805 = vmul.f32 %v544, %v544
  %v806 = vmul.f32 %v549, %v549
  %v807 = vmul.f32 %v552, %v552
  %v808 = vmul.f32 %v557, %v557
  %v809 = vmul.f32 %v560, %v560
  %v810 = vmul.f32 %v565, %v565
  %v811 = vmul.f32 %v568, %v568
  %v812 = vmul.f32 %v573, %v573
  %v813 = vmul.f32 %v576, %v576
  %v814 = vmul.f32 %v581, %v581
  %v815 = vmul.f32 %v584, %v584
  %v816 = vmul.f32 %v589, %v589
  %v817 = vmul.f32 %v592, %v592
  %v818 = vmul.f32 %v597, %v597
  %v819 = vmul.f32 %v600, %v600
  %v820 = vmul.f32 %v605, %v605
  %v821 = vmul.f32 %v608, %v608
  %v822 = vmul.f32 %v613, %v613
  %v823 = vmul.f32 %v616, %v616
  %v824 = vmul.f32 %v621, %v621
  %v825 = vmul.f32 %v624, %v624
  %v826 = vsel %vm627, %v762, 0.0
  %v827 = vsel %vm627, %v763, 0.0
  %v828 = vadd.f32 %v826, %v827
  %v829 = vsel %vm627, %v764, 0.0
  %v830 = vadd.f32 %v828, %v829
  %v831 = vsel %vm627, %v765, 0.0
  %v832 = vadd.f32 %v830, %v831
  %v833 = vsel %vm627, %v766, 0.0
  %v834 = vadd.f32 %v832, %v833
  %v835 = vsel %vm627, %v767, 0.0
  %v836 = vadd.f32 %v834, %v835
  %v837 = vsel %vm627, %v768, 0.0
  %v838 = vadd.f32 %v836, %v837
  %v839 = vsel %vm627, %v769, 0.0
  %v840 = vadd.f32 %v838, %v839
  %v841 = vsel %vm627, %v770, 0.0
  %v842 = vadd.f32 %v840, %v841
  %v843 = vsel %vm627, %v771, 0.0
  %v844 = vadd.f32 %v842, %v843
  %v845 = vsel %vm627, %v772, 0.0
  %v846 = vadd.f32 %v844, %v845
  %v847 = vsel %vm627, %v773, 0.0
  %v848 = vadd.f32 %v846, %v847
  %v849 = vsel %vm627, %v774, 0.0
  %v850 = vadd.f32 %v848, %v849
  %v851 = vsel %vm627, %v775, 0.0
  %v852 = vadd.f32 %v850, %v851
  %v853 = vsel %vm627, %v776, 0.0
  %v854 = vadd.f32 %v852, %v853
  %v855 = vsel %vm627, %v777, 0.0
  %v856 = vadd.f32 %v854, %v855
  %v857 = vsel %vm627, %v778, 0.0
  %v858 = vadd.f32 %v856, %v857
  %v859 = vsel %vm627, %v779, 0.0
  %v860 = vadd.f32 %v858, %v859
  %v861 = vsel %vm627, %v780, 0.0
  %v862 = vadd.f32 %v860, %v861
  %v863 = vsel %vm627, %v781, 0.0
  %v864 = vadd.f32 %v862, %v863
  %v865 = vsel %vm627, %v782, 0.0
  %v866 = vadd.f32 %v864, %v865
  %v867 = vsel %vm627, %v783, 0.0
  %v868 = vadd.f32 %v866, %v867
  %v869 = vsel %vm627, %v784, 0.0
  %v870 = vadd.f32 %v868, %v869
  %v871 = vsel %vm627, %v785, 0.0
  %v872 = vadd.f32 %v870, %v871
  %v873 = vsel %vm627, %v786, 0.0
  %v874 = vadd.f32 %v872, %v873
  %v875 = vsel %vm627, %v787, 0.0
  %v876 = vadd.f32 %v874, %v875
  %v877 = vsel %vm627, %v788, 0.0
  %v878 = vadd.f32 %v876, %v877
  %v879 = vsel %vm627, %v789, 0.0
  %v880 = vadd.f32 %v878, %v879
  %v881 = vsel %vm627, %v790, 0.0
  %v882 = vadd.f32 %v880, %v881
  %v883 = vsel %vm627, %v791, 0.0
  %v884 = vadd.f32 %v882, %v883
  %v885 = vsel %vm627, %v792, 0.0
  %v886 = vadd.f32 %v884, %v885
  %v887 = vsel %vm627, %v793, 0.0
  %v888 = vadd.f32 %v886, %v887
  %v889 = vsel %vm627, %v794, 0.0
  %v890 = vadd.f32 %v888, %v889
  %v891 = vsel %vm627, %v795, 0.0
  %v892 = vadd.f32 %v890, %v891
  %v893 = vsel %vm627, %v796, 0.0
  %v894 = vadd.f32 %v892, %v893
  %v895 = vsel %vm627, %v797, 0.0
  %v896 = vadd.f32 %v894, %v895
  %v897 = vsel %vm627, %v798, 0.0
  %v898 = vadd.f32 %v896, %v897
  %v899 = vsel %vm627, %v799, 0.0
  %v900 = vadd.f32 %v898, %v899
  %v901 = vsel %vm627, %v800, 0.0
  %v902 = vadd.f32 %v900, %v901
  %v903 = vsel %vm627, %v801, 0.0
  %v904 = vadd.f32 %v902, %v903
  %v905 = vsel %vm627, %v802, 0.0
  %v906 = vadd.f32 %v904, %v905
  %v907 = vsel %vm627, %v803, 0.0
  %v908 = vadd.f32 %v906, %v907
  %v909 = vsel %vm627, %v804, 0.0
  %v910 = vadd.f32 %v908, %v909
  %v911 = vsel %vm627, %v805, 0.0
  %v912 = vadd.f32 %v910, %v911
  %v913 = vsel %vm627, %v806, 0.0
  %v914 = vadd.f32 %v912, %v913
  %v915 = vsel %vm627, %v807, 0.0
  %v916 = vadd.f32 %v914, %v915
  %v917 = vsel %vm627, %v808, 0.0
  %v918 = vadd.f32 %v916, %v917
  %v919 = vsel %vm627, %v809, 0.0
  %v920 = vadd.f32 %v918, %v919
  %v921 = vsel %vm627, %v810, 0.0
  %v922 = vadd.f32 %v920, %v921
  %v923 = vsel %vm627, %v811, 0.0
  %v924 = vadd.f32 %v922, %v923
  %v925 = vsel %vm627, %v812, 0.0
  %v926 = vadd.f32 %v924, %v925
  %v927 = vsel %vm627, %v813, 0.0
  %v928 = vadd.f32 %v926, %v927
  %v929 = vsel %vm627, %v814, 0.0
  %v930 = vadd.f32 %v928, %v929
  %v931 = vsel %vm627, %v815, 0.0
  %v932 = vadd.f32 %v930, %v931
  %v933 = vsel %vm627, %v816, 0.0
  %v934 = vadd.f32 %v932, %v933
  %v935 = vsel %vm627, %v817, 0.0
  %v936 = vadd.f32 %v934, %v935
  %v937 = vsel %vm627, %v818, 0.0
  %v938 = vadd.f32 %v936, %v937
  %v939 = vsel %vm627, %v819, 0.0
  %v940 = vadd.f32 %v938, %v939
  %v941 = vsel %vm627, %v820, 0.0
  %v942 = vadd.f32 %v940, %v941
  %v943 = vsel %vm627, %v821, 0.0
  %v944 = vadd.f32 %v942, %v943
  %v945 = vsel %vm627, %v822, 0.0
  %v946 = vadd.f32 %v944, %v945
  %v947 = vsel %vm627, %v823, 0.0
  %v948 = vadd.f32 %v946, %v947
  %v949 = vsel %vm627, %v824, 0.0
  %v950 = vadd.f32 %v948, %v949
  %v951 = vsel %vm627, %v825, 0.0
  %v952 = vadd.f32 %v950, %v951
  %v953 = vrot.slane %v952, 4
  %v954 = vadd.f32 %v952, %v953
  %v955 = vrot.slane %v954, 2
  %v956 = vadd.f32 %v954, %v955
  %v957 = vrot.slane %v956, 1
  %v958 = vadd.f32 %v956, %v957
  %v959 = vmul.f32 %v958, 0.001953125
  %v960 = vmul.f32 %v761, %v761
  %v961 = vsub.f32 %v959, %v960
  %v962 = vmax.f32 %v961, 0.0
  %v963 = vadd.f32 %v962, 1e-05
  %v964 = vrsqrt.pop %v963
  %v965 = vld [vmem:[%s2] sm:$0x1]
  %v966 = vmul.f32 %v965, %v964
  %v967 = vld [vmem:[%s3] sm:$0x1]
  %v968 = vmul.f32 %v761, %v966
  %v969 = vsub.f32 %v967, %v968
  %v971 = vlaneseq
  %v972 = vshrl.u32 %v971, 7
  %v973 = vsub.s32 0, %v972
  %v974 = vrot.slane %v966, %v973
  %v976 = vmul.f32 %v373, %v974
  %v977 = vmul.f32 %v376, %v974
  %v978 = vmul.f32 %v381, %v974
  %v979 = vmul.f32 %v384, %v974
  %v980 = vmul.f32 %v389, %v974
  %v981 = vmul.f32 %v392, %v974
  %v982 = vmul.f32 %v397, %v974
  %v983 = vmul.f32 %v400, %v974
  %v984 = vmul.f32 %v405, %v974
  %v985 = vmul.f32 %v408, %v974
  %v986 = vmul.f32 %v413, %v974
  %v987 = vmul.f32 %v416, %v974
  %v988 = vmul.f32 %v421, %v974
  %v989 = vmul.f32 %v424, %v974
  %v990 = vmul.f32 %v429, %v974
  %v991 = vmul.f32 %v432, %v974
  %v992 = vmul.f32 %v437, %v974
  %v993 = vmul.f32 %v440, %v974
  %v994 = vmul.f32 %v445, %v974
  %v995 = vmul.f32 %v448, %v974
  %v996 = vmul.f32 %v453, %v974
  %v997 = vmul.f32 %v456, %v974
  %v998 = vmul.f32 %v461, %v974
  %v999 = vmul.f32 %v464, %v974
  %v1000 = vmul.f32 %v469, %v974
  %v1001 = vmul.f32 %v472, %v974
  %v1002 = vmul.f32 %v477, %v974
  %v1003 = vmul.f32 %v480, %v974
  %v1004 = vmul.f32 %v485, %v974
  %v1005 = vmul.f32 %v488, %v974
  %v1006 = vmul.f32 %v493, %v974
  %v1007 = vmul.f32 %v496, %v974
  %v1008 = vmul.f32 %v501, %v974
  %v1009 = vmul.f32 %v504, %v974
  %v1010 = vmul.f32 %v509, %v974
  %v1011 = vmul.f32 %v512, %v974
  %v1012 = vmul.f32 %v517, %v974
  %v1013 = vmul.f32 %v520, %v974
  %v1014 = vmul.f32 %v525, %v974
  %v1015 = vmul.f32 %v528, %v974
  %v1016 = vmul.f32 %v533, %v974
  %v1017 = vmul.f32 %v536, %v974
  %v1018 = vmul.f32 %v541, %v974
  %v1019 = vmul.f32 %v544, %v974
  %v1020 = vmul.f32 %v549, %v974
  %v1021 = vmul.f32 %v552, %v974
  %v1022 = vmul.f32 %v557, %v974
  %v1023 = vmul.f32 %v560, %v974
  %v1024 = vmul.f32 %v565, %v974
  %v1025 = vmul.f32 %v568, %v974
  %v1026 = vmul.f32 %v573, %v974
  %v1027 = vmul.f32 %v576, %v974
  %v1028 = vmul.f32 %v581, %v974
  %v1029 = vmul.f32 %v584, %v974
  %v1030 = vmul.f32 %v589, %v974
  %v1031 = vmul.f32 %v592, %v974
  %v1032 = vmul.f32 %v597, %v974
  %v1033 = vmul.f32 %v600, %v974
  %v1034 = vmul.f32 %v605, %v974
  %v1035 = vmul.f32 %v608, %v974
  %v1036 = vmul.f32 %v613, %v974
  %v1037 = vmul.f32 %v616, %v974
  %v1038 = vmul.f32 %v621, %v974
  %v1039 = vmul.f32 %v624, %v974
  %v1041 = vlaneseq
  %v1042 = vshrl.u32 %v1041, 7
  %v1043 = vsub.s32 0, %v1042
  %v1044 = vrot.slane %v969, %v1043
  %v1046 = vadd.f32 %v976, %v1044
  %v1047 = vadd.f32 %v977, %v1044
  %v1048 = vadd.f32 %v978, %v1044
  %v1049 = vadd.f32 %v979, %v1044
  %v1050 = vadd.f32 %v980, %v1044
  %v1051 = vadd.f32 %v981, %v1044
  %v1052 = vadd.f32 %v982, %v1044
  %v1053 = vadd.f32 %v983, %v1044
  %v1054 = vadd.f32 %v984, %v1044
  %v1055 = vadd.f32 %v985, %v1044
  %v1056 = vadd.f32 %v986, %v1044
  %v1057 = vadd.f32 %v987, %v1044
  %v1058 = vadd.f32 %v988, %v1044
  %v1059 = vadd.f32 %v989, %v1044
  %v1060 = vadd.f32 %v990, %v1044
  %v1061 = vadd.f32 %v991, %v1044
  %v1062 = vadd.f32 %v992, %v1044
  %v1063 = vadd.f32 %v993, %v1044
  %v1064 = vadd.f32 %v994, %v1044
  %v1065 = vadd.f32 %v995, %v1044
  %v1066 = vadd.f32 %v996, %v1044
  %v1067 = vadd.f32 %v997, %v1044
  %v1068 = vadd.f32 %v998, %v1044
  %v1069 = vadd.f32 %v999, %v1044
  %v1070 = vadd.f32 %v1000, %v1044
  %v1071 = vadd.f32 %v1001, %v1044
  %v1072 = vadd.f32 %v1002, %v1044
  %v1073 = vadd.f32 %v1003, %v1044
  %v1074 = vadd.f32 %v1004, %v1044
  %v1075 = vadd.f32 %v1005, %v1044
  %v1076 = vadd.f32 %v1006, %v1044
  %v1077 = vadd.f32 %v1007, %v1044
  %v1078 = vadd.f32 %v1008, %v1044
  %v1079 = vadd.f32 %v1009, %v1044
  %v1080 = vadd.f32 %v1010, %v1044
  %v1081 = vadd.f32 %v1011, %v1044
  %v1082 = vadd.f32 %v1012, %v1044
  %v1083 = vadd.f32 %v1013, %v1044
  %v1084 = vadd.f32 %v1014, %v1044
  %v1085 = vadd.f32 %v1015, %v1044
  %v1086 = vadd.f32 %v1016, %v1044
  %v1087 = vadd.f32 %v1017, %v1044
  %v1088 = vadd.f32 %v1018, %v1044
  %v1089 = vadd.f32 %v1019, %v1044
  %v1090 = vadd.f32 %v1020, %v1044
  %v1091 = vadd.f32 %v1021, %v1044
  %v1092 = vadd.f32 %v1022, %v1044
  %v1093 = vadd.f32 %v1023, %v1044
  %v1094 = vadd.f32 %v1024, %v1044
  %v1095 = vadd.f32 %v1025, %v1044
  %v1096 = vadd.f32 %v1026, %v1044
  %v1097 = vadd.f32 %v1027, %v1044
  %v1098 = vadd.f32 %v1028, %v1044
  %v1099 = vadd.f32 %v1029, %v1044
  %v1100 = vadd.f32 %v1030, %v1044
  %v1101 = vadd.f32 %v1031, %v1044
  %v1102 = vadd.f32 %v1032, %v1044
  %v1103 = vadd.f32 %v1033, %v1044
  %v1104 = vadd.f32 %v1034, %v1044
  %v1105 = vadd.f32 %v1035, %v1044
  %v1106 = vadd.f32 %v1036, %v1044
  %v1107 = vadd.f32 %v1037, %v1044
  %v1108 = vadd.f32 %v1038, %v1044
  %v1109 = vadd.f32 %v1039, %v1044
  %vm1110 = vcmp.ge.f32.partialorder %v1046, 0.0
  %vm1111 = vcmp.ge.f32.partialorder %v1047, 0.0
  %vm1112 = vcmp.ge.f32.partialorder %v1048, 0.0
  %vm1113 = vcmp.ge.f32.partialorder %v1049, 0.0
  %vm1114 = vcmp.ge.f32.partialorder %v1050, 0.0
  %vm1115 = vcmp.ge.f32.partialorder %v1051, 0.0
  %vm1116 = vcmp.ge.f32.partialorder %v1052, 0.0
  %vm1117 = vcmp.ge.f32.partialorder %v1053, 0.0
  %vm1118 = vcmp.ge.f32.partialorder %v1054, 0.0
  %vm1119 = vcmp.ge.f32.partialorder %v1055, 0.0
  %vm1120 = vcmp.ge.f32.partialorder %v1056, 0.0
  %vm1121 = vcmp.ge.f32.partialorder %v1057, 0.0
  %vm1122 = vcmp.ge.f32.partialorder %v1058, 0.0
  %vm1123 = vcmp.ge.f32.partialorder %v1059, 0.0
  %vm1124 = vcmp.ge.f32.partialorder %v1060, 0.0
  %vm1125 = vcmp.ge.f32.partialorder %v1061, 0.0
  %vm1126 = vcmp.ge.f32.partialorder %v1062, 0.0
  %vm1127 = vcmp.ge.f32.partialorder %v1063, 0.0
  %vm1128 = vcmp.ge.f32.partialorder %v1064, 0.0
  %vm1129 = vcmp.ge.f32.partialorder %v1065, 0.0
  %vm1130 = vcmp.ge.f32.partialorder %v1066, 0.0
  %vm1131 = vcmp.ge.f32.partialorder %v1067, 0.0
  %vm1132 = vcmp.ge.f32.partialorder %v1068, 0.0
  %vm1133 = vcmp.ge.f32.partialorder %v1069, 0.0
  %vm1134 = vcmp.ge.f32.partialorder %v1070, 0.0
  %vm1135 = vcmp.ge.f32.partialorder %v1071, 0.0
  %vm1136 = vcmp.ge.f32.partialorder %v1072, 0.0
  %vm1137 = vcmp.ge.f32.partialorder %v1073, 0.0
  %vm1138 = vcmp.ge.f32.partialorder %v1074, 0.0
  %vm1139 = vcmp.ge.f32.partialorder %v1075, 0.0
  %vm1140 = vcmp.ge.f32.partialorder %v1076, 0.0
  %vm1141 = vcmp.ge.f32.partialorder %v1077, 0.0
  %vm1142 = vcmp.ge.f32.partialorder %v1078, 0.0
  %vm1143 = vcmp.ge.f32.partialorder %v1079, 0.0
  %vm1144 = vcmp.ge.f32.partialorder %v1080, 0.0
  %vm1145 = vcmp.ge.f32.partialorder %v1081, 0.0
  %vm1146 = vcmp.ge.f32.partialorder %v1082, 0.0
  %vm1147 = vcmp.ge.f32.partialorder %v1083, 0.0
  %vm1148 = vcmp.ge.f32.partialorder %v1084, 0.0
  %vm1149 = vcmp.ge.f32.partialorder %v1085, 0.0
  %vm1150 = vcmp.ge.f32.partialorder %v1086, 0.0
  %vm1151 = vcmp.ge.f32.partialorder %v1087, 0.0
  %vm1152 = vcmp.ge.f32.partialorder %v1088, 0.0
  %vm1153 = vcmp.ge.f32.partialorder %v1089, 0.0
  %vm1154 = vcmp.ge.f32.partialorder %v1090, 0.0
  %vm1155 = vcmp.ge.f32.partialorder %v1091, 0.0
  %vm1156 = vcmp.ge.f32.partialorder %v1092, 0.0
  %vm1157 = vcmp.ge.f32.partialorder %v1093, 0.0
  %vm1158 = vcmp.ge.f32.partialorder %v1094, 0.0
  %vm1159 = vcmp.ge.f32.partialorder %v1095, 0.0
  %vm1160 = vcmp.ge.f32.partialorder %v1096, 0.0
  %vm1161 = vcmp.ge.f32.partialorder %v1097, 0.0
  %vm1162 = vcmp.ge.f32.partialorder %v1098, 0.0
  %vm1163 = vcmp.ge.f32.partialorder %v1099, 0.0
  %vm1164 = vcmp.ge.f32.partialorder %v1100, 0.0
  %vm1165 = vcmp.ge.f32.partialorder %v1101, 0.0
  %vm1166 = vcmp.ge.f32.partialorder %v1102, 0.0
  %vm1167 = vcmp.ge.f32.partialorder %v1103, 0.0
  %vm1168 = vcmp.ge.f32.partialorder %v1104, 0.0
  %vm1169 = vcmp.ge.f32.partialorder %v1105, 0.0
  %vm1170 = vcmp.ge.f32.partialorder %v1106, 0.0
  %vm1171 = vcmp.ge.f32.partialorder %v1107, 0.0
  %vm1172 = vcmp.ge.f32.partialorder %v1108, 0.0
  %vm1173 = vcmp.ge.f32.partialorder %v1109, 0.0
  %v1174 = vmul.f32 %v1046, 0.2
  %v1175 = vmul.f32 %v1047, 0.2
  %v1176 = vmul.f32 %v1048, 0.2
  %v1177 = vmul.f32 %v1049, 0.2
  %v1178 = vmul.f32 %v1050, 0.2
  %v1179 = vmul.f32 %v1051, 0.2
  %v1180 = vmul.f32 %v1052, 0.2
  %v1181 = vmul.f32 %v1053, 0.2
  %v1182 = vmul.f32 %v1054, 0.2
  %v1183 = vmul.f32 %v1055, 0.2
  %v1184 = vmul.f32 %v1056, 0.2
  %v1185 = vmul.f32 %v1057, 0.2
  %v1186 = vmul.f32 %v1058, 0.2
  %v1187 = vmul.f32 %v1059, 0.2
  %v1188 = vmul.f32 %v1060, 0.2
  %v1189 = vmul.f32 %v1061, 0.2
  %v1190 = vmul.f32 %v1062, 0.2
  %v1191 = vmul.f32 %v1063, 0.2
  %v1192 = vmul.f32 %v1064, 0.2
  %v1193 = vmul.f32 %v1065, 0.2
  %v1194 = vmul.f32 %v1066, 0.2
  %v1195 = vmul.f32 %v1067, 0.2
  %v1196 = vmul.f32 %v1068, 0.2
  %v1197 = vmul.f32 %v1069, 0.2
  %v1198 = vmul.f32 %v1070, 0.2
  %v1199 = vmul.f32 %v1071, 0.2
  %v1200 = vmul.f32 %v1072, 0.2
  %v1201 = vmul.f32 %v1073, 0.2
  %v1202 = vmul.f32 %v1074, 0.2
  %v1203 = vmul.f32 %v1075, 0.2
  %v1204 = vmul.f32 %v1076, 0.2
  %v1205 = vmul.f32 %v1077, 0.2
  %v1206 = vmul.f32 %v1078, 0.2
  %v1207 = vmul.f32 %v1079, 0.2
  %v1208 = vmul.f32 %v1080, 0.2
  %v1209 = vmul.f32 %v1081, 0.2
  %v1210 = vmul.f32 %v1082, 0.2
  %v1211 = vmul.f32 %v1083, 0.2
  %v1212 = vmul.f32 %v1084, 0.2
  %v1213 = vmul.f32 %v1085, 0.2
  %v1214 = vmul.f32 %v1086, 0.2
  %v1215 = vmul.f32 %v1087, 0.2
  %v1216 = vmul.f32 %v1088, 0.2
  %v1217 = vmul.f32 %v1089, 0.2
  %v1218 = vmul.f32 %v1090, 0.2
  %v1219 = vmul.f32 %v1091, 0.2
  %v1220 = vmul.f32 %v1092, 0.2
  %v1221 = vmul.f32 %v1093, 0.2
  %v1222 = vmul.f32 %v1094, 0.2
  %v1223 = vmul.f32 %v1095, 0.2
  %v1224 = vmul.f32 %v1096, 0.2
  %v1225 = vmul.f32 %v1097, 0.2
  %v1226 = vmul.f32 %v1098, 0.2
  %v1227 = vmul.f32 %v1099, 0.2
  %v1228 = vmul.f32 %v1100, 0.2
  %v1229 = vmul.f32 %v1101, 0.2
  %v1230 = vmul.f32 %v1102, 0.2
  %v1231 = vmul.f32 %v1103, 0.2
  %v1232 = vmul.f32 %v1104, 0.2
  %v1233 = vmul.f32 %v1105, 0.2
  %v1234 = vmul.f32 %v1106, 0.2
  %v1235 = vmul.f32 %v1107, 0.2
  %v1236 = vmul.f32 %v1108, 0.2
  %v1237 = vmul.f32 %v1109, 0.2
  %v1238 = vsel %vm1110, %v1046, %v1174
  %v1239 = vsel %vm1111, %v1047, %v1175
  %v1240 = vsel %vm1112, %v1048, %v1176
  %v1241 = vsel %vm1113, %v1049, %v1177
  %v1242 = vsel %vm1114, %v1050, %v1178
  %v1243 = vsel %vm1115, %v1051, %v1179
  %v1244 = vsel %vm1116, %v1052, %v1180
  %v1245 = vsel %vm1117, %v1053, %v1181
  %v1246 = vsel %vm1118, %v1054, %v1182
  %v1247 = vsel %vm1119, %v1055, %v1183
  %v1248 = vsel %vm1120, %v1056, %v1184
  %v1249 = vsel %vm1121, %v1057, %v1185
  %v1250 = vsel %vm1122, %v1058, %v1186
  %v1251 = vsel %vm1123, %v1059, %v1187
  %v1252 = vsel %vm1124, %v1060, %v1188
  %v1253 = vsel %vm1125, %v1061, %v1189
  %v1254 = vsel %vm1126, %v1062, %v1190
  %v1255 = vsel %vm1127, %v1063, %v1191
  %v1256 = vsel %vm1128, %v1064, %v1192
  %v1257 = vsel %vm1129, %v1065, %v1193
  %v1258 = vsel %vm1130, %v1066, %v1194
  %v1259 = vsel %vm1131, %v1067, %v1195
  %v1260 = vsel %vm1132, %v1068, %v1196
  %v1261 = vsel %vm1133, %v1069, %v1197
  %v1262 = vsel %vm1134, %v1070, %v1198
  %v1263 = vsel %vm1135, %v1071, %v1199
  %v1264 = vsel %vm1136, %v1072, %v1200
  %v1265 = vsel %vm1137, %v1073, %v1201
  %v1266 = vsel %vm1138, %v1074, %v1202
  %v1267 = vsel %vm1139, %v1075, %v1203
  %v1268 = vsel %vm1140, %v1076, %v1204
  %v1269 = vsel %vm1141, %v1077, %v1205
  %v1270 = vsel %vm1142, %v1078, %v1206
  %v1271 = vsel %vm1143, %v1079, %v1207
  %v1272 = vsel %vm1144, %v1080, %v1208
  %v1273 = vsel %vm1145, %v1081, %v1209
  %v1274 = vsel %vm1146, %v1082, %v1210
  %v1275 = vsel %vm1147, %v1083, %v1211
  %v1276 = vsel %vm1148, %v1084, %v1212
  %v1277 = vsel %vm1149, %v1085, %v1213
  %v1278 = vsel %vm1150, %v1086, %v1214
  %v1279 = vsel %vm1151, %v1087, %v1215
  %v1280 = vsel %vm1152, %v1088, %v1216
  %v1281 = vsel %vm1153, %v1089, %v1217
  %v1282 = vsel %vm1154, %v1090, %v1218
  %v1283 = vsel %vm1155, %v1091, %v1219
  %v1284 = vsel %vm1156, %v1092, %v1220
  %v1285 = vsel %vm1157, %v1093, %v1221
  %v1286 = vsel %vm1158, %v1094, %v1222
  %v1287 = vsel %vm1159, %v1095, %v1223
  %v1288 = vsel %vm1160, %v1096, %v1224
  %v1289 = vsel %vm1161, %v1097, %v1225
  %v1290 = vsel %vm1162, %v1098, %v1226
  %v1291 = vsel %vm1163, %v1099, %v1227
  %v1292 = vsel %vm1164, %v1100, %v1228
  %v1293 = vsel %vm1165, %v1101, %v1229
  %v1294 = vsel %vm1166, %v1102, %v1230
  %v1295 = vsel %vm1167, %v1103, %v1231
  %v1296 = vsel %vm1168, %v1104, %v1232
  %v1297 = vsel %vm1169, %v1105, %v1233
  %v1298 = vsel %vm1170, %v1106, %v1234
  %v1299 = vsel %vm1171, %v1107, %v1235
  %v1300 = vsel %vm1172, %v1108, %v1236
  %v1301 = vsel %vm1173, %v1109, %v1237
  %v1302 = vpack.c.bf16 %v1239, %v1238
  %v1303 = vpack.c.bf16 %v1241, %v1240
  %v1304 = vpack.c.bf16 %v1243, %v1242
  %v1305 = vpack.c.bf16 %v1245, %v1244
  %v1306 = vpack.c.bf16 %v1247, %v1246
  %v1307 = vpack.c.bf16 %v1249, %v1248
  %v1308 = vpack.c.bf16 %v1251, %v1250
  %v1309 = vpack.c.bf16 %v1253, %v1252
  %v1310 = vpack.c.bf16 %v1255, %v1254
  %v1311 = vpack.c.bf16 %v1257, %v1256
  %v1312 = vpack.c.bf16 %v1259, %v1258
  %v1313 = vpack.c.bf16 %v1261, %v1260
  %v1314 = vpack.c.bf16 %v1263, %v1262
  %v1315 = vpack.c.bf16 %v1265, %v1264
  %v1316 = vpack.c.bf16 %v1267, %v1266
  %v1317 = vpack.c.bf16 %v1269, %v1268
  %v1318 = vpack.c.bf16 %v1271, %v1270
  %v1319 = vpack.c.bf16 %v1273, %v1272
  %v1320 = vpack.c.bf16 %v1275, %v1274
  %v1321 = vpack.c.bf16 %v1277, %v1276
  %v1322 = vpack.c.bf16 %v1279, %v1278
  %v1323 = vpack.c.bf16 %v1281, %v1280
  %v1324 = vpack.c.bf16 %v1283, %v1282
  %v1325 = vpack.c.bf16 %v1285, %v1284
  %v1326 = vpack.c.bf16 %v1287, %v1286
  %v1327 = vpack.c.bf16 %v1289, %v1288
  %v1328 = vpack.c.bf16 %v1291, %v1290
  %v1329 = vpack.c.bf16 %v1293, %v1292
  %v1330 = vpack.c.bf16 %v1295, %v1294
  %v1331 = vpack.c.bf16 %v1297, %v1296
  %v1332 = vpack.c.bf16 %v1299, %v1298
  %v1333 = vpack.c.bf16 %v1301, %v1300
  %v1366 = vunpack.c.l.b16 %v1302
  %v1367 = vunpack.c.h.b16 %v1302
  %v1368 = vunpack.c.l.b16 %v1303
  %v1369 = vunpack.c.h.b16 %v1303
  %v1370 = vunpack.c.l.b16 %v1304
  %v1371 = vunpack.c.h.b16 %v1304
  %v1372 = vunpack.c.l.b16 %v1305
  %v1373 = vunpack.c.h.b16 %v1305
  %v1374 = vunpack.c.l.b16 %v1306
  %v1375 = vunpack.c.h.b16 %v1306
  %v1376 = vunpack.c.l.b16 %v1307
  %v1377 = vunpack.c.h.b16 %v1307
  %v1378 = vunpack.c.l.b16 %v1308
  %v1379 = vunpack.c.h.b16 %v1308
  %v1380 = vunpack.c.l.b16 %v1309
  %v1381 = vunpack.c.h.b16 %v1309
  %v1382 = vunpack.c.l.b16 %v1310
  %v1383 = vunpack.c.h.b16 %v1310
  %v1384 = vunpack.c.l.b16 %v1311
  %v1385 = vunpack.c.h.b16 %v1311
  %v1386 = vunpack.c.l.b16 %v1312
  %v1387 = vunpack.c.h.b16 %v1312
  %v1388 = vunpack.c.l.b16 %v1313
  %v1389 = vunpack.c.h.b16 %v1313
  %v1390 = vunpack.c.l.b16 %v1314
  %v1391 = vunpack.c.h.b16 %v1314
  %v1392 = vunpack.c.l.b16 %v1315
  %v1393 = vunpack.c.h.b16 %v1315
  %v1394 = vunpack.c.l.b16 %v1316
  %v1395 = vunpack.c.h.b16 %v1316
  %v1396 = vunpack.c.l.b16 %v1317
  %v1397 = vunpack.c.h.b16 %v1317
  %v1398 = vunpack.c.l.b16 %v1318
  %v1399 = vunpack.c.h.b16 %v1318
  %v1400 = vunpack.c.l.b16 %v1319
  %v1401 = vunpack.c.h.b16 %v1319
  %v1402 = vunpack.c.l.b16 %v1320
  %v1403 = vunpack.c.h.b16 %v1320
  %v1404 = vunpack.c.l.b16 %v1321
  %v1405 = vunpack.c.h.b16 %v1321
  %v1406 = vunpack.c.l.b16 %v1322
  %v1407 = vunpack.c.h.b16 %v1322
  %v1408 = vunpack.c.l.b16 %v1323
  %v1409 = vunpack.c.h.b16 %v1323
  %v1410 = vunpack.c.l.b16 %v1324
  %v1411 = vunpack.c.h.b16 %v1324
  %v1412 = vunpack.c.l.b16 %v1325
  %v1413 = vunpack.c.h.b16 %v1325
  %v1414 = vunpack.c.l.b16 %v1326
  %v1415 = vunpack.c.h.b16 %v1326
  %v1416 = vunpack.c.l.b16 %v1327
  %v1417 = vunpack.c.h.b16 %v1327
  %v1418 = vunpack.c.l.b16 %v1328
  %v1419 = vunpack.c.h.b16 %v1328
  %v1420 = vunpack.c.l.b16 %v1329
  %v1421 = vunpack.c.h.b16 %v1329
  %v1422 = vunpack.c.l.b16 %v1330
  %v1423 = vunpack.c.h.b16 %v1330
  %v1424 = vunpack.c.l.b16 %v1331
  %v1425 = vunpack.c.h.b16 %v1331
  %v1426 = vunpack.c.l.b16 %v1332
  %v1427 = vunpack.c.h.b16 %v1332
  %v1428 = vunpack.c.l.b16 %v1333
  %v1429 = vunpack.c.h.b16 %v1333
  %v1430 = vpack.c.b16 %v1366, %v1366
  %v1431 = vpack.c.b16 %v1367, %v1367
  %v1432 = vpack.c.b16 %v1368, %v1368
  %v1433 = vpack.c.b16 %v1369, %v1369
  %v1434 = vpack.c.b16 %v1370, %v1370
  %v1435 = vpack.c.b16 %v1371, %v1371
  %v1436 = vpack.c.b16 %v1372, %v1372
  %v1437 = vpack.c.b16 %v1373, %v1373
  %v1438 = vpack.c.b16 %v1374, %v1374
  %v1439 = vpack.c.b16 %v1375, %v1375
  %v1440 = vpack.c.b16 %v1376, %v1376
  %v1441 = vpack.c.b16 %v1377, %v1377
  %v1442 = vpack.c.b16 %v1378, %v1378
  %v1443 = vpack.c.b16 %v1379, %v1379
  %v1444 = vpack.c.b16 %v1380, %v1380
  %v1445 = vpack.c.b16 %v1381, %v1381
  %v1446 = vpack.c.b16 %v1382, %v1382
  %v1447 = vpack.c.b16 %v1383, %v1383
  %v1448 = vpack.c.b16 %v1384, %v1384
  %v1449 = vpack.c.b16 %v1385, %v1385
  %v1450 = vpack.c.b16 %v1386, %v1386
  %v1451 = vpack.c.b16 %v1387, %v1387
  %v1452 = vpack.c.b16 %v1388, %v1388
  %v1453 = vpack.c.b16 %v1389, %v1389
  %v1454 = vpack.c.b16 %v1390, %v1390
  %v1455 = vpack.c.b16 %v1391, %v1391
  %v1456 = vpack.c.b16 %v1392, %v1392
  %v1457 = vpack.c.b16 %v1393, %v1393
  %v1458 = vpack.c.b16 %v1394, %v1394
  %v1459 = vpack.c.b16 %v1395, %v1395
  %v1460 = vpack.c.b16 %v1396, %v1396
  %v1461 = vpack.c.b16 %v1397, %v1397
  %v1462 = vpack.c.b16 %v1398, %v1398
  %v1463 = vpack.c.b16 %v1399, %v1399
  %v1464 = vpack.c.b16 %v1400, %v1400
  %v1465 = vpack.c.b16 %v1401, %v1401
  %v1466 = vpack.c.b16 %v1402, %v1402
  %v1467 = vpack.c.b16 %v1403, %v1403
  %v1468 = vpack.c.b16 %v1404, %v1404
  %v1469 = vpack.c.b16 %v1405, %v1405
  %v1470 = vpack.c.b16 %v1406, %v1406
  %v1471 = vpack.c.b16 %v1407, %v1407
  %v1472 = vpack.c.b16 %v1408, %v1408
  %v1473 = vpack.c.b16 %v1409, %v1409
  %v1474 = vpack.c.b16 %v1410, %v1410
  %v1475 = vpack.c.b16 %v1411, %v1411
  %v1476 = vpack.c.b16 %v1412, %v1412
  %v1477 = vpack.c.b16 %v1413, %v1413
  %v1478 = vpack.c.b16 %v1414, %v1414
  %v1479 = vpack.c.b16 %v1415, %v1415
  %v1480 = vpack.c.b16 %v1416, %v1416
  %v1481 = vpack.c.b16 %v1417, %v1417
  %v1482 = vpack.c.b16 %v1418, %v1418
  %v1483 = vpack.c.b16 %v1419, %v1419
  %v1484 = vpack.c.b16 %v1420, %v1420
  %v1485 = vpack.c.b16 %v1421, %v1421
  %v1486 = vpack.c.b16 %v1422, %v1422
  %v1487 = vpack.c.b16 %v1423, %v1423
  %v1488 = vpack.c.b16 %v1424, %v1424
  %v1489 = vpack.c.b16 %v1425, %v1425
  %v1490 = vpack.c.b16 %v1426, %v1426
  %v1491 = vpack.c.b16 %v1427, %v1427
  %v1492 = vpack.c.b16 %v1428, %v1428
  %v1493 = vpack.c.b16 %v1429, %v1429
  %vm1558 = vcmask 125952
  %1559 = vst.msk [vmem:[%s4] sm:$0xf] %vm1558, %v1430
  %1560 = vst.msk [vmem:[%s4 + $0x4] sm:$0xf] %vm1558, %v1431
  %1561 = vst.msk [vmem:[%s4 + $0x8] sm:$0xf] %vm1558, %v1432
  %1562 = vst.msk [vmem:[%s4 + $0xc] sm:$0xf] %vm1558, %v1433
  %1563 = vst.msk [vmem:[%s4 + $0x10] sm:$0xf] %vm1558, %v1434
  %1564 = vst.msk [vmem:[%s4 + $0x14] sm:$0xf] %vm1558, %v1435
  %1565 = vst.msk [vmem:[%s4 + $0x18] sm:$0xf] %vm1558, %v1436
  %1566 = vst.msk [vmem:[%s4 + $0x1c] sm:$0xf] %vm1558, %v1437
  %1567 = vst.msk [vmem:[%s4 + $0x20] sm:$0xf] %vm1558, %v1438
  %1568 = vst.msk [vmem:[%s4 + $0x24] sm:$0xf] %vm1558, %v1439
  %1569 = vst.msk [vmem:[%s4 + $0x28] sm:$0xf] %vm1558, %v1440
  %1570 = vst.msk [vmem:[%s4 + $0x2c] sm:$0xf] %vm1558, %v1441
  %1571 = vst.msk [vmem:[%s4 + $0x30] sm:$0xf] %vm1558, %v1442
  %1572 = vst.msk [vmem:[%s4 + $0x34] sm:$0xf] %vm1558, %v1443
  %1573 = vst.msk [vmem:[%s4 + $0x38] sm:$0xf] %vm1558, %v1444
  %1574 = vst.msk [vmem:[%s4 + $0x3c] sm:$0xf] %vm1558, %v1445
  %1575 = vst.msk [vmem:[%s4 + $0x40] sm:$0xf] %vm1558, %v1446
  %1576 = vst.msk [vmem:[%s4 + $0x44] sm:$0xf] %vm1558, %v1447
  %1577 = vst.msk [vmem:[%s4 + $0x48] sm:$0xf] %vm1558, %v1448
  %1578 = vst.msk [vmem:[%s4 + $0x4c] sm:$0xf] %vm1558, %v1449
  %1579 = vst.msk [vmem:[%s4 + $0x50] sm:$0xf] %vm1558, %v1450
  %1580 = vst.msk [vmem:[%s4 + $0x54] sm:$0xf] %vm1558, %v1451
  %1581 = vst.msk [vmem:[%s4 + $0x58] sm:$0xf] %vm1558, %v1452
  %1582 = vst.msk [vmem:[%s4 + $0x5c] sm:$0xf] %vm1558, %v1453
  %1583 = vst.msk [vmem:[%s4 + $0x60] sm:$0xf] %vm1558, %v1454
  %1584 = vst.msk [vmem:[%s4 + $0x64] sm:$0xf] %vm1558, %v1455
  %1585 = vst.msk [vmem:[%s4 + $0x68] sm:$0xf] %vm1558, %v1456
  %1586 = vst.msk [vmem:[%s4 + $0x6c] sm:$0xf] %vm1558, %v1457
  %1587 = vst.msk [vmem:[%s4 + $0x70] sm:$0xf] %vm1558, %v1458
  %1588 = vst.msk [vmem:[%s4 + $0x74] sm:$0xf] %vm1558, %v1459
  %1589 = vst.msk [vmem:[%s4 + $0x78] sm:$0xf] %vm1558, %v1460
  %1590 = vst.msk [vmem:[%s4 + $0x7c] sm:$0xf] %vm1558, %v1461
  %1591 = vst.msk [vmem:[%s4 + $0x80] sm:$0xf] %vm1558, %v1462
  %1592 = vst.msk [vmem:[%s4 + $0x84] sm:$0xf] %vm1558, %v1463
  %1593 = vst.msk [vmem:[%s4 + $0x88] sm:$0xf] %vm1558, %v1464
  %1594 = vst.msk [vmem:[%s4 + $0x8c] sm:$0xf] %vm1558, %v1465
  %1595 = vst.msk [vmem:[%s4 + $0x90] sm:$0xf] %vm1558, %v1466
  %1596 = vst.msk [vmem:[%s4 + $0x94] sm:$0xf] %vm1558, %v1467
  %1597 = vst.msk [vmem:[%s4 + $0x98] sm:$0xf] %vm1558, %v1468
  %1598 = vst.msk [vmem:[%s4 + $0x9c] sm:$0xf] %vm1558, %v1469
  %1599 = vst.msk [vmem:[%s4 + $0xa0] sm:$0xf] %vm1558, %v1470
  %1600 = vst.msk [vmem:[%s4 + $0xa4] sm:$0xf] %vm1558, %v1471
  %1601 = vst.msk [vmem:[%s4 + $0xa8] sm:$0xf] %vm1558, %v1472
  %1602 = vst.msk [vmem:[%s4 + $0xac] sm:$0xf] %vm1558, %v1473
  %1603 = vst.msk [vmem:[%s4 + $0xb0] sm:$0xf] %vm1558, %v1474
  %1604 = vst.msk [vmem:[%s4 + $0xb4] sm:$0xf] %vm1558, %v1475
  %1605 = vst.msk [vmem:[%s4 + $0xb8] sm:$0xf] %vm1558, %v1476
  %1606 = vst.msk [vmem:[%s4 + $0xbc] sm:$0xf] %vm1558, %v1477
  %1607 = vst.msk [vmem:[%s4 + $0xc0] sm:$0xf] %vm1558, %v1478
  %1608 = vst.msk [vmem:[%s4 + $0xc4] sm:$0xf] %vm1558, %v1479
  %1609 = vst.msk [vmem:[%s4 + $0xc8] sm:$0xf] %vm1558, %v1480
  %1610 = vst.msk [vmem:[%s4 + $0xcc] sm:$0xf] %vm1558, %v1481
  %1611 = vst.msk [vmem:[%s4 + $0xd0] sm:$0xf] %vm1558, %v1482
  %1612 = vst.msk [vmem:[%s4 + $0xd4] sm:$0xf] %vm1558, %v1483
  %1613 = vst.msk [vmem:[%s4 + $0xd8] sm:$0xf] %vm1558, %v1484
  %1614 = vst.msk [vmem:[%s4 + $0xdc] sm:$0xf] %vm1558, %v1485
  %1615 = vst.msk [vmem:[%s4 + $0xe0] sm:$0xf] %vm1558, %v1486
  %1616 = vst.msk [vmem:[%s4 + $0xe4] sm:$0xf] %vm1558, %v1487
  %1617 = vst.msk [vmem:[%s4 + $0xe8] sm:$0xf] %vm1558, %v1488
  %1618 = vst.msk [vmem:[%s4 + $0xec] sm:$0xf] %vm1558, %v1489
  %1619 = vst.msk [vmem:[%s4 + $0xf0] sm:$0xf] %vm1558, %v1490
  %1620 = vst.msk [vmem:[%s4 + $0xf4] sm:$0xf] %vm1558, %v1491
  %1621 = vst.msk [vmem:[%s4 + $0xf8] sm:$0xf] %vm1558, %v1492
  %1622 = vst.msk [vmem:[%s4 + $0xfc] sm:$0xf] %vm1558, %v1493
  // Predicated region
  $region18: #{vgg_discriminator.13} parent=0 // pred_check
    _
  $region19: #{vgg_discriminator.13} parent=0 // pred_check_branch
    %1624 = sbr.rel (0) target = $region21
  $region20: #{vgg_discriminator.13} parent=0 // pred_region
    _
  $region21: #{vgg_discriminator.13} parent=0 // pred_fallthru
    _
  // Predicated region
  $region22: #{vgg_discriminator.13} parent=0 // pred_check
    _
  $region23: #{vgg_discriminator.13} parent=0 // pred_check_branch
    %1626 = sbr.rel (0) target = $region25
  $region24: #{vgg_discriminator.13} parent=0 // pred_region
    _
  $region25: #{vgg_discriminator.13} parent=0 // pred_fallthru
    _

// kernel: vgg_discriminator.14
$region0: #{vgg_discriminator.14}
  #allocation0 [shape = 'u32[]', space=smem, size = 0x4, offset = 0x4, fixed_abs, tag = 'smem constant byte address 0x4 - core index']
  #allocation1 [shape = 'u32[144,128]{1,0:T(1,128)}', space=vmem, size = 0x12000, scoped, tag = 'internal scratch']
  %s0 = inlined_call_operand.vmem [shape: bf16[128,256], index: 0, kind: input, shape index: {}]
  %s1 = inlined_call_operand.vmem [shape: bf16[256,16], index: 1, kind: input, shape index: {}]
  %s2 = inlined_call_operand.vmem [shape: f32[1,16], index: 2, kind: input, shape index: {}]
  %s3 = inlined_call_operand.vmem [shape: f32[1,16], index: 3, kind: input, shape index: {}]
  %s4 = inlined_call_operand.vmem [shape: bf16[128,16], index: 4, kind: output, shape index: {}]
  %s5 = sld [smem:[#allocation0]]
  $region26: #{vgg_discriminator.14} parent=0
    _
  %s7 = ssub.s32 1, %s5
  %s8 = scalar_select 0, %s7, %s5
  // Predicated region
  $region2: #{vgg_discriminator.14} parent=0 // pred_check
    _
  $region3: #{vgg_discriminator.14} parent=0 // pred_check_branch
    %10 = sbr.rel (0) target = $region5
  $region4: #{vgg_discriminator.14} parent=0 // pred_region
    _
  $region5: #{vgg_discriminator.14} parent=0 // pred_fallthru
    _
  // Predicated region
  $region6: #{vgg_discriminator.14} parent=0 // pred_check
    _
  $region7: #{vgg_discriminator.14} parent=0 // pred_check_branch
    %12 = sbr.rel (0) target = $region9
  $region8: #{vgg_discriminator.14} parent=0 // pred_region
    _
  $region9: #{vgg_discriminator.14} parent=0 // pred_fallthru
    _
  // Predicated region
  $region10: #{vgg_discriminator.14} parent=0 // pred_check
    _
  $region11: #{vgg_discriminator.14} parent=0 // pred_check_branch
    %14 = sbr.rel (0) target = $region13
  $region12: #{vgg_discriminator.14} parent=0 // pred_region
    _
  $region13: #{vgg_discriminator.14} parent=0 // pred_fallthru
    _
  // Predicated region
  $region14: #{vgg_discriminator.14} parent=0 // pred_check
    _
  $region15: #{vgg_discriminator.14} parent=0 // pred_check_branch
    %16 = sbr.rel (0) target = $region17
  $region16: #{vgg_discriminator.14} parent=0 // pred_region
    _
  $region17: #{vgg_discriminator.14} parent=0 // pred_fallthru
    _
  %v18 = vld [vmem:[%s0] sm:$0xff]
  %v19 = vld [vmem:[%s0 + $0x8] sm:$0xff]
  %v20 = vld [vmem:[%s0 + $0x10] sm:$0xff]
  %v21 = vld [vmem:[%s0 + $0x18] sm:$0xff]
  %v22 = vld [vmem:[%s0 + $0x20] sm:$0xff]
  %v23 = vld [vmem:[%s0 + $0x28] sm:$0xff]
  %v24 = vld [vmem:[%s0 + $0x30] sm:$0xff]
  %v25 = vld [vmem:[%s0 + $0x38] sm:$0xff]
  %v26 = vld [vmem:[%s0 + $0x40] sm:$0xff]
  %v27 = vld [vmem:[%s0 + $0x48] sm:$0xff]
  %v28 = vld [vmem:[%s0 + $0x50] sm:$0xff]
  %v29 = vld [vmem:[%s0 + $0x58] sm:$0xff]
  %v30 = vld [vmem:[%s0 + $0x60] sm:$0xff]
  %v31 = vld [vmem:[%s0 + $0x68] sm:$0xff]
  %v32 = vld [vmem:[%s0 + $0x70] sm:$0xff]
  %v33 = vld [vmem:[%s0 + $0x78] sm:$0xff]
  %v34 = vld [vmem:[%s1] sm:$0xf]
  %v35 = vld [vmem:[%s1 + $0x4] sm:$0xf]
  %v36 = vld [vmem:[%s1 + $0x8] sm:$0xf]
  %v37 = vld [vmem:[%s1 + $0xc] sm:$0xf]
  %v38 = vld [vmem:[%s1 + $0x10] sm:$0xf]
  %v39 = vld [vmem:[%s1 + $0x14] sm:$0xf]
  %v40 = vld [vmem:[%s1 + $0x18] sm:$0xf]
  %v41 = vld [vmem:[%s1 + $0x1c] sm:$0xf]
  %v42 = vld [vmem:[%s1 + $0x20] sm:$0xf]
  %v43 = vld [vmem:[%s1 + $0x24] sm:$0xf]
  %v44 = vld [vmem:[%s1 + $0x28] sm:$0xf]
  %v45 = vld [vmem:[%s1 + $0x2c] sm:$0xf]
  %v46 = vld [vmem:[%s1 + $0x30] sm:$0xf]
  %v47 = vld [vmem:[%s1 + $0x34] sm:$0xf]
  %v48 = vld [vmem:[%s1 + $0x38] sm:$0xf]
  %v49 = vld [vmem:[%s1 + $0x3c] sm:$0xf]
  %v50 = vld [vmem:[%s1 + $0x40] sm:$0xf]
  %v51 = vld [vmem:[%s1 + $0x44] sm:$0xf]
  %v52 = vld [vmem:[%s1 + $0x48] sm:$0xf]
  %v53 = vld [vmem:[%s1 + $0x4c] sm:$0xf]
  %v54 = vld [vmem:[%s1 + $0x50] sm:$0xf]
  %v55 = vld [vmem:[%s1 + $0x54] sm:$0xf]
  %v56 = vld [vmem:[%s1 + $0x58] sm:$0xf]
  %v57 = vld [vmem:[%s1 + $0x5c] sm:$0xf]
  %v58 = vld [vmem:[%s1 + $0x60] sm:$0xf]
  %v59 = vld [vmem:[%s1 + $0x64] sm:$0xf]
  %v60 = vld [vmem:[%s1 + $0x68] sm:$0xf]
  %v61 = vld [vmem:[%s1 + $0x6c] sm:$0xf]
  %v62 = vld [vmem:[%s1 + $0x70] sm:$0xf]
  %v63 = vld [vmem:[%s1 + $0x74] sm:$0xf]
  %v64 = vld [vmem:[%s1 + $0x78] sm:$0xf]
  %v65 = vld [vmem:[%s1 + $0x7c] sm:$0xf]
  %v82 = vunpack.c.l.b16 %v18
  %v83 = vunpack.c.h.b16 %v18
  %v84 = vunpack.c.l.b16 %v19
  %v85 = vunpack.c.h.b16 %v19
  %v86 = vunpack.c.l.b16 %v20
  %v87 = vunpack.c.h.b16 %v20
  %v88 = vunpack.c.l.b16 %v21
  %v89 = vunpack.c.h.b16 %v21
  %v90 = vunpack.c.l.b16 %v22
  %v91 = vunpack.c.h.b16 %v22
  %v92 = vunpack.c.l.b16 %v23
  %v93 = vunpack.c.h.b16 %v23
  %v94 = vunpack.c.l.b16 %v24
  %v95 = vunpack.c.h.b16 %v24
  %v96 = vunpack.c.l.b16 %v25
  %v97 = vunpack.c.h.b16 %v25
  %v98 = vunpack.c.l.b16 %v26
  %v99 = vunpack.c.h.b16 %v26
  %v100 = vunpack.c.l.b16 %v27
  %v101 = vunpack.c.h.b16 %v27
  %v102 = vunpack.c.l.b16 %v28
  %v103 = vunpack.c.h.b16 %v28
  %v104 = vunpack.c.l.b16 %v29
  %v105 = vunpack.c.h.b16 %v29
  %v106 = vunpack.c.l.b16 %v30
  %v107 = vunpack.c.h.b16 %v30
  %v108 = vunpack.c.l.b16 %v31
  %v109 = vunpack.c.h.b16 %v31
  %v110 = vunpack.c.l.b16 %v32
  %v111 = vunpack.c.h.b16 %v32
  %v112 = vunpack.c.l.b16 %v33
  %v113 = vunpack.c.h.b16 %v33
  %v114 = vpack.c.b16 %v84, %v82
  %v115 = vpack.c.b16 %v85, %v83
  %v116 = vpack.c.b16 %v88, %v86
  %v117 = vpack.c.b16 %v89, %v87
  %v118 = vpack.c.b16 %v92, %v90
  %v119 = vpack.c.b16 %v93, %v91
  %v120 = vpack.c.b16 %v96, %v94
  %v121 = vpack.c.b16 %v97, %v95
  %v122 = vpack.c.b16 %v100, %v98
  %v123 = vpack.c.b16 %v101, %v99
  %v124 = vpack.c.b16 %v104, %v102
  %v125 = vpack.c.b16 %v105, %v103
  %v126 = vpack.c.b16 %v108, %v106
  %v127 = vpack.c.b16 %v109, %v107
  %v128 = vpack.c.b16 %v112, %v110
  %v129 = vpack.c.b16 %v113, %v111
  %v178 = vunpack.c.l.b16 %v34
  %v179 = vunpack.c.l.b16 %v35
  %v180 = vunpack.c.l.b16 %v36
  %v181 = vunpack.c.l.b16 %v37
  %v182 = vunpack.c.l.b16 %v38
  %v183 = vunpack.c.l.b16 %v39
  %v184 = vunpack.c.l.b16 %v40
  %v185 = vunpack.c.l.b16 %v41
  %v186 = vunpack.c.l.b16 %v42
  %v187 = vunpack.c.l.b16 %v43
  %v188 = vunpack.c.l.b16 %v44
  %v189 = vunpack.c.l.b16 %v45
  %v190 = vunpack.c.l.b16 %v46
  %v191 = vunpack.c.l.b16 %v47
  %v192 = vunpack.c.l.b16 %v48
  %v193 = vunpack.c.l.b16 %v49
  %v194 = vunpack.c.l.b16 %v50
  %v195 = vunpack.c.l.b16 %v51
  %v196 = vunpack.c.l.b16 %v52
  %v197 = vunpack.c.l.b16 %v53
  %v198 = vunpack.c.l.b16 %v54
  %v199 = vunpack.c.l.b16 %v55
  %v200 = vunpack.c.l.b16 %v56
  %v201 = vunpack.c.l.b16 %v57
  %v202 = vunpack.c.l.b16 %v58
  %v203 = vunpack.c.l.b16 %v59
  %v204 = vunpack.c.l.b16 %v60
  %v205 = vunpack.c.l.b16 %v61
  %v206 = vunpack.c.l.b16 %v62
  %v207 = vunpack.c.l.b16 %v63
  %v208 = vunpack.c.l.b16 %v64
  %v209 = vunpack.c.l.b16 %v65
  %v210 = vpack.c.b16 %v179, %v178
  %v211 = vpack.c.b16 %v181, %v180
  %v212 = vpack.c.b16 %v183, %v182
  %v213 = vpack.c.b16 %v185, %v184
  %v214 = vpack.c.b16 %v187, %v186
  %v215 = vpack.c.b16 %v189, %v188
  %v216 = vpack.c.b16 %v191, %v190
  %v217 = vpack.c.b16 %v193, %v192
  %v218 = vpack.c.b16 %v195, %v194
  %v219 = vpack.c.b16 %v197, %v196
  %v220 = vpack.c.b16 %v199, %v198
  %v221 = vpack.c.b16 %v201, %v200
  %v222 = vpack.c.b16 %v203, %v202
  %v223 = vpack.c.b16 %v205, %v204
  %v224 = vpack.c.b16 %v207, %v206
  %v225 = vpack.c.b16 %v209, %v208
  %242 = vmatprep.subr.bf16.mxu0 0
  %243 = vmatpush1.bf16.msra.mxu0 %v210
  %244 = vmatprep.subr.bf16.mxu0 0
  %245 = vmatpush1.bf16.msra.mxu0 %v211
  %246 = vmatprep.subr.bf16.mxu0 0
  %247 = vmatpush1.bf16.msra.mxu0 %v212
  %248 = vmatprep.subr.bf16.mxu0 0
  %249 = vmatpush1.bf16.msra.mxu0 %v213
  %250 = vmatprep.subr.bf16.mxu0 0
  %251 = vmatpush1.bf16.msra.mxu0 %v214
  %252 = vmatprep.subr.bf16.mxu0 0
  %253 = vmatpush1.bf16.msra.mxu0 %v215
  %254 = vmatprep.subr.bf16.mxu0 0
  %255 = vmatpush1.bf16.msra.mxu0 %v216
  %256 = vmatprep.subr.bf16.mxu0 0
  %257 = vmatpush1.bf16.msra.mxu0 %v217
  %258 = vmatprep.subr.bf16.mxu0 0
  %259 = vmatpush1.bf16.msra.mxu0 %v218
  %260 = vmatprep.subr.bf16.mxu0 0
  %261 = vmatpush1.bf16.msra.mxu0 %v219
  %262 = vmatprep.subr.bf16.mxu0 0
  %263 = vmatpush1.bf16.msra.mxu0 %v220
  %264 = vmatprep.subr.bf16.mxu0 0
  %265 = vmatpush1.bf16.msra.mxu0 %v221
  %266 = vmatprep.subr.bf16.mxu0 0
  %267 = vmatpush1.bf16.msra.mxu0 %v222
  %268 = vmatprep.subr.bf16.mxu0 0
  %269 = vmatpush1.bf16.msra.mxu0 %v223
  %270 = vmatprep.subr.bf16.mxu0 0
  %271 = vmatpush1.bf16.msra.mxu0 %v224
  %272 = vmatprep.subr.bf16.mxu0 0
  %273 = vmatpush1.bf16.msra.mxu0 %v225
  %274 = vmatprep.mubr.bf16.mxu0 %v115
  %275 = vmatmul.mubr.bf16.gmra.mrb[0].mxu0 %v114
  %v276 = vpop.f32.mrb[0].mxu0
  %v277 = vadd.f32 0.0, %v276
  %v278 = vpop.f32.mrb[0].mxu0
  %v279 = vpop.f32.mrb[0].mxu0
  %v280 = vadd.f32 0.0, %v279
  %v281 = vpop.f32.mrb[0].mxu0
  %282 = vmatprep.mubr.bf16.mxu0 %v117
  %283 = vmatmul.mubr.bf16.gmra.mrb[0].mxu0 %v116
  %v284 = vpop.f32.mrb[0].mxu0
  %v285 = vadd.f32 0.0, %v284
  %v286 = vpop.f32.mrb[0].mxu0
  %v287 = vpop.f32.mrb[0].mxu0
  %v288 = vadd.f32 0.0, %v287
  %v289 = vpop.f32.mrb[0].mxu0
  %290 = vmatprep.mubr.bf16.mxu0 %v119
  %291 = vmatmul.mubr.bf16.gmra.mrb[0].mxu0 %v118
  %v292 = vpop.f32.mrb[0].mxu0
  %v293 = vadd.f32 0.0, %v292
  %v294 = vpop.f32.mrb[0].mxu0
  %v295 = vpop.f32.mrb[0].mxu0
  %v296 = vadd.f32 0.0, %v295
  %v297 = vpop.f32.mrb[0].mxu0
  %298 = vmatprep.mubr.bf16.mxu0 %v121
  %299 = vmatmul.mubr.bf16.gmra.mrb[0].mxu0 %v120
  %v300 = vpop.f32.mrb[0].mxu0
  %v301 = vadd.f32 0.0, %v300
  %v302 = vpop.f32.mrb[0].mxu0
  %v303 = vpop.f32.mrb[0].mxu0
  %v304 = vadd.f32 0.0, %v303
  %v305 = vpop.f32.mrb[0].mxu0
  %306 = vmatprep.mubr.bf16.mxu0 %v123
  %307 = vmatmul.mubr.bf16.gmra.mrb[0].mxu0 %v122
  %v308 = vpop.f32.mrb[0].mxu0
  %v309 = vadd.f32 0.0, %v308
  %v310 = vpop.f32.mrb[0].mxu0
  %v311 = vpop.f32.mrb[0].mxu0
  %v312 = vadd.f32 0.0, %v311
  %v313 = vpop.f32.mrb[0].mxu0
  %314 = vmatprep.mubr.bf16.mxu0 %v125
  %315 = vmatmul.mubr.bf16.gmra.mrb[0].mxu0 %v124
  %v316 = vpop.f32.mrb[0].mxu0
  %v317 = vadd.f32 0.0, %v316
  %v318 = vpop.f32.mrb[0].mxu0
  %v319 = vpop.f32.mrb[0].mxu0
  %v320 = vadd.f32 0.0, %v319
  %v321 = vpop.f32.mrb[0].mxu0
  %322 = vmatprep.mubr.bf16.mxu0 %v127
  %323 = vmatmul.mubr.bf16.gmra.mrb[0].mxu0 %v126
  %v324 = vpop.f32.mrb[0].mxu0
  %v325 = vadd.f32 0.0, %v324
  %v326 = vpop.f32.mrb[0].mxu0
  %v327 = vpop.f32.mrb[0].mxu0
  %v328 = vadd.f32 0.0, %v327
  %v329 = vpop.f32.mrb[0].mxu0
  %330 = vmatprep.mubr.bf16.mxu0 %v129
  %331 = vmatmul.mubr.bf16.gmra.mrb[0].mxu0 %v128
  %v332 = vpop.f32.mrb[0].mxu0
  %v333 = vadd.f32 0.0, %v332
  %v334 = vpop.f32.mrb[0].mxu0
  %v335 = vpop.f32.mrb[0].mxu0
  %v336 = vadd.f32 0.0, %v335
  %v337 = vpop.f32.mrb[0].mxu0
  %338 = vdwg.mxu0
  %vm339 = vcmask 130048
  %v340 = vsel %vm339, %v277, 0.0
  %v341 = vsel %vm339, %v280, 0.0
  %v342 = vadd.f32 %v340, %v341
  %v343 = vsel %vm339, %v285, 0.0
  %v344 = vadd.f32 %v342, %v343
  %v345 = vsel %vm339, %v288, 0.0
  %v346 = vadd.f32 %v344, %v345
  %v347 = vsel %vm339, %v293, 0.0
  %v348 = vadd.f32 %v346, %v347
  %v349 = vsel %vm339, %v296, 0.0
  %v350 = vadd.f32 %v348, %v349
  %v351 = vsel %vm339, %v301, 0.0
  %v352 = vadd.f32 %v350, %v351
  %v353 = vsel %vm339, %v304, 0.0
  %v354 = vadd.f32 %v352, %v353
  %v355 = vsel %vm339, %v309, 0.0
  %v356 = vadd.f32 %v354, %v355
  %v357 = vsel %vm339, %v312, 0.0
  %v358 = vadd.f32 %v356, %v357
  %v359 = vsel %vm339, %v317, 0.0
  %v360 = vadd.f32 %v358, %v359
  %v361 = vsel %vm339, %v320, 0.0
  %v362 = vadd.f32 %v360, %v361
  %v363 = vsel %vm339, %v325, 0.0
  %v364 = vadd.f32 %v362, %v363
  %v365 = vsel %vm339, %v328, 0.0
  %v366 = vadd.f32 %v364, %v365
  %v367 = vsel %vm339, %v333, 0.0
  %v368 = vadd.f32 %v366, %v367
  %v369 = vsel %vm339, %v336, 0.0
  %v370 = vadd.f32 %v368, %v369
  %v371 = vrot.slane %v370, 4
  %v372 = vadd.f32 %v370, %v371
  %v373 = vrot.slane %v372, 2
  %v374 = vadd.f32 %v372, %v373
  %v375 = vrot.slane %v374, 1
  %v376 = vadd.f32 %v374, %v375
  %v377 = vmul.f32 %v376, 0.0078125
  %v378 = vmul.f32 %v277, %v277
  %v379 = vmul.f32 %v280, %v280
  %v380 = vmul.f32 %v285, %v285
  %v381 = vmul.f32 %v288, %v288
  %v382 = vmul.f32 %v293, %v293
  %v383 = vmul.f32 %v296, %v296
  %v384 = vmul.f32 %v301, %v301
  %v385 = vmul.f32 %v304, %v304
  %v386 = vmul.f32 %v309, %v309
  %v387 = vmul.f32 %v312, %v312
  %v388 = vmul.f32 %v317, %v317
  %v389 = vmul.f32 %v320, %v320
  %v390 = vmul.f32 %v325, %v325
  %v391 = vmul.f32 %v328, %v328
  %v392 = vmul.f32 %v333, %v333
  %v393 = vmul.f32 %v336, %v336
  %v394 = vsel %vm339, %v378, 0.0
  %v395 = vsel %vm339, %v379, 0.0
  %v396 = vadd.f32 %v394, %v395
  %v397 = vsel %vm339, %v380, 0.0
  %v398 = vadd.f32 %v396, %v397
  %v399 = vsel %vm339, %v381, 0.0
  %v400 = vadd.f32 %v398, %v399
  %v401 = vsel %vm339, %v382, 0.0
  %v402 = vadd.f32 %v400, %v401
  %v403 = vsel %vm339, %v383, 0.0
  %v404 = vadd.f32 %v402, %v403
  %v405 = vsel %vm339, %v384, 0.0
  %v406 = vadd.f32 %v404, %v405
  %v407 = vsel %vm339, %v385, 0.0
  %v408 = vadd.f32 %v406, %v407
  %v409 = vsel %vm339, %v386, 0.0
  %v410 = vadd.f32 %v408, %v409
  %v411 = vsel %vm339, %v387, 0.0
  %v412 = vadd.f32 %v410, %v411
  %v413 = vsel %vm339, %v388, 0.0
  %v414 = vadd.f32 %v412, %v413
  %v415 = vsel %vm339, %v389, 0.0
  %v416 = vadd.f32 %v414, %v415
  %v417 = vsel %vm339, %v390, 0.0
  %v418 = vadd.f32 %v416, %v417
  %v419 = vsel %vm339, %v391, 0.0
  %v420 = vadd.f32 %v418, %v419
  %v421 = vsel %vm339, %v392, 0.0
  %v422 = vadd.f32 %v420, %v421
  %v423 = vsel %vm339, %v393, 0.0
  %v424 = vadd.f32 %v422, %v423
  %v425 = vrot.slane %v424, 4
  %v426 = vadd.f32 %v424, %v425
  %v427 = vrot.slane %v426, 2
  %v428 = vadd.f32 %v426, %v427
  %v429 = vrot.slane %v428, 1
  %v430 = vadd.f32 %v428, %v429
  %v431 = vmul.f32 %v430, 0.0078125
  %v432 = vmul.f32 %v377, %v377
  %v433 = vsub.f32 %v431, %v432
  %v434 = vmax.f32 %v433, 0.0
  %v435 = vadd.f32 %v434, 1e-05
  %v436 = vrsqrt.pop %v435
  %v437 = vld [vmem:[%s2] sm:$0x1]
  %v438 = vmul.f32 %v437, %v436
  %v439 = vld [vmem:[%s3] sm:$0x1]
  %v440 = vmul.f32 %v377, %v438
  %v441 = vsub.f32 %v439, %v440
  %v443 = vlaneseq
  %v444 = vshrl.u32 %v443, 7
  %v445 = vsub.s32 0, %v444
  %v446 = vrot.slane %v438, %v445
  %v448 = vmul.f32 %v277, %v446
  %v449 = vmul.f32 %v280, %v446
  %v450 = vmul.f32 %v285, %v446
  %v451 = vmul.f32 %v288, %v446
  %v452 = vmul.f32 %v293, %v446
  %v453 = vmul.f32 %v296, %v446
  %v454 = vmul.f32 %v301, %v446
  %v455 = vmul.f32 %v304, %v446
  %v456 = vmul.f32 %v309, %v446
  %v457 = vmul.f32 %v312, %v446
  %v458 = vmul.f32 %v317, %v446
  %v459 = vmul.f32 %v320, %v446
  %v460 = vmul.f32 %v325, %v446
  %v461 = vmul.f32 %v328, %v446
  %v462 = vmul.f32 %v333, %v446
  %v463 = vmul.f32 %v336, %v446
  %v465 = vlaneseq
  %v466 = vshrl.u32 %v465, 7
  %v467 = vsub.s32 0, %v466
  %v468 = vrot.slane %v441, %v467
  %v470 = vadd.f32 %v448, %v468
  %v471 = vadd.f32 %v449, %v468
  %v472 = vadd.f32 %v450, %v468
  %v473 = vadd.f32 %v451, %v468
  %v474 = vadd.f32 %v452, %v468
  %v475 = vadd.f32 %v453, %v468
  %v476 = vadd.f32 %v454, %v468
  %v477 = vadd.f32 %v455, %v468
  %v478 = vadd.f32 %v456, %v468
  %v479 = vadd.f32 %v457, %v468
  %v480 = vadd.f32 %v458, %v468
  %v481 = vadd.f32 %v459, %v468
  %v482 = vadd.f32 %v460, %v468
  %v483 = vadd.f32 %v461, %v468
  %v484 = vadd.f32 %v462, %v468
  %v485 = vadd.f32 %v463, %v468
  %vm486 = vcmp.ge.f32.partialorder %v470, 0.0
  %vm487 = vcmp.ge.f32.partialorder %v471, 0.0
  %vm488 = vcmp.ge.f32.partialorder %v472, 0.0
  %vm489 = vcmp.ge.f32.partialorder %v473, 0.0
  %vm490 = vcmp.ge.f32.partialorder %v474, 0.0
  %vm491 = vcmp.ge.f32.partialorder %v475, 0.0
  %vm492 = vcmp.ge.f32.partialorder %v476, 0.0
  %vm493 = vcmp.ge.f32.partialorder %v477, 0.0
  %vm494 = vcmp.ge.f32.partialorder %v478, 0.0
  %vm495 = vcmp.ge.f32.partialorder %v479, 0.0
  %vm496 = vcmp.ge.f32.partialorder %v480, 0.0
  %vm497 = vcmp.ge.f32.partialorder %v481, 0.0
  %vm498 = vcmp.ge.f32.partialorder %v482, 0.0
  %vm499 = vcmp.ge.f32.partialorder %v483, 0.0
  %vm500 = vcmp.ge.f32.partialorder %v484, 0.0
  %vm501 = vcmp.ge.f32.partialorder %v485, 0.0
  %v502 = vmul.f32 %v470, 0.2
  %v503 = vmul.f32 %v471, 0.2
  %v504 = vmul.f32 %v472, 0.2
  %v505 = vmul.f32 %v473, 0.2
  %v506 = vmul.f32 %v474, 0.2
  %v507 = vmul.f32 %v475, 0.2
  %v508 = vmul.f32 %v476, 0.2
  %v509 = vmul.f32 %v477, 0.2
  %v510 = vmul.f32 %v478, 0.2
  %v511 = vmul.f32 %v479, 0.2
  %v512 = vmul.f32 %v480, 0.2
  %v513 = vmul.f32 %v481, 0.2
  %v514 = vmul.f32 %v482, 0.2
  %v515 = vmul.f32 %v483, 0.2
  %v516 = vmul.f32 %v484, 0.2
  %v517 = vmul.f32 %v485, 0.2
  %v518 = vsel %vm486, %v470, %v502
  %v519 = vsel %vm487, %v471, %v503
  %v520 = vsel %vm488, %v472, %v504
  %v521 = vsel %vm489, %v473, %v505
  %v522 = vsel %vm490, %v474, %v506
  %v523 = vsel %vm491, %v475, %v507
  %v524 = vsel %vm492, %v476, %v508
  %v525 = vsel %vm493, %v477, %v509
  %v526 = vsel %vm494, %v478, %v510
  %v527 = vsel %vm495, %v479, %v511
  %v528 = vsel %vm496, %v480, %v512
  %v529 = vsel %vm497, %v481, %v513
  %v530 = vsel %vm498, %v482, %v514
  %v531 = vsel %vm499, %v483, %v515
  %v532 = vsel %vm500, %v484, %v516
  %v533 = vsel %vm501, %v485, %v517
  %v534 = vpack.c.bf16 %v519, %v518
  %v535 = vpack.c.bf16 %v521, %v520
  %v536 = vpack.c.bf16 %v523, %v522
  %v537 = vpack.c.bf16 %v525, %v524
  %v538 = vpack.c.bf16 %v527, %v526
  %v539 = vpack.c.bf16 %v529, %v528
  %v540 = vpack.c.bf16 %v531, %v530
  %v541 = vpack.c.bf16 %v533, %v532
  %v550 = vunpack.c.l.b16 %v534
  %v551 = vunpack.c.h.b16 %v534
  %v552 = vunpack.c.l.b16 %v535
  %v553 = vunpack.c.h.b16 %v535
  %v554 = vunpack.c.l.b16 %v536
  %v555 = vunpack.c.h.b16 %v536
  %v556 = vunpack.c.l.b16 %v537
  %v557 = vunpack.c.h.b16 %v537
  %v558 = vunpack.c.l.b16 %v538
  %v559 = vunpack.c.h.b16 %v538
  %v560 = vunpack.c.l.b16 %v539
  %v561 = vunpack.c.h.b16 %v539
  %v562 = vunpack.c.l.b16 %v540
  %v563 = vunpack.c.h.b16 %v540
  %v564 = vunpack.c.l.b16 %v541
  %v565 = vunpack.c.h.b16 %v541
  %v566 = vpack.c.b16 %v550, %v550
  %v567 = vpack.c.b16 %v551, %v551
  %v568 = vpack.c.b16 %v552, %v552
  %v569 = vpack.c.b16 %v553, %v553
  %v570 = vpack.c.b16 %v554, %v554
  %v571 = vpack.c.b16 %v555, %v555
  %v572 = vpack.c.b16 %v556, %v556
  %v573 = vpack.c.b16 %v557, %v557
  %v574 = vpack.c.b16 %v558, %v558
  %v575 = vpack.c.b16 %v559, %v559
  %v576 = vpack.c.b16 %v560, %v560
  %v577 = vpack.c.b16 %v561, %v561
  %v578 = vpack.c.b16 %v562, %v562
  %v579 = vpack.c.b16 %v563, %v563
  %v580 = vpack.c.b16 %v564, %v564
  %v581 = vpack.c.b16 %v565, %v565
  %vm598 = vcmask 125952
  %599 = vst.msk [vmem:[%s4] sm:$0xf] %vm598, %v566
  %600 = vst.msk [vmem:[%s4 + $0x4] sm:$0xf] %vm598, %v567
  %601 = vst.msk [vmem:[%s4 + $0x8] sm:$0xf] %vm598, %v568
  %602 = vst.msk [vmem:[%s4 + $0xc] sm:$0xf] %vm598, %v569
  %603 = vst.msk [vmem:[%s4 + $0x10] sm:$0xf] %vm598, %v570
  %604 = vst.msk [vmem:[%s4 + $0x14] sm:$0xf] %vm598, %v571
  %605 = vst.msk [vmem:[%s4 + $0x18] sm:$0xf] %vm598, %v572
  %606 = vst.msk [vmem:[%s4 + $0x1c] sm:$0xf] %vm598, %v573
  %607 = vst.msk [vmem:[%s4 + $0x20] sm:$0xf] %vm598, %v574
  %608 = vst.msk [vmem:[%s4 + $0x24] sm:$0xf] %vm598, %v575
  %609 = vst.msk [vmem:[%s4 + $0x28] sm:$0xf] %vm598, %v576
  %610 = vst.msk [vmem:[%s4 + $0x2c] sm:$0xf] %vm598, %v577
  %611 = vst.msk [vmem:[%s4 + $0x30] sm:$0xf] %vm598, %v578
  %612 = vst.msk [vmem:[%s4 + $0x34] sm:$0xf] %vm598, %v579
  %613 = vst.msk [vmem:[%s4 + $0x38] sm:$0xf] %vm598, %v580
  %614 = vst.msk [vmem:[%s4 + $0x3c] sm:$0xf] %vm598, %v581
  // Predicated region
  $region18: #{vgg_discriminator.14} parent=0 // pred_check
    _
  $region19: #{vgg_discriminator.14} parent=0 // pred_check_branch
    %616 = sbr.rel (0) target = $region21
  $region20: #{vgg_discriminator.14} parent=0 // pred_region
    _
  $region21: #{vgg_discriminator.14} parent=0 // pred_fallthru
    _
  // Predicated region
  $region22: #{vgg_discriminator.14} parent=0 // pred_check
    _
  $region23: #{vgg_discriminator.14} parent=0 // pred_check_branch
    %618 = sbr.rel (0) target = $region25
  $region24: #{vgg_discriminator.14} parent=0 // pred_region
    _
  $region25: #{vgg_discriminator.14} parent=0 // pred_fallthru
    _

// kernel: vgg_discriminator.15
$region0: #{vgg_discriminator.15}
  #allocation0 [shape = 'u32[]', space=smem, size = 0x4, offset = 0x4, fixed_abs, tag = 'smem constant byte address 0x4 - core index']
  #allocation1 [shape = 'u32[144,128]{1,0:T(1,128)}', space=vmem, size = 0x12000, scoped, tag = 'internal scratch']
  %s0 = inlined_call_operand.vmem [shape: bf16[128,256], index: 0, kind: input, shape index: {}]
  %s1 = inlined_call_operand.vmem [shape: bf16[256,32], index: 1, kind: input, shape index: {}]
  %s2 = inlined_call_operand.vmem [shape: f32[1,32], index: 2, kind: input, shape index: {}]
  %s3 = inlined_call_operand.vmem [shape: f32[1,32], index: 3, kind: input, shape index: {}]
  %s4 = inlined_call_operand.vmem [shape: bf16[128,32], index: 4, kind: output, shape index: {}]
  %s5 = sld [smem:[#allocation0]]
  $region26: #{vgg_discriminator.15} parent=0
    _
  %s7 = ssub.s32 1, %s5
  %s8 = scalar_select 0, %s7, %s5
  // Predicated region
  $region2: #{vgg_discriminator.15} parent=0 // pred_check
    _
  $region3: #{vgg_discriminator.15} parent=0 // pred_check_branch
    %10 = sbr.rel (0) target = $region5
  $region4: #{vgg_discriminator.15} parent=0 // pred_region
    _
  $region5: #{vgg_discriminator.15} parent=0 // pred_fallthru
    _
  // Predicated region
  $region6: #{vgg_discriminator.15} parent=0 // pred_check
    _
  $region7: #{vgg_discriminator.15} parent=0 // pred_check_branch
    %12 = sbr.rel (0) target = $region9
  $region8: #{vgg_discriminator.15} parent=0 // pred_region
    _
  $region9: #{vgg_discriminator.15} parent=0 // pred_fallthru
    _
  // Predicated region
  $region10: #{vgg_discriminator.15} parent=0 // pred_check
    _
  $region11: #{vgg_discriminator.15} parent=0 // pred_check_branch
    %14 = sbr.rel (0) target = $region13
  $region12: #{vgg_discriminator.15} parent=0 // pred_region
    _
  $region13: #{vgg_discriminator.15} parent=0 // pred_fallthru
    _
  // Predicated region
  $region14: #{vgg_discriminator.15} parent=0 // pred_check
    _
  $region15: #{vgg_discriminator.15} parent=0 // pred_check_branch
    %16 = sbr.rel (0) target = $region17
  $region16: #{vgg_discriminator.15} parent=0 // pred_region
    _
  $region17: #{vgg_discriminator.15} parent=0 // pred_fallthru
    _
  %v18 = vld [vmem:[%s0] sm:$0xff]
  %v19 = vld [vmem:[%s0 + $0x8] sm:$0xff]
  %v20 = vld [vmem:[%s0 + $0x10] sm:$0xff]
  %v21 = vld [vmem:[%s0 + $0x18] sm:$0xff]
  %v22 = vld [vmem:[%s0 + $0x20] sm:$0xff]
  %v23 = vld [vmem:[%s0 + $0x28] sm:$0xff]
  %v24 = vld [vmem:[%s0 + $0x30] sm:$0xff]
  %v25 = vld [vmem:[%s0 + $0x38] sm:$0xff]
  %v26 = vld [vmem:[%s0 + $0x40] sm:$0xff]
  %v27 = vld [vmem:[%s0 + $0x48] sm:$0xff]
  %v28 = vld [vmem:[%s0 + $0x50] sm:$0xff]
  %v29 = vld [vmem:[%s0 + $0x58] sm:$0xff]
  %v30 = vld [vmem:[%s0 + $0x60] sm:$0xff]
  %v31 = vld [vmem:[%s0 + $0x68] sm:$0xff]
  %v32 = vld [vmem:[%s0 + $0x70] sm:$0xff]
  %v33 = vld [vmem:[%s0 + $0x78] sm:$0xff]
  %v34 = vld [vmem:[%s1] sm:$0xf]
  %v35 = vld [vmem:[%s1 + $0x4] sm:$0xf]
  %v36 = vld [vmem:[%s1 + $0x8] sm:$0xf]
  %v37 = vld [vmem:[%s1 + $0xc] sm:$0xf]
  %v38 = vld [vmem:[%s1 + $0x10] sm:$0xf]
  %v39 = vld [vmem:[%s1 + $0x14] sm:$0xf]
  %v40 = vld [vmem:[%s1 + $0x18] sm:$0xf]
  %v41 = vld [vmem:[%s1 + $0x1c] sm:$0xf]
  %v42 = vld [vmem:[%s1 + $0x20] sm:$0xf]
  %v43 = vld [vmem:[%s1 + $0x24] sm:$0xf]
  %v44 = vld [vmem:[%s1 + $0x28] sm:$0xf]
  %v45 = vld [vmem:[%s1 + $0x2c] sm:$0xf]
  %v46 = vld [vmem:[%s1 + $0x30] sm:$0xf]
  %v47 = vld [vmem:[%s1 + $0x34] sm:$0xf]
  %v48 = vld [vmem:[%s1 + $0x38] sm:$0xf]
  %v49 = vld [vmem:[%s1 + $0x3c] sm:$0xf]
  %v50 = vld [vmem:[%s1 + $0x40] sm:$0xf]
  %v51 = vld [vmem:[%s1 + $0x44] sm:$0xf]
  %v52 = vld [vmem:[%s1 + $0x48] sm:$0xf]
  %v53 = vld [vmem:[%s1 + $0x4c] sm:$0xf]
  %v54 = vld [vmem:[%s1 + $0x50] sm:$0xf]
  %v55 = vld [vmem:[%s1 + $0x54] sm:$0xf]
  %v56 = vld [vmem:[%s1 + $0x58] sm:$0xf]
  %v57 = vld [vmem:[%s1 + $0x5c] sm:$0xf]
  %v58 = vld [vmem:[%s1 + $0x60] sm:$0xf]
  %v59 = vld [vmem:[%s1 + $0x64] sm:$0xf]
  %v60 = vld [vmem:[%s1 + $0x68] sm:$0xf]
  %v61 = vld [vmem:[%s1 + $0x6c] sm:$0xf]
  %v62 = vld [vmem:[%s1 + $0x70] sm:$0xf]
  %v63 = vld [vmem:[%s1 + $0x74] sm:$0xf]
  %v64 = vld [vmem:[%s1 + $0x78] sm:$0xf]
  %v65 = vld [vmem:[%s1 + $0x7c] sm:$0xf]
  %v82 = vunpack.c.l.b16 %v18
  %v83 = vunpack.c.h.b16 %v18
  %v84 = vunpack.c.l.b16 %v19
  %v85 = vunpack.c.h.b16 %v19
  %v86 = vunpack.c.l.b16 %v20
  %v87 = vunpack.c.h.b16 %v20
  %v88 = vunpack.c.l.b16 %v21
  %v89 = vunpack.c.h.b16 %v21
  %v90 = vunpack.c.l.b16 %v22
  %v91 = vunpack.c.h.b16 %v22
  %v92 = vunpack.c.l.b16 %v23
  %v93 = vunpack.c.h.b16 %v23
  %v94 = vunpack.c.l.b16 %v24
  %v95 = vunpack.c.h.b16 %v24
  %v96 = vunpack.c.l.b16 %v25
  %v97 = vunpack.c.h.b16 %v25
  %v98 = vunpack.c.l.b16 %v26
  %v99 = vunpack.c.h.b16 %v26
  %v100 = vunpack.c.l.b16 %v27
  %v101 = vunpack.c.h.b16 %v27
  %v102 = vunpack.c.l.b16 %v28
  %v103 = vunpack.c.h.b16 %v28
  %v104 = vunpack.c.l.b16 %v29
  %v105 = vunpack.c.h.b16 %v29
  %v106 = vunpack.c.l.b16 %v30
  %v107 = vunpack.c.h.b16 %v30
  %v108 = vunpack.c.l.b16 %v31
  %v109 = vunpack.c.h.b16 %v31
  %v110 = vunpack.c.l.b16 %v32
  %v111 = vunpack.c.h.b16 %v32
  %v112 = vunpack.c.l.b16 %v33
  %v113 = vunpack.c.h.b16 %v33
  %v114 = vpack.c.b16 %v84, %v82
  %v115 = vpack.c.b16 %v85, %v83
  %v116 = vpack.c.b16 %v88, %v86
  %v117 = vpack.c.b16 %v89, %v87
  %v118 = vpack.c.b16 %v92, %v90
  %v119 = vpack.c.b16 %v93, %v91
  %v120 = vpack.c.b16 %v96, %v94
  %v121 = vpack.c.b16 %v97, %v95
  %v122 = vpack.c.b16 %v100, %v98
  %v123 = vpack.c.b16 %v101, %v99
  %v124 = vpack.c.b16 %v104, %v102
  %v125 = vpack.c.b16 %v105, %v103
  %v126 = vpack.c.b16 %v108, %v106
  %v127 = vpack.c.b16 %v109, %v107
  %v128 = vpack.c.b16 %v112, %v110
  %v129 = vpack.c.b16 %v113, %v111
  %v178 = vunpack.c.l.b16 %v34
  %v179 = vunpack.c.l.b16 %v35
  %v180 = vunpack.c.l.b16 %v36
  %v181 = vunpack.c.l.b16 %v37
  %v182 = vunpack.c.l.b16 %v38
  %v183 = vunpack.c.l.b16 %v39
  %v184 = vunpack.c.l.b16 %v40
  %v185 = vunpack.c.l.b16 %v41
  %v186 = vunpack.c.l.b16 %v42
  %v187 = vunpack.c.l.b16 %v43
  %v188 = vunpack.c.l.b16 %v44
  %v189 = vunpack.c.l.b16 %v45
  %v190 = vunpack.c.l.b16 %v46
  %v191 = vunpack.c.l.b16 %v47
  %v192 = vunpack.c.l.b16 %v48
  %v193 = vunpack.c.l.b16 %v49
  %v194 = vunpack.c.l.b16 %v50
  %v195 = vunpack.c.l.b16 %v51
  %v196 = vunpack.c.l.b16 %v52
  %v197 = vunpack.c.l.b16 %v53
  %v198 = vunpack.c.l.b16 %v54
  %v199 = vunpack.c.l.b16 %v55
  %v200 = vunpack.c.l.b16 %v56
  %v201 = vunpack.c.l.b16 %v57
  %v202 = vunpack.c.l.b16 %v58
  %v203 = vunpack.c.l.b16 %v59
  %v204 = vunpack.c.l.b16 %v60
  %v205 = vunpack.c.l.b16 %v61
  %v206 = vunpack.c.l.b16 %v62
  %v207 = vunpack.c.l.b16 %v63
  %v208 = vunpack.c.l.b16 %v64
  %v209 = vunpack.c.l.b16 %v65
  %v210 = vpack.c.b16 %v179, %v178
  %v211 = vpack.c.b16 %v181, %v180
  %v212 = vpack.c.b16 %v183, %v182
  %v213 = vpack.c.b16 %v185, %v184
  %v214 = vpack.c.b16 %v187, %v186
  %v215 = vpack.c.b16 %v189, %v188
  %v216 = vpack.c.b16 %v191, %v190
  %v217 = vpack.c.b16 %v193, %v192
  %v218 = vpack.c.b16 %v195, %v194
  %v219 = vpack.c.b16 %v197, %v196
  %v220 = vpack.c.b16 %v199, %v198
  %v221 = vpack.c.b16 %v201, %v200
  %v222 = vpack.c.b16 %v203, %v202
  %v223 = vpack.c.b16 %v205, %v204
  %v224 = vpack.c.b16 %v207, %v206
  %v225 = vpack.c.b16 %v209, %v208
  %242 = vmatprep.subr.bf16.mxu0 0
  %243 = vmatpush1.bf16.msra.mxu0 %v210
  %244 = vmatprep.subr.bf16.mxu0 0
  %245 = vmatpush1.bf16.msra.mxu0 %v211
  %246 = vmatprep.subr.bf16.mxu0 0
  %247 = vmatpush1.bf16.msra.mxu0 %v212
  %248 = vmatprep.subr.bf16.mxu0 0
  %249 = vmatpush1.bf16.msra.mxu0 %v213
  %250 = vmatprep.subr.bf16.mxu0 0
  %251 = vmatpush1.bf16.msra.mxu0 %v214
  %252 = vmatprep.subr.bf16.mxu0 0
  %253 = vmatpush1.bf16.msra.mxu0 %v215
  %254 = vmatprep.subr.bf16.mxu0 0
  %255 = vmatpush1.bf16.msra.mxu0 %v216
  %256 = vmatprep.subr.bf16.mxu0 0
  %257 = vmatpush1.bf16.msra.mxu0 %v217
  %258 = vmatprep.subr.bf16.mxu0 0
  %259 = vmatpush1.bf16.msra.mxu0 %v218
  %260 = vmatprep.subr.bf16.mxu0 0
  %261 = vmatpush1.bf16.msra.mxu0 %v219
  %262 = vmatprep.subr.bf16.mxu0 0
  %263 = vmatpush1.bf16.msra.mxu0 %v220
  %264 = vmatprep.subr.bf16.mxu0 0
  %265 = vmatpush1.bf16.msra.mxu0 %v221
  %266 = vmatprep.subr.bf16.mxu0 0
  %267 = vmatpush1.bf16.msra.mxu0 %v222
  %268 = vmatprep.subr.bf16.mxu0 0
  %269 = vmatpush1.bf16.msra.mxu0 %v223
  %270 = vmatprep.subr.bf16.mxu0 0
  %271 = vmatpush1.bf16.msra.mxu0 %v224
  %272 = vmatprep.subr.bf16.mxu0 0
  %273 = vmatpush1.bf16.msra.mxu0 %v225
  %274 = vmatprep.mubr.bf16.mxu0 %v115
  %275 = vmatmul.mubr.bf16.gmra.mrb[0].mxu0 %v114
  %v276 = vpop.f32.mrb[0].mxu0
  %v277 = vadd.f32 0.0, %v276
  %v278 = vpop.f32.mrb[0].mxu0
  %v279 = vpop.f32.mrb[0].mxu0
  %v280 = vadd.f32 0.0, %v279
  %v281 = vpop.f32.mrb[0].mxu0
  %282 = vmatprep.mubr.bf16.mxu0 %v117
  %283 = vmatmul.mubr.bf16.gmra.mrb[0].mxu0 %v116
  %v284 = vpop.f32.mrb[0].mxu0
  %v285 = vadd.f32 0.0, %v284
  %v286 = vpop.f32.mrb[0].mxu0
  %v287 = vpop.f32.mrb[0].mxu0
  %v288 = vadd.f32 0.0, %v287
  %v289 = vpop.f32.mrb[0].mxu0
  %290 = vmatprep.mubr.bf16.mxu0 %v119
  %291 = vmatmul.mubr.bf16.gmra.mrb[0].mxu0 %v118
  %v292 = vpop.f32.mrb[0].mxu0
  %v293 = vadd.f32 0.0, %v292
  %v294 = vpop.f32.mrb[0].mxu0
  %v295 = vpop.f32.mrb[0].mxu0
  %v296 = vadd.f32 0.0, %v295
  %v297 = vpop.f32.mrb[0].mxu0
  %298 = vmatprep.mubr.bf16.mxu0 %v121
  %299 = vmatmul.mubr.bf16.gmra.mrb[0].mxu0 %v120
  %v300 = vpop.f32.mrb[0].mxu0
  %v301 = vadd.f32 0.0, %v300
  %v302 = vpop.f32.mrb[0].mxu0
  %v303 = vpop.f32.mrb[0].mxu0
  %v304 = vadd.f32 0.0, %v303
  %v305 = vpop.f32.mrb[0].mxu0
  %306 = vmatprep.mubr.bf16.mxu0 %v123
  %307 = vmatmul.mubr.bf16.gmra.mrb[0].mxu0 %v122
  %v308 = vpop.f32.mrb[0].mxu0
  %v309 = vadd.f32 0.0, %v308
  %v310 = vpop.f32.mrb[0].mxu0
  %v311 = vpop.f32.mrb[0].mxu0
  %v312 = vadd.f32 0.0, %v311
  %v313 = vpop.f32.mrb[0].mxu0
  %314 = vmatprep.mubr.bf16.mxu0 %v125
  %315 = vmatmul.mubr.bf16.gmra.mrb[0].mxu0 %v124
  %v316 = vpop.f32.mrb[0].mxu0
  %v317 = vadd.f32 0.0, %v316
  %v318 = vpop.f32.mrb[0].mxu0
  %v319 = vpop.f32.mrb[0].mxu0
  %v320 = vadd.f32 0.0, %v319
  %v321 = vpop.f32.mrb[0].mxu0
  %322 = vmatprep.mubr.bf16.mxu0 %v127
  %323 = vmatmul.mubr.bf16.gmra.mrb[0].mxu0 %v126
  %v324 = vpop.f32.mrb[0].mxu0
  %v325 = vadd.f32 0.0, %v324
  %v326 = vpop.f32.mrb[0].mxu0
  %v327 = vpop.f32.mrb[0].mxu0
  %v328 = vadd.f32 0.0, %v327
  %v329 = vpop.f32.mrb[0].mxu0
  %330 = vmatprep.mubr.bf16.mxu0 %v129
  %331 = vmatmul.mubr.bf16.gmra.mrb[0].mxu0 %v128
  %v332 = vpop.f32.mrb[0].mxu0
  %v333 = vadd.f32 0.0, %v332
  %v334 = vpop.f32.mrb[0].mxu0
  %v335 = vpop.f32.mrb[0].mxu0
  %v336 = vadd.f32 0.0, %v335
  %v337 = vpop.f32.mrb[0].mxu0
  %338 = vdwg.mxu0
  %vm339 = vcmask 261120
  %v340 = vsel %vm339, %v277, 0.0
  %v341 = vsel %vm339, %v280, 0.0
  %v342 = vadd.f32 %v340, %v341
  %v343 = vsel %vm339, %v285, 0.0
  %v344 = vadd.f32 %v342, %v343
  %v345 = vsel %vm339, %v288, 0.0
  %v346 = vadd.f32 %v344, %v345
  %v347 = vsel %vm339, %v293, 0.0
  %v348 = vadd.f32 %v346, %v347
  %v349 = vsel %vm339, %v296, 0.0
  %v350 = vadd.f32 %v348, %v349
  %v351 = vsel %vm339, %v301, 0.0
  %v352 = vadd.f32 %v350, %v351
  %v353 = vsel %vm339, %v304, 0.0
  %v354 = vadd.f32 %v352, %v353
  %v355 = vsel %vm339, %v309, 0.0
  %v356 = vadd.f32 %v354, %v355
  %v357 = vsel %vm339, %v312, 0.0
  %v358 = vadd.f32 %v356, %v357
  %v359 = vsel %vm339, %v317, 0.0
  %v360 = vadd.f32 %v358, %v359
  %v361 = vsel %vm339, %v320, 0.0
  %v362 = vadd.f32 %v360, %v361
  %v363 = vsel %vm339, %v325, 0.0
  %v364 = vadd.f32 %v362, %v363
  %v365 = vsel %vm339, %v328, 0.0
  %v366 = vadd.f32 %v364, %v365
  %v367 = vsel %vm339, %v333, 0.0
  %v368 = vadd.f32 %v366, %v367
  %v369 = vsel %vm339, %v336, 0.0
  %v370 = vadd.f32 %v368, %v369
  %v371 = vrot.slane %v370, 4
  %v372 = vadd.f32 %v370, %v371
  %v373 = vrot.slane %v372, 2
  %v374 = vadd.f32 %v372, %v373
  %v375 = vrot.slane %v374, 1
  %v376 = vadd.f32 %v374, %v375
  %v377 = vmul.f32 %v376, 0.0078125
  %v378 = vmul.f32 %v277, %v277
  %v379 = vmul.f32 %v280, %v280
  %v380 = vmul.f32 %v285, %v285
  %v381 = vmul.f32 %v288, %v288
  %v382 = vmul.f32 %v293, %v293
  %v383 = vmul.f32 %v296, %v296
  %v384 = vmul.f32 %v301, %v301
  %v385 = vmul.f32 %v304, %v304
  %v386 = vmul.f32 %v309, %v309
  %v387 = vmul.f32 %v312, %v312
  %v388 = vmul.f32 %v317, %v317
  %v389 = vmul.f32 %v320, %v320
  %v390 = vmul.f32 %v325, %v325
  %v391 = vmul.f32 %v328, %v328
  %v392 = vmul.f32 %v333, %v333
  %v393 = vmul.f32 %v336, %v336
  %v394 = vsel %vm339, %v378, 0.0
  %v395 = vsel %vm339, %v379, 0.0
  %v396 = vadd.f32 %v394, %v395
  %v397 = vsel %vm339, %v380, 0.0
  %v398 = vadd.f32 %v396, %v397
  %v399 = vsel %vm339, %v381, 0.0
  %v400 = vadd.f32 %v398, %v399
  %v401 = vsel %vm339, %v382, 0.0
  %v402 = vadd.f32 %v400, %v401
  %v403 = vsel %vm339, %v383, 0.0
  %v404 = vadd.f32 %v402, %v403
  %v405 = vsel %vm339, %v384, 0.0
  %v406 = vadd.f32 %v404, %v405
  %v407 = vsel %vm339, %v385, 0.0
  %v408 = vadd.f32 %v406, %v407
  %v409 = vsel %vm339, %v386, 0.0
  %v410 = vadd.f32 %v408, %v409
  %v411 = vsel %vm339, %v387, 0.0
  %v412 = vadd.f32 %v410, %v411
  %v413 = vsel %vm339, %v388, 0.0
  %v414 = vadd.f32 %v412, %v413
  %v415 = vsel %vm339, %v389, 0.0
  %v416 = vadd.f32 %v414, %v415
  %v417 = vsel %vm339, %v390, 0.0
  %v418 = vadd.f32 %v416, %v417
  %v419 = vsel %vm339, %v391, 0.0
  %v420 = vadd.f32 %v418, %v419
  %v421 = vsel %vm339, %v392, 0.0
  %v422 = vadd.f32 %v420, %v421
  %v423 = vsel %vm339, %v393, 0.0
  %v424 = vadd.f32 %v422, %v423
  %v425 = vrot.slane %v424, 4
  %v426 = vadd.f32 %v424, %v425
  %v427 = vrot.slane %v426, 2
  %v428 = vadd.f32 %v426, %v427
  %v429 = vrot.slane %v428, 1
  %v430 = vadd.f32 %v428, %v429
  %v431 = vmul.f32 %v430, 0.0078125
  %v432 = vmul.f32 %v377, %v377
  %v433 = vsub.f32 %v431, %v432
  %v434 = vmax.f32 %v433, 0.0
  %v435 = vadd.f32 %v434, 1e-05
  %v436 = vrsqrt.pop %v435
  %v437 = vld [vmem:[%s2] sm:$0x1]
  %v438 = vmul.f32 %v437, %v436
  %v439 = vld [vmem:[%s3] sm:$0x1]
  %v440 = vmul.f32 %v377, %v438
  %v441 = vsub.f32 %v439, %v440
  %v443 = vlaneseq
  %v444 = vshrl.u32 %v443, 7
  %v445 = vsub.s32 0, %v444
  %v446 = vrot.slane %v438, %v445
  %v448 = vmul.f32 %v277, %v446
  %v449 = vmul.f32 %v280, %v446
  %v450 = vmul.f32 %v285, %v446
  %v451 = vmul.f32 %v288, %v446
  %v452 = vmul.f32 %v293, %v446
  %v453 = vmul.f32 %v296, %v446
  %v454 = vmul.f32 %v301, %v446
  %v455 = vmul.f32 %v304, %v446
  %v456 = vmul.f32 %v309, %v446
  %v457 = vmul.f32 %v312, %v446
  %v458 = vmul.f32 %v317, %v446
  %v459 = vmul.f32 %v320, %v446
  %v460 = vmul.f32 %v325, %v446
  %v461 = vmul.f32 %v328, %v446
  %v462 = vmul.f32 %v333, %v446
  %v463 = vmul.f32 %v336, %v446
  %v465 = vlaneseq
  %v466 = vshrl.u32 %v465, 7
  %v467 = vsub.s32 0, %v466
  %v468 = vrot.slane %v441, %v467
  %v470 = vadd.f32 %v448, %v468
  %v471 = vadd.f32 %v449, %v468
  %v472 = vadd.f32 %v450, %v468
  %v473 = vadd.f32 %v451, %v468
  %v474 = vadd.f32 %v452, %v468
  %v475 = vadd.f32 %v453, %v468
  %v476 = vadd.f32 %v454, %v468
  %v477 = vadd.f32 %v455, %v468
  %v478 = vadd.f32 %v456, %v468
  %v479 = vadd.f32 %v457, %v468
  %v480 = vadd.f32 %v458, %v468
  %v481 = vadd.f32 %v459, %v468
  %v482 = vadd.f32 %v460, %v468
  %v483 = vadd.f32 %v461, %v468
  %v484 = vadd.f32 %v462, %v468
  %v485 = vadd.f32 %v463, %v468
  %vm486 = vcmp.ge.f32.partialorder %v470, 0.0
  %vm487 = vcmp.ge.f32.partialorder %v471, 0.0
  %vm488 = vcmp.ge.f32.partialorder %v472, 0.0
  %vm489 = vcmp.ge.f32.partialorder %v473, 0.0
  %vm490 = vcmp.ge.f32.partialorder %v474, 0.0
  %vm491 = vcmp.ge.f32.partialorder %v475, 0.0
  %vm492 = vcmp.ge.f32.partialorder %v476, 0.0
  %vm493 = vcmp.ge.f32.partialorder %v477, 0.0
  %vm494 = vcmp.ge.f32.partialorder %v478, 0.0
  %vm495 = vcmp.ge.f32.partialorder %v479, 0.0
  %vm496 = vcmp.ge.f32.partialorder %v480, 0.0
  %vm497 = vcmp.ge.f32.partialorder %v481, 0.0
  %vm498 = vcmp.ge.f32.partialorder %v482, 0.0
  %vm499 = vcmp.ge.f32.partialorder %v483, 0.0
  %vm500 = vcmp.ge.f32.partialorder %v484, 0.0
  %vm501 = vcmp.ge.f32.partialorder %v485, 0.0
  %v502 = vmul.f32 %v470, 0.2
  %v503 = vmul.f32 %v471, 0.2
  %v504 = vmul.f32 %v472, 0.2
  %v505 = vmul.f32 %v473, 0.2
  %v506 = vmul.f32 %v474, 0.2
  %v507 = vmul.f32 %v475, 0.2
  %v508 = vmul.f32 %v476, 0.2
  %v509 = vmul.f32 %v477, 0.2
  %v510 = vmul.f32 %v478, 0.2
  %v511 = vmul.f32 %v479, 0.2
  %v512 = vmul.f32 %v480, 0.2
  %v513 = vmul.f32 %v481, 0.2
  %v514 = vmul.f32 %v482, 0.2
  %v515 = vmul.f32 %v483, 0.2
  %v516 = vmul.f32 %v484, 0.2
  %v517 = vmul.f32 %v485, 0.2
  %v518 = vsel %vm486, %v470, %v502
  %v519 = vsel %vm487, %v471, %v503
  %v520 = vsel %vm488, %v472, %v504
  %v521 = vsel %vm489, %v473, %v505
  %v522 = vsel %vm490, %v474, %v506
  %v523 = vsel %vm491, %v475, %v507
  %v524 = vsel %vm492, %v476, %v508
  %v525 = vsel %vm493, %v477, %v509
  %v526 = vsel %vm494, %v478, %v510
  %v527 = vsel %vm495, %v479, %v511
  %v528 = vsel %vm496, %v480, %v512
  %v529 = vsel %vm497, %v481, %v513
  %v530 = vsel %vm498, %v482, %v514
  %v531 = vsel %vm499, %v483, %v515
  %v532 = vsel %vm500, %v484, %v516
  %v533 = vsel %vm501, %v485, %v517
  %v534 = vpack.c.bf16 %v519, %v518
  %v535 = vpack.c.bf16 %v521, %v520
  %v536 = vpack.c.bf16 %v523, %v522
  %v537 = vpack.c.bf16 %v525, %v524
  %v538 = vpack.c.bf16 %v527, %v526
  %v539 = vpack.c.bf16 %v529, %v528
  %v540 = vpack.c.bf16 %v531, %v530
  %v541 = vpack.c.bf16 %v533, %v532
  %v550 = vunpack.c.l.b16 %v534
  %v551 = vunpack.c.h.b16 %v534
  %v552 = vunpack.c.l.b16 %v535
  %v553 = vunpack.c.h.b16 %v535
  %v554 = vunpack.c.l.b16 %v536
  %v555 = vunpack.c.h.b16 %v536
  %v556 = vunpack.c.l.b16 %v537
  %v557 = vunpack.c.h.b16 %v537
  %v558 = vunpack.c.l.b16 %v538
  %v559 = vunpack.c.h.b16 %v538
  %v560 = vunpack.c.l.b16 %v539
  %v561 = vunpack.c.h.b16 %v539
  %v562 = vunpack.c.l.b16 %v540
  %v563 = vunpack.c.h.b16 %v540
  %v564 = vunpack.c.l.b16 %v541
  %v565 = vunpack.c.h.b16 %v541
  %v566 = vpack.c.b16 %v550, %v550
  %v567 = vpack.c.b16 %v551, %v551
  %v568 = vpack.c.b16 %v552, %v552
  %v569 = vpack.c.b16 %v553, %v553
  %v570 = vpack.c.b16 %v554, %v554
  %v571 = vpack.c.b16 %v555, %v555
  %v572 = vpack.c.b16 %v556, %v556
  %v573 = vpack.c.b16 %v557, %v557
  %v574 = vpack.c.b16 %v558, %v558
  %v575 = vpack.c.b16 %v559, %v559
  %v576 = vpack.c.b16 %v560, %v560
  %v577 = vpack.c.b16 %v561, %v561
  %v578 = vpack.c.b16 %v562, %v562
  %v579 = vpack.c.b16 %v563, %v563
  %v580 = vpack.c.b16 %v564, %v564
  %v581 = vpack.c.b16 %v565, %v565
  %vm598 = vcmask 257024
  %599 = vst.msk [vmem:[%s4] sm:$0xf] %vm598, %v566
  %600 = vst.msk [vmem:[%s4 + $0x4] sm:$0xf] %vm598, %v567
  %601 = vst.msk [vmem:[%s4 + $0x8] sm:$0xf] %vm598, %v568
  %602 = vst.msk [vmem:[%s4 + $0xc] sm:$0xf] %vm598, %v569
  %603 = vst.msk [vmem:[%s4 + $0x10] sm:$0xf] %vm598, %v570
  %604 = vst.msk [vmem:[%s4 + $0x14] sm:$0xf] %vm598, %v571
  %605 = vst.msk [vmem:[%s4 + $0x18] sm:$0xf] %vm598, %v572
  %606 = vst.msk [vmem:[%s4 + $0x1c] sm:$0xf] %vm598, %v573
  %607 = vst.msk [vmem:[%s4 + $0x20] sm:$0xf] %vm598, %v574
  %608 = vst.msk [vmem:[%s4 + $0x24] sm:$0xf] %vm598, %v575
  %609 = vst.msk [vmem:[%s4 + $0x28] sm:$0xf] %vm598, %v576
  %610 = vst.msk [vmem:[%s4 + $0x2c] sm:$0xf] %vm598, %v577
  %611 = vst.msk [vmem:[%s4 + $0x30] sm:$0xf] %vm598, %v578
  %612 = vst.msk [vmem:[%s4 + $0x34] sm:$0xf] %vm598, %v579
  %613 = vst.msk [vmem:[%s4 + $0x38] sm:$0xf] %vm598, %v580
  %614 = vst.msk [vmem:[%s4 + $0x3c] sm:$0xf] %vm598, %v581
  // Predicated region
  $region18: #{vgg_discriminator.15} parent=0 // pred_check
    _
  $region19: #{vgg_discriminator.15} parent=0 // pred_check_branch
    %616 = sbr.rel (0) target = $region21
  $region20: #{vgg_discriminator.15} parent=0 // pred_region
    _
  $region21: #{vgg_discriminator.15} parent=0 // pred_fallthru
    _
  // Predicated region
  $region22: #{vgg_discriminator.15} parent=0 // pred_check
    _
  $region23: #{vgg_discriminator.15} parent=0 // pred_check_branch
    %618 = sbr.rel (0) target = $region25
  $region24: #{vgg_discriminator.15} parent=0 // pred_region
    _
  $region25: #{vgg_discriminator.15} parent=0 // pred_fallthru
    _

// kernel: vgg_discriminator.16
$region0: #{vgg_discriminator.16}
  #allocation0 [shape = 'u32[]', space=smem, size = 0x4, offset = 0x4, fixed_abs, tag = 'smem constant byte address 0x4 - core index']
  #allocation1 [shape = 'u32[144,128]{1,0:T(1,128)}', space=vmem, size = 0x12000, scoped, tag = 'internal scratch']
  %s0 = inlined_call_operand.vmem [shape: bf16[32,512], index: 0, kind: input, shape index: {}]
  %s1 = inlined_call_operand.vmem [shape: bf16[512,32], index: 1, kind: input, shape index: {}]
  %s2 = inlined_call_operand.vmem [shape: f32[1,32], index: 2, kind: input, shape index: {}]
  %s3 = inlined_call_operand.vmem [shape: f32[1,32], index: 3, kind: input, shape index: {}]
  %s4 = inlined_call_operand.vmem [shape: bf16[32,32], index: 4, kind: output, shape index: {}]
  %s5 = sld [smem:[#allocation0]]
  $region26: #{vgg_discriminator.16} parent=0
    _
  %s7 = ssub.s32 1, %s5
  %s8 = scalar_select 0, %s7, %s5
  // Predicated region
  $region2: #{vgg_discriminator.16} parent=0 // pred_check
    _
  $region3: #{vgg_discriminator.16} parent=0 // pred_check_branch
    %10 = sbr.rel (0) target = $region5
  $region4: #{vgg_discriminator.16} parent=0 // pred_region
    _
  $region5: #{vgg_discriminator.16} parent=0 // pred_fallthru
    _
  // Predicated region
  $region6: #{vgg_discriminator.16} parent=0 // pred_check
    _
  $region7: #{vgg_discriminator.16} parent=0 // pred_check_branch
    %12 = sbr.rel (0) target = $region9
  $region8: #{vgg_discriminator.16} parent=0 // pred_region
    _
  $region9: #{vgg_discriminator.16} parent=0 // pred_fallthru
    _
  // Predicated region
  $region10: #{vgg_discriminator.16} parent=0 // pred_check
    _
  $region11: #{vgg_discriminator.16} parent=0 // pred_check_branch
    %14 = sbr.rel (0) target = $region13
  $region12: #{vgg_discriminator.16} parent=0 // pred_region
    _
  $region13: #{vgg_discriminator.16} parent=0 // pred_fallthru
    _
  // Predicated region
  $region14: #{vgg_discriminator.16} parent=0 // pred_check
    _
  $region15: #{vgg_discriminator.16} parent=0 // pred_check_branch
    %16 = sbr.rel (0) target = $region17
  $region16: #{vgg_discriminator.16} parent=0 // pred_region
    _
  $region17: #{vgg_discriminator.16} parent=0 // pred_fallthru
    _
  %v18 = vld [vmem:[%s0] sm:$0xff]
  %v19 = vld [vmem:[%s0 + $0x8] sm:$0xff]
  %v20 = vld [vmem:[%s0 + $0x10] sm:$0xff]
  %v21 = vld [vmem:[%s0 + $0x18] sm:$0xff]
  %v22 = vld [vmem:[%s0 + $0x20] sm:$0xff]
  %v23 = vld [vmem:[%s0 + $0x28] sm:$0xff]
  %v24 = vld [vmem:[%s0 + $0x30] sm:$0xff]
  %v25 = vld [vmem:[%s0 + $0x38] sm:$0xff]
  %v26 = vld [vmem:[%s1] sm:$0xf]
  %v27 = vld [vmem:[%s1 + $0x4] sm:$0xf]
  %v28 = vld [vmem:[%s1 + $0x8] sm:$0xf]
  %v29 = vld [vmem:[%s1 + $0xc] sm:$0xf]
  %v30 = vld [vmem:[%s1 + $0x10] sm:$0xf]
  %v31 = vld [vmem:[%s1 + $0x14] sm:$0xf]
  %v32 = vld [vmem:[%s1 + $0x18] sm:$0xf]
  %v33 = vld [vmem:[%s1 + $0x1c] sm:$0xf]
  %v34 = vld [vmem:[%s1 + $0x20] sm:$0xf]
  %v35 = vld [vmem:[%s1 + $0x24] sm:$0xf]
  %v36 = vld [vmem:[%s1 + $0x28] sm:$0xf]
  %v37 = vld [vmem:[%s1 + $0x2c] sm:$0xf]
  %v38 = vld [vmem:[%s1 + $0x30] sm:$0xf]
  %v39 = vld [vmem:[%s1 + $0x34] sm:$0xf]
  %v40 = vld [vmem:[%s1 + $0x38] sm:$0xf]
  %v41 = vld [vmem:[%s1 + $0x3c] sm:$0xf]
  %v42 = vld [vmem:[%s1 + $0x40] sm:$0xf]
  %v43 = vld [vmem:[%s1 + $0x44] sm:$0xf]
  %v44 = vld [vmem:[%s1 + $0x48] sm:$0xf]
  %v45 = vld [vmem:[%s1 + $0x4c] sm:$0xf]
  %v46 = vld [vmem:[%s1 + $0x50] sm:$0xf]
  %v47 = vld [vmem:[%s1 + $0x54] sm:$0xf]
  %v48 = vld [vmem:[%s1 + $0x58] sm:$0xf]
  %v49 = vld [vmem:[%s1 + $0x5c] sm:$0xf]
  %v50 = vld [vmem:[%s1 + $0x60] sm:$0xf]
  %v51 = vld [vmem:[%s1 + $0x64] sm:$0xf]
  %v52 = vld [vmem:[%s1 + $0x68] sm:$0xf]
  %v53 = vld [vmem:[%s1 + $0x6c] sm:$0xf]
  %v54 = vld [vmem:[%s1 + $0x70] sm:$0xf]
  %v55 = vld [vmem:[%s1 + $0x74] sm:$0xf]
  %v56 = vld [vmem:[%s1 + $0x78] sm:$0xf]
  %v57 = vld [vmem:[%s1 + $0x7c] sm:$0xf]
  %v58 = vld [vmem:[%s1 + $0x80] sm:$0xf]
  %v59 = vld [vmem:[%s1 + $0x84] sm:$0xf]
  %v60 = vld [vmem:[%s1 + $0x88] sm:$0xf]
  %v61 = vld [vmem:[%s1 + $0x8c] sm:$0xf]
  %v62 = vld [vmem:[%s1 + $0x90] sm:$0xf]
  %v63 = vld [vmem:[%s1 + $0x94] sm:$0xf]
  %v64 = vld [vmem:[%s1 + $0x98] sm:$0xf]
  %v65 = vld [vmem:[%s1 + $0x9c] sm:$0xf]
  %v66 = vld [vmem:[%s1 + $0xa0] sm:$0xf]
  %v67 = vld [vmem:[%s1 + $0xa4] sm:$0xf]
  %v68 = vld [vmem:[%s1 + $0xa8] sm:$0xf]
  %v69 = vld [vmem:[%s1 + $0xac] sm:$0xf]
  %v70 = vld [vmem:[%s1 + $0xb0] sm:$0xf]
  %v71 = vld [vmem:[%s1 + $0xb4] sm:$0xf]
  %v72 = vld [vmem:[%s1 + $0xb8] sm:$0xf]
  %v73 = vld [vmem:[%s1 + $0xbc] sm:$0xf]
  %v74 = vld [vmem:[%s1 + $0xc0] sm:$0xf]
  %v75 = vld [vmem:[%s1 + $0xc4] sm:$0xf]
  %v76 = vld [vmem:[%s1 + $0xc8] sm:$0xf]
  %v77 = vld [vmem:[%s1 + $0xcc] sm:$0xf]
  %v78 = vld [vmem:[%s1 + $0xd0] sm:$0xf]
  %v79 = vld [vmem:[%s1 + $0xd4] sm:$0xf]
  %v80 = vld [vmem:[%s1 + $0xd8] sm:$0xf]
  %v81 = vld [vmem:[%s1 + $0xdc] sm:$0xf]
  %v82 = vld [vmem:[%s1 + $0xe0] sm:$0xf]
  %v83 = vld [vmem:[%s1 + $0xe4] sm:$0xf]
  %v84 = vld [vmem:[%s1 + $0xe8] sm:$0xf]
  %v85 = vld [vmem:[%s1 + $0xec] sm:$0xf]
  %v86 = vld [vmem:[%s1 + $0xf0] sm:$0xf]
  %v87 = vld [vmem:[%s1 + $0xf4] sm:$0xf]
  %v88 = vld [vmem:[%s1 + $0xf8] sm:$0xf]
  %v89 = vld [vmem:[%s1 + $0xfc] sm:$0xf]
  %v98 = vunpack.c.l.b16 %v18
  %v99 = vunpack.c.h.b16 %v18
  %v100 = vunpack.c.l.b16 %v19
  %v101 = vunpack.c.h.b16 %v19
  %v102 = vunpack.c.l.b16 %v20
  %v103 = vunpack.c.h.b16 %v20
  %v104 = vunpack.c.l.b16 %v21
  %v105 = vunpack.c.h.b16 %v21
  %v106 = vunpack.c.l.b16 %v22
  %v107 = vunpack.c.h.b16 %v22
  %v108 = vunpack.c.l.b16 %v23
  %v109 = vunpack.c.h.b16 %v23
  %v110 = vunpack.c.l.b16 %v24
  %v111 = vunpack.c.h.b16 %v24
  %v112 = vunpack.c.l.b16 %v25
  %v113 = vunpack.c.h.b16 %v25
  %v114 = vpack.c.b16 %v102, %v98
  %v115 = vpack.c.b16 %v103, %v99
  %v116 = vpack.c.b16 %v104, %v100
  %v117 = vpack.c.b16 %v105, %v101
  %v118 = vpack.c.b16 %v110, %v106
  %v119 = vpack.c.b16 %v111, %v107
  %v120 = vpack.c.b16 %v112, %v108
  %v121 = vpack.c.b16 %v113, %v109
  %v194 = vunpack.c.l.b16 %v26
  %v195 = vunpack.c.l.b16 %v27
  %v196 = vunpack.c.l.b16 %v28
  %v197 = vunpack.c.l.b16 %v29
  %v198 = vunpack.c.l.b16 %v30
  %v199 = vunpack.c.l.b16 %v31
  %v200 = vunpack.c.l.b16 %v32
  %v201 = vunpack.c.l.b16 %v33
  %v202 = vunpack.c.l.b16 %v34
  %v203 = vunpack.c.l.b16 %v35
  %v204 = vunpack.c.l.b16 %v36
  %v205 = vunpack.c.l.b16 %v37
  %v206 = vunpack.c.l.b16 %v38
  %v207 = vunpack.c.l.b16 %v39
  %v208 = vunpack.c.l.b16 %v40
  %v209 = vunpack.c.l.b16 %v41
  %v210 = vunpack.c.l.b16 %v42
  %v211 = vunpack.c.l.b16 %v43
  %v212 = vunpack.c.l.b16 %v44
  %v213 = vunpack.c.l.b16 %v45
  %v214 = vunpack.c.l.b16 %v46
  %v215 = vunpack.c.l.b16 %v47
  %v216 = vunpack.c.l.b16 %v48
  %v217 = vunpack.c.l.b16 %v49
  %v218 = vunpack.c.l.b16 %v50
  %v219 = vunpack.c.l.b16 %v51
  %v220 = vunpack.c.l.b16 %v52
  %v221 = vunpack.c.l.b16 %v53
  %v222 = vunpack.c.l.b16 %v54
  %v223 = vunpack.c.l.b16 %v55
  %v224 = vunpack.c.l.b16 %v56
  %v225 = vunpack.c.l.b16 %v57
  %v226 = vunpack.c.l.b16 %v58
  %v227 = vunpack.c.l.b16 %v59
  %v228 = vunpack.c.l.b16 %v60
  %v229 = vunpack.c.l.b16 %v61
  %v230 = vunpack.c.l.b16 %v62
  %v231 = vunpack.c.l.b16 %v63
  %v232 = vunpack.c.l.b16 %v64
  %v233 = vunpack.c.l.b16 %v65
  %v234 = vunpack.c.l.b16 %v66
  %v235 = vunpack.c.l.b16 %v67
  %v236 = vunpack.c.l.b16 %v68
  %v237 = vunpack.c.l.b16 %v69
  %v238 = vunpack.c.l.b16 %v70
  %v239 = vunpack.c.l.b16 %v71
  %v240 = vunpack.c.l.b16 %v72
  %v241 = vunpack.c.l.b16 %v73
  %v242 = vunpack.c.l.b16 %v74
  %v243 = vunpack.c.l.b16 %v75
  %v244 = vunpack.c.l.b16 %v76
  %v245 = vunpack.c.l.b16 %v77
  %v246 = vunpack.c.l.b16 %v78
  %v247 = vunpack.c.l.b16 %v79
  %v248 = vunpack.c.l.b16 %v80
  %v249 = vunpack.c.l.b16 %v81
  %v250 = vunpack.c.l.b16 %v82
  %v251 = vunpack.c.l.b16 %v83
  %v252 = vunpack.c.l.b16 %v84
  %v253 = vunpack.c.l.b16 %v85
  %v254 = vunpack.c.l.b16 %v86
  %v255 = vunpack.c.l.b16 %v87
  %v256 = vunpack.c.l.b16 %v88
  %v257 = vunpack.c.l.b16 %v89
  %v258 = vpack.c.b16 %v195, %v194
  %v259 = vpack.c.b16 %v197, %v196
  %v260 = vpack.c.b16 %v199, %v198
  %v261 = vpack.c.b16 %v201, %v200
  %v262 = vpack.c.b16 %v203, %v202
  %v263 = vpack.c.b16 %v205, %v204
  %v264 = vpack.c.b16 %v207, %v206
  %v265 = vpack.c.b16 %v209, %v208
  %v266 = vpack.c.b16 %v211, %v210
  %v267 = vpack.c.b16 %v213, %v212
  %v268 = vpack.c.b16 %v215, %v214
  %v269 = vpack.c.b16 %v217, %v216
  %v270 = vpack.c.b16 %v219, %v218
  %v271 = vpack.c.b16 %v221, %v220
  %v272 = vpack.c.b16 %v223, %v222
  %v273 = vpack.c.b16 %v225, %v224
  %v274 = vpack.c.b16 %v227, %v226
  %v275 = vpack.c.b16 %v229, %v228
  %v276 = vpack.c.b16 %v231, %v230
  %v277 = vpack.c.b16 %v233, %v232
  %v278 = vpack.c.b16 %v235, %v234
  %v279 = vpack.c.b16 %v237, %v236
  %v280 = vpack.c.b16 %v239, %v238
  %v281 = vpack.c.b16 %v241, %v240
  %v282 = vpack.c.b16 %v243, %v242
  %v283 = vpack.c.b16 %v245, %v244
  %v284 = vpack.c.b16 %v247, %v246
  %v285 = vpack.c.b16 %v249, %v248
  %v286 = vpack.c.b16 %v251, %v250
  %v287 = vpack.c.b16 %v253, %v252
  %v288 = vpack.c.b16 %v255, %v254
  %v289 = vpack.c.b16 %v257, %v256
  %322 = vmatprep.subr.bf16.mxu0 0
  %323 = vmatpush1.bf16.msra.mxu0 %v258
  %324 = vmatprep.subr.bf16.mxu0 0
  %325 = vmatpush1.bf16.msra.mxu0 %v259
  %326 = vmatprep.subr.bf16.mxu0 0
  %327 = vmatpush1.bf16.msra.mxu0 %v260
  %328 = vmatprep.subr.bf16.mxu0 0
  %329 = vmatpush1.bf16.msra.mxu0 %v261
  %330 = vmatprep.subr.bf16.mxu0 0
  %331 = vmatpush1.bf16.msra.mxu0 %v262
  %332 = vmatprep.subr.bf16.mxu0 0
  %333 = vmatpush1.bf16.msra.mxu0 %v263
  %334 = vmatprep.subr.bf16.mxu0 0
  %335 = vmatpush1.bf16.msra.mxu0 %v264
  %336 = vmatprep.subr.bf16.mxu0 0
  %337 = vmatpush1.bf16.msra.mxu0 %v265
  %338 = vmatprep.subr.bf16.mxu0 0
  %339 = vmatpush1.bf16.msra.mxu0 %v266
  %340 = vmatprep.subr.bf16.mxu0 0
  %341 = vmatpush1.bf16.msra.mxu0 %v267
  %342 = vmatprep.subr.bf16.mxu0 0
  %343 = vmatpush1.bf16.msra.mxu0 %v268
  %344 = vmatprep.subr.bf16.mxu0 0
  %345 = vmatpush1.bf16.msra.mxu0 %v269
  %346 = vmatprep.subr.bf16.mxu0 0
  %347 = vmatpush1.bf16.msra.mxu0 %v270
  %348 = vmatprep.subr.bf16.mxu0 0
  %349 = vmatpush1.bf16.msra.mxu0 %v271
  %350 = vmatprep.subr.bf16.mxu0 0
  %351 = vmatpush1.bf16.msra.mxu0 %v272
  %352 = vmatprep.subr.bf16.mxu0 0
  %353 = vmatpush1.bf16.msra.mxu0 %v273
  %354 = vmatprep.mubr.bf16.mxu0 %v115
  %355 = vmatmul.mubr.bf16.gmra.mrb[0].mxu0 %v114
  %v356 = vpop.f32.mrb[0].mxu0
  %v357 = vadd.f32 0.0, %v356
  %v358 = vpop.f32.mrb[0].mxu0
  %v359 = vpop.f32.mrb[0].mxu0
  %v360 = vadd.f32 0.0, %v359
  %v361 = vpop.f32.mrb[0].mxu0
  %362 = vmatprep.mubr.bf16.mxu0 %v119
  %363 = vmatmul.mubr.bf16.gmra.mrb[0].mxu0 %v118
  %v364 = vpop.f32.mrb[0].mxu0
  %v365 = vadd.f32 0.0, %v364
  %v366 = vpop.f32.mrb[0].mxu0
  %v367 = vpop.f32.mrb[0].mxu0
  %v368 = vadd.f32 0.0, %v367
  %v369 = vpop.f32.mrb[0].mxu0
  %370 = vdwg.mxu0
  %371 = vmatprep.subr.bf16.mxu0 0
  %372 = vmatpush1.bf16.msra.mxu0 %v274
  %373 = vmatprep.subr.bf16.mxu0 0
  %374 = vmatpush1.bf16.msra.mxu0 %v275
  %375 = vmatprep.subr.bf16.mxu0 0
  %376 = vmatpush1.bf16.msra.mxu0 %v276
  %377 = vmatprep.subr.bf16.mxu0 0
  %378 = vmatpush1.bf16.msra.mxu0 %v277
  %379 = vmatprep.subr.bf16.mxu0 0
  %380 = vmatpush1.bf16.msra.mxu0 %v278
  %381 = vmatprep.subr.bf16.mxu0 0
  %382 = vmatpush1.bf16.msra.mxu0 %v279
  %383 = vmatprep.subr.bf16.mxu0 0
  %384 = vmatpush1.bf16.msra.mxu0 %v280
  %385 = vmatprep.subr.bf16.mxu0 0
  %386 = vmatpush1.bf16.msra.mxu0 %v281
  %387 = vmatprep.subr.bf16.mxu0 0
  %388 = vmatpush1.bf16.msra.mxu0 %v282
  %389 = vmatprep.subr.bf16.mxu0 0
  %390 = vmatpush1.bf16.msra.mxu0 %v283
  %391 = vmatprep.subr.bf16.mxu0 0
  %392 = vmatpush1.bf16.msra.mxu0 %v284
  %393 = vmatprep.subr.bf16.mxu0 0
  %394 = vmatpush1.bf16.msra.mxu0 %v285
  %395 = vmatprep.subr.bf16.mxu0 0
  %396 = vmatpush1.bf16.msra.mxu0 %v286
  %397 = vmatprep.subr.bf16.mxu0 0
  %398 = vmatpush1.bf16.msra.mxu0 %v287
  %399 = vmatprep.subr.bf16.mxu0 0
  %400 = vmatpush1.bf16.msra.mxu0 %v288
  %401 = vmatprep.subr.bf16.mxu0 0
  %402 = vmatpush1.bf16.msra.mxu0 %v289
  %403 = vmatprep.mubr.bf16.mxu0 %v117
  %404 = vmatmul.mubr.bf16.gmra.mrb[0].mxu0 %v116
  %v405 = vpop.f32.mrb[0].mxu0
  %v406 = vadd.f32 %v357, %v405
  %v407 = vpop.f32.mrb[0].mxu0
  %v408 = vpop.f32.mrb[0].mxu0
  %v409 = vadd.f32 %v360, %v408
  %v410 = vpop.f32.mrb[0].mxu0
  %411 = vmatprep.mubr.bf16.mxu0 %v121
  %412 = vmatmul.mubr.bf16.gmra.mrb[0].mxu0 %v120
  %v413 = vpop.f32.mrb[0].mxu0
  %v414 = vadd.f32 %v365, %v413
  %v415 = vpop.f32.mrb[0].mxu0
  %v416 = vpop.f32.mrb[0].mxu0
  %v417 = vadd.f32 %v368, %v416
  %v418 = vpop.f32.mrb[0].mxu0
  %419 = vdwg.mxu0
  %vm420 = vcmask 261120
  %v421 = vsel %vm420, %v406, 0.0
  %v422 = vsel %vm420, %v409, 0.0
  %v423 = vadd.f32 %v421, %v422
  %v424 = vsel %vm420, %v414, 0.0
  %v425 = vadd.f32 %v423, %v424
  %v426 = vsel %vm420, %v417, 0.0
  %v427 = vadd.f32 %v425, %v426
  %v428 = vrot.slane %v427, 4
  %v429 = vadd.f32 %v427, %v428
  %v430 = vrot.slane %v429, 2
  %v431 = vadd.f32 %v429, %v430
  %v432 = vrot.slane %v431, 1
  %v433 = vadd.f32 %v431, %v432
  %v434 = vmul.f32 %v433, 0.03125
  %v435 = vmul.f32 %v406, %v406
  %v436 = vmul.f32 %v409, %v409
  %v437 = vmul.f32 %v414, %v414
  %v438 = vmul.f32 %v417, %v417
  %v439 = vsel %vm420, %v435, 0.0
  %v440 = vsel %vm420, %v436, 0.0
  %v441 = vadd.f32 %v439, %v440
  %v442 = vsel %vm420, %v437, 0.0
  %v443 = vadd.f32 %v441, %v442
  %v444 = vsel %vm420, %v438, 0.0
  %v445 = vadd.f32 %v443, %v444
  %v446 = vrot.slane %v445, 4
  %v447 = vadd.f32 %v445, %v446
  %v448 = vrot.slane %v447, 2
  %v449 = vadd.f32 %v447, %v448
  %v450 = vrot.slane %v449, 1
  %v451 = vadd.f32 %v449, %v450
  %v452 = vmul.f32 %v451, 0.03125
  %v453 = vmul.f32 %v434, %v434
  %v454 = vsub.f32 %v452, %v453
  %v455 = vmax.f32 %v454, 0.0
  %v456 = vadd.f32 %v455, 1e-05
  %v457 = vrsqrt.pop %v456
  %v458 = vld [vmem:[%s2] sm:$0x1]
  %v459 = vmul.f32 %v458, %v457
  %v460 = vld [vmem:[%s3] sm:$0x1]
  %v461 = vmul.f32 %v434, %v459
  %v462 = vsub.f32 %v460, %v461
  %v464 = vlaneseq
  %v465 = vshrl.u32 %v464, 7
  %v466 = vsub.s32 0, %v465
  %v467 = vrot.slane %v459, %v466
  %v469 = vmul.f32 %v406, %v467
  %v470 = vmul.f32 %v409, %v467
  %v471 = vmul.f32 %v414, %v467
  %v472 = vmul.f32 %v417, %v467
  %v474 = vlaneseq
  %v475 = vshrl.u32 %v474, 7
  %v476 = vsub.s32 0, %v475
  %v477 = vrot.slane %v462, %v476
  %v479 = vadd.f32 %v469, %v477
  %v480 = vadd.f32 %v470, %v477
  %v481 = vadd.f32 %v471, %v477
  %v482 = vadd.f32 %v472, %v477
  %vm483 = vcmp.ge.f32.partialorder %v479, 0.0
  %vm484 = vcmp.ge.f32.partialorder %v480, 0.0
  %vm485 = vcmp.ge.f32.partialorder %v481, 0.0
  %vm486 = vcmp.ge.f32.partialorder %v482, 0.0
  %v487 = vmul.f32 %v479, 0.2
  %v488 = vmul.f32 %v480, 0.2
  %v489 = vmul.f32 %v481, 0.2
  %v490 = vmul.f32 %v482, 0.2
  %v491 = vsel %vm483, %v479, %v487
  %v492 = vsel %vm484, %v480, %v488
  %v493 = vsel %vm485, %v481, %v489
  %v494 = vsel %vm486, %v482, %v490
  %v495 = vpack.c.bf16 %v492, %v491
  %v496 = vpack.c.bf16 %v494, %v493
  %v499 = vunpack.c.l.b16 %v495
  %v500 = vunpack.c.h.b16 %v495
  %v501 = vunpack.c.l.b16 %v496
  %v502 = vunpack.c.h.b16 %v496
  %v503 = vpack.c.b16 %v499, %v499
  %v504 = vpack.c.b16 %v500, %v500
  %v505 = vpack.c.b16 %v501, %v501
  %v506 = vpack.c.b16 %v502, %v502
  %vm511 = vcmask 257024
  %512 = vst.msk [vmem:[%s4] sm:$0xf] %vm511, %v503
  %513 = vst.msk [vmem:[%s4 + $0x4] sm:$0xf] %vm511, %v504
  %514 = vst.msk [vmem:[%s4 + $0x8] sm:$0xf] %vm511, %v505
  %515 = vst.msk [vmem:[%s4 + $0xc] sm:$0xf] %vm511, %v506
  // Predicated region
  $region18: #{vgg_discriminator.16} parent=0 // pred_check
    _
  $region19: #{vgg_discriminator.16} parent=0 // pred_check_branch
    %517 = sbr.rel (0) target = $region21
  $region20: #{vgg_discriminator.16} parent=0 // pred_region
    _
  $region21: #{vgg_discriminator.16} parent=0 // pred_fallthru
    _
  // Predicated region
  $region22: #{vgg_discriminator.16} parent=0 // pred_check
    _
  $region23: #{vgg_discriminator.16} parent=0 // pred_check_branch
    %519 = sbr.rel (0) target = $region25
  $region24: #{vgg_discriminator.16} parent=0 // pred_region
    _
  $region25: #{vgg_discriminator.16} parent=0 // pred_fallthru
    _

// kernel: vgg_discriminator.17
$region0: #{vgg_discriminator.17}
  #allocation0 [shape = 'u32[]', space=smem, size = 0x4, offset = 0x4, fixed_abs, tag = 'smem constant byte address 0x4 - core index']
  #allocation1 [shape = 'u32[144,128]{1,0:T(1,128)}', space=vmem, size = 0x12000, scoped, tag = 'internal scratch']
  %s0 = inlined_call_operand.vmem [shape: bf16[32,384], index: 0, kind: input, shape index: {}]
  %s1 = inlined_call_operand.vmem [shape: bf16[384,64], index: 1, kind: input, shape index: {}]
  %s2 = inlined_call_operand.vmem [shape: f32[1,64], index: 2, kind: input, shape index: {}]
  %s3 = inlined_call_operand.vmem [shape: f32[1,64], index: 3, kind: input, shape index: {}]
  %s4 = inlined_call_operand.vmem [shape: bf16[32,64], index: 4, kind: output, shape index: {}]
  %s5 = sld [smem:[#allocation0]]
  $region26: #{vgg_discriminator.17} parent=0
    _
  %s7 = ssub.s32 1, %s5
  %s8 = scalar_select 0, %s7, %s5
  // Predicated region
  $region2: #{vgg_discriminator.17} parent=0 // pred_check
    _
  $region3: #{vgg_discriminator.17} parent=0 // pred_check_branch
    %10 = sbr.rel (0) target = $region5
  $region4: #{vgg_discriminator.17} parent=0 // pred_region
    _
  $region5: #{vgg_discriminator.17} parent=0 // pred_fallthru
    _
  // Predicated region
  $region6: #{vgg_discriminator.17} parent=0 // pred_check
    _
  $region7: #{vgg_discriminator.17} parent=0 // pred_check_branch
    %12 = sbr.rel (0) target = $region9
  $region8: #{vgg_discriminator.17} parent=0 // pred_region
    _
  $region9: #{vgg_discriminator.17} parent=0 // pred_fallthru
    _
  // Predicated region
  $region10: #{vgg_discriminator.17} parent=0 // pred_check
    _
  $region11: #{vgg_discriminator.17} parent=0 // pred_check_branch
    %14 = sbr.rel (0) target = $region13
  $region12: #{vgg_discriminator.17} parent=0 // pred_region
    _
  $region13: #{vgg_discriminator.17} parent=0 // pred_fallthru
    _
  // Predicated region
  $region14: #{vgg_discriminator.17} parent=0 // pred_check
    _
  $region15: #{vgg_discriminator.17} parent=0 // pred_check_branch
    %16 = sbr.rel (0) target = $region17
  $region16: #{vgg_discriminator.17} parent=0 // pred_region
    _
  $region17: #{vgg_discriminator.17} parent=0 // pred_fallthru
    _
  %v18 = vld [vmem:[%s0] sm:$0xff]
  %v19 = vld [vmem:[%s0 + $0x8] sm:$0xf]
  %v20 = vld [vmem:[%s0 + $0xc] sm:$0xff]
  %v21 = vld [vmem:[%s0 + $0x14] sm:$0xf]
  %v22 = vld [vmem:[%s0 + $0x18] sm:$0xff]
  %v23 = vld [vmem:[%s0 + $0x20] sm:$0xf]
  %v24 = vld [vmem:[%s0 + $0x24] sm:$0xff]
  %v25 = vld [vmem:[%s0 + $0x2c] sm:$0xf]
  %v26 = vld [vmem:[%s1] sm:$0xf]
  %v27 = vld [vmem:[%s1 + $0x4] sm:$0xf]
  %v28 = vld [vmem:[%s1 + $0x8] sm:$0xf]
  %v29 = vld [vmem:[%s1 + $0xc] sm:$0xf]
  %v30 = vld [vmem:[%s1 + $0x10] sm:$0xf]
  %v31 = vld [vmem:[%s1 + $0x14] sm:$0xf]
  %v32 = vld [vmem:[%s1 + $0x18] sm:$0xf]
  %v33 = vld [vmem:[%s1 + $0x1c] sm:$0xf]
  %v34 = vld [vmem:[%s1 + $0x20] sm:$0xf]
  %v35 = vld [vmem:[%s1 + $0x24] sm:$0xf]
  %v36 = vld [vmem:[%s1 + $0x28] sm:$0xf]
  %v37 = vld [vmem:[%s1 + $0x2c] sm:$0xf]
  %v38 = vld [vmem:[%s1 + $0x30] sm:$0xf]
  %v39 = vld [vmem:[%s1 + $0x34] sm:$0xf]
  %v40 = vld [vmem:[%s1 + $0x38] sm:$0xf]
  %v41 = vld [vmem:[%s1 + $0x3c] sm:$0xf]
  %v42 = vld [vmem:[%s1 + $0x40] sm:$0xf]
  %v43 = vld [vmem:[%s1 + $0x44] sm:$0xf]
  %v44 = vld [vmem:[%s1 + $0x48] sm:$0xf]
  %v45 = vld [vmem:[%s1 + $0x4c] sm:$0xf]
  %v46 = vld [vmem:[%s1 + $0x50] sm:$0xf]
  %v47 = vld [vmem:[%s1 + $0x54] sm:$0xf]
  %v48 = vld [vmem:[%s1 + $0x58] sm:$0xf]
  %v49 = vld [vmem:[%s1 + $0x5c] sm:$0xf]
  %v50 = vld [vmem:[%s1 + $0x60] sm:$0xf]
  %v51 = vld [vmem:[%s1 + $0x64] sm:$0xf]
  %v52 = vld [vmem:[%s1 + $0x68] sm:$0xf]
  %v53 = vld [vmem:[%s1 + $0x6c] sm:$0xf]
  %v54 = vld [vmem:[%s1 + $0x70] sm:$0xf]
  %v55 = vld [vmem:[%s1 + $0x74] sm:$0xf]
  %v56 = vld [vmem:[%s1 + $0x78] sm:$0xf]
  %v57 = vld [vmem:[%s1 + $0x7c] sm:$0xf]
  %v58 = vld [vmem:[%s1 + $0x80] sm:$0xf]
  %v59 = vld [vmem:[%s1 + $0x84] sm:$0xf]
  %v60 = vld [vmem:[%s1 + $0x88] sm:$0xf]
  %v61 = vld [vmem:[%s1 + $0x8c] sm:$0xf]
  %v62 = vld [vmem:[%s1 + $0x90] sm:$0xf]
  %v63 = vld [vmem:[%s1 + $0x94] sm:$0xf]
  %v64 = vld [vmem:[%s1 + $0x98] sm:$0xf]
  %v65 = vld [vmem:[%s1 + $0x9c] sm:$0xf]
  %v66 = vld [vmem:[%s1 + $0xa0] sm:$0xf]
  %v67 = vld [vmem:[%s1 + $0xa4] sm:$0xf]
  %v68 = vld [vmem:[%s1 + $0xa8] sm:$0xf]
  %v69 = vld [vmem:[%s1 + $0xac] sm:$0xf]
  %v70 = vld [vmem:[%s1 + $0xb0] sm:$0xf]
  %v71 = vld [vmem:[%s1 + $0xb4] sm:$0xf]
  %v72 = vld [vmem:[%s1 + $0xb8] sm:$0xf]
  %v73 = vld [vmem:[%s1 + $0xbc] sm:$0xf]
  %v82 = vunpack.c.l.b16 %v18
  %v83 = vunpack.c.h.b16 %v18
  %v84 = vunpack.c.l.b16 %v19
  %v85 = vunpack.c.l.b16 %v20
  %v86 = vunpack.c.h.b16 %v20
  %v87 = vunpack.c.l.b16 %v21
  %v88 = vunpack.c.l.b16 %v22
  %v89 = vunpack.c.h.b16 %v22
  %v90 = vunpack.c.l.b16 %v23
  %v91 = vunpack.c.l.b16 %v24
  %v92 = vunpack.c.h.b16 %v24
  %v93 = vunpack.c.l.b16 %v25
  %v94 = vpack.c.b16 %v85, %v82
  %v95 = vpack.c.b16 %v86, %v83
  %v96 = vpack.c.b16 %v87, %v84
  %v97 = vpack.c.b16 %v91, %v88
  %v98 = vpack.c.b16 %v92, %v89
  %v99 = vpack.c.b16 %v93, %v90
  %v154 = vunpack.c.l.b16 %v26
  %v155 = vunpack.c.l.b16 %v27
  %v156 = vunpack.c.l.b16 %v28
  %v157 = vunpack.c.l.b16 %v29
  %v158 = vunpack.c.l.b16 %v30
  %v159 = vunpack.c.l.b16 %v31
  %v160 = vunpack.c.l.b16 %v32
  %v161 = vunpack.c.l.b16 %v33
  %v162 = vunpack.c.l.b16 %v34
  %v163 = vunpack.c.l.b16 %v35
  %v164 = vunpack.c.l.b16 %v36
  %v165 = vunpack.c.l.b16 %v37
  %v166 = vunpack.c.l.b16 %v38
  %v167 = vunpack.c.l.b16 %v39
  %v168 = vunpack.c.l.b16 %v40
  %v169 = vunpack.c.l.b16 %v41
  %v170 = vunpack.c.l.b16 %v42
  %v171 = vunpack.c.l.b16 %v43
  %v172 = vunpack.c.l.b16 %v44
  %v173 = vunpack.c.l.b16 %v45
  %v174 = vunpack.c.l.b16 %v46
  %v175 = vunpack.c.l.b16 %v47
  %v176 = vunpack.c.l.b16 %v48
  %v177 = vunpack.c.l.b16 %v49
  %v178 = vunpack.c.l.b16 %v50
  %v179 = vunpack.c.l.b16 %v51
  %v180 = vunpack.c.l.b16 %v52
  %v181 = vunpack.c.l.b16 %v53
  %v182 = vunpack.c.l.b16 %v54
  %v183 = vunpack.c.l.b16 %v55
  %v184 = vunpack.c.l.b16 %v56
  %v185 = vunpack.c.l.b16 %v57
  %v186 = vunpack.c.l.b16 %v58
  %v187 = vunpack.c.l.b16 %v59
  %v188 = vunpack.c.l.b16 %v60
  %v189 = vunpack.c.l.b16 %v61
  %v190 = vunpack.c.l.b16 %v62
  %v191 = vunpack.c.l.b16 %v63
  %v192 = vunpack.c.l.b16 %v64
  %v193 = vunpack.c.l.b16 %v65
  %v194 = vunpack.c.l.b16 %v66
  %v195 = vunpack.c.l.b16 %v67
  %v196 = vunpack.c.l.b16 %v68
  %v197 = vunpack.c.l.b16 %v69
  %v198 = vunpack.c.l.b16 %v70
  %v199 = vunpack.c.l.b16 %v71
  %v200 = vunpack.c.l.b16 %v72
  %v201 = vunpack.c.l.b16 %v73
  %v202 = vpack.c.b16 %v155, %v154
  %v203 = vpack.c.b16 %v157, %v156
  %v204 = vpack.c.b16 %v159, %v158
  %v205 = vpack.c.b16 %v161, %v160
  %v206 = vpack.c.b16 %v163, %v162
  %v207 = vpack.c.b16 %v165, %v164
  %v208 = vpack.c.b16 %v167, %v166
  %v209 = vpack.c.b16 %v169, %v168
  %v210 = vpack.c.b16 %v171, %v170
  %v211 = vpack.c.b16 %v173, %v172
  %v212 = vpack.c.b16 %v175, %v174
  %v213 = vpack.c.b16 %v177, %v176
  %v214 = vpack.c.b16 %v179, %v178
  %v215 = vpack.c.b16 %v181, %v180
  %v216 = vpack.c.b16 %v183, %v182
  %v217 = vpack.c.b16 %v185, %v184
  %v218 = vpack.c.b16 %v187, %v186
  %v219 = vpack.c.b16 %v189, %v188
  %v220 = vpack.c.b16 %v191, %v190
  %v221 = vpack.c.b16 %v193, %v192
  %v222 = vpack.c.b16 %v195, %v194
  %v223 = vpack.c.b16 %v197, %v196
  %v224 = vpack.c.b16 %v199, %v198
  %v225 = vpack.c.b16 %v201, %v200
  %250 = vmatprep.subr.bf16.mxu0 0
  %251 = vmatpush1.bf16.msra.mxu0 %v202
  %252 = vmatprep.subr.bf16.mxu0 0
  %253 = vmatpush1.bf16.msra.mxu0 %v203
  %254 = vmatprep.subr.bf16.mxu0 0
  %255 = vmatpush1.bf16.msra.mxu0 %v204
  %256 = vmatprep.subr.bf16.mxu0 0
  %257 = vmatpush1.bf16.msra.mxu0 %v205
  %258 = vmatprep.subr.bf16.mxu0 0
  %259 = vmatpush1.bf16.msra.mxu0 %v206
  %260 = vmatprep.subr.bf16.mxu0 0
  %261 = vmatpush1.bf16.msra.mxu0 %v207
  %262 = vmatprep.subr.bf16.mxu0 0
  %263 = vmatpush1.bf16.msra.mxu0 %v208
  %264 = vmatprep.subr.bf16.mxu0 0
  %265 = vmatpush1.bf16.msra.mxu0 %v209
  %266 = vmatprep.subr.bf16.mxu0 0
  %267 = vmatpush1.bf16.msra.mxu0 %v210
  %268 = vmatprep.subr.bf16.mxu0 0
  %269 = vmatpush1.bf16.msra.mxu0 %v211
  %270 = vmatprep.subr.bf16.mxu0 0
  %271 = vmatpush1.bf16.msra.mxu0 %v212
  %272 = vmatprep.subr.bf16.mxu0 0
  %273 = vmatpush1.bf16.msra.mxu0 %v213
  %274 = vmatprep.subr.bf16.mxu0 0
  %275 = vmatpush1.bf16.msra.mxu0 %v214
  %276 = vmatprep.subr.bf16.mxu0 0
  %277 = vmatpush1.bf16.msra.mxu0 %v215
  %278 = vmatprep.subr.bf16.mxu0 0
  %279 = vmatpush1.bf16.msra.mxu0 %v216
  %280 = vmatprep.subr.bf16.mxu0 0
  %281 = vmatpush1.bf16.msra.mxu0 %v217
  %282 = vmatprep.mubr.bf16.mxu0 %v95
  %283 = vmatmul.mubr.bf16.gmra.mrb[0].mxu0 %v94
  %v284 = vpop.f32.mrb[0].mxu0
  %v285 = vadd.f32 0.0, %v284
  %v286 = vpop.f32.mrb[0].mxu0
  %v287 = vpop.f32.mrb[0].mxu0
  %v288 = vadd.f32 0.0, %v287
  %v289 = vpop.f32.mrb[0].mxu0
  %290 = vmatprep.mubr.bf16.mxu0 %v98
  %291 = vmatmul.mubr.bf16.gmra.mrb[0].mxu0 %v97
  %v292 = vpop.f32.mrb[0].mxu0
  %v293 = vadd.f32 0.0, %v292
  %v294 = vpop.f32.mrb[0].mxu0
  %v295 = vpop.f32.mrb[0].mxu0
  %v296 = vadd.f32 0.0, %v295
  %v297 = vpop.f32.mrb[0].mxu0
  %298 = vdwg.mxu0
  %299 = vmatprep.subr.bf16.mxu0 0
  %300 = vmatpush1.bf16.msra.mxu0 %v218
  %301 = vmatprep.subr.bf16.mxu0 0
  %302 = vmatpush1.bf16.msra.mxu0 %v219
  %303 = vmatprep.subr.bf16.mxu0 0
  %304 = vmatpush1.bf16.msra.mxu0 %v220
  %305 = vmatprep.subr.bf16.mxu0 0
  %306 = vmatpush1.bf16.msra.mxu0 %v221
  %307 = vmatprep.subr.bf16.mxu0 0
  %308 = vmatpush1.bf16.msra.mxu0 %v222
  %309 = vmatprep.subr.bf16.mxu0 0
  %310 = vmatpush1.bf16.msra.mxu0 %v223
  %311 = vmatprep.subr.bf16.mxu0 0
  %312 = vmatpush1.bf16.msra.mxu0 %v224
  %313 = vmatprep.subr.bf16.mxu0 0
  %314 = vmatpush1.bf16.msra.mxu0 %v225
  %315 = vmatprep.subr.bf16.mxu0 0
  %316 = vmatpush1.bf16.msra.mxu0 0
  %317 = vmatprep.subr.bf16.mxu0 0
  %318 = vmatpush1.bf16.msra.mxu0 0
  %319 = vmatprep.subr.bf16.mxu0 0
  %320 = vmatpush1.bf16.msra.mxu0 0
  %321 = vmatprep.subr.bf16.mxu0 0
  %322 = vmatpush1.bf16.msra.mxu0 0
  %323 = vmatprep.subr.bf16.mxu0 0
  %324 = vmatpush1.bf16.msra.mxu0 0
  %325 = vmatprep.subr.bf16.mxu0 0
  %326 = vmatpush1.bf16.msra.mxu0 0
  %327 = vmatprep.subr.bf16.mxu0 0
  %328 = vmatpush1.bf16.msra.mxu0 0
  %329 = vmatprep.subr.bf16.mxu0 0
  %330 = vmatpush1.bf16.msra.mxu0 0
  %331 = vmatprep.mubr.bf16.mxu0 0
  %332 = vmatmul.mubr.bf16.gmra.mrb[0].mxu0 %v96
  %v333 = vpop.f32.mrb[0].mxu0
  %v334 = vadd.f32 %v285, %v333
  %v335 = vpop.f32.mrb[0].mxu0
  %v336 = vpop.f32.mrb[0].mxu0
  %v337 = vadd.f32 %v288, %v336
  %v338 = vpop.f32.mrb[0].mxu0
  %339 = vmatprep.mubr.bf16.mxu0 0
  %340 = vmatmul.mubr.bf16.gmra.mrb[0].mxu0 %v99
  %v341 = vpop.f32.mrb[0].mxu0
  %v342 = vadd.f32 %v293, %v341
  %v343 = vpop.f32.mrb[0].mxu0
  %v344 = vpop.f32.mrb[0].mxu0
  %v345 = vadd.f32 %v296, %v344
  %v346 = vpop.f32.mrb[0].mxu0
  %347 = vdwg.mxu0
  %vm348 = vcmask 523264
  %v349 = vsel %vm348, %v334, 0.0
  %v350 = vsel %vm348, %v337, 0.0
  %v351 = vadd.f32 %v349, %v350
  %v352 = vsel %vm348, %v342, 0.0
  %v353 = vadd.f32 %v351, %v352
  %v354 = vsel %vm348, %v345, 0.0
  %v355 = vadd.f32 %v353, %v354
  %v356 = vrot.slane %v355, 4
  %v357 = vadd.f32 %v355, %v356
  %v358 = vrot.slane %v357, 2
  %v359 = vadd.f32 %v357, %v358
  %v360 = vrot.slane %v359, 1
  %v361 = vadd.f32 %v359, %v360
  %v362 = vmul.f32 %v361, 0.03125
  %v363 = vmul.f32 %v334, %v334
  %v364 = vmul.f32 %v337, %v337
  %v365 = vmul.f32 %v342, %v342
  %v366 = vmul.f32 %v345, %v345
  %v367 = vsel %vm348, %v363, 0.0
  %v368 = vsel %vm348, %v364, 0.0
  %v369 = vadd.f32 %v367, %v368
  %v370 = vsel %vm348, %v365, 0.0
  %v371 = vadd.f32 %v369, %v370
  %v372 = vsel %vm348, %v366, 0.0
  %v373 = vadd.f32 %v371, %v372
  %v374 = vrot.slane %v373, 4
  %v375 = vadd.f32 %v373, %v374
  %v376 = vrot.slane %v375, 2
  %v377 = vadd.f32 %v375, %v376
  %v378 = vrot.slane %v377, 1
  %v379 = vadd.f32 %v377, %v378
  %v380 = vmul.f32 %v379, 0.03125
  %v381 = vmul.f32 %v362, %v362
  %v382 = vsub.f32 %v380, %v381
  %v383 = vmax.f32 %v382, 0.0
  %v384 = vadd.f32 %v383, 1e-05
  %v385 = vrsqrt.pop %v384
  %v386 = vld [vmem:[%s2] sm:$0x1]
  %v387 = vmul.f32 %v386, %v385
  %v388 = vld [vmem:[%s3] sm:$0x1]
  %v389 = vmul.f32 %v362, %v387
  %v390 = vsub.f32 %v388, %v389
  %v392 = vlaneseq
  %v393 = vshrl.u32 %v392, 7
  %v394 = vsub.s32 0, %v393
  %v395 = vrot.slane %v387, %v394
  %v397 = vmul.f32 %v334, %v395
  %v398 = vmul.f32 %v337, %v395
  %v399 = vmul.f32 %v342, %v395
  %v400 = vmul.f32 %v345, %v395
  %v402 = vlaneseq
  %v403 = vshrl.u32 %v402, 7
  %v404 = vsub.s32 0, %v403
  %v405 = vrot.slane %v390, %v404
  %v407 = vadd.f32 %v397, %v405
  %v408 = vadd.f32 %v398, %v405
  %v409 = vadd.f32 %v399, %v405
  %v410 = vadd.f32 %v400, %v405
  %vm411 = vcmp.ge.f32.partialorder %v407, 0.0
  %vm412 = vcmp.ge.f32.partialorder %v408, 0.0
  %vm413 = vcmp.ge.f32.partialorder %v409, 0.0
  %vm414 = vcmp.ge.f32.partialorder %v410, 0.0
  %v415 = vmul.f32 %v407, 0.2
  %v416 = vmul.f32 %v408, 0.2
  %v417 = vmul.f32 %v409, 0.2
  %v418 = vmul.f32 %v410, 0.2
  %v419 = vsel %vm411, %v407, %v415
  %v420 = vsel %vm412, %v408, %v416
  %v421 = vsel %vm413, %v409, %v417
  %v422 = vsel %vm414, %v410, %v418
  %v423 = vpack.c.bf16 %v420, %v419
  %v424 = vpack.c.bf16 %v422, %v421
  %v427 = vunpack.c.l.b16 %v423
  %v428 = vunpack.c.h.b16 %v423
  %v429 = vunpack.c.l.b16 %v424
  %v430 = vunpack.c.h.b16 %v424
  %v431 = vpack.c.b16 %v427, %v427
  %v432 = vpack.c.b16 %v428, %v428
  %v433 = vpack.c.b16 %v429, %v429
  %v434 = vpack.c.b16 %v430, %v430
  %vm439 = vcmask 519168
  %440 = vst.msk [vmem:[%s4] sm:$0xf] %vm439, %v431
  %441 = vst.msk [vmem:[%s4 + $0x4] sm:$0xf] %vm439, %v432
  %442 = vst.msk [vmem:[%s4 + $0x8] sm:$0xf] %vm439, %v433
  %443 = vst.msk [vmem:[%s4 + $0xc] sm:$0xf] %vm439, %v434
  // Predicated region
  $region18: #{vgg_discriminator.17} parent=0 // pred_check
    _
  $region19: #{vgg_discriminator.17} parent=0 // pred_check_branch
    %445 = sbr.rel (0) target = $region21
  $region20: #{vgg_discriminator.17} parent=0 // pred_region
    _
  $region21: #{vgg_discriminator.17} parent=0 // pred_fallthru
    _
  // Predicated region
  $region22: #{vgg_discriminator.17} parent=0 // pred_check
    _
  $region23: #{vgg_discriminator.17} parent=0 // pred_check_branch
    %447 = sbr.rel (0) target = $region25
  $region24: #{vgg_discriminator.17} parent=0 // pred_region
    _
  $region25: #{vgg_discriminator.17} parent=0 // pred_fallthru
    _

// kernel: vgg_discriminator.18
$region0: #{vgg_discriminator.18}
  #allocation0 [shape = 'u32[]', space=smem, size = 0x4, offset = 0x4, fixed_abs, tag = 'smem constant byte address 0x4 - core index']
  #allocation1 [shape = 'u32[144,128]{1,0:T(1,128)}', space=vmem, size = 0x12000, scoped, tag = 'internal scratch']
  %s0 = inlined_call_operand.vmem [shape: bf16[8,1024], index: 0, kind: input, shape index: {}]
  %s1 = inlined_call_operand.vmem [shape: bf16[1024,64], index: 1, kind: input, shape index: {}]
  %s2 = inlined_call_operand.vmem [shape: f32[1,64], index: 2, kind: input, shape index: {}]
  %s3 = inlined_call_operand.vmem [shape: f32[1,64], index: 3, kind: input, shape index: {}]
  %s4 = inlined_call_operand.vmem [shape: bf16[8,64], index: 4, kind: output, shape index: {}]
  %s5 = sld [smem:[#allocation0]]
  $region26: #{vgg_discriminator.18} parent=0
    _
  %s7 = ssub.s32 1, %s5
  %s8 = scalar_select 0, %s7, %s5
  // Predicated region
  $region2: #{vgg_discriminator.18} parent=0 // pred_check
    _
  $region3: #{vgg_discriminator.18} parent=0 // pred_check_branch
    %10 = sbr.rel (0) target = $region5
  $region4: #{vgg_discriminator.18} parent=0 // pred_region
    _
  $region5: #{vgg_discriminator.18} parent=0 // pred_fallthru
    _
  // Predicated region
  $region6: #{vgg_discriminator.18} parent=0 // pred_check
    _
  $region7: #{vgg_discriminator.18} parent=0 // pred_check_branch
    %12 = sbr.rel (0) target = $region9
  $region8: #{vgg_discriminator.18} parent=0 // pred_region
    _
  $region9: #{vgg_discriminator.18} parent=0 // pred_fallthru
    _
  // Predicated region
  $region10: #{vgg_discriminator.18} parent=0 // pred_check
    _
  $region11: #{vgg_discriminator.18} parent=0 // pred_check_branch
    %14 = sbr.rel (0) target = $region13
  $region12: #{vgg_discriminator.18} parent=0 // pred_region
    _
  $region13: #{vgg_discriminator.18} parent=0 // pred_fallthru
    _
  // Predicated region
  $region14: #{vgg_discriminator.18} parent=0 // pred_check
    _
  $region15: #{vgg_discriminator.18} parent=0 // pred_check_branch
    %16 = sbr.rel (0) target = $region17
  $region16: #{vgg_discriminator.18} parent=0 // pred_region
    _
  $region17: #{vgg_discriminator.18} parent=0 // pred_fallthru
    _
  %v18 = vld [vmem:[%s0] sm:$0xff]
  %v19 = vld [vmem:[%s0 + $0x8] sm:$0xff]
  %v20 = vld [vmem:[%s0 + $0x10] sm:$0xff]
  %v21 = vld [vmem:[%s0 + $0x18] sm:$0xff]
  %v22 = vld [vmem:[%s1] sm:$0xf]
  %v23 = vld [vmem:[%s1 + $0x4] sm:$0xf]
  %v24 = vld [vmem:[%s1 + $0x8] sm:$0xf]
  %v25 = vld [vmem:[%s1 + $0xc] sm:$0xf]
  %v26 = vld [vmem:[%s1 + $0x10] sm:$0xf]
  %v27 = vld [vmem:[%s1 + $0x14] sm:$0xf]
  %v28 = vld [vmem:[%s1 + $0x18] sm:$0xf]
  %v29 = vld [vmem:[%s1 + $0x1c] sm:$0xf]
  %v30 = vld [vmem:[%s1 + $0x20] sm:$0xf]
  %v31 = vld [vmem:[%s1 + $0x24] sm:$0xf]
  %v32 = vld [vmem:[%s1 + $0x28] sm:$0xf]
  %v33 = vld [vmem:[%s1 + $0x2c] sm:$0xf]
  %v34 = vld [vmem:[%s1 + $0x30] sm:$0xf]
  %v35 = vld [vmem:[%s1 + $0x34] sm:$0xf]
  %v36 = vld [vmem:[%s1 + $0x38] sm:$0xf]
  %v37 = vld [vmem:[%s1 + $0x3c] sm:$0xf]
  %v38 = vld [vmem:[%s1 + $0x40] sm:$0xf]
  %v39 = vld [vmem:[%s1 + $0x44] sm:$0xf]
  %v40 = vld [vmem:[%s1 + $0x48] sm:$0xf]
  %v41 = vld [vmem:[%s1 + $0x4c] sm:$0xf]
  %v42 = vld [vmem:[%s1 + $0x50] sm:$0xf]
  %v43 = vld [vmem:[%s1 + $0x54] sm:$0xf]
  %v44 = vld [vmem:[%s1 + $0x58] sm:$0xf]
  %v45 = vld [vmem:[%s1 + $0x5c] sm:$0xf]
  %v46 = vld [vmem:[%s1 + $0x60] sm:$0xf]
  %v47 = vld [vmem:[%s1 + $0x64] sm:$0xf]
  %v48 = vld [vmem:[%s1 + $0x68] sm:$0xf]
  %v49 = vld [vmem:[%s1 + $0x6c] sm:$0xf]
  %v50 = vld [vmem:[%s1 + $0x70] sm:$0xf]
  %v51 = vld [vmem:[%s1 + $0x74] sm:$0xf]
  %v52 = vld [vmem:[%s1 + $0x78] sm:$0xf]
  %v53 = vld [vmem:[%s1 + $0x7c] sm:$0xf]
  %v54 = vld [vmem:[%s1 + $0x80] sm:$0xf]
  %v55 = vld [vmem:[%s1 + $0x84] sm:$0xf]
  %v56 = vld [vmem:[%s1 + $0x88] sm:$0xf]
  %v57 = vld [vmem:[%s1 + $0x8c] sm:$0xf]
  %v58 = vld [vmem:[%s1 + $0x90] sm:$0xf]
  %v59 = vld [vmem:[%s1 + $0x94] sm:$0xf]
  %v60 = vld [vmem:[%s1 + $0x98] sm:$0xf]
  %v61 = vld [vmem:[%s1 + $0x9c] sm:$0xf]
  %v62 = vld [vmem:[%s1 + $0xa0] sm:$0xf]
  %v63 = vld [vmem:[%s1 + $0xa4] sm:$0xf]
  %v64 = vld [vmem:[%s1 + $0xa8] sm:$0xf]
  %v65 = vld [vmem:[%s1 + $0xac] sm:$0xf]
  %v66 = vld [vmem:[%s1 + $0xb0] sm:$0xf]
  %v67 = vld [vmem:[%s1 + $0xb4] sm:$0xf]
  %v68 = vld [vmem:[%s1 + $0xb8] sm:$0xf]
  %v69 = vld [vmem:[%s1 + $0xbc] sm:$0xf]
  %v70 = vld [vmem:[%s1 + $0xc0] sm:$0xf]
  %v71 = vld [vmem:[%s1 + $0xc4] sm:$0xf]
  %v72 = vld [vmem:[%s1 + $0xc8] sm:$0xf]
  %v73 = vld [vmem:[%s1 + $0xcc] sm:$0xf]
  %v74 = vld [vmem:[%s1 + $0xd0] sm:$0xf]
  %v75 = vld [vmem:[%s1 + $0xd4] sm:$0xf]
  %v76 = vld [vmem:[%s1 + $0xd8] sm:$0xf]
  %v77 = vld [vmem:[%s1 + $0xdc] sm:$0xf]
  %v78 = vld [vmem:[%s1 + $0xe0] sm:$0xf]
  %v79 = vld [vmem:[%s1 + $0xe4] sm:$0xf]
  %v80 = vld [vmem:[%s1 + $0xe8] sm:$0xf]
  %v81 = vld [vmem:[%s1 + $0xec] sm:$0xf]
  %v82 = vld [vmem:[%s1 + $0xf0] sm:$0xf]
  %v83 = vld [vmem:[%s1 + $0xf4] sm:$0xf]
  %v84 = vld [vmem:[%s1 + $0xf8] sm:$0xf]
  %v85 = vld [vmem:[%s1 + $0xfc] sm:$0xf]
  %v86 = vld [vmem:[%s1 + $0x100] sm:$0xf]
  %v87 = vld [vmem:[%s1 + $0x104] sm:$0xf]
  %v88 = vld [vmem:[%s1 + $0x108] sm:$0xf]
  %v89 = vld [vmem:[%s1 + $0x10c] sm:$0xf]
  %v90 = vld [vmem:[%s1 + $0x110] sm:$0xf]
  %v91 = vld [vmem:[%s1 + $0x114] sm:$0xf]
  %v92 = vld [vmem:[%s1 + $0x118] sm:$0xf]
  %v93 = vld [vmem:[%s1 + $0x11c] sm:$0xf]
  %v94 = vld [vmem:[%s1 + $0x120] sm:$0xf]
  %v95 = vld [vmem:[%s1 + $0x124] sm:$0xf]
  %v96 = vld [vmem:[%s1 + $0x128] sm:$0xf]
  %v97 = vld [vmem:[%s1 + $0x12c] sm:$0xf]
  %v98 = vld [vmem:[%s1 + $0x130] sm:$0xf]
  %v99 = vld [vmem:[%s1 + $0x134] sm:$0xf]
  %v100 = vld [vmem:[%s1 + $0x138] sm:$0xf]
  %v101 = vld [vmem:[%s1 + $0x13c] sm:$0xf]
  %v102 = vld [vmem:[%s1 + $0x140] sm:$0xf]
  %v103 = vld [vmem:[%s1 + $0x144] sm:$0xf]
  %v104 = vld [vmem:[%s1 + $0x148] sm:$0xf]
  %v105 = vld [vmem:[%s1 + $0x14c] sm:$0xf]
  %v106 = vld [vmem:[%s1 + $0x150] sm:$0xf]
  %v107 = vld [vmem:[%s1 + $0x154] sm:$0xf]
  %v108 = vld [vmem:[%s1 + $0x158] sm:$0xf]
  %v109 = vld [vmem:[%s1 + $0x15c] sm:$0xf]
  %v110 = vld [vmem:[%s1 + $0x160] sm:$0xf]
  %v111 = vld [vmem:[%s1 + $0x164] sm:$0xf]
  %v112 = vld [vmem:[%s1 + $0x168] sm:$0xf]
  %v113 = vld [vmem:[%s1 + $0x16c] sm:$0xf]
  %v114 = vld [vmem:[%s1 + $0x170] sm:$0xf]
  %v115 = vld [vmem:[%s1 + $0x174] sm:$0xf]
  %v116 = vld [vmem:[%s1 + $0x178] sm:$0xf]
  %v117 = vld [vmem:[%s1 + $0x17c] sm:$0xf]
  %v118 = vld [vmem:[%s1 + $0x180] sm:$0xf]
  %v119 = vld [vmem:[%s1 + $0x184] sm:$0xf]
  %v120 = vld [vmem:[%s1 + $0x188] sm:$0xf]
  %v121 = vld [vmem:[%s1 + $0x18c] sm:$0xf]
  %v122 = vld [vmem:[%s1 + $0x190] sm:$0xf]
  %v123 = vld [vmem:[%s1 + $0x194] sm:$0xf]
  %v124 = vld [vmem:[%s1 + $0x198] sm:$0xf]
  %v125 = vld [vmem:[%s1 + $0x19c] sm:$0xf]
  %v126 = vld [vmem:[%s1 + $0x1a0] sm:$0xf]
  %v127 = vld [vmem:[%s1 + $0x1a4] sm:$0xf]
  %v128 = vld [vmem:[%s1 + $0x1a8] sm:$0xf]
  %v129 = vld [vmem:[%s1 + $0x1ac] sm:$0xf]
  %v130 = vld [vmem:[%s1 + $0x1b0] sm:$0xf]
  %v131 = vld [vmem:[%s1 + $0x1b4] sm:$0xf]
  %v132 = vld [vmem:[%s1 + $0x1b8] sm:$0xf]
  %v133 = vld [vmem:[%s1 + $0x1bc] sm:$0xf]
  %v134 = vld [vmem:[%s1 + $0x1c0] sm:$0xf]
  %v135 = vld [vmem:[%s1 + $0x1c4] sm:$0xf]
  %v136 = vld [vmem:[%s1 + $0x1c8] sm:$0xf]
  %v137 = vld [vmem:[%s1 + $0x1cc] sm:$0xf]
  %v138 = vld [vmem:[%s1 + $0x1d0] sm:$0xf]
  %v139 = vld [vmem:[%s1 + $0x1d4] sm:$0xf]
  %v140 = vld [vmem:[%s1 + $0x1d8] sm:$0xf]
  %v141 = vld [vmem:[%s1 + $0x1dc] sm:$0xf]
  %v142 = vld [vmem:[%s1 + $0x1e0] sm:$0xf]
  %v143 = vld [vmem:[%s1 + $0x1e4] sm:$0xf]
  %v144 = vld [vmem:[%s1 + $0x1e8] sm:$0xf]
  %v145 = vld [vmem:[%s1 + $0x1ec] sm:$0xf]
  %v146 = vld [vmem:[%s1 + $0x1f0] sm:$0xf]
  %v147 = vld [vmem:[%s1 + $0x1f4] sm:$0xf]
  %v148 = vld [vmem:[%s1 + $0x1f8] sm:$0xf]
  %v149 = vld [vmem:[%s1 + $0x1fc] sm:$0xf]
  %v154 = vunpack.c.l.b16 %v18
  %v155 = vunpack.c.h.b16 %v18
  %v156 = vunpack.c.l.b16 %v19
  %v157 = vunpack.c.h.b16 %v19
  %v158 = vunpack.c.l.b16 %v20
  %v159 = vunpack.c.h.b16 %v20
  %v160 = vunpack.c.l.b16 %v21
  %v161 = vunpack.c.h.b16 %v21
  %v162 = vpack.c.b16 %v154, %v154
  %v163 = vpack.c.b16 %v155, %v155
  %v164 = vpack.c.b16 %v156, %v156
  %v165 = vpack.c.b16 %v157, %v157
  %v166 = vpack.c.b16 %v158, %v158
  %v167 = vpack.c.b16 %v159, %v159
  %v168 = vpack.c.b16 %v160, %v160
  %v169 = vpack.c.b16 %v161, %v161
  %v306 = vunpack.c.l.b16 %v22
  %v307 = vunpack.c.l.b16 %v23
  %v308 = vunpack.c.l.b16 %v24
  %v309 = vunpack.c.l.b16 %v25
  %v310 = vunpack.c.l.b16 %v26
  %v311 = vunpack.c.l.b16 %v27
  %v312 = vunpack.c.l.b16 %v28
  %v313 = vunpack.c.l.b16 %v29
  %v314 = vunpack.c.l.b16 %v30
  %v315 = vunpack.c.l.b16 %v31
  %v316 = vunpack.c.l.b16 %v32
  %v317 = vunpack.c.l.b16 %v33
  %v318 = vunpack.c.l.b16 %v34
  %v319 = vunpack.c.l.b16 %v35
  %v320 = vunpack.c.l.b16 %v36
  %v321 = vunpack.c.l.b16 %v37
  %v322 = vunpack.c.l.b16 %v38
  %v323 = vunpack.c.l.b16 %v39
  %v324 = vunpack.c.l.b16 %v40
  %v325 = vunpack.c.l.b16 %v41
  %v326 = vunpack.c.l.b16 %v42
  %v327 = vunpack.c.l.b16 %v43
  %v328 = vunpack.c.l.b16 %v44
  %v329 = vunpack.c.l.b16 %v45
  %v330 = vunpack.c.l.b16 %v46
  %v331 = vunpack.c.l.b16 %v47
  %v332 = vunpack.c.l.b16 %v48
  %v333 = vunpack.c.l.b16 %v49
  %v334 = vunpack.c.l.b16 %v50
  %v335 = vunpack.c.l.b16 %v51
  %v336 = vunpack.c.l.b16 %v52
  %v337 = vunpack.c.l.b16 %v53
  %v338 = vunpack.c.l.b16 %v54
  %v339 = vunpack.c.l.b16 %v55
  %v340 = vunpack.c.l.b16 %v56
  %v341 = vunpack.c.l.b16 %v57
  %v342 = vunpack.c.l.b16 %v58
  %v343 = vunpack.c.l.b16 %v59
  %v344 = vunpack.c.l.b16 %v60
  %v345 = vunpack.c.l.b16 %v61
  %v346 = vunpack.c.l.b16 %v62
  %v347 = vunpack.c.l.b16 %v63
  %v348 = vunpack.c.l.b16 %v64
  %v349 = vunpack.c.l.b16 %v65
  %v350 = vunpack.c.l.b16 %v66
  %v351 = vunpack.c.l.b16 %v67
  %v352 = vunpack.c.l.b16 %v68
  %v353 = vunpack.c.l.b16 %v69
  %v354 = vunpack.c.l.b16 %v70
  %v355 = vunpack.c.l.b16 %v71
  %v356 = vunpack.c.l.b16 %v72
  %v357 = vunpack.c.l.b16 %v73
  %v358 = vunpack.c.l.b16 %v74
  %v359 = vunpack.c.l.b16 %v75
  %v360 = vunpack.c.l.b16 %v76
  %v361 = vunpack.c.l.b16 %v77
  %v362 = vunpack.c.l.b16 %v78
  %v363 = vunpack.c.l.b16 %v79
  %v364 = vunpack.c.l.b16 %v80
  %v365 = vunpack.c.l.b16 %v81
  %v366 = vunpack.c.l.b16 %v82
  %v367 = vunpack.c.l.b16 %v83
  %v368 = vunpack.c.l.b16 %v84
  %v369 = vunpack.c.l.b16 %v85
  %v370 = vunpack.c.l.b16 %v86
  %v371 = vunpack.c.l.b16 %v87
  %v372 = vunpack.c.l.b16 %v88
  %v373 = vunpack.c.l.b16 %v89
  %v374 = vunpack.c.l.b16 %v90
  %v375 = vunpack.c.l.b16 %v91
  %v376 = vunpack.c.l.b16 %v92
  %v377 = vunpack.c.l.b16 %v93
  %v378 = vunpack.c.l.b16 %v94
  %v379 = vunpack.c.l.b16 %v95
  %v380 = vunpack.c.l.b16 %v96
  %v381 = vunpack.c.l.b16 %v97
  %v382 = vunpack.c.l.b16 %v98
  %v383 = vunpack.c.l.b16 %v99
  %v384 = vunpack.c.l.b16 %v100
  %v385 = vunpack.c.l.b16 %v101
  %v386 = vunpack.c.l.b16 %v102
  %v387 = vunpack.c.l.b16 %v103
  %v388 = vunpack.c.l.b16 %v104
  %v389 = vunpack.c.l.b16 %v105
  %v390 = vunpack.c.l.b16 %v106
  %v391 = vunpack.c.l.b16 %v107
  %v392 = vunpack.c.l.b16 %v108
  %v393 = vunpack.c.l.b16 %v109
  %v394 = vunpack.c.l.b16 %v110
  %v395 = vunpack.c.l.b16 %v111
  %v396 = vunpack.c.l.b16 %v112
  %v397 = vunpack.c.l.b16 %v113
  %v398 = vunpack.c.l.b16 %v114
  %v399 = vunpack.c.l.b16 %v115
  %v400 = vunpack.c.l.b16 %v116
  %v401 = vunpack.c.l.b16 %v117
  %v402 = vunpack.c.l.b16 %v118
  %v403 = vunpack.c.l.b16 %v119
  %v404 = vunpack.c.l.b16 %v120
  %v405 = vunpack.c.l.b16 %v121
  %v406 = vunpack.c.l.b16 %v122
  %v407 = vunpack.c.l.b16 %v123
  %v408 = vunpack.c.l.b16 %v124
  %v409 = vunpack.c.l.b16 %v125
  %v410 = vunpack.c.l.b16 %v126
  %v411 = vunpack.c.l.b16 %v127
  %v412 = vunpack.c.l.b16 %v128
  %v413 = vunpack.c.l.b16 %v129
  %v414 = vunpack.c.l.b16 %v130
  %v415 = vunpack.c.l.b16 %v131
  %v416 = vunpack.c.l.b16 %v132
  %v417 = vunpack.c.l.b16 %v133
  %v418 = vunpack.c.l.b16 %v134
  %v419 = vunpack.c.l.b16 %v135
  %v420 = vunpack.c.l.b16 %v136
  %v421 = vunpack.c.l.b16 %v137
  %v422 = vunpack.c.l.b16 %v138
  %v423 = vunpack.c.l.b16 %v139
  %v424 = vunpack.c.l.b16 %v140
  %v425 = vunpack.c.l.b16 %v141
  %v426 = vunpack.c.l.b16 %v142
  %v427 = vunpack.c.l.b16 %v143
  %v428 = vunpack.c.l.b16 %v144
  %v429 = vunpack.c.l.b16 %v145
  %v430 = vunpack.c.l.b16 %v146
  %v431 = vunpack.c.l.b16 %v147
  %v432 = vunpack.c.l.b16 %v148
  %v433 = vunpack.c.l.b16 %v149
  %v434 = vpack.c.b16 %v307, %v306
  %v435 = vpack.c.b16 %v309, %v308
  %v436 = vpack.c.b16 %v311, %v310
  %v437 = vpack.c.b16 %v313, %v312
  %v438 = vpack.c.b16 %v315, %v314
  %v439 = vpack.c.b16 %v317, %v316
  %v440 = vpack.c.b16 %v319, %v318
  %v441 = vpack.c.b16 %v321, %v320
  %v442 = vpack.c.b16 %v323, %v322
  %v443 = vpack.c.b16 %v325, %v324
  %v444 = vpack.c.b16 %v327, %v326
  %v445 = vpack.c.b16 %v329, %v328
  %v446 = vpack.c.b16 %v331, %v330
  %v447 = vpack.c.b16 %v333, %v332
  %v448 = vpack.c.b16 %v335, %v334
  %v449 = vpack.c.b16 %v337, %v336
  %v450 = vpack.c.b16 %v339, %v338
  %v451 = vpack.c.b16 %v341, %v340
  %v452 = vpack.c.b16 %v343, %v342
  %v453 = vpack.c.b16 %v345, %v344
  %v454 = vpack.c.b16 %v347, %v346
  %v455 = vpack.c.b16 %v349, %v348
  %v456 = vpack.c.b16 %v351, %v350
  %v457 = vpack.c.b16 %v353, %v352
  %v458 = vpack.c.b16 %v355, %v354
  %v459 = vpack.c.b16 %v357, %v356
  %v460 = vpack.c.b16 %v359, %v358
  %v461 = vpack.c.b16 %v361, %v360
  %v462 = vpack.c.b16 %v363, %v362
  %v463 = vpack.c.b16 %v365, %v364
  %v464 = vpack.c.b16 %v367, %v366
  %v465 = vpack.c.b16 %v369, %v368
  %v466 = vpack.c.b16 %v371, %v370
  %v467 = vpack.c.b16 %v373, %v372
  %v468 = vpack.c.b16 %v375, %v374
  %v469 = vpack.c.b16 %v377, %v376
  %v470 = vpack.c.b16 %v379, %v378
  %v471 = vpack.c.b16 %v381, %v380
  %v472 = vpack.c.b16 %v383, %v382
  %v473 = vpack.c.b16 %v385, %v384
  %v474 = vpack.c.b16 %v387, %v386
  %v475 = vpack.c.b16 %v389, %v388
  %v476 = vpack.c.b16 %v391, %v390
  %v477 = vpack.c.b16 %v393, %v392
  %v478 = vpack.c.b16 %v395, %v394
  %v479 = vpack.c.b16 %v397, %v396
  %v480 = vpack.c.b16 %v399, %v398
  %v481 = vpack.c.b16 %v401, %v400
  %v482 = vpack.c.b16 %v403, %v402
  %v483 = vpack.c.b16 %v405, %v404
  %v484 = vpack.c.b16 %v407, %v406
  %v485 = vpack.c.b16 %v409, %v408
  %v486 = vpack.c.b16 %v411, %v410
  %v487 = vpack.c.b16 %v413, %v412
  %v488 = vpack.c.b16 %v415, %v414
  %v489 = vpack.c.b16 %v417, %v416
  %v490 = vpack.c.b16 %v419, %v418
  %v491 = vpack.c.b16 %v421, %v420
  %v492 = vpack.c.b16 %v423, %v422
  %v493 = vpack.c.b16 %v425, %v424
  %v494 = vpack.c.b16 %v427, %v426
  %v495 = vpack.c.b16 %v429, %v428
  %v496 = vpack.c.b16 %v431, %v430
  %v497 = vpack.c.b16 %v433, %v432
  %562 = vmatprep.subr.bf16.mxu0 0
  %563 = vmatpush1.bf16.msra.mxu0 %v434
  %564 = vmatprep.subr.bf16.mxu0 0
  %565 = vmatpush1.bf16.msra.mxu0 %v435
  %566 = vmatprep.subr.bf16.mxu0 0
  %567 = vmatpush1.bf16.msra.mxu0 %v436
  %568 = vmatprep.subr.bf16.mxu0 0
  %569 = vmatpush1.bf16.msra.mxu0 %v437
  %570 = vmatprep.subr.bf16.mxu0 0
  %571 = vmatpush1.bf16.msra.mxu0 %v438
  %572 = vmatprep.subr.bf16.mxu0 0
  %573 = vmatpush1.bf16.msra.mxu0 %v439
  %574 = vmatprep.subr.bf16.mxu0 0
  %575 = vmatpush1.bf16.msra.mxu0 %v440
  %576 = vmatprep.subr.bf16.mxu0 0
  %577 = vmatpush1.bf16.msra.mxu0 %v441
  %578 = vmatprep.subr.bf16.mxu0 0
  %579 = vmatpush1.bf16.msra.mxu0 %v442
  %580 = vmatprep.subr.bf16.mxu0 0
  %581 = vmatpush1.bf16.msra.mxu0 %v443
  %582 = vmatprep.subr.bf16.mxu0 0
  %583 = vmatpush1.bf16.msra.mxu0 %v444
  %584 = vmatprep.subr.bf16.mxu0 0
  %585 = vmatpush1.bf16.msra.mxu0 %v445
  %586 = vmatprep.subr.bf16.mxu0 0
  %587 = vmatpush1.bf16.msra.mxu0 %v446
  %588 = vmatprep.subr.bf16.mxu0 0
  %589 = vmatpush1.bf16.msra.mxu0 %v447
  %590 = vmatprep.subr.bf16.mxu0 0
  %591 = vmatpush1.bf16.msra.mxu0 %v448
  %592 = vmatprep.subr.bf16.mxu0 0
  %593 = vmatpush1.bf16.msra.mxu0 %v449
  %594 = vmatprep.mubr.bf16.mxu0 %v163
  %595 = vmatmul.mubr.bf16.gmra.mrb[0].mxu0 %v162
  %v596 = vpop.f32.mrb[0].mxu0
  %v597 = vadd.f32 0.0, %v596
  %v598 = vpop.f32.mrb[0].mxu0
  %v599 = vpop.f32.mrb[0].mxu0
  %v600 = vpop.f32.mrb[0].mxu0
  %601 = vdwg.mxu0
  %602 = vmatprep.subr.bf16.mxu0 0
  %603 = vmatpush1.bf16.msra.mxu0 %v450
  %604 = vmatprep.subr.bf16.mxu0 0
  %605 = vmatpush1.bf16.msra.mxu0 %v451
  %606 = vmatprep.subr.bf16.mxu0 0
  %607 = vmatpush1.bf16.msra.mxu0 %v452
  %608 = vmatprep.subr.bf16.mxu0 0
  %609 = vmatpush1.bf16.msra.mxu0 %v453
  %610 = vmatprep.subr.bf16.mxu0 0
  %611 = vmatpush1.bf16.msra.mxu0 %v454
  %612 = vmatprep.subr.bf16.mxu0 0
  %613 = vmatpush1.bf16.msra.mxu0 %v455
  %614 = vmatprep.subr.bf16.mxu0 0
  %615 = vmatpush1.bf16.msra.mxu0 %v456
  %616 = vmatprep.subr.bf16.mxu0 0
  %617 = vmatpush1.bf16.msra.mxu0 %v457
  %618 = vmatprep.subr.bf16.mxu0 0
  %619 = vmatpush1.bf16.msra.mxu0 %v458
  %620 = vmatprep.subr.bf16.mxu0 0
  %621 = vmatpush1.bf16.msra.mxu0 %v459
  %622 = vmatprep.subr.bf16.mxu0 0
  %623 = vmatpush1.bf16.msra.mxu0 %v460
  %624 = vmatprep.subr.bf16.mxu0 0
  %625 = vmatpush1.bf16.msra.mxu0 %v461
  %626 = vmatprep.subr.bf16.mxu0 0
  %627 = vmatpush1.bf16.msra.mxu0 %v462
  %628 = vmatprep.subr.bf16.mxu0 0
  %629 = vmatpush1.bf16.msra.mxu0 %v463
  %630 = vmatprep.subr.bf16.mxu0 0
  %631 = vmatpush1.bf16.msra.mxu0 %v464
  %632 = vmatprep.subr.bf16.mxu0 0
  %633 = vmatpush1.bf16.msra.mxu0 %v465
  %634 = vmatprep.mubr.bf16.mxu0 %v165
  %635 = vmatmul.mubr.bf16.gmra.mrb[0].mxu0 %v164
  %v636 = vpop.f32.mrb[0].mxu0
  %v637 = vadd.f32 %v597, %v636
  %v638 = vpop.f32.mrb[0].mxu0
  %v639 = vpop.f32.mrb[0].mxu0
  %v640 = vpop.f32.mrb[0].mxu0
  %641 = vdwg.mxu0
  %642 = vmatprep.subr.bf16.mxu0 0
  %643 = vmatpush1.bf16.msra.mxu0 %v466
  %644 = vmatprep.subr.bf16.mxu0 0
  %645 = vmatpush1.bf16.msra.mxu0 %v467
  %646 = vmatprep.subr.bf16.mxu0 0
  %647 = vmatpush1.bf16.msra.mxu0 %v468
  %648 = vmatprep.subr.bf16.mxu0 0
  %649 = vmatpush1.bf16.msra.mxu0 %v469
  %650 = vmatprep.subr.bf16.mxu0 0
  %651 = vmatpush1.bf16.msra.mxu0 %v470
  %652 = vmatprep.subr.bf16.mxu0 0
  %653 = vmatpush1.bf16.msra.mxu0 %v471
  %654 = vmatprep.subr.bf16.mxu0 0
  %655 = vmatpush1.bf16.msra.mxu0 %v472
  %656 = vmatprep.subr.bf16.mxu0 0
  %657 = vmatpush1.bf16.msra.mxu0 %v473
  %658 = vmatprep.subr.bf16.mxu0 0
  %659 = vmatpush1.bf16.msra.mxu0 %v474
  %660 = vmatprep.subr.bf16.mxu0 0
  %661 = vmatpush1.bf16.msra.mxu0 %v475
  %662 = vmatprep.subr.bf16.mxu0 0
  %663 = vmatpush1.bf16.msra.mxu0 %v476
  %664 = vmatprep.subr.bf16.mxu0 0
  %665 = vmatpush1.bf16.msra.mxu0 %v477
  %666 = vmatprep.subr.bf16.mxu0 0
  %667 = vmatpush1.bf16.msra.mxu0 %v478
  %668 = vmatprep.subr.bf16.mxu0 0
  %669 = vmatpush1.bf16.msra.mxu0 %v479
  %670 = vmatprep.subr.bf16.mxu0 0
  %671 = vmatpush1.bf16.msra.mxu0 %v480
  %672 = vmatprep.subr.bf16.mxu0 0
  %673 = vmatpush1.bf16.msra.mxu0 %v481
  %674 = vmatprep.mubr.bf16.mxu0 %v167
  %675 = vmatmul.mubr.bf16.gmra.mrb[0].mxu0 %v166
  %v676 = vpop.f32.mrb[0].mxu0
  %v677 = vadd.f32 %v637, %v676
  %v678 = vpop.f32.mrb[0].mxu0
  %v679 = vpop.f32.mrb[0].mxu0
  %v680 = vpop.f32.mrb[0].mxu0
  %681 = vdwg.mxu0
  %682 = vmatprep.subr.bf16.mxu0 0
  %683 = vmatpush1.bf16.msra.mxu0 %v482
  %684 = vmatprep.subr.bf16.mxu0 0
  %685 = vmatpush1.bf16.msra.mxu0 %v483
  %686 = vmatprep.subr.bf16.mxu0 0
  %687 = vmatpush1.bf16.msra.mxu0 %v484
  %688 = vmatprep.subr.bf16.mxu0 0
  %689 = vmatpush1.bf16.msra.mxu0 %v485
  %690 = vmatprep.subr.bf16.mxu0 0
  %691 = vmatpush1.bf16.msra.mxu0 %v486
  %692 = vmatprep.subr.bf16.mxu0 0
  %693 = vmatpush1.bf16.msra.mxu0 %v487
  %694 = vmatprep.subr.bf16.mxu0 0
  %695 = vmatpush1.bf16.msra.mxu0 %v488
  %696 = vmatprep.subr.bf16.mxu0 0
  %697 = vmatpush1.bf16.msra.mxu0 %v489
  %698 = vmatprep.subr.bf16.mxu0 0
  %699 = vmatpush1.bf16.msra.mxu0 %v490
  %700 = vmatprep.subr.bf16.mxu0 0
  %701 = vmatpush1.bf16.msra.mxu0 %v491
  %702 = vmatprep.subr.bf16.mxu0 0
  %703 = vmatpush1.bf16.msra.mxu0 %v492
  %704 = vmatprep.subr.bf16.mxu0 0
  %705 = vmatpush1.bf16.msra.mxu0 %v493
  %706 = vmatprep.subr.bf16.mxu0 0
  %707 = vmatpush1.bf16.msra.mxu0 %v494
  %708 = vmatprep.subr.bf16.mxu0 0
  %709 = vmatpush1.bf16.msra.mxu0 %v495
  %710 = vmatprep.subr.bf16.mxu0 0
  %711 = vmatpush1.bf16.msra.mxu0 %v496
  %712 = vmatprep.subr.bf16.mxu0 0
  %713 = vmatpush1.bf16.msra.mxu0 %v497
  %714 = vmatprep.mubr.bf16.mxu0 %v169
  %715 = vmatmul.mubr.bf16.gmra.mrb[0].mxu0 %v168
  %v716 = vpop.f32.mrb[0].mxu0
  %v717 = vadd.f32 %v677, %v716
  %v718 = vpop.f32.mrb[0].mxu0
  %v719 = vpop.f32.mrb[0].mxu0
  %v720 = vpop.f32.mrb[0].mxu0
  %721 = vdwg.mxu0
  %vm722 = vcmask 523264
  %v723 = vsel %vm722, %v717, 0.0
  %v724 = vrot.slane %v723, 4
  %v725 = vadd.f32 %v723, %v724
  %v726 = vrot.slane %v725, 2
  %v727 = vadd.f32 %v725, %v726
  %v728 = vrot.slane %v727, 1
  %v729 = vadd.f32 %v727, %v728
  %v730 = vmul.f32 %v729, 0.125
  %v731 = vmul.f32 %v717, %v717
  %v732 = vsel %vm722, %v731, 0.0
  %v733 = vrot.slane %v732, 4
  %v734 = vadd.f32 %v732, %v733
  %v735 = vrot.slane %v734, 2
  %v736 = vadd.f32 %v734, %v735
  %v737 = vrot.slane %v736, 1
  %v738 = vadd.f32 %v736, %v737
  %v739 = vmul.f32 %v738, 0.125
  %v740 = vmul.f32 %v730, %v730
  %v741 = vsub.f32 %v739, %v740
  %v742 = vmax.f32 %v741, 0.0
  %v743 = vadd.f32 %v742, 1e-05
  %v744 = vrsqrt.pop %v743
  %v745 = vld [vmem:[%s2] sm:$0x1]
  %v746 = vmul.f32 %v745, %v744
  %v747 = vld [vmem:[%s3] sm:$0x1]
  %v748 = vmul.f32 %v730, %v746
  %v749 = vsub.f32 %v747, %v748
  %v751 = vlaneseq
  %v752 = vshrl.u32 %v751, 7
  %v753 = vsub.s32 0, %v752
  %v754 = vrot.slane %v746, %v753
  %v756 = vmul.f32 %v717, %v754
  %v758 = vlaneseq
  %v759 = vshrl.u32 %v758, 7
  %v760 = vsub.s32 0, %v759
  %v761 = vrot.slane %v749, %v760
  %v763 = vadd.f32 %v756, %v761
  %vm764 = vcmp.ge.f32.partialorder %v763, 0.0
  %v765 = vmul.f32 %v763, 0.2
  %v766 = vsel %vm764, %v763, %v765
  %v767 = vpack.c.bf16 %v766, %v766
  %vm768 = vcmask 519168
  %769 = vst.msk [vmem:[%s4] sm:$0xf] %vm768, %v767
  // Predicated region
  $region18: #{vgg_discriminator.18} parent=0 // pred_check
    _
  $region19: #{vgg_discriminator.18} parent=0 // pred_check_branch
    %771 = sbr.rel (0) target = $region21
  $region20: #{vgg_discriminator.18} parent=0 // pred_region
    _
  $region21: #{vgg_discriminator.18} parent=0 // pred_fallthru
    _
  // Predicated region
  $region22: #{vgg_discriminator.18} parent=0 // pred_check
    _
  $region23: #{vgg_discriminator.18} parent=0 // pred_check_branch
    %773 = sbr.rel (0) target = $region25
  $region24: #{vgg_discriminator.18} parent=0 // pred_region
    _
  $region25: #{vgg_discriminator.18} parent=0 // pred_fallthru
    _

// kernel: vgg_discriminator.19
$region0: #{vgg_discriminator.19}
  #allocation0 [shape = 'u32[]', space=smem, size = 0x4, offset = 0x4, fixed_abs, tag = 'smem constant byte address 0x4 - core index']
  #allocation1 [shape = 'u32[144,128]{1,0:T(1,128)}', space=vmem, size = 0x12000, scoped, tag = 'internal scratch']
  %s0 = inlined_call_operand.vmem [shape: bf16[8,640], index: 0, kind: input, shape index: {}]
  %s1 = inlined_call_operand.vmem [shape: bf16[640,64], index: 1, kind: input, shape index: {}]
  %s2 = inlined_call_operand.vmem [shape: f32[1,64], index: 2, kind: input, shape index: {}]
  %s3 = inlined_call_operand.vmem [shape: f32[1,64], index: 3, kind: input, shape index: {}]
  %s4 = inlined_call_operand.vmem [shape: bf16[8,64], index: 4, kind: output, shape index: {}]
  %s5 = sld [smem:[#allocation0]]
  $region26: #{vgg_discriminator.19} parent=0
    _
  %s7 = ssub.s32 1, %s5
  %s8 = scalar_select 0, %s7, %s5
  // Predicated region
  $region2: #{vgg_discriminator.19} parent=0 // pred_check
    _
  $region3: #{vgg_discriminator.19} parent=0 // pred_check_branch
    %10 = sbr.rel (0) target = $region5
  $region4: #{vgg_discriminator.19} parent=0 // pred_region
    _
  $region5: #{vgg_discriminator.19} parent=0 // pred_fallthru
    _
  // Predicated region
  $region6: #{vgg_discriminator.19} parent=0 // pred_check
    _
  $region7: #{vgg_discriminator.19} parent=0 // pred_check_branch
    %12 = sbr.rel (0) target = $region9
  $region8: #{vgg_discriminator.19} parent=0 // pred_region
    _
  $region9: #{vgg_discriminator.19} parent=0 // pred_fallthru
    _
  // Predicated region
  $region10: #{vgg_discriminator.19} parent=0 // pred_check
    _
  $region11: #{vgg_discriminator.19} parent=0 // pred_check_branch
    %14 = sbr.rel (0) target = $region13
  $region12: #{vgg_discriminator.19} parent=0 // pred_region
    _
  $region13: #{vgg_discriminator.19} parent=0 // pred_fallthru
    _
  // Predicated region
  $region14: #{vgg_discriminator.19} parent=0 // pred_check
    _
  $region15: #{vgg_discriminator.19} parent=0 // pred_check_branch
    %16 = sbr.rel (0) target = $region17
  $region16: #{vgg_discriminator.19} parent=0 // pred_region
    _
  $region17: #{vgg_discriminator.19} parent=0 // pred_fallthru
    _
  %v18 = vld [vmem:[%s0] sm:$0xff]
  %v19 = vld [vmem:[%s0 + $0x8] sm:$0xff]
  %v20 = vld [vmem:[%s0 + $0x10] sm:$0xf]
  %v21 = vld [vmem:[%s1] sm:$0xf]
  %v22 = vld [vmem:[%s1 + $0x4] sm:$0xf]
  %v23 = vld [vmem:[%s1 + $0x8] sm:$0xf]
  %v24 = vld [vmem:[%s1 + $0xc] sm:$0xf]
  %v25 = vld [vmem:[%s1 + $0x10] sm:$0xf]
  %v26 = vld [vmem:[%s1 + $0x14] sm:$0xf]
  %v27 = vld [vmem:[%s1 + $0x18] sm:$0xf]
  %v28 = vld [vmem:[%s1 + $0x1c] sm:$0xf]
  %v29 = vld [vmem:[%s1 + $0x20] sm:$0xf]
  %v30 = vld [vmem:[%s1 + $0x24] sm:$0xf]
  %v31 = vld [vmem:[%s1 + $0x28] sm:$0xf]
  %v32 = vld [vmem:[%s1 + $0x2c] sm:$0xf]
  %v33 = vld [vmem:[%s1 + $0x30] sm:$0xf]
  %v34 = vld [vmem:[%s1 + $0x34] sm:$0xf]
  %v35 = vld [vmem:[%s1 + $0x38] sm:$0xf]
  %v36 = vld [vmem:[%s1 + $0x3c] sm:$0xf]
  %v37 = vld [vmem:[%s1 + $0x40] sm:$0xf]
  %v38 = vld [vmem:[%s1 + $0x44] sm:$0xf]
  %v39 = vld [vmem:[%s1 + $0x48] sm:$0xf]
  %v40 = vld [vmem:[%s1 + $0x4c] sm:$0xf]
  %v41 = vld [vmem:[%s1 + $0x50] sm:$0xf]
  %v42 = vld [vmem:[%s1 + $0x54] sm:$0xf]
  %v43 = vld [vmem:[%s1 + $0x58] sm:$0xf]
  %v44 = vld [vmem:[%s1 + $0x5c] sm:$0xf]
  %v45 = vld [vmem:[%s1 + $0x60] sm:$0xf]
  %v46 = vld [vmem:[%s1 + $0x64] sm:$0xf]
  %v47 = vld [vmem:[%s1 + $0x68] sm:$0xf]
  %v48 = vld [vmem:[%s1 + $0x6c] sm:$0xf]
  %v49 = vld [vmem:[%s1 + $0x70] sm:$0xf]
  %v50 = vld [vmem:[%s1 + $0x74] sm:$0xf]
  %v51 = vld [vmem:[%s1 + $0x78] sm:$0xf]
  %v52 = vld [vmem:[%s1 + $0x7c] sm:$0xf]
  %v53 = vld [vmem:[%s1 + $0x80] sm:$0xf]
  %v54 = vld [vmem:[%s1 + $0x84] sm:$0xf]
  %v55 = vld [vmem:[%s1 + $0x88] sm:$0xf]
  %v56 = vld [vmem:[%s1 + $0x8c] sm:$0xf]
  %v57 = vld [vmem:[%s1 + $0x90] sm:$0xf]
  %v58 = vld [vmem:[%s1 + $0x94] sm:$0xf]
  %v59 = vld [vmem:[%s1 + $0x98] sm:$0xf]
  %v60 = vld [vmem:[%s1 + $0x9c] sm:$0xf]
  %v61 = vld [vmem:[%s1 + $0xa0] sm:$0xf]
  %v62 = vld [vmem:[%s1 + $0xa4] sm:$0xf]
  %v63 = vld [vmem:[%s1 + $0xa8] sm:$0xf]
  %v64 = vld [vmem:[%s1 + $0xac] sm:$0xf]
  %v65 = vld [vmem:[%s1 + $0xb0] sm:$0xf]
  %v66 = vld [vmem:[%s1 + $0xb4] sm:$0xf]
  %v67 = vld [vmem:[%s1 + $0xb8] sm:$0xf]
  %v68 = vld [vmem:[%s1 + $0xbc] sm:$0xf]
  %v69 = vld [vmem:[%s1 + $0xc0] sm:$0xf]
  %v70 = vld [vmem:[%s1 + $0xc4] sm:$0xf]
  %v71 = vld [vmem:[%s1 + $0xc8] sm:$0xf]
  %v72 = vld [vmem:[%s1 + $0xcc] sm:$0xf]
  %v73 = vld [vmem:[%s1 + $0xd0] sm:$0xf]
  %v74 = vld [vmem:[%s1 + $0xd4] sm:$0xf]
  %v75 = vld [vmem:[%s1 + $0xd8] sm:$0xf]
  %v76 = vld [vmem:[%s1 + $0xdc] sm:$0xf]
  %v77 = vld [vmem:[%s1 + $0xe0] sm:$0xf]
  %v78 = vld [vmem:[%s1 + $0xe4] sm:$0xf]
  %v79 = vld [vmem:[%s1 + $0xe8] sm:$0xf]
  %v80 = vld [vmem:[%s1 + $0xec] sm:$0xf]
  %v81 = vld [vmem:[%s1 + $0xf0] sm:$0xf]
  %v82 = vld [vmem:[%s1 + $0xf4] sm:$0xf]
  %v83 = vld [vmem:[%s1 + $0xf8] sm:$0xf]
  %v84 = vld [vmem:[%s1 + $0xfc] sm:$0xf]
  %v85 = vld [vmem:[%s1 + $0x100] sm:$0xf]
  %v86 = vld [vmem:[%s1 + $0x104] sm:$0xf]
  %v87 = vld [vmem:[%s1 + $0x108] sm:$0xf]
  %v88 = vld [vmem:[%s1 + $0x10c] sm:$0xf]
  %v89 = vld [vmem:[%s1 + $0x110] sm:$0xf]
  %v90 = vld [vmem:[%s1 + $0x114] sm:$0xf]
  %v91 = vld [vmem:[%s1 + $0x118] sm:$0xf]
  %v92 = vld [vmem:[%s1 + $0x11c] sm:$0xf]
  %v93 = vld [vmem:[%s1 + $0x120] sm:$0xf]
  %v94 = vld [vmem:[%s1 + $0x124] sm:$0xf]
  %v95 = vld [vmem:[%s1 + $0x128] sm:$0xf]
  %v96 = vld [vmem:[%s1 + $0x12c] sm:$0xf]
  %v97 = vld [vmem:[%s1 + $0x130] sm:$0xf]
  %v98 = vld [vmem:[%s1 + $0x134] sm:$0xf]
  %v99 = vld [vmem:[%s1 + $0x138] sm:$0xf]
  %v100 = vld [vmem:[%s1 + $0x13c] sm:$0xf]
  %v104 = vunpack.c.l.b16 %v18
  %v105 = vunpack.c.h.b16 %v18
  %v106 = vunpack.c.l.b16 %v19
  %v107 = vunpack.c.h.b16 %v19
  %v108 = vunpack.c.l.b16 %v20
  %v109 = vpack.c.b16 %v104, %v104
  %v110 = vpack.c.b16 %v105, %v105
  %v111 = vpack.c.b16 %v106, %v106
  %v112 = vpack.c.b16 %v107, %v107
  %v113 = vpack.c.b16 %v108, %v108
  %v199 = vunpack.c.l.b16 %v21
  %v200 = vunpack.c.l.b16 %v22
  %v201 = vunpack.c.l.b16 %v23
  %v202 = vunpack.c.l.b16 %v24
  %v203 = vunpack.c.l.b16 %v25
  %v204 = vunpack.c.l.b16 %v26
  %v205 = vunpack.c.l.b16 %v27
  %v206 = vunpack.c.l.b16 %v28
  %v207 = vunpack.c.l.b16 %v29
  %v208 = vunpack.c.l.b16 %v30
  %v209 = vunpack.c.l.b16 %v31
  %v210 = vunpack.c.l.b16 %v32
  %v211 = vunpack.c.l.b16 %v33
  %v212 = vunpack.c.l.b16 %v34
  %v213 = vunpack.c.l.b16 %v35
  %v214 = vunpack.c.l.b16 %v36
  %v215 = vunpack.c.l.b16 %v37
  %v216 = vunpack.c.l.b16 %v38
  %v217 = vunpack.c.l.b16 %v39
  %v218 = vunpack.c.l.b16 %v40
  %v219 = vunpack.c.l.b16 %v41
  %v220 = vunpack.c.l.b16 %v42
  %v221 = vunpack.c.l.b16 %v43
  %v222 = vunpack.c.l.b16 %v44
  %v223 = vunpack.c.l.b16 %v45
  %v224 = vunpack.c.l.b16 %v46
  %v225 = vunpack.c.l.b16 %v47
  %v226 = vunpack.c.l.b16 %v48
  %v227 = vunpack.c.l.b16 %v49
  %v228 = vunpack.c.l.b16 %v50
  %v229 = vunpack.c.l.b16 %v51
  %v230 = vunpack.c.l.b16 %v52
  %v231 = vunpack.c.l.b16 %v53
  %v232 = vunpack.c.l.b16 %v54
  %v233 = vunpack.c.l.b16 %v55
  %v234 = vunpack.c.l.b16 %v56
  %v235 = vunpack.c.l.b16 %v57
  %v236 = vunpack.c.l.b16 %v58
  %v237 = vunpack.c.l.b16 %v59
  %v238 = vunpack.c.l.b16 %v60
  %v239 = vunpack.c.l.b16 %v61
  %v240 = vunpack.c.l.b16 %v62
  %v241 = vunpack.c.l.b16 %v63
  %v242 = vunpack.c.l.b16 %v64
  %v243 = vunpack.c.l.b16 %v65
  %v244 = vunpack.c.l.b16 %v66
  %v245 = vunpack.c.l.b16 %v67
  %v246 = vunpack.c.l.b16 %v68
  %v247 = vunpack.c.l.b16 %v69
  %v248 = vunpack.c.l.b16 %v70
  %v249 = vunpack.c.l.b16 %v71
  %v250 = vunpack.c.l.b16 %v72
  %v251 = vunpack.c.l.b16 %v73
  %v252 = vunpack.c.l.b16 %v74
  %v253 = vunpack.c.l.b16 %v75
  %v254 = vunpack.c.l.b16 %v76
  %v255 = vunpack.c.l.b16 %v77
  %v256 = vunpack.c.l.b16 %v78
  %v257 = vunpack.c.l.b16 %v79
  %v258 = vunpack.c.l.b16 %v80
  %v259 = vunpack.c.l.b16 %v81
  %v260 = vunpack.c.l.b16 %v82
  %v261 = vunpack.c.l.b16 %v83
  %v262 = vunpack.c.l.b16 %v84
  %v263 = vunpack.c.l.b16 %v85
  %v264 = vunpack.c.l.b16 %v86
  %v265 = vunpack.c.l.b16 %v87
  %v266 = vunpack.c.l.b16 %v88
  %v267 = vunpack.c.l.b16 %v89
  %v268 = vunpack.c.l.b16 %v90
  %v269 = vunpack.c.l.b16 %v91
  %v270 = vunpack.c.l.b16 %v92
  %v271 = vunpack.c.l.b16 %v93
  %v272 = vunpack.c.l.b16 %v94
  %v273 = vunpack.c.l.b16 %v95
  %v274 = vunpack.c.l.b16 %v96
  %v275 = vunpack.c.l.b16 %v97
  %v276 = vunpack.c.l.b16 %v98
  %v277 = vunpack.c.l.b16 %v99
  %v278 = vunpack.c.l.b16 %v100
  %v279 = vpack.c.b16 %v200, %v199
  %v280 = vpack.c.b16 %v202, %v201
  %v281 = vpack.c.b16 %v204, %v203
  %v282 = vpack.c.b16 %v206, %v205
  %v283 = vpack.c.b16 %v208, %v207
  %v284 = vpack.c.b16 %v210, %v209
  %v285 = vpack.c.b16 %v212, %v211
  %v286 = vpack.c.b16 %v214, %v213
  %v287 = vpack.c.b16 %v216, %v215
  %v288 = vpack.c.b16 %v218, %v217
  %v289 = vpack.c.b16 %v220, %v219
  %v290 = vpack.c.b16 %v222, %v221
  %v291 = vpack.c.b16 %v224, %v223
  %v292 = vpack.c.b16 %v226, %v225
  %v293 = vpack.c.b16 %v228, %v227
  %v294 = vpack.c.b16 %v230, %v229
  %v295 = vpack.c.b16 %v232, %v231
  %v296 = vpack.c.b16 %v234, %v233
  %v297 = vpack.c.b16 %v236, %v235
  %v298 = vpack.c.b16 %v238, %v237
  %v299 = vpack.c.b16 %v240, %v239
  %v300 = vpack.c.b16 %v242, %v241
  %v301 = vpack.c.b16 %v244, %v243
  %v302 = vpack.c.b16 %v246, %v245
  %v303 = vpack.c.b16 %v248, %v247
  %v304 = vpack.c.b16 %v250, %v249
  %v305 = vpack.c.b16 %v252, %v251
  %v306 = vpack.c.b16 %v254, %v253
  %v307 = vpack.c.b16 %v256, %v255
  %v308 = vpack.c.b16 %v258, %v257
  %v309 = vpack.c.b16 %v260, %v259
  %v310 = vpack.c.b16 %v262, %v261
  %v311 = vpack.c.b16 %v264, %v263
  %v312 = vpack.c.b16 %v266, %v265
  %v313 = vpack.c.b16 %v268, %v267
  %v314 = vpack.c.b16 %v270, %v269
  %v315 = vpack.c.b16 %v272, %v271
  %v316 = vpack.c.b16 %v274, %v273
  %v317 = vpack.c.b16 %v276, %v275
  %v318 = vpack.c.b16 %v278, %v277
  %359 = vmatprep.subr.bf16.mxu0 0
  %360 = vmatpush1.bf16.msra.mxu0 %v279
  %361 = vmatprep.subr.bf16.mxu0 0
  %362 = vmatpush1.bf16.msra.mxu0 %v280
  %363 = vmatprep.subr.bf16.mxu0 0
  %364 = vmatpush1.bf16.msra.mxu0 %v281
  %365 = vmatprep.subr.bf16.mxu0 0
  %366 = vmatpush1.bf16.msra.mxu0 %v282
  %367 = vmatprep.subr.bf16.mxu0 0
  %368 = vmatpush1.bf16.msra.mxu0 %v283
  %369 = vmatprep.subr.bf16.mxu0 0
  %370 = vmatpush1.bf16.msra.mxu0 %v284
  %371 = vmatprep.subr.bf16.mxu0 0
  %372 = vmatpush1.bf16.msra.mxu0 %v285
  %373 = vmatprep.subr.bf16.mxu0 0
  %374 = vmatpush1.bf16.msra.mxu0 %v286
  %375 = vmatprep.subr.bf16.mxu0 0
  %376 = vmatpush1.bf16.msra.mxu0 %v287
  %377 = vmatprep.subr.bf16.mxu0 0
  %378 = vmatpush1.bf16.msra.mxu0 %v288
  %379 = vmatprep.subr.bf16.mxu0 0
  %380 = vmatpush1.bf16.msra.mxu0 %v289
  %381 = vmatprep.subr.bf16.mxu0 0
  %382 = vmatpush1.bf16.msra.mxu0 %v290
  %383 = vmatprep.subr.bf16.mxu0 0
  %384 = vmatpush1.bf16.msra.mxu0 %v291
  %385 = vmatprep.subr.bf16.mxu0 0
  %386 = vmatpush1.bf16.msra.mxu0 %v292
  %387 = vmatprep.subr.bf16.mxu0 0
  %388 = vmatpush1.bf16.msra.mxu0 %v293
  %389 = vmatprep.subr.bf16.mxu0 0
  %390 = vmatpush1.bf16.msra.mxu0 %v294
  %391 = vmatprep.mubr.bf16.mxu0 %v110
  %392 = vmatmul.mubr.bf16.gmra.mrb[0].mxu0 %v109
  %v393 = vpop.f32.mrb[0].mxu0
  %v394 = vadd.f32 0.0, %v393
  %v395 = vpop.f32.mrb[0].mxu0
  %v396 = vpop.f32.mrb[0].mxu0
  %v397 = vpop.f32.mrb[0].mxu0
  %398 = vdwg.mxu0
  %399 = vmatprep.subr.bf16.mxu0 0
  %400 = vmatpush1.bf16.msra.mxu0 %v295
  %401 = vmatprep.subr.bf16.mxu0 0
  %402 = vmatpush1.bf16.msra.mxu0 %v296
  %403 = vmatprep.subr.bf16.mxu0 0
  %404 = vmatpush1.bf16.msra.mxu0 %v297
  %405 = vmatprep.subr.bf16.mxu0 0
  %406 = vmatpush1.bf16.msra.mxu0 %v298
  %407 = vmatprep.subr.bf16.mxu0 0
  %408 = vmatpush1.bf16.msra.mxu0 %v299
  %409 = vmatprep.subr.bf16.mxu0 0
  %410 = vmatpush1.bf16.msra.mxu0 %v300
  %411 = vmatprep.subr.bf16.mxu0 0
  %412 = vmatpush1.bf16.msra.mxu0 %v301
  %413 = vmatprep.subr.bf16.mxu0 0
  %414 = vmatpush1.bf16.msra.mxu0 %v302
  %415 = vmatprep.subr.bf16.mxu0 0
  %416 = vmatpush1.bf16.msra.mxu0 %v303
  %417 = vmatprep.subr.bf16.mxu0 0
  %418 = vmatpush1.bf16.msra.mxu0 %v304
  %419 = vmatprep.subr.bf16.mxu0 0
  %420 = vmatpush1.bf16.msra.mxu0 %v305
  %421 = vmatprep.subr.bf16.mxu0 0
  %422 = vmatpush1.bf16.msra.mxu0 %v306
  %423 = vmatprep.subr.bf16.mxu0 0
  %424 = vmatpush1.bf16.msra.mxu0 %v307
  %425 = vmatprep.subr.bf16.mxu0 0
  %426 = vmatpush1.bf16.msra.mxu0 %v308
  %427 = vmatprep.subr.bf16.mxu0 0
  %428 = vmatpush1.bf16.msra.mxu0 %v309
  %429 = vmatprep.subr.bf16.mxu0 0
  %430 = vmatpush1.bf16.msra.mxu0 %v310
  %431 = vmatprep.mubr.bf16.mxu0 %v112
  %432 = vmatmul.mubr.bf16.gmra.mrb[0].mxu0 %v111
  %v433 = vpop.f32.mrb[0].mxu0
  %v434 = vadd.f32 %v394, %v433
  %v435 = vpop.f32.mrb[0].mxu0
  %v436 = vpop.f32.mrb[0].mxu0
  %v437 = vpop.f32.mrb[0].mxu0
  %438 = vdwg.mxu0
  %439 = vmatprep.subr.bf16.mxu0 0
  %440 = vmatpush1.bf16.msra.mxu0 %v311
  %441 = vmatprep.subr.bf16.mxu0 0
  %442 = vmatpush1.bf16.msra.mxu0 %v312
  %443 = vmatprep.subr.bf16.mxu0 0
  %444 = vmatpush1.bf16.msra.mxu0 %v313
  %445 = vmatprep.subr.bf16.mxu0 0
  %446 = vmatpush1.bf16.msra.mxu0 %v314
  %447 = vmatprep.subr.bf16.mxu0 0
  %448 = vmatpush1.bf16.msra.mxu0 %v315
  %449 = vmatprep.subr.bf16.mxu0 0
  %450 = vmatpush1.bf16.msra.mxu0 %v316
  %451 = vmatprep.subr.bf16.mxu0 0
  %452 = vmatpush1.bf16.msra.mxu0 %v317
  %453 = vmatprep.subr.bf16.mxu0 0
  %454 = vmatpush1.bf16.msra.mxu0 %v318
  %455 = vmatprep.subr.bf16.mxu0 0
  %456 = vmatpush1.bf16.msra.mxu0 0
  %457 = vmatprep.subr.bf16.mxu0 0
  %458 = vmatpush1.bf16.msra.mxu0 0
  %459 = vmatprep.subr.bf16.mxu0 0
  %460 = vmatpush1.bf16.msra.mxu0 0
  %461 = vmatprep.subr.bf16.mxu0 0
  %462 = vmatpush1.bf16.msra.mxu0 0
  %463 = vmatprep.subr.bf16.mxu0 0
  %464 = vmatpush1.bf16.msra.mxu0 0
  %465 = vmatprep.subr.bf16.mxu0 0
  %466 = vmatpush1.bf16.msra.mxu0 0
  %467 = vmatprep.subr.bf16.mxu0 0
  %468 = vmatpush1.bf16.msra.mxu0 0
  %469 = vmatprep.subr.bf16.mxu0 0
  %470 = vmatpush1.bf16.msra.mxu0 0
  %471 = vmatprep.mubr.bf16.mxu0 0
  %472 = vmatmul.mubr.bf16.gmra.mrb[0].mxu0 %v113
  %v473 = vpop.f32.mrb[0].mxu0
  %v474 = vadd.f32 %v434, %v473
  %v475 = vpop.f32.mrb[0].mxu0
  %v476 = vpop.f32.mrb[0].mxu0
  %v477 = vpop.f32.mrb[0].mxu0
  %478 = vdwg.mxu0
  %vm479 = vcmask 523264
  %v480 = vsel %vm479, %v474, 0.0
  %v481 = vrot.slane %v480, 4
  %v482 = vadd.f32 %v480, %v481
  %v483 = vrot.slane %v482, 2
  %v484 = vadd.f32 %v482, %v483
  %v485 = vrot.slane %v484, 1
  %v486 = vadd.f32 %v484, %v485
  %v487 = vmul.f32 %v486, 0.125
  %v488 = vmul.f32 %v474, %v474
  %v489 = vsel %vm479, %v488, 0.0
  %v490 = vrot.slane %v489, 4
  %v491 = vadd.f32 %v489, %v490
  %v492 = vrot.slane %v491, 2
  %v493 = vadd.f32 %v491, %v492
  %v494 = vrot.slane %v493, 1
  %v495 = vadd.f32 %v493, %v494
  %v496 = vmul.f32 %v495, 0.125
  %v497 = vmul.f32 %v487, %v487
  %v498 = vsub.f32 %v496, %v497
  %v499 = vmax.f32 %v498, 0.0
  %v500 = vadd.f32 %v499, 1e-05
  %v501 = vrsqrt.pop %v500
  %v502 = vld [vmem:[%s2] sm:$0x1]
  %v503 = vmul.f32 %v502, %v501
  %v504 = vld [vmem:[%s3] sm:$0x1]
  %v505 = vmul.f32 %v487, %v503
  %v506 = vsub.f32 %v504, %v505
  %v508 = vlaneseq
  %v509 = vshrl.u32 %v508, 7
  %v510 = vsub.s32 0, %v509
  %v511 = vrot.slane %v503, %v510
  %v513 = vmul.f32 %v474, %v511
  %v515 = vlaneseq
  %v516 = vshrl.u32 %v515, 7
  %v517 = vsub.s32 0, %v516
  %v518 = vrot.slane %v506, %v517
  %v520 = vadd.f32 %v513, %v518
  %vm521 = vcmp.ge.f32.partialorder %v520, 0.0
  %v522 = vmul.f32 %v520, 0.2
  %v523 = vsel %vm521, %v520, %v522
  %v524 = vpack.c.bf16 %v523, %v523
  %vm525 = vcmask 519168
  %526 = vst.msk [vmem:[%s4] sm:$0xf] %vm525, %v524
  // Predicated region
  $region18: #{vgg_discriminator.19} parent=0 // pred_check
    _
  $region19: #{vgg_discriminator.19} parent=0 // pred_check_branch
    %528 = sbr.rel (0) target = $region21
  $region20: #{vgg_discriminator.19} parent=0 // pred_region
    _
  $region21: #{vgg_discriminator.19} parent=0 // pred_fallthru
    _
  // Predicated region
  $region22: #{vgg_discriminator.19} parent=0 // pred_check
    _
  $region23: #{vgg_discriminator.19} parent=0 // pred_check_branch
    %530 = sbr.rel (0) target = $region25
  $region24: #{vgg_discriminator.19} parent=0 // pred_region
    _
  $region25: #{vgg_discriminator.19} parent=0 // pred_fallthru
    _

// kernel: vgg_discriminator.21
$region0: #{vgg_discriminator.21}
  #allocation0 [shape = 'u32[]', space=smem, size = 0x4, offset = 0x4, fixed_abs, tag = 'smem constant byte address 0x4 - core index']
  #allocation1 [shape = 'u32[144,128]{1,0:T(1,128)}', space=vmem, size = 0x12000, scoped, tag = 'internal scratch']
  %s0 = inlined_call_operand.vmem [shape: bf16[2,128], index: 0, kind: input, shape index: {}]
  %s1 = inlined_call_operand.vmem [shape: bf16[128,128], index: 1, kind: input, shape index: {}]
  %s2 = inlined_call_operand.vmem [shape: f32[1,128], index: 2, kind: input, shape index: {}]
  %s3 = inlined_call_operand.vmem [shape: bf16[128,128], index: 3, kind: input, shape index: {}]
  %s4 = inlined_call_operand.vmem [shape: f32[1,128], index: 4, kind: input, shape index: {}]
  %s5 = inlined_call_operand.vmem [shape: f32[2,128], index: 5, kind: output, shape index: {}]
  %s6 = sld [smem:[#allocation0]]
  $region30: #{vgg_discriminator.21} parent=0
    _
  %s8 = ssub.s32 1, %s6
  %s9 = scalar_select 0, %s8, %s6
  // Predicated region
  $region2: #{vgg_discriminator.21} parent=0 // pred_check
    _
  $region3: #{vgg_discriminator.21} parent=0 // pred_check_branch
    %11 = sbr.rel (0) target = $region5
  $region4: #{vgg_discriminator.21} parent=0 // pred_region
    _
  $region5: #{vgg_discriminator.21} parent=0 // pred_fallthru
    _
  // Predicated region
  $region6: #{vgg_discriminator.21} parent=0 // pred_check
    _
  $region7: #{vgg_discriminator.21} parent=0 // pred_check_branch
    %13 = sbr.rel (0) target = $region9
  $region8: #{vgg_discriminator.21} parent=0 // pred_region
    _
  $region9: #{vgg_discriminator.21} parent=0 // pred_fallthru
    _
  // Predicated region
  $region10: #{vgg_discriminator.21} parent=0 // pred_check
    _
  $region11: #{vgg_discriminator.21} parent=0 // pred_check_branch
    %15 = sbr.rel (0) target = $region13
  $region12: #{vgg_discriminator.21} parent=0 // pred_region
    _
  $region13: #{vgg_discriminator.21} parent=0 // pred_fallthru
    _
  // Predicated region
  $region14: #{vgg_discriminator.21} parent=0 // pred_check
    _
  $region15: #{vgg_discriminator.21} parent=0 // pred_check_branch
    %17 = sbr.rel (0) target = $region17
  $region16: #{vgg_discriminator.21} parent=0 // pred_region
    _
  $region17: #{vgg_discriminator.21} parent=0 // pred_fallthru
    _
  // Predicated region
  $region18: #{vgg_discriminator.21} parent=0 // pred_check
    _
  $region19: #{vgg_discriminator.21} parent=0 // pred_check_branch
    %19 = sbr.rel (0) target = $region21
  $region20: #{vgg_discriminator.21} parent=0 // pred_region
    _
  $region21: #{vgg_discriminator.21} parent=0 // pred_fallthru
    _
  %v21 = vld [vmem:[%s0] sm:$0x1]
  %v22 = vld [vmem:[%s1] sm:$0xf]
  %v23 = vld [vmem:[%s1 + $0x4] sm:$0xf]
  %v24 = vld [vmem:[%s1 + $0x8] sm:$0xf]
  %v25 = vld [vmem:[%s1 + $0xc] sm:$0xf]
  %v26 = vld [vmem:[%s1 + $0x10] sm:$0xf]
  %v27 = vld [vmem:[%s1 + $0x14] sm:$0xf]
  %v28 = vld [vmem:[%s1 + $0x18] sm:$0xf]
  %v29 = vld [vmem:[%s1 + $0x1c] sm:$0xf]
  %v30 = vld [vmem:[%s1 + $0x20] sm:$0xf]
  %v31 = vld [vmem:[%s1 + $0x24] sm:$0xf]
  %v32 = vld [vmem:[%s1 + $0x28] sm:$0xf]
  %v33 = vld [vmem:[%s1 + $0x2c] sm:$0xf]
  %v34 = vld [vmem:[%s1 + $0x30] sm:$0xf]
  %v35 = vld [vmem:[%s1 + $0x34] sm:$0xf]
  %v36 = vld [vmem:[%s1 + $0x38] sm:$0xf]
  %v37 = vld [vmem:[%s1 + $0x3c] sm:$0xf]
  %v38 = vld [vmem:[%s2] sm:$0x1]
  %v40 = vlaneseq
  %v41 = vshrl.u32 %v40, 7
  %v42 = vsub.s32 0, %v41
  %v43 = vrot.slane %v38, %v42
  %v61 = vunpack.c.l.b16 %v22
  %v62 = vunpack.c.l.b16 %v23
  %v63 = vunpack.c.l.b16 %v24
  %v64 = vunpack.c.l.b16 %v25
  %v65 = vunpack.c.l.b16 %v26
  %v66 = vunpack.c.l.b16 %v27
  %v67 = vunpack.c.l.b16 %v28
  %v68 = vunpack.c.l.b16 %v29
  %v69 = vunpack.c.l.b16 %v30
  %v70 = vunpack.c.l.b16 %v31
  %v71 = vunpack.c.l.b16 %v32
  %v72 = vunpack.c.l.b16 %v33
  %v73 = vunpack.c.l.b16 %v34
  %v74 = vunpack.c.l.b16 %v35
  %v75 = vunpack.c.l.b16 %v36
  %v76 = vunpack.c.l.b16 %v37
  %v77 = vpack.c.b16 %v62, %v61
  %v78 = vpack.c.b16 %v64, %v63
  %v79 = vpack.c.b16 %v66, %v65
  %v80 = vpack.c.b16 %v68, %v67
  %v81 = vpack.c.b16 %v70, %v69
  %v82 = vpack.c.b16 %v72, %v71
  %v83 = vpack.c.b16 %v74, %v73
  %v84 = vpack.c.b16 %v76, %v75
  %93 = vmatprep.subr.bf16.mxu0 0
  %94 = vmatpush1.bf16.msra.mxu0 %v77
  %95 = vmatprep.subr.bf16.mxu0 0
  %96 = vmatpush1.bf16.msra.mxu0 %v78
  %97 = vmatprep.subr.bf16.mxu0 0
  %98 = vmatpush1.bf16.msra.mxu0 %v79
  %99 = vmatprep.subr.bf16.mxu0 0
  %100 = vmatpush1.bf16.msra.mxu0 %v80
  %101 = vmatprep.subr.bf16.mxu0 0
  %102 = vmatpush1.bf16.msra.mxu0 %v81
  %103 = vmatprep.subr.bf16.mxu0 0
  %104 = vmatpush1.bf16.msra.mxu0 %v82
  %105 = vmatprep.subr.bf16.mxu0 0
  %106 = vmatpush1.bf16.msra.mxu0 %v83
  %107 = vmatprep.subr.bf16.mxu0 0
  %108 = vmatpush1.bf16.msra.mxu0 %v84
  %109 = vmatprep.subr.bf16.mxu0 0
  %110 = vmatpush1.bf16.msra.mxu0 0
  %111 = vmatprep.subr.bf16.mxu0 0
  %112 = vmatpush1.bf16.msra.mxu0 0
  %113 = vmatprep.subr.bf16.mxu0 0
  %114 = vmatpush1.bf16.msra.mxu0 0
  %115 = vmatprep.subr.bf16.mxu0 0
  %116 = vmatpush1.bf16.msra.mxu0 0
  %117 = vmatprep.subr.bf16.mxu0 0
  %118 = vmatpush1.bf16.msra.mxu0 0
  %119 = vmatprep.subr.bf16.mxu0 0
  %120 = vmatpush1.bf16.msra.mxu0 0
  %121 = vmatprep.subr.bf16.mxu0 0
  %122 = vmatpush1.bf16.msra.mxu0 0
  %123 = vmatprep.subr.bf16.mxu0 0
  %124 = vmatpush1.bf16.msra.mxu0 0
  %125 = vmatprep.mubr.bf16.mxu0 0
  %126 = vmatmul.mubr.bf16.gmra.mrb[0].mxu0 %v21
  %v127 = vpop.f32.mrb[0].mxu0
  %v128 = vadd.f32 %v43, %v127
  %v129 = vpop.f32.mrb[0].mxu0
  %v130 = vpop.f32.mrb[0].mxu0
  %v131 = vpop.f32.mrb[0].mxu0
  %132 = vdwg.mxu0
  %vm133 = vcmp.ge.f32.partialorder %v128, 0.0
  %v134 = vmul.f32 %v128, 0.2
  %v135 = vsel %vm133, %v128, %v134
  %v136 = vpack.c.bf16 %v135, %v135
  %v137 = vld [vmem:[%s3] sm:$0xf]
  %v138 = vld [vmem:[%s3 + $0x4] sm:$0xf]
  %v139 = vld [vmem:[%s3 + $0x8] sm:$0xf]
  %v140 = vld [vmem:[%s3 + $0xc] sm:$0xf]
  %v141 = vld [vmem:[%s3 + $0x10] sm:$0xf]
  %v142 = vld [vmem:[%s3 + $0x14] sm:$0xf]
  %v143 = vld [vmem:[%s3 + $0x18] sm:$0xf]
  %v144 = vld [vmem:[%s3 + $0x1c] sm:$0xf]
  %v145 = vld [vmem:[%s3 + $0x20] sm:$0xf]
  %v146 = vld [vmem:[%s3 + $0x24] sm:$0xf]
  %v147 = vld [vmem:[%s3 + $0x28] sm:$0xf]
  %v148 = vld [vmem:[%s3 + $0x2c] sm:$0xf]
  %v149 = vld [vmem:[%s3 + $0x30] sm:$0xf]
  %v150 = vld [vmem:[%s3 + $0x34] sm:$0xf]
  %v151 = vld [vmem:[%s3 + $0x38] sm:$0xf]
  %v152 = vld [vmem:[%s3 + $0x3c] sm:$0xf]
  %v153 = vld [vmem:[%s4] sm:$0x1]
  %v155 = vlaneseq
  %v156 = vshrl.u32 %v155, 7
  %v157 = vsub.s32 0, %v156
  %v158 = vrot.slane %v153, %v157
  %v176 = vunpack.c.l.b16 %v137
  %v177 = vunpack.c.l.b16 %v138
  %v178 = vunpack.c.l.b16 %v139
  %v179 = vunpack.c.l.b16 %v140
  %v180 = vunpack.c.l.b16 %v141
  %v181 = vunpack.c.l.b16 %v142
  %v182 = vunpack.c.l.b16 %v143
  %v183 = vunpack.c.l.b16 %v144
  %v184 = vunpack.c.l.b16 %v145
  %v185 = vunpack.c.l.b16 %v146
  %v186 = vunpack.c.l.b16 %v147
  %v187 = vunpack.c.l.b16 %v148
  %v188 = vunpack.c.l.b16 %v149
  %v189 = vunpack.c.l.b16 %v150
  %v190 = vunpack.c.l.b16 %v151
  %v191 = vunpack.c.l.b16 %v152
  %v192 = vpack.c.b16 %v177, %v176
  %v193 = vpack.c.b16 %v179, %v178
  %v194 = vpack.c.b16 %v181, %v180
  %v195 = vpack.c.b16 %v183, %v182
  %v196 = vpack.c.b16 %v185, %v184
  %v197 = vpack.c.b16 %v187, %v186
  %v198 = vpack.c.b16 %v189, %v188
  %v199 = vpack.c.b16 %v191, %v190
  %208 = vmatprep.subr.bf16.mxu0 0
  %209 = vmatpush1.bf16.msra.mxu0 %v192
  %210 = vmatprep.subr.bf16.mxu0 0
  %211 = vmatpush1.bf16.msra.mxu0 %v193
  %212 = vmatprep.subr.bf16.mxu0 0
  %213 = vmatpush1.bf16.msra.mxu0 %v194
  %214 = vmatprep.subr.bf16.mxu0 0
  %215 = vmatpush1.bf16.msra.mxu0 %v195
  %216 = vmatprep.subr.bf16.mxu0 0
  %217 = vmatpush1.bf16.msra.mxu0 %v196
  %218 = vmatprep.subr.bf16.mxu0 0
  %219 = vmatpush1.bf16.msra.mxu0 %v197
  %220 = vmatprep.subr.bf16.mxu0 0
  %221 = vmatpush1.bf16.msra.mxu0 %v198
  %222 = vmatprep.subr.bf16.mxu0 0
  %223 = vmatpush1.bf16.msra.mxu0 %v199
  %224 = vmatprep.subr.bf16.mxu0 0
  %225 = vmatpush1.bf16.msra.mxu0 0
  %226 = vmatprep.subr.bf16.mxu0 0
  %227 = vmatpush1.bf16.msra.mxu0 0
  %228 = vmatprep.subr.bf16.mxu0 0
  %229 = vmatpush1.bf16.msra.mxu0 0
  %230 = vmatprep.subr.bf16.mxu0 0
  %231 = vmatpush1.bf16.msra.mxu0 0
  %232 = vmatprep.subr.bf16.mxu0 0
  %233 = vmatpush1.bf16.msra.mxu0 0
  %234 = vmatprep.subr.bf16.mxu0 0
  %235 = vmatpush1.bf16.msra.mxu0 0
  %236 = vmatprep.subr.bf16.mxu0 0
  %237 = vmatpush1.bf16.msra.mxu0 0
  %238 = vmatprep.subr.bf16.mxu0 0
  %239 = vmatpush1.bf16.msra.mxu0 0
  %240 = vmatprep.mubr.bf16.mxu0 0
  %241 = vmatmul.mubr.bf16.gmra.mrb[0].mxu0 %v136
  %v242 = vpop.f32.mrb[0].mxu0
  %v243 = vadd.f32 %v158, %v242
  %v244 = vpop.f32.mrb[0].mxu0
  %v245 = vpop.f32.mrb[0].mxu0
  %v246 = vpop.f32.mrb[0].mxu0
  %247 = vdwg.mxu0
  %248 = vst [vmem:[%s5] sm:$0x3] %v243
  // Predicated region
  $region22: #{vgg_discriminator.21} parent=0 // pred_check
    _
  $region23: #{vgg_discriminator.21} parent=0 // pred_check_branch
    %250 = sbr.rel (0) target = $region25
  $region24: #{vgg_discriminator.21} parent=0 // pred_region
    _
  $region25: #{vgg_discriminator.21} parent=0 // pred_fallthru
    _
  // Predicated region
  $region26: #{vgg_discriminator.21} parent=0 // pred_check
    _
  $region27: #{vgg_discriminator.21} parent=0 // pred_check_branch
    %252 = sbr.rel (0) target = $region29
  $region28: #{vgg_discriminator.21} parent=0 // pred_region
    _
  $region29: #{vgg_discriminator.21} parent=0 // pred_fallthru
    _

// kernel: vgg_discriminator.20
$region0: #{vgg_discriminator.20}
  #allocation0 [shape = 'u32[]', space=smem, size = 0x4, offset = 0x4, fixed_abs, tag = 'smem constant byte address 0x4 - core index']
  #allocation1 [shape = 'u32[144,128]{1,0:T(1,128)}', space=vmem, size = 0x12000, scoped, tag = 'internal scratch']
  %s0 = inlined_call_operand.vmem [shape: bf16[8,1024], index: 0, kind: input, shape index: {}]
  %s1 = inlined_call_operand.vmem [shape: bf16[1024,64], index: 1, kind: input, shape index: {}]
  %s2 = inlined_call_operand.vmem [shape: f32[1,64], index: 2, kind: input, shape index: {}]
  %s3 = inlined_call_operand.vmem [shape: f32[1,64], index: 3, kind: input, shape index: {}]
  %s4 = inlined_call_operand.vmem [shape: bf16[8,64], index: 4, kind: output, shape index: {}]
  %s5 = sld [smem:[#allocation0]]
  $region26: #{vgg_discriminator.20} parent=0
    _
  %s7 = ssub.s32 1, %s5
  %s8 = scalar_select 0, %s7, %s5
  // Predicated region
  $region2: #{vgg_discriminator.20} parent=0 // pred_check
    _
  $region3: #{vgg_discriminator.20} parent=0 // pred_check_branch
    %10 = sbr.rel (0) target = $region5
  $region4: #{vgg_discriminator.20} parent=0 // pred_region
    _
  $region5: #{vgg_discriminator.20} parent=0 // pred_fallthru
    _
  // Predicated region
  $region6: #{vgg_discriminator.20} parent=0 // pred_check
    _
  $region7: #{vgg_discriminator.20} parent=0 // pred_check_branch
    %12 = sbr.rel (0) target = $region9
  $region8: #{vgg_discriminator.20} parent=0 // pred_region
    _
  $region9: #{vgg_discriminator.20} parent=0 // pred_fallthru
    _
  // Predicated region
  $region10: #{vgg_discriminator.20} parent=0 // pred_check
    _
  $region11: #{vgg_discriminator.20} parent=0 // pred_check_branch
    %14 = sbr.rel (0) target = $region13
  $region12: #{vgg_discriminator.20} parent=0 // pred_region
    _
  $region13: #{vgg_discriminator.20} parent=0 // pred_fallthru
    _
  // Predicated region
  $region14: #{vgg_discriminator.20} parent=0 // pred_check
    _
  $region15: #{vgg_discriminator.20} parent=0 // pred_check_branch
    %16 = sbr.rel (0) target = $region17
  $region16: #{vgg_discriminator.20} parent=0 // pred_region
    _
  $region17: #{vgg_discriminator.20} parent=0 // pred_fallthru
    _
  %v18 = vld [vmem:[%s0] sm:$0xff]
  %v19 = vld [vmem:[%s0 + $0x8] sm:$0xff]
  %v20 = vld [vmem:[%s0 + $0x10] sm:$0xff]
  %v21 = vld [vmem:[%s0 + $0x18] sm:$0xff]
  %v22 = vld [vmem:[%s1] sm:$0xf]
  %v23 = vld [vmem:[%s1 + $0x4] sm:$0xf]
  %v24 = vld [vmem:[%s1 + $0x8] sm:$0xf]
  %v25 = vld [vmem:[%s1 + $0xc] sm:$0xf]
  %v26 = vld [vmem:[%s1 + $0x10] sm:$0xf]
  %v27 = vld [vmem:[%s1 + $0x14] sm:$0xf]
  %v28 = vld [vmem:[%s1 + $0x18] sm:$0xf]
  %v29 = vld [vmem:[%s1 + $0x1c] sm:$0xf]
  %v30 = vld [vmem:[%s1 + $0x20] sm:$0xf]
  %v31 = vld [vmem:[%s1 + $0x24] sm:$0xf]
  %v32 = vld [vmem:[%s1 + $0x28] sm:$0xf]
  %v33 = vld [vmem:[%s1 + $0x2c] sm:$0xf]
  %v34 = vld [vmem:[%s1 + $0x30] sm:$0xf]
  %v35 = vld [vmem:[%s1 + $0x34] sm:$0xf]
  %v36 = vld [vmem:[%s1 + $0x38] sm:$0xf]
  %v37 = vld [vmem:[%s1 + $0x3c] sm:$0xf]
  %v38 = vld [vmem:[%s1 + $0x40] sm:$0xf]
  %v39 = vld [vmem:[%s1 + $0x44] sm:$0xf]
  %v40 = vld [vmem:[%s1 + $0x48] sm:$0xf]
  %v41 = vld [vmem:[%s1 + $0x4c] sm:$0xf]
  %v42 = vld [vmem:[%s1 + $0x50] sm:$0xf]
  %v43 = vld [vmem:[%s1 + $0x54] sm:$0xf]
  %v44 = vld [vmem:[%s1 + $0x58] sm:$0xf]
  %v45 = vld [vmem:[%s1 + $0x5c] sm:$0xf]
  %v46 = vld [vmem:[%s1 + $0x60] sm:$0xf]
  %v47 = vld [vmem:[%s1 + $0x64] sm:$0xf]
  %v48 = vld [vmem:[%s1 + $0x68] sm:$0xf]
  %v49 = vld [vmem:[%s1 + $0x6c] sm:$0xf]
  %v50 = vld [vmem:[%s1 + $0x70] sm:$0xf]
  %v51 = vld [vmem:[%s1 + $0x74] sm:$0xf]
  %v52 = vld [vmem:[%s1 + $0x78] sm:$0xf]
  %v53 = vld [vmem:[%s1 + $0x7c] sm:$0xf]
  %v54 = vld [vmem:[%s1 + $0x80] sm:$0xf]
  %v55 = vld [vmem:[%s1 + $0x84] sm:$0xf]
  %v56 = vld [vmem:[%s1 + $0x88] sm:$0xf]
  %v57 = vld [vmem:[%s1 + $0x8c] sm:$0xf]
  %v58 = vld [vmem:[%s1 + $0x90] sm:$0xf]
  %v59 = vld [vmem:[%s1 + $0x94] sm:$0xf]
  %v60 = vld [vmem:[%s1 + $0x98] sm:$0xf]
  %v61 = vld [vmem:[%s1 + $0x9c] sm:$0xf]
  %v62 = vld [vmem:[%s1 + $0xa0] sm:$0xf]
  %v63 = vld [vmem:[%s1 + $0xa4] sm:$0xf]
  %v64 = vld [vmem:[%s1 + $0xa8] sm:$0xf]
  %v65 = vld [vmem:[%s1 + $0xac] sm:$0xf]
  %v66 = vld [vmem:[%s1 + $0xb0] sm:$0xf]
  %v67 = vld [vmem:[%s1 + $0xb4] sm:$0xf]
  %v68 = vld [vmem:[%s1 + $0xb8] sm:$0xf]
  %v69 = vld [vmem:[%s1 + $0xbc] sm:$0xf]
  %v70 = vld [vmem:[%s1 + $0xc0] sm:$0xf]
  %v71 = vld [vmem:[%s1 + $0xc4] sm:$0xf]
  %v72 = vld [vmem:[%s1 + $0xc8] sm:$0xf]
  %v73 = vld [vmem:[%s1 + $0xcc] sm:$0xf]
  %v74 = vld [vmem:[%s1 + $0xd0] sm:$0xf]
  %v75 = vld [vmem:[%s1 + $0xd4] sm:$0xf]
  %v76 = vld [vmem:[%s1 + $0xd8] sm:$0xf]
  %v77 = vld [vmem:[%s1 + $0xdc] sm:$0xf]
  %v78 = vld [vmem:[%s1 + $0xe0] sm:$0xf]
  %v79 = vld [vmem:[%s1 + $0xe4] sm:$0xf]
  %v80 = vld [vmem:[%s1 + $0xe8] sm:$0xf]
  %v81 = vld [vmem:[%s1 + $0xec] sm:$0xf]
  %v82 = vld [vmem:[%s1 + $0xf0] sm:$0xf]
  %v83 = vld [vmem:[%s1 + $0xf4] sm:$0xf]
  %v84 = vld [vmem:[%s1 + $0xf8] sm:$0xf]
  %v85 = vld [vmem:[%s1 + $0xfc] sm:$0xf]
  %v86 = vld [vmem:[%s1 + $0x100] sm:$0xf]
  %v87 = vld [vmem:[%s1 + $0x104] sm:$0xf]
  %v88 = vld [vmem:[%s1 + $0x108] sm:$0xf]
  %v89 = vld [vmem:[%s1 + $0x10c] sm:$0xf]
  %v90 = vld [vmem:[%s1 + $0x110] sm:$0xf]
  %v91 = vld [vmem:[%s1 + $0x114] sm:$0xf]
  %v92 = vld [vmem:[%s1 + $0x118] sm:$0xf]
  %v93 = vld [vmem:[%s1 + $0x11c] sm:$0xf]
  %v94 = vld [vmem:[%s1 + $0x120] sm:$0xf]
  %v95 = vld [vmem:[%s1 + $0x124] sm:$0xf]
  %v96 = vld [vmem:[%s1 + $0x128] sm:$0xf]
  %v97 = vld [vmem:[%s1 + $0x12c] sm:$0xf]
  %v98 = vld [vmem:[%s1 + $0x130] sm:$0xf]
  %v99 = vld [vmem:[%s1 + $0x134] sm:$0xf]
  %v100 = vld [vmem:[%s1 + $0x138] sm:$0xf]
  %v101 = vld [vmem:[%s1 + $0x13c] sm:$0xf]
  %v102 = vld [vmem:[%s1 + $0x140] sm:$0xf]
  %v103 = vld [vmem:[%s1 + $0x144] sm:$0xf]
  %v104 = vld [vmem:[%s1 + $0x148] sm:$0xf]
  %v105 = vld [vmem:[%s1 + $0x14c] sm:$0xf]
  %v106 = vld [vmem:[%s1 + $0x150] sm:$0xf]
  %v107 = vld [vmem:[%s1 + $0x154] sm:$0xf]
  %v108 = vld [vmem:[%s1 + $0x158] sm:$0xf]
  %v109 = vld [vmem:[%s1 + $0x15c] sm:$0xf]
  %v110 = vld [vmem:[%s1 + $0x160] sm:$0xf]
  %v111 = vld [vmem:[%s1 + $0x164] sm:$0xf]
  %v112 = vld [vmem:[%s1 + $0x168] sm:$0xf]
  %v113 = vld [vmem:[%s1 + $0x16c] sm:$0xf]
  %v114 = vld [vmem:[%s1 + $0x170] sm:$0xf]
  %v115 = vld [vmem:[%s1 + $0x174] sm:$0xf]
  %v116 = vld [vmem:[%s1 + $0x178] sm:$0xf]
  %v117 = vld [vmem:[%s1 + $0x17c] sm:$0xf]
  %v118 = vld [vmem:[%s1 + $0x180] sm:$0xf]
  %v119 = vld [vmem:[%s1 + $0x184] sm:$0xf]
  %v120 = vld [vmem:[%s1 + $0x188] sm:$0xf]
  %v121 = vld [vmem:[%s1 + $0x18c] sm:$0xf]
  %v122 = vld [vmem:[%s1 + $0x190] sm:$0xf]
  %v123 = vld [vmem:[%s1 + $0x194] sm:$0xf]
  %v124 = vld [vmem:[%s1 + $0x198] sm:$0xf]
  %v125 = vld [vmem:[%s1 + $0x19c] sm:$0xf]
  %v126 = vld [vmem:[%s1 + $0x1a0] sm:$0xf]
  %v127 = vld [vmem:[%s1 + $0x1a4] sm:$0xf]
  %v128 = vld [vmem:[%s1 + $0x1a8] sm:$0xf]
  %v129 = vld [vmem:[%s1 + $0x1ac] sm:$0xf]
  %v130 = vld [vmem:[%s1 + $0x1b0] sm:$0xf]
  %v131 = vld [vmem:[%s1 + $0x1b4] sm:$0xf]
  %v132 = vld [vmem:[%s1 + $0x1b8] sm:$0xf]
  %v133 = vld [vmem:[%s1 + $0x1bc] sm:$0xf]
  %v134 = vld [vmem:[%s1 + $0x1c0] sm:$0xf]
  %v135 = vld [vmem:[%s1 + $0x1c4] sm:$0xf]
  %v136 = vld [vmem:[%s1 + $0x1c8] sm:$0xf]
  %v137 = vld [vmem:[%s1 + $0x1cc] sm:$0xf]
  %v138 = vld [vmem:[%s1 + $0x1d0] sm:$0xf]
  %v139 = vld [vmem:[%s1 + $0x1d4] sm:$0xf]
  %v140 = vld [vmem:[%s1 + $0x1d8] sm:$0xf]
  %v141 = vld [vmem:[%s1 + $0x1dc] sm:$0xf]
  %v142 = vld [vmem:[%s1 + $0x1e0] sm:$0xf]
  %v143 = vld [vmem:[%s1 + $0x1e4] sm:$0xf]
  %v144 = vld [vmem:[%s1 + $0x1e8] sm:$0xf]
  %v145 = vld [vmem:[%s1 + $0x1ec] sm:$0xf]
  %v146 = vld [vmem:[%s1 + $0x1f0] sm:$0xf]
  %v147 = vld [vmem:[%s1 + $0x1f4] sm:$0xf]
  %v148 = vld [vmem:[%s1 + $0x1f8] sm:$0xf]
  %v149 = vld [vmem:[%s1 + $0x1fc] sm:$0xf]
  %v154 = vunpack.c.l.b16 %v18
  %v155 = vunpack.c.h.b16 %v18
  %v156 = vunpack.c.l.b16 %v19
  %v157 = vunpack.c.h.b16 %v19
  %v158 = vunpack.c.l.b16 %v20
  %v159 = vunpack.c.h.b16 %v20
  %v160 = vunpack.c.l.b16 %v21
  %v161 = vunpack.c.h.b16 %v21
  %v162 = vpack.c.b16 %v154, %v154
  %v163 = vpack.c.b16 %v155, %v155
  %v164 = vpack.c.b16 %v156, %v156
  %v165 = vpack.c.b16 %v157, %v157
  %v166 = vpack.c.b16 %v158, %v158
  %v167 = vpack.c.b16 %v159, %v159
  %v168 = vpack.c.b16 %v160, %v160
  %v169 = vpack.c.b16 %v161, %v161
  %v306 = vunpack.c.l.b16 %v22
  %v307 = vunpack.c.l.b16 %v23
  %v308 = vunpack.c.l.b16 %v24
  %v309 = vunpack.c.l.b16 %v25
  %v310 = vunpack.c.l.b16 %v26
  %v311 = vunpack.c.l.b16 %v27
  %v312 = vunpack.c.l.b16 %v28
  %v313 = vunpack.c.l.b16 %v29
  %v314 = vunpack.c.l.b16 %v30
  %v315 = vunpack.c.l.b16 %v31
  %v316 = vunpack.c.l.b16 %v32
  %v317 = vunpack.c.l.b16 %v33
  %v318 = vunpack.c.l.b16 %v34
  %v319 = vunpack.c.l.b16 %v35
  %v320 = vunpack.c.l.b16 %v36
  %v321 = vunpack.c.l.b16 %v37
  %v322 = vunpack.c.l.b16 %v38
  %v323 = vunpack.c.l.b16 %v39
  %v324 = vunpack.c.l.b16 %v40
  %v325 = vunpack.c.l.b16 %v41
  %v326 = vunpack.c.l.b16 %v42
  %v327 = vunpack.c.l.b16 %v43
  %v328 = vunpack.c.l.b16 %v44
  %v329 = vunpack.c.l.b16 %v45
  %v330 = vunpack.c.l.b16 %v46
  %v331 = vunpack.c.l.b16 %v47
  %v332 = vunpack.c.l.b16 %v48
  %v333 = vunpack.c.l.b16 %v49
  %v334 = vunpack.c.l.b16 %v50
  %v335 = vunpack.c.l.b16 %v51
  %v336 = vunpack.c.l.b16 %v52
  %v337 = vunpack.c.l.b16 %v53
  %v338 = vunpack.c.l.b16 %v54
  %v339 = vunpack.c.l.b16 %v55
  %v340 = vunpack.c.l.b16 %v56
  %v341 = vunpack.c.l.b16 %v57
  %v342 = vunpack.c.l.b16 %v58
  %v343 = vunpack.c.l.b16 %v59
  %v344 = vunpack.c.l.b16 %v60
  %v345 = vunpack.c.l.b16 %v61
  %v346 = vunpack.c.l.b16 %v62
  %v347 = vunpack.c.l.b16 %v63
  %v348 = vunpack.c.l.b16 %v64
  %v349 = vunpack.c.l.b16 %v65
  %v350 = vunpack.c.l.b16 %v66
  %v351 = vunpack.c.l.b16 %v67
  %v352 = vunpack.c.l.b16 %v68
  %v353 = vunpack.c.l.b16 %v69
  %v354 = vunpack.c.l.b16 %v70
  %v355 = vunpack.c.l.b16 %v71
  %v356 = vunpack.c.l.b16 %v72
  %v357 = vunpack.c.l.b16 %v73
  %v358 = vunpack.c.l.b16 %v74
  %v359 = vunpack.c.l.b16 %v75
  %v360 = vunpack.c.l.b16 %v76
  %v361 = vunpack.c.l.b16 %v77
  %v362 = vunpack.c.l.b16 %v78
  %v363 = vunpack.c.l.b16 %v79
  %v364 = vunpack.c.l.b16 %v80
  %v365 = vunpack.c.l.b16 %v81
  %v366 = vunpack.c.l.b16 %v82
  %v367 = vunpack.c.l.b16 %v83
  %v368 = vunpack.c.l.b16 %v84
  %v369 = vunpack.c.l.b16 %v85
  %v370 = vunpack.c.l.b16 %v86
  %v371 = vunpack.c.l.b16 %v87
  %v372 = vunpack.c.l.b16 %v88
  %v373 = vunpack.c.l.b16 %v89
  %v374 = vunpack.c.l.b16 %v90
  %v375 = vunpack.c.l.b16 %v91
  %v376 = vunpack.c.l.b16 %v92
  %v377 = vunpack.c.l.b16 %v93
  %v378 = vunpack.c.l.b16 %v94
  %v379 = vunpack.c.l.b16 %v95
  %v380 = vunpack.c.l.b16 %v96
  %v381 = vunpack.c.l.b16 %v97
  %v382 = vunpack.c.l.b16 %v98
  %v383 = vunpack.c.l.b16 %v99
  %v384 = vunpack.c.l.b16 %v100
  %v385 = vunpack.c.l.b16 %v101
  %v386 = vunpack.c.l.b16 %v102
  %v387 = vunpack.c.l.b16 %v103
  %v388 = vunpack.c.l.b16 %v104
  %v389 = vunpack.c.l.b16 %v105
  %v390 = vunpack.c.l.b16 %v106
  %v391 = vunpack.c.l.b16 %v107
  %v392 = vunpack.c.l.b16 %v108
  %v393 = vunpack.c.l.b16 %v109
  %v394 = vunpack.c.l.b16 %v110
  %v395 = vunpack.c.l.b16 %v111
  %v396 = vunpack.c.l.b16 %v112
  %v397 = vunpack.c.l.b16 %v113
  %v398 = vunpack.c.l.b16 %v114
  %v399 = vunpack.c.l.b16 %v115
  %v400 = vunpack.c.l.b16 %v116
  %v401 = vunpack.c.l.b16 %v117
  %v402 = vunpack.c.l.b16 %v118
  %v403 = vunpack.c.l.b16 %v119
  %v404 = vunpack.c.l.b16 %v120
  %v405 = vunpack.c.l.b16 %v121
  %v406 = vunpack.c.l.b16 %v122
  %v407 = vunpack.c.l.b16 %v123
  %v408 = vunpack.c.l.b16 %v124
  %v409 = vunpack.c.l.b16 %v125
  %v410 = vunpack.c.l.b16 %v126
  %v411 = vunpack.c.l.b16 %v127
  %v412 = vunpack.c.l.b16 %v128
  %v413 = vunpack.c.l.b16 %v129
  %v414 = vunpack.c.l.b16 %v130
  %v415 = vunpack.c.l.b16 %v131
  %v416 = vunpack.c.l.b16 %v132
  %v417 = vunpack.c.l.b16 %v133
  %v418 = vunpack.c.l.b16 %v134
  %v419 = vunpack.c.l.b16 %v135
  %v420 = vunpack.c.l.b16 %v136
  %v421 = vunpack.c.l.b16 %v137
  %v422 = vunpack.c.l.b16 %v138
  %v423 = vunpack.c.l.b16 %v139
  %v424 = vunpack.c.l.b16 %v140
  %v425 = vunpack.c.l.b16 %v141
  %v426 = vunpack.c.l.b16 %v142
  %v427 = vunpack.c.l.b16 %v143
  %v428 = vunpack.c.l.b16 %v144
  %v429 = vunpack.c.l.b16 %v145
  %v430 = vunpack.c.l.b16 %v146
  %v431 = vunpack.c.l.b16 %v147
  %v432 = vunpack.c.l.b16 %v148
  %v433 = vunpack.c.l.b16 %v149
  %v434 = vpack.c.b16 %v307, %v306
  %v435 = vpack.c.b16 %v309, %v308
  %v436 = vpack.c.b16 %v311, %v310
  %v437 = vpack.c.b16 %v313, %v312
  %v438 = vpack.c.b16 %v315, %v314
  %v439 = vpack.c.b16 %v317, %v316
  %v440 = vpack.c.b16 %v319, %v318
  %v441 = vpack.c.b16 %v321, %v320
  %v442 = vpack.c.b16 %v323, %v322
  %v443 = vpack.c.b16 %v325, %v324
  %v444 = vpack.c.b16 %v327, %v326
  %v445 = vpack.c.b16 %v329, %v328
  %v446 = vpack.c.b16 %v331, %v330
  %v447 = vpack.c.b16 %v333, %v332
  %v448 = vpack.c.b16 %v335, %v334
  %v449 = vpack.c.b16 %v337, %v336
  %v450 = vpack.c.b16 %v339, %v338
  %v451 = vpack.c.b16 %v341, %v340
  %v452 = vpack.c.b16 %v343, %v342
  %v453 = vpack.c.b16 %v345, %v344
  %v454 = vpack.c.b16 %v347, %v346
  %v455 = vpack.c.b16 %v349, %v348
  %v456 = vpack.c.b16 %v351, %v350
  %v457 = vpack.c.b16 %v353, %v352
  %v458 = vpack.c.b16 %v355, %v354
  %v459 = vpack.c.b16 %v357, %v356
  %v460 = vpack.c.b16 %v359, %v358
  %v461 = vpack.c.b16 %v361, %v360
  %v462 = vpack.c.b16 %v363, %v362
  %v463 = vpack.c.b16 %v365, %v364
  %v464 = vpack.c.b16 %v367, %v366
  %v465 = vpack.c.b16 %v369, %v368
  %v466 = vpack.c.b16 %v371, %v370
  %v467 = vpack.c.b16 %v373, %v372
  %v468 = vpack.c.b16 %v375, %v374
  %v469 = vpack.c.b16 %v377, %v376
  %v470 = vpack.c.b16 %v379, %v378
  %v471 = vpack.c.b16 %v381, %v380
  %v472 = vpack.c.b16 %v383, %v382
  %v473 = vpack.c.b16 %v385, %v384
  %v474 = vpack.c.b16 %v387, %v386
  %v475 = vpack.c.b16 %v389, %v388
  %v476 = vpack.c.b16 %v391, %v390
  %v477 = vpack.c.b16 %v393, %v392
  %v478 = vpack.c.b16 %v395, %v394
  %v479 = vpack.c.b16 %v397, %v396
  %v480 = vpack.c.b16 %v399, %v398
  %v481 = vpack.c.b16 %v401, %v400
  %v482 = vpack.c.b16 %v403, %v402
  %v483 = vpack.c.b16 %v405, %v404
  %v484 = vpack.c.b16 %v407, %v406
  %v485 = vpack.c.b16 %v409, %v408
  %v486 = vpack.c.b16 %v411, %v410
  %v487 = vpack.c.b16 %v413, %v412
  %v488 = vpack.c.b16 %v415, %v414
  %v489 = vpack.c.b16 %v417, %v416
  %v490 = vpack.c.b16 %v419, %v418
  %v491 = vpack.c.b16 %v421, %v420
  %v492 = vpack.c.b16 %v423, %v422
  %v493 = vpack.c.b16 %v425, %v424
  %v494 = vpack.c.b16 %v427, %v426
  %v495 = vpack.c.b16 %v429, %v428
  %v496 = vpack.c.b16 %v431, %v430
  %v497 = vpack.c.b16 %v433, %v432
  %562 = vmatprep.subr.bf16.mxu0 0
  %563 = vmatpush1.bf16.msra.mxu0 %v434
  %564 = vmatprep.subr.bf16.mxu0 0
  %565 = vmatpush1.bf16.msra.mxu0 %v435
  %566 = vmatprep.subr.bf16.mxu0 0
  %567 = vmatpush1.bf16.msra.mxu0 %v436
  %568 = vmatprep.subr.bf16.mxu0 0
  %569 = vmatpush1.bf16.msra.mxu0 %v437
  %570 = vmatprep.subr.bf16.mxu0 0
  %571 = vmatpush1.bf16.msra.mxu0 %v438
  %572 = vmatprep.subr.bf16.mxu0 0
  %573 = vmatpush1.bf16.msra.mxu0 %v439
  %574 = vmatprep.subr.bf16.mxu0 0
  %575 = vmatpush1.bf16.msra.mxu0 %v440
  %576 = vmatprep.subr.bf16.mxu0 0
  %577 = vmatpush1.bf16.msra.mxu0 %v441
  %578 = vmatprep.subr.bf16.mxu0 0
  %579 = vmatpush1.bf16.msra.mxu0 %v442
  %580 = vmatprep.subr.bf16.mxu0 0
  %581 = vmatpush1.bf16.msra.mxu0 %v443
  %582 = vmatprep.subr.bf16.mxu0 0
  %583 = vmatpush1.bf16.msra.mxu0 %v444
  %584 = vmatprep.subr.bf16.mxu0 0
  %585 = vmatpush1.bf16.msra.mxu0 %v445
  %586 = vmatprep.subr.bf16.mxu0 0
  %587 = vmatpush1.bf16.msra.mxu0 %v446
  %588 = vmatprep.subr.bf16.mxu0 0
  %589 = vmatpush1.bf16.msra.mxu0 %v447
  %590 = vmatprep.subr.bf16.mxu0 0
  %591 = vmatpush1.bf16.msra.mxu0 %v448
  %592 = vmatprep.subr.bf16.mxu0 0
  %593 = vmatpush1.bf16.msra.mxu0 %v449
  %594 = vmatprep.mubr.bf16.mxu0 %v163
  %595 = vmatmul.mubr.bf16.gmra.mrb[0].mxu0 %v162
  %v596 = vpop.f32.mrb[0].mxu0
  %v597 = vadd.f32 0.0, %v596
  %v598 = vpop.f32.mrb[0].mxu0
  %v599 = vpop.f32.mrb[0].mxu0
  %v600 = vpop.f32.mrb[0].mxu0
  %601 = vdwg.mxu0
  %602 = vmatprep.subr.bf16.mxu0 0
  %603 = vmatpush1.bf16.msra.mxu0 %v450
  %604 = vmatprep.subr.bf16.mxu0 0
  %605 = vmatpush1.bf16.msra.mxu0 %v451
  %606 = vmatprep.subr.bf16.mxu0 0
  %607 = vmatpush1.bf16.msra.mxu0 %v452
  %608 = vmatprep.subr.bf16.mxu0 0
  %609 = vmatpush1.bf16.msra.mxu0 %v453
  %610 = vmatprep.subr.bf16.mxu0 0
  %611 = vmatpush1.bf16.msra.mxu0 %v454
  %612 = vmatprep.subr.bf16.mxu0 0
  %613 = vmatpush1.bf16.msra.mxu0 %v455
  %614 = vmatprep.subr.bf16.mxu0 0
  %615 = vmatpush1.bf16.msra.mxu0 %v456
  %616 = vmatprep.subr.bf16.mxu0 0
  %617 = vmatpush1.bf16.msra.mxu0 %v457
  %618 = vmatprep.subr.bf16.mxu0 0
  %619 = vmatpush1.bf16.msra.mxu0 %v458
  %620 = vmatprep.subr.bf16.mxu0 0
  %621 = vmatpush1.bf16.msra.mxu0 %v459
  %622 = vmatprep.subr.bf16.mxu0 0
  %623 = vmatpush1.bf16.msra.mxu0 %v460
  %624 = vmatprep.subr.bf16.mxu0 0
  %625 = vmatpush1.bf16.msra.mxu0 %v461
  %626 = vmatprep.subr.bf16.mxu0 0
  %627 = vmatpush1.bf16.msra.mxu0 %v462
  %628 = vmatprep.subr.bf16.mxu0 0
  %629 = vmatpush1.bf16.msra.mxu0 %v463
  %630 = vmatprep.subr.bf16.mxu0 0
  %631 = vmatpush1.bf16.msra.mxu0 %v464
  %632 = vmatprep.subr.bf16.mxu0 0
  %633 = vmatpush1.bf16.msra.mxu0 %v465
  %634 = vmatprep.mubr.bf16.mxu0 %v165
  %635 = vmatmul.mubr.bf16.gmra.mrb[0].mxu0 %v164
  %v636 = vpop.f32.mrb[0].mxu0
  %v637 = vadd.f32 %v597, %v636
  %v638 = vpop.f32.mrb[0].mxu0
  %v639 = vpop.f32.mrb[0].mxu0
  %v640 = vpop.f32.mrb[0].mxu0
  %641 = vdwg.mxu0
  %642 = vmatprep.subr.bf16.mxu0 0
  %643 = vmatpush1.bf16.msra.mxu0 %v466
  %644 = vmatprep.subr.bf16.mxu0 0
  %645 = vmatpush1.bf16.msra.mxu0 %v467
  %646 = vmatprep.subr.bf16.mxu0 0
  %647 = vmatpush1.bf16.msra.mxu0 %v468
  %648 = vmatprep.subr.bf16.mxu0 0
  %649 = vmatpush1.bf16.msra.mxu0 %v469
  %650 = vmatprep.subr.bf16.mxu0 0
  %651 = vmatpush1.bf16.msra.mxu0 %v470
  %652 = vmatprep.subr.bf16.mxu0 0
  %653 = vmatpush1.bf16.msra.mxu0 %v471
  %654 = vmatprep.subr.bf16.mxu0 0
  %655 = vmatpush1.bf16.msra.mxu0 %v472
  %656 = vmatprep.subr.bf16.mxu0 0
  %657 = vmatpush1.bf16.msra.mxu0 %v473
  %658 = vmatprep.subr.bf16.mxu0 0
  %659 = vmatpush1.bf16.msra.mxu0 %v474
  %660 = vmatprep.subr.bf16.mxu0 0
  %661 = vmatpush1.bf16.msra.mxu0 %v475
  %662 = vmatprep.subr.bf16.mxu0 0
  %663 = vmatpush1.bf16.msra.mxu0 %v476
  %664 = vmatprep.subr.bf16.mxu0 0
  %665 = vmatpush1.bf16.msra.mxu0 %v477
  %666 = vmatprep.subr.bf16.mxu0 0
  %667 = vmatpush1.bf16.msra.mxu0 %v478
  %668 = vmatprep.subr.bf16.mxu0 0
  %669 = vmatpush1.bf16.msra.mxu0 %v479
  %670 = vmatprep.subr.bf16.mxu0 0
  %671 = vmatpush1.bf16.msra.mxu0 %v480
  %672 = vmatprep.subr.bf16.mxu0 0
  %673 = vmatpush1.bf16.msra.mxu0 %v481
  %674 = vmatprep.mubr.bf16.mxu0 %v167
  %675 = vmatmul.mubr.bf16.gmra.mrb[0].mxu0 %v166
  %v676 = vpop.f32.mrb[0].mxu0
  %v677 = vadd.f32 %v637, %v676
  %v678 = vpop.f32.mrb[0].mxu0
  %v679 = vpop.f32.mrb[0].mxu0
  %v680 = vpop.f32.mrb[0].mxu0
  %681 = vdwg.mxu0
  %682 = vmatprep.subr.bf16.mxu0 0
  %683 = vmatpush1.bf16.msra.mxu0 %v482
  %684 = vmatprep.subr.bf16.mxu0 0
  %685 = vmatpush1.bf16.msra.mxu0 %v483
  %686 = vmatprep.subr.bf16.mxu0 0
  %687 = vmatpush1.bf16.msra.mxu0 %v484
  %688 = vmatprep.subr.bf16.mxu0 0
  %689 = vmatpush1.bf16.msra.mxu0 %v485
  %690 = vmatprep.subr.bf16.mxu0 0
  %691 = vmatpush1.bf16.msra.mxu0 %v486
  %692 = vmatprep.subr.bf16.mxu0 0
  %693 = vmatpush1.bf16.msra.mxu0 %v487
  %694 = vmatprep.subr.bf16.mxu0 0
  %695 = vmatpush1.bf16.msra.mxu0 %v488
  %696 = vmatprep.subr.bf16.mxu0 0
  %697 = vmatpush1.bf16.msra.mxu0 %v489
  %698 = vmatprep.subr.bf16.mxu0 0
  %699 = vmatpush1.bf16.msra.mxu0 %v490
  %700 = vmatprep.subr.bf16.mxu0 0
  %701 = vmatpush1.bf16.msra.mxu0 %v491
  %702 = vmatprep.subr.bf16.mxu0 0
  %703 = vmatpush1.bf16.msra.mxu0 %v492
  %704 = vmatprep.subr.bf16.mxu0 0
  %705 = vmatpush1.bf16.msra.mxu0 %v493
  %706 = vmatprep.subr.bf16.mxu0 0
  %707 = vmatpush1.bf16.msra.mxu0 %v494
  %708 = vmatprep.subr.bf16.mxu0 0
  %709 = vmatpush1.bf16.msra.mxu0 %v495
  %710 = vmatprep.subr.bf16.mxu0 0
  %711 = vmatpush1.bf16.msra.mxu0 %v496
  %712 = vmatprep.subr.bf16.mxu0 0
  %713 = vmatpush1.bf16.msra.mxu0 %v497
  %714 = vmatprep.mubr.bf16.mxu0 %v169
  %715 = vmatmul.mubr.bf16.gmra.mrb[0].mxu0 %v168
  %v716 = vpop.f32.mrb[0].mxu0
  %v717 = vadd.f32 %v677, %v716
  %v718 = vpop.f32.mrb[0].mxu0
  %v719 = vpop.f32.mrb[0].mxu0
  %v720 = vpop.f32.mrb[0].mxu0
  %721 = vdwg.mxu0
  %vm722 = vcmask 523264
  %v723 = vsel %vm722, %v717, 0.0
  %v724 = vrot.slane %v723, 4
  %v725 = vadd.f32 %v723, %v724
  %v726 = vrot.slane %v725, 2
  %v727 = vadd.f32 %v725, %v726
  %v728 = vrot.slane %v727, 1
  %v729 = vadd.f32 %v727, %v728
  %v730 = vmul.f32 %v729, 0.5
  %v731 = vmul.f32 %v717, %v717
  %v732 = vsel %vm722, %v731, 0.0
  %v733 = vrot.slane %v732, 4
  %v734 = vadd.f32 %v732, %v733
  %v735 = vrot.slane %v734, 2
  %v736 = vadd.f32 %v734, %v735
  %v737 = vrot.slane %v736, 1
  %v738 = vadd.f32 %v736, %v737
  %v739 = vmul.f32 %v738, 0.5
  %v740 = vmul.f32 %v730, %v730
  %v741 = vsub.f32 %v739, %v740
  %v742 = vmax.f32 %v741, 0.0
  %v743 = vadd.f32 %v742, 1e-05
  %v744 = vrsqrt.pop %v743
  %v745 = vld [vmem:[%s2] sm:$0x1]
  %v746 = vmul.f32 %v745, %v744
  %v747 = vld [vmem:[%s3] sm:$0x1]
  %v748 = vmul.f32 %v730, %v746
  %v749 = vsub.f32 %v747, %v748
  %v751 = vlaneseq
  %v752 = vshrl.u32 %v751, 7
  %v753 = vsub.s32 0, %v752
  %v754 = vrot.slane %v746, %v753
  %v756 = vmul.f32 %v717, %v754
  %v758 = vlaneseq
  %v759 = vshrl.u32 %v758, 7
  %v760 = vsub.s32 0, %v759
  %v761 = vrot.slane %v749, %v760
  %v763 = vadd.f32 %v756, %v761
  %vm764 = vcmp.ge.f32.partialorder %v763, 0.0
  %v765 = vmul.f32 %v763, 0.2
  %v766 = vsel %vm764, %v763, %v765
  %v767 = vpack.c.bf16 %v766, %v766
  %vm768 = vcmask 519168
  %769 = vst.msk [vmem:[%s4] sm:$0xf] %vm768, %v767
  // Predicated region
  $region18: #{vgg_discriminator.20} parent=0 // pred_check
    _
  $region19: #{vgg_discriminator.20} parent=0 // pred_check_branch
    %771 = sbr.rel (0) target = $region21
  $region20: #{vgg_discriminator.20} parent=0 // pred_region
    _
  $region21: #{vgg_discriminator.20} parent=0 // pred_fallthru
    _
  // Predicated region
  $region22: #{vgg_discriminator.20} parent=0 // pred_check
    _
  $region23: #{vgg_discriminator.20} parent=0 // pred_check_branch
    %773 = sbr.rel (0) target = $region25
  $region24: #{vgg_discriminator.20} parent=0 // pred_region
    _
  $region25: #{vgg_discriminator.20} parent=0 // pred_fallthru
    _

</llo_original>
